<compile_context>
chip_gen: v6e
topology: v6e:2x2x1
jax: 0.10.0
libtpu: 0.0.40
codegen_flags: <defaults>
</compile_context>

<pallas_src>
import functools

import jax
import jax.numpy as jnp
from jax.experimental import pallas as pl
from jax.experimental.pallas import tpu as pltpu

BN_EPS = 1e-5
LANE = 128
SUBLANE = 8
_TARGET_ROWS = 8192            # max output pixels (R = TH*W) per grid tile


def _round_up(x, m):
    return (x + m - 1) // m * m


def _pick_row_tile(h, w, c_in, c_pad):
    """Row-band TH with TH | H, TH*W within a VMEM byte budget, TH % 8 == 0 and
    (TH*W) % 128 == 0 (lane-dense output store), or TH == H (full-array blocks)."""
    bpp = 18 * c_in + 12 * c_pad                 # patches bf16 + acc f32 + 2x out f32
    target = max(LANE, min(_TARGET_ROWS, (16 * 1024 * 1024) // max(bpp, 1)))
    if h * w <= target:
        return h
    cand = [th for th in range(SUBLANE, h, SUBLANE)
            if h % th == 0 and (th * w) % LANE == 0]
    fits = [th for th in cand if th * w <= target]
    if fits:
        return max(fits)
    if cand:
        return min(cand)                         # smallest legal tile bounds VMEM
    any_div = [th for th in range(1, h) if h % th == 0 and (th * w) % LANE == 0]
    if any_div:
        fits2 = [th for th in any_div if th * w <= target]
        return max(fits2) if fits2 else min(any_div)
    # TODO(synk): ragged last-band tiling (pl.cdiv grid + masking) for H with no
    # suitable divisor; fall back to a single whole-H band.
    return h


def _vmem_limit_bytes(c_in, c_pad, k, h, w, th):
    r = th * w
    need = (2 * c_in * (h + 2) * (w + 2) * 2     # double-buffered padded image (bf16)
            + 2 * c_pad * k * 2                  # weight matrix
            + k * r * 2                          # patch scratch (bf16)
            + c_pad * r * 4                      # f32 conv result
            + 2 * c_pad * r * 4                  # double-buffered output block
            + 8 * c_pad * 4 + (1 << 20))         # stats / scale / shift + slack
    return int(min(64 * 1024 * 1024, max(32 * 1024 * 1024, 2 * need)))


# ----------------------------------------------------------------------------
# In-kernel patch build: 9 shifted slabs of a row band written into VMEM scratch
# ----------------------------------------------------------------------------
def _build_patches(x_ref, patch_ref, hb, th, w_out, c_in, kh, kw):
    # x_ref: (1, C_in, Hp, Wp) bf16 padded image (resident per batch index)
    # patch_ref: (K, R) bf16 VMEM scratch, K = kh*kw*C_in, R = TH*W
    row0 = hb * th
    if th % SUBLANE == 0:
        row0 = pl.multiple_of(row0, SUBLANE)              # aligned sublane loads
    band = x_ref[0, :, pl.ds(row0, th + kh - 1), :]       # (C_in, TH+2, Wp)
    for di in range(kh):
        for dj in range(kw):
            base = (di * kw + dj) * c_in
            slab = band[:, di:di + th, dj:dj + w_out]     # (C_in, TH, W)
            patch_ref[base:base + c_in, :] = slab.reshape(c_in, th * w_out)


# ----------------------------------------------------------------------------
# Pass 1: conv + streaming per-channel sum / sum-of-squares (BN batch stats)
# ----------------------------------------------------------------------------
def _conv_stats_kernel(x_ref, w_ref, sum_ref, sq_ref, patch_ref, *,
                       th, w_out, c_in, kh, kw):
    hb = pl.program_id(1)

    @pl.when(hb == 0)
    def _():
        sum_ref[...] = jnp.zeros_like(sum_ref)
        sq_ref[...] = jnp.zeros_like(sq_ref)

    _build_patches(x_ref, patch_ref, hb, th, w_out, c_in, kh, kw)
    acc = jnp.dot(w_ref[...], patch_ref[...],
                  preferred_element_type=jnp.float32)     # (C_pad, R) f32
    sum_ref[...] += jnp.sum(acc, axis=1, keepdims=True)[None]    # (1, C_pad, 1)
    sq_ref[...] += jnp.sum(acc * acc, axis=1, keepdims=True)[None]


# ----------------------------------------------------------------------------
# Pass 2: recompute conv tile + fused BN scale/shift, lane-dense (1,C_pad,R) store
# ----------------------------------------------------------------------------
def _conv_norm_kernel(x_ref, w_ref, scale_ref, shift_ref, o_ref, patch_ref, *,
                      th, w_out, c_in, kh, kw):
    hb = pl.program_id(1)
    _build_patches(x_ref, patch_ref, hb, th, w_out, c_in, kh, kw)
    acc = jnp.dot(w_ref[...], patch_ref[...],
                  preferred_element_type=jnp.float32)     # (C_pad, R) f32
    y = acc * scale_ref[...] + shift_ref[...]             # f32 BN math
    o_ref[...] = y[None].astype(o_ref.dtype)              # unmasked lane-dense store


# ----------------------------------------------------------------------------
# One branch: conv3x3(pad=1) + BatchNorm (training statistics), NCHW in/out
# ----------------------------------------------------------------------------
def _conv_bn_branch(xp_bf16, w_mat_bf16, gamma, beta, n, c_out, h, w, th):
    c_pad, k = w_mat_bf16.shape
    c_in = xp_bf16.shape[1]
    n_hb = h // th
    grid = (n, n_hb)
    r = th * w
    vmem_limit = _vmem_limit_bytes(c_in, c_pad, k, h, w, th)

    x_spec = pl.BlockSpec((1, c_in, h + 2, w + 2), lambda i, j: (i, 0, 0, 0))
    w_spec = pl.BlockSpec((c_pad, k), lambda i, j: (0, 0))
    stats_spec = pl.BlockSpec((1, c_pad, 1), lambda i, j: (i, 0, 0))
    patch_scratch = pltpu.VMEM((k, r), jnp.bfloat16)

    ysum, ysq = pl.pallas_call(
        functools.partial(_conv_stats_kernel, th=th, w_out=w, c_in=c_in, kh=3, kw=3),
        grid=grid,
        in_specs=[x_spec, w_spec],
        out_specs=(stats_spec, stats_spec),
        out_shape=(jax.ShapeDtypeStruct((n, c_pad, 1), jnp.float32),
                   jax.ShapeDtypeStruct((n, c_pad, 1), jnp.float32)),
        scratch_shapes=[patch_scratch],
        compiler_params=pltpu.CompilerParams(
            dimension_semantics=("parallel", "arbitrary"),
            vmem_limit_bytes=vmem_limit),
    )(xp_bf16, w_mat_bf16)
    # TODO(synk): on v7x (2 TensorCores) add a leading 'parallel' band-chunk axis to
    # pass 1 (partial stats summed in the epilogue) so both cores work when N is small.

    # Tiny per-channel epilogue (length C_pad) in plain JAX: mean/var -> scale/shift.
    count = jnp.float32(n * h * w)
    mean = jnp.sum(ysum, axis=0) / count                                  # (C_pad, 1)
    var = jnp.maximum(jnp.sum(ysq, axis=0) / count - mean * mean, 0.0)    # E[y^2]-mean^2
    inv_std = jax.lax.rsqrt(var + BN_EPS)
    gamma_p = jnp.pad(gamma.astype(jnp.float32), (0, c_pad - c_out)).reshape(c_pad, 1)
    beta_p = jnp.pad(beta.astype(jnp.float32), (0, c_pad - c_out)).reshape(c_pad, 1)
    scale = gamma_p * inv_std
    shift = beta_p - mean * scale

    vec_spec = pl.BlockSpec((c_pad, 1), lambda i, j: (0, 0))
    out_spec = pl.BlockSpec((1, c_pad, r), lambda i, j: (i, 0, j))
    out_flat = pl.pallas_call(
        functools.partial(_conv_norm_kernel, th=th, w_out=w, c_in=c_in, kh=3, kw=3),
        grid=grid,
        in_specs=[x_spec, w_spec, vec_spec, vec_spec],
        out_specs=out_spec,
        out_shape=jax.ShapeDtypeStruct((n, c_pad, h * w), jnp.float32),
        scratch_shapes=[patch_scratch],
        compiler_params=pltpu.CompilerParams(
            dimension_semantics=("parallel", "parallel"),
            vmem_limit_bytes=vmem_limit),
    )(xp_bf16, w_mat_bf16, scale, shift)

    # Kernel stores all C_pad (multiple-of-8) rows unmasked; slice/reshape here
    # (reshape of contiguous trailing dims is free, slice is negligible bytes).
    if c_pad != c_out:
        out_flat = out_flat[:, :c_out, :]
    return out_flat.reshape(n, c_out, h, w)


# ----------------------------------------------------------------------------
# Plain-JAX glue (cheap, NCHW end-to-end: no layout transposes)
# ----------------------------------------------------------------------------
def _pad_nchw(x):
    return jnp.pad(x, ((0, 0), (0, 0), (1, 1), (1, 1)))


def _avg_pool_2x2_nchw(x):
    n, c, h, w = x.shape
    he, we = (h // 2) * 2, (w // 2) * 2           # floor, like nn.AvgPool2d(2, 2)
    x = x[:, :, :he, :we]
    return x.reshape(n, c, he // 2, 2, we // 2, 2).mean(axis=(3, 5))


def _weight_matrix(w_b, c_pad):
    # (C_b, C_in, 3, 3) -> (C_pad, 9*C_in); column order (di, dj, ci) matches patches.
    c_b, c_in, kh, kw = w_b.shape
    wm = jnp.transpose(w_b, (0, 2, 3, 1)).reshape(c_b, kh * kw * c_in)
    wm = jnp.pad(wm, ((0, c_pad - c_b), (0, 0)))
    return wm.astype(jnp.bfloat16)


# ----------------------------------------------------------------------------
# FirstOctaveCB forward
# ----------------------------------------------------------------------------
@functools.partial(jax.jit, static_argnames=("alpha_out",))
def first_octave_cb(x, weights, gamma_h, beta_h, gamma_l, beta_l, alpha_out=0.5):
    """x: (N, C_in, H, W) f32; weights: (C_out, C_in, 3, 3) f32. Returns NCHW (x_h, x_l)."""
    n, c_in, h, w = x.shape
    c_out = weights.shape[0]
    c_h = int(c_out * (1 - alpha_out))
    c_l = c_out - c_h

    # TODO(synk): fold pad + bf16 cast (+ 2x2 avg-pool) into the kernels via a
    # zero-filled VMEM band scratch to remove these extra HBM passes.
    # High-frequency branch: conv3x3(pad=1)(x) -> BN.
    xp_h = _pad_nchw(x.astype(jnp.bfloat16))
    c_pad_h = _round_up(max(c_h, 1), SUBLANE)
    w_h = _weight_matrix(weights[:c_h], c_pad_h)
    x_h = _conv_bn_branch(xp_h, w_h, gamma_h, beta_h, n, c_h, h, w,
                          _pick_row_tile(h, w, c_in, c_pad_h))

    # Low-frequency branch: conv3x3(pad=1)(avgpool2x2(x)) -> BN.
    x_pool = _avg_pool_2x2_nchw(x)
    hl, wl = x_pool.shape[2], x_pool.shape[3]
    xp_l = _pad_nchw(x_pool.astype(jnp.bfloat16))
    c_pad_l = _round_up(max(c_l, 1), SUBLANE)
    w_l = _weight_matrix(weights[c_h:], c_pad_l)
    x_l = _conv_bn_branch(xp_l, w_l, gamma_l, beta_l, n, c_l, hl, wl,
                          _pick_row_tile(hl, wl, c_in, c_pad_l))

    # TODO(synk): BatchNorm running_mean/running_var buffers are not updated (stateless fwd).
    return x_h, x_l


if __name__ == "__main__":
    key = jax.random.PRNGKey(0)
    k_x, k_w = jax.random.split(key)

    N, C_IN, H, W = 2, 4, 16, 16
    C_OUT = 8                  # -> 4 high-frequency + 4 low-frequency channels
    ALPHA_OUT = 0.5

    x = jax.random.normal(k_x, (N, C_IN, H, W), dtype=jnp.float32)
    # nn.Parameter(torch.Tensor(...)) is uninitialized in the reference; synthetic init.
    weights = 0.1 * jax.random.normal(k_w, (C_OUT, C_IN, 3, 3), dtype=jnp.float32)

    c_h = int(C_OUT * (1 - ALPHA_OUT))
    c_l = C_OUT - c_h
    gamma_h = jnp.ones((c_h,), jnp.float32)   # BatchNorm2d affine defaults
    beta_h = jnp.zeros((c_h,), jnp.float32)
    gamma_l = jnp.ones((c_l,), jnp.float32)
    beta_l = jnp.zeros((c_l,), jnp.float32)

    x_h, x_l = first_octave_cb(x, weights, gamma_h, beta_h, gamma_l, beta_l,
                               alpha_out=ALPHA_OUT)
    jax.block_until_ready((x_h, x_l))

    assert x_h.shape == (N, c_h, H, W), x_h.shape
    assert x_l.shape == (N, c_l, H // 2, W // 2), x_l.shape
    assert bool(jnp.all(jnp.isfinite(x_h))) and bool(jnp.all(jnp.isfinite(x_l)))
    print("KERNEL_OK")
</pallas_src>

<mosaic_0001>
module attributes {stable_mosaic.version = 11 : i64} {
  func.func @_conv_stats_kernel(%arg0: i32, %arg1: i32, %arg2: memref<1x4x10x10xbf16, #tpu.memory_space<vmem>>, %arg3: memref<8x36xbf16, #tpu.memory_space<vmem>>, %arg4: memref<1x8x1xf32, #tpu.memory_space<vmem>>, %arg5: memref<1x8x1xf32, #tpu.memory_space<vmem>>, %arg6: memref<36x64xbf16, #tpu.memory_space<vmem>>) attributes {dimension_semantics = [#tpu.dimension_semantics<parallel>, #tpu.dimension_semantics<arbitrary>], iteration_bounds = array<i64: 2, 1>, scalar_prefetch = 0 : i64, scratch_operands = 1 : i64, tpu.core_type = #tpu.core_type<tc>, window_params = [{transform_indices = @transform_0, window_bounds = array<i64: 1, 4, 10, 10>}, {pipeline_mode = #tpu.pipeline_mode<synchronous>, transform_indices = @transform_1, window_bounds = array<i64: 8, 36>}, {transform_indices = @transform_2, window_bounds = array<i64: 1, 8, 1>}, {transform_indices = @transform_3, window_bounds = array<i64: 1, 8, 1>}]} {
    %c0_i32 = arith.constant 0 : i32
    %0 = arith.cmpi eq, %arg1, %c0_i32 : i32
    %1 = arith.extui %0 : i1 to i32
    %c0_i32_0 = arith.constant 0 : i32
    %2 = arith.cmpi ne, %1, %c0_i32_0 : i32
    scf.if %2 {
      %cst_31 = arith.constant 0.000000e+00 : f32
      %51 = vector.broadcast %cst_31 : f32 to vector<1x8x1xf32>
      %c0_32 = arith.constant 0 : index
      %c0_33 = arith.constant 0 : index
      %c0_34 = arith.constant 0 : index
      %52 = vector.load %arg4[%c0_32, %c0_33, %c0_34] : memref<1x8x1xf32, #tpu.memory_space<vmem>>, vector<1x8x1xf32>
      tpu.vector_store %arg4[%c0_32, %c0_33, %c0_34], %51 {strides = array<i32>} : memref<1x8x1xf32, #tpu.memory_space<vmem>>, vector<1x8x1xf32>,
      %cst_35 = arith.constant 0.000000e+00 : f32
      %53 = vector.broadcast %cst_35 : f32 to vector<1x8x1xf32>
      %c0_36 = arith.constant 0 : index
      %c0_37 = arith.constant 0 : index
      %c0_38 = arith.constant 0 : index
      %54 = vector.load %arg5[%c0_36, %c0_37, %c0_38] : memref<1x8x1xf32, #tpu.memory_space<vmem>>, vector<1x8x1xf32>
      tpu.vector_store %arg5[%c0_36, %c0_37, %c0_38], %53 {strides = array<i32>} : memref<1x8x1xf32, #tpu.memory_space<vmem>>, vector<1x8x1xf32>,
    } else {
    }
    %c8_i32 = arith.constant 8 : i32
    %3 = arith.muli %arg1, %c8_i32 : i32
    %4 = tpu.assume_multiple %3, 8 : i32
    %c0 = arith.constant 0 : index
    %c0_1 = arith.constant 0 : index
    %5 = arith.index_cast %4 : i32 to index
    %c0_2 = arith.constant 0 : index
    %6 = vector.load %arg2[%c0, %c0_1, %5, %c0_2] : memref<1x4x10x10xbf16, #tpu.memory_space<vmem>>, vector<1x4x10x10xbf16>
    %7 = vector.shape_cast %6 : vector<1x4x10x10xbf16> to vector<4x10x10xbf16>
    %8 = vector.extract_strided_slice %7 {offsets = [0, 0, 0], sizes = [4, 8, 8], strides = [1, 1, 1]} : vector<4x10x10xbf16> to vector<4x8x8xbf16>
    %9 = vector.shape_cast %8 : vector<4x8x8xbf16> to vector<4x64xbf16>
    %c0_3 = arith.constant 0 : index
    %c0_4 = arith.constant 0 : index
    %10 = vector.load %arg6[%c0_3, %c0_4] : memref<36x64xbf16, #tpu.memory_space<vmem>>, vector<4x64xbf16>
    tpu.vector_store %arg6[%c0_3, %c0_4], %9 {strides = array<i32>} : memref<36x64xbf16, #tpu.memory_space<vmem>>, vector<4x64xbf16>,
    %11 = vector.extract_strided_slice %7 {offsets = [0, 0, 1], sizes = [4, 8, 8], strides = [1, 1, 1]} : vector<4x10x10xbf16> to vector<4x8x8xbf16>
    %12 = vector.shape_cast %11 : vector<4x8x8xbf16> to vector<4x64xbf16>
    %c4 = arith.constant 4 : index
    %c0_5 = arith.constant 0 : index
    %13 = vector.load %arg6[%c4, %c0_5] : memref<36x64xbf16, #tpu.memory_space<vmem>>, vector<4x64xbf16>
    tpu.vector_store %arg6[%c4, %c0_5], %12 {strides = array<i32>} : memref<36x64xbf16, #tpu.memory_space<vmem>>, vector<4x64xbf16>,
    %14 = vector.extract_strided_slice %7 {offsets = [0, 0, 2], sizes = [4, 8, 8], strides = [1, 1, 1]} : vector<4x10x10xbf16> to vector<4x8x8xbf16>
    %15 = vector.shape_cast %14 : vector<4x8x8xbf16> to vector<4x64xbf16>
    %c8 = arith.constant 8 : index
    %c0_6 = arith.constant 0 : index
    %16 = vector.load %arg6[%c8, %c0_6] : memref<36x64xbf16, #tpu.memory_space<vmem>>, vector<4x64xbf16>
    tpu.vector_store %arg6[%c8, %c0_6], %15 {strides = array<i32>} : memref<36x64xbf16, #tpu.memory_space<vmem>>, vector<4x64xbf16>,
    %17 = vector.extract_strided_slice %7 {offsets = [0, 1, 0], sizes = [4, 8, 8], strides = [1, 1, 1]} : vector<4x10x10xbf16> to vector<4x8x8xbf16>
    %18 = vector.shape_cast %17 : vector<4x8x8xbf16> to vector<4x64xbf16>
    %c12 = arith.constant 12 : index
    %c0_7 = arith.constant 0 : index
    %19 = vector.load %arg6[%c12, %c0_7] : memref<36x64xbf16, #tpu.memory_space<vmem>>, vector<4x64xbf16>
    tpu.vector_store %arg6[%c12, %c0_7], %18 {strides = array<i32>} : memref<36x64xbf16, #tpu.memory_space<vmem>>, vector<4x64xbf16>,
    %20 = vector.extract_strided_slice %7 {offsets = [0, 1, 1], sizes = [4, 8, 8], strides = [1, 1, 1]} : vector<4x10x10xbf16> to vector<4x8x8xbf16>
    %21 = vector.shape_cast %20 : vector<4x8x8xbf16> to vector<4x64xbf16>
    %c16 = arith.constant 16 : index
    %c0_8 = arith.constant 0 : index
    %22 = vector.load %arg6[%c16, %c0_8] : memref<36x64xbf16, #tpu.memory_space<vmem>>, vector<4x64xbf16>
    tpu.vector_store %arg6[%c16, %c0_8], %21 {strides = array<i32>} : memref<36x64xbf16, #tpu.memory_space<vmem>>, vector<4x64xbf16>,
    %23 = vector.extract_strided_slice %7 {offsets = [0, 1, 2], sizes = [4, 8, 8], strides = [1, 1, 1]} : vector<4x10x10xbf16> to vector<4x8x8xbf16>
    %24 = vector.shape_cast %23 : vector<4x8x8xbf16> to vector<4x64xbf16>
    %c20 = arith.constant 20 : index
    %c0_9 = arith.constant 0 : index
    %25 = vector.load %arg6[%c20, %c0_9] : memref<36x64xbf16, #tpu.memory_space<vmem>>, vector<4x64xbf16>
    tpu.vector_store %arg6[%c20, %c0_9], %24 {strides = array<i32>} : memref<36x64xbf16, #tpu.memory_space<vmem>>, vector<4x64xbf16>,
    %26 = vector.extract_strided_slice %7 {offsets = [0, 2, 0], sizes = [4, 8, 8], strides = [1, 1, 1]} : vector<4x10x10xbf16> to vector<4x8x8xbf16>
    %27 = vector.shape_cast %26 : vector<4x8x8xbf16> to vector<4x64xbf16>
    %c24 = arith.constant 24 : index
    %c0_10 = arith.constant 0 : index
    %28 = vector.load %arg6[%c24, %c0_10] : memref<36x64xbf16, #tpu.memory_space<vmem>>, vector<4x64xbf16>
    tpu.vector_store %arg6[%c24, %c0_10], %27 {strides = array<i32>} : memref<36x64xbf16, #tpu.memory_space<vmem>>, vector<4x64xbf16>,
    %29 = vector.extract_strided_slice %7 {offsets = [0, 2, 1], sizes = [4, 8, 8], strides = [1, 1, 1]} : vector<4x10x10xbf16> to vector<4x8x8xbf16>
    %30 = vector.shape_cast %29 : vector<4x8x8xbf16> to vector<4x64xbf16>
    %c28 = arith.constant 28 : index
    %c0_11 = arith.constant 0 : index
    %31 = vector.load %arg6[%c28, %c0_11] : memref<36x64xbf16, #tpu.memory_space<vmem>>, vector<4x64xbf16>
    tpu.vector_store %arg6[%c28, %c0_11], %30 {strides = array<i32>} : memref<36x64xbf16, #tpu.memory_space<vmem>>, vector<4x64xbf16>,
    %32 = vector.extract_strided_slice %7 {offsets = [0, 2, 2], sizes = [4, 8, 8], strides = [1, 1, 1]} : vector<4x10x10xbf16> to vector<4x8x8xbf16>
    %33 = vector.shape_cast %32 : vector<4x8x8xbf16> to vector<4x64xbf16>
    %c32 = arith.constant 32 : index
    %c0_12 = arith.constant 0 : index
    %34 = vector.load %arg6[%c32, %c0_12] : memref<36x64xbf16, #tpu.memory_space<vmem>>, vector<4x64xbf16>
    tpu.vector_store %arg6[%c32, %c0_12], %33 {strides = array<i32>} : memref<36x64xbf16, #tpu.memory_space<vmem>>, vector<4x64xbf16>,
    %c0_13 = arith.constant 0 : index
    %c0_14 = arith.constant 0 : index
    %35 = vector.load %arg3[%c0_13, %c0_14] : memref<8x36xbf16, #tpu.memory_space<vmem>>, vector<8x36xbf16>
    %c0_15 = arith.constant 0 : index
    %c0_16 = arith.constant 0 : index
    %36 = vector.load %arg6[%c0_15, %c0_16] : memref<36x64xbf16, #tpu.memory_space<vmem>>, vector<36x64xbf16>
    %cst = arith.constant dense<0.000000e+00> : vector<8x64xf32>
    %37 = tpu.matmul %35, %36, %cst {dimension_numbers = #tpu.dot_dimension_numbers<[1], [0], [0], [1], [0, 0, 1, 1], [], []>} : vector<8x36xbf16>, vector<36x64xbf16>, vector<8x64xf32> -> vector<8x64xf32>
    %c0_17 = arith.constant 0 : index
    %c0_18 = arith.constant 0 : index
    %c0_19 = arith.constant 0 : index
    %38 = vector.load %arg4[%c0_17, %c0_18, %c0_19] : memref<1x8x1xf32, #tpu.memory_space<vmem>>, vector<1x8x1xf32>
    %cst_20 = arith.constant dense<0.000000e+00> : vector<8xf32>
    %39 = vector.multi_reduction <add>, %37, %cst_20 [1] : vector<8x64xf32> to vector<8xf32>
    %40 = vector.shape_cast %39 : vector<8xf32> to vector<8x1xf32>
    %41 = vector.shape_cast %40 : vector<8x1xf32> to vector<1x8x1xf32>
    %42 = arith.addf %38, %41 : vector<1x8x1xf32>
    %c0_21 = arith.constant 0 : index
    %c0_22 = arith.constant 0 : index
    %c0_23 = arith.constant 0 : index
    %43 = vector.load %arg4[%c0_21, %c0_22, %c0_23] : memref<1x8x1xf32, #tpu.memory_space<vmem>>, vector<1x8x1xf32>
    tpu.vector_store %arg4[%c0_21, %c0_22, %c0_23], %42 {strides = array<i32>} : memref<1x8x1xf32, #tpu.memory_space<vmem>>, vector<1x8x1xf32>,
    %c0_24 = arith.constant 0 : index
    %c0_25 = arith.constant 0 : index
    %c0_26 = arith.constant 0 : index
    %44 = vector.load %arg5[%c0_24, %c0_25, %c0_26] : memref<1x8x1xf32, #tpu.memory_space<vmem>>, vector<1x8x1xf32>
    %45 = arith.mulf %37, %37 : vector<8x64xf32>
    %cst_27 = arith.constant dense<0.000000e+00> : vector<8xf32>
    %46 = vector.multi_reduction <add>, %45, %cst_27 [1] : vector<8x64xf32> to vector<8xf32>
    %47 = vector.shape_cast %46 : vector<8xf32> to vector<8x1xf32>
    %48 = vector.shape_cast %47 : vector<8x1xf32> to vector<1x8x1xf32>
    %49 = arith.addf %44, %48 : vector<1x8x1xf32>
    %c0_28 = arith.constant 0 : index
    %c0_29 = arith.constant 0 : index
    %c0_30 = arith.constant 0 : index
    %50 = vector.load %arg5[%c0_28, %c0_29, %c0_30] : memref<1x8x1xf32, #tpu.memory_space<vmem>>, vector<1x8x1xf32>
    tpu.vector_store %arg5[%c0_28, %c0_29, %c0_30], %49 {strides = array<i32>} : memref<1x8x1xf32, #tpu.memory_space<vmem>>, vector<1x8x1xf32>,
    return
  }
  func.func @transform_0(%arg0: i32, %arg1: i32) -> (i32, i32, i32, i32) {
    %c0_i32 = arith.constant 0 : i32
    %c0_i32_0 = arith.constant 0 : i32
    %c0_i32_1 = arith.constant 0 : i32
    %c0_i32_2 = arith.constant 0 : i32
    return %arg0, %c0_i32, %c0_i32_0, %c0_i32_1 : i32, i32, i32, i32
  }
  func.func @transform_1(%arg0: i32, %arg1: i32) -> (i32, i32) {
    %c0_i32 = arith.constant 0 : i32
    %c0_i32_0 = arith.constant 0 : i32
    %c0_i32_1 = arith.constant 0 : i32
    return %c0_i32, %c0_i32_0 : i32, i32
  }
  func.func @transform_2(%arg0: i32, %arg1: i32) -> (i32, i32, i32) {
    %c0_i32 = arith.constant 0 : i32
    %c0_i32_0 = arith.constant 0 : i32
    %c0_i32_1 = arith.constant 0 : i32
    return %arg0, %c0_i32, %c0_i32_0 : i32, i32, i32
  }
  func.func @transform_3(%arg0: i32, %arg1: i32) -> (i32, i32, i32) {
    %c0_i32 = arith.constant 0 : i32
    %c0_i32_0 = arith.constant 0 : i32
    %c0_i32_1 = arith.constant 0 : i32
    return %arg0, %c0_i32, %c0_i32_0 : i32, i32, i32
  }
}

module attributes {stable_mosaic.version = 11 : i64} {
  func.func @_conv_norm_kernel(%arg0: i32, %arg1: i32, %arg2: memref<1x4x10x10xbf16, #tpu.memory_space<vmem>>, %arg3: memref<8x36xbf16, #tpu.memory_space<vmem>>, %arg4: memref<8x1xf32, #tpu.memory_space<vmem>>, %arg5: memref<8x1xf32, #tpu.memory_space<vmem>>, %arg6: memref<1x8x64xf32, #tpu.memory_space<vmem>>, %arg7: memref<36x64xbf16, #tpu.memory_space<vmem>>) attributes {dimension_semantics = [#tpu.dimension_semantics<parallel>, #tpu.dimension_semantics<parallel>], iteration_bounds = array<i64: 2, 1>, scalar_prefetch = 0 : i64, scratch_operands = 1 : i64, tpu.core_type = #tpu.core_type<tc>, window_params = [{transform_indices = @transform_0, window_bounds = array<i64: 1, 4, 10, 10>}, {pipeline_mode = #tpu.pipeline_mode<synchronous>, transform_indices = @transform_1, window_bounds = array<i64: 8, 36>}, {pipeline_mode = #tpu.pipeline_mode<synchronous>, transform_indices = @transform_2, window_bounds = array<i64: 8, 1>}, {pipeline_mode = #tpu.pipeline_mode<synchronous>, transform_indices = @transform_3, window_bounds = array<i64: 8, 1>}, {transform_indices = @transform_4, window_bounds = array<i64: 1, 8, 64>}]} {
    %c8_i32 = arith.constant 8 : i32
    %0 = arith.muli %arg1, %c8_i32 : i32
    %1 = tpu.assume_multiple %0, 8 : i32
    %c0 = arith.constant 0 : index
    %c0_0 = arith.constant 0 : index
    %2 = arith.index_cast %1 : i32 to index
    %c0_1 = arith.constant 0 : index
    %3 = vector.load %arg2[%c0, %c0_0, %2, %c0_1] : memref<1x4x10x10xbf16, #tpu.memory_space<vmem>>, vector<1x4x10x10xbf16>
    %4 = vector.shape_cast %3 : vector<1x4x10x10xbf16> to vector<4x10x10xbf16>
    %5 = vector.extract_strided_slice %4 {offsets = [0, 0, 0], sizes = [4, 8, 8], strides = [1, 1, 1]} : vector<4x10x10xbf16> to vector<4x8x8xbf16>
    %6 = vector.shape_cast %5 : vector<4x8x8xbf16> to vector<4x64xbf16>
    %c0_2 = arith.constant 0 : index
    %c0_3 = arith.constant 0 : index
    %7 = vector.load %arg7[%c0_2, %c0_3] : memref<36x64xbf16, #tpu.memory_space<vmem>>, vector<4x64xbf16>
    tpu.vector_store %arg7[%c0_2, %c0_3], %6 {strides = array<i32>} : memref<36x64xbf16, #tpu.memory_space<vmem>>, vector<4x64xbf16>,
    %8 = vector.extract_strided_slice %4 {offsets = [0, 0, 1], sizes = [4, 8, 8], strides = [1, 1, 1]} : vector<4x10x10xbf16> to vector<4x8x8xbf16>
    %9 = vector.shape_cast %8 : vector<4x8x8xbf16> to vector<4x64xbf16>
    %c4 = arith.constant 4 : index
    %c0_4 = arith.constant 0 : index
    %10 = vector.load %arg7[%c4, %c0_4] : memref<36x64xbf16, #tpu.memory_space<vmem>>, vector<4x64xbf16>
    tpu.vector_store %arg7[%c4, %c0_4], %9 {strides = array<i32>} : memref<36x64xbf16, #tpu.memory_space<vmem>>, vector<4x64xbf16>,
    %11 = vector.extract_strided_slice %4 {offsets = [0, 0, 2], sizes = [4, 8, 8], strides = [1, 1, 1]} : vector<4x10x10xbf16> to vector<4x8x8xbf16>
    %12 = vector.shape_cast %11 : vector<4x8x8xbf16> to vector<4x64xbf16>
    %c8 = arith.constant 8 : index
    %c0_5 = arith.constant 0 : index
    %13 = vector.load %arg7[%c8, %c0_5] : memref<36x64xbf16, #tpu.memory_space<vmem>>, vector<4x64xbf16>
    tpu.vector_store %arg7[%c8, %c0_5], %12 {strides = array<i32>} : memref<36x64xbf16, #tpu.memory_space<vmem>>, vector<4x64xbf16>,
    %14 = vector.extract_strided_slice %4 {offsets = [0, 1, 0], sizes = [4, 8, 8], strides = [1, 1, 1]} : vector<4x10x10xbf16> to vector<4x8x8xbf16>
    %15 = vector.shape_cast %14 : vector<4x8x8xbf16> to vector<4x64xbf16>
    %c12 = arith.constant 12 : index
    %c0_6 = arith.constant 0 : index
    %16 = vector.load %arg7[%c12, %c0_6] : memref<36x64xbf16, #tpu.memory_space<vmem>>, vector<4x64xbf16>
    tpu.vector_store %arg7[%c12, %c0_6], %15 {strides = array<i32>} : memref<36x64xbf16, #tpu.memory_space<vmem>>, vector<4x64xbf16>,
    %17 = vector.extract_strided_slice %4 {offsets = [0, 1, 1], sizes = [4, 8, 8], strides = [1, 1, 1]} : vector<4x10x10xbf16> to vector<4x8x8xbf16>
    %18 = vector.shape_cast %17 : vector<4x8x8xbf16> to vector<4x64xbf16>
    %c16 = arith.constant 16 : index
    %c0_7 = arith.constant 0 : index
    %19 = vector.load %arg7[%c16, %c0_7] : memref<36x64xbf16, #tpu.memory_space<vmem>>, vector<4x64xbf16>
    tpu.vector_store %arg7[%c16, %c0_7], %18 {strides = array<i32>} : memref<36x64xbf16, #tpu.memory_space<vmem>>, vector<4x64xbf16>,
    %20 = vector.extract_strided_slice %4 {offsets = [0, 1, 2], sizes = [4, 8, 8], strides = [1, 1, 1]} : vector<4x10x10xbf16> to vector<4x8x8xbf16>
    %21 = vector.shape_cast %20 : vector<4x8x8xbf16> to vector<4x64xbf16>
    %c20 = arith.constant 20 : index
    %c0_8 = arith.constant 0 : index
    %22 = vector.load %arg7[%c20, %c0_8] : memref<36x64xbf16, #tpu.memory_space<vmem>>, vector<4x64xbf16>
    tpu.vector_store %arg7[%c20, %c0_8], %21 {strides = array<i32>} : memref<36x64xbf16, #tpu.memory_space<vmem>>, vector<4x64xbf16>,
    %23 = vector.extract_strided_slice %4 {offsets = [0, 2, 0], sizes = [4, 8, 8], strides = [1, 1, 1]} : vector<4x10x10xbf16> to vector<4x8x8xbf16>
    %24 = vector.shape_cast %23 : vector<4x8x8xbf16> to vector<4x64xbf16>
    %c24 = arith.constant 24 : index
    %c0_9 = arith.constant 0 : index
    %25 = vector.load %arg7[%c24, %c0_9] : memref<36x64xbf16, #tpu.memory_space<vmem>>, vector<4x64xbf16>
    tpu.vector_store %arg7[%c24, %c0_9], %24 {strides = array<i32>} : memref<36x64xbf16, #tpu.memory_space<vmem>>, vector<4x64xbf16>,
    %26 = vector.extract_strided_slice %4 {offsets = [0, 2, 1], sizes = [4, 8, 8], strides = [1, 1, 1]} : vector<4x10x10xbf16> to vector<4x8x8xbf16>
    %27 = vector.shape_cast %26 : vector<4x8x8xbf16> to vector<4x64xbf16>
    %c28 = arith.constant 28 : index
    %c0_10 = arith.constant 0 : index
    %28 = vector.load %arg7[%c28, %c0_10] : memref<36x64xbf16, #tpu.memory_space<vmem>>, vector<4x64xbf16>
    tpu.vector_store %arg7[%c28, %c0_10], %27 {strides = array<i32>} : memref<36x64xbf16, #tpu.memory_space<vmem>>, vector<4x64xbf16>,
    %29 = vector.extract_strided_slice %4 {offsets = [0, 2, 2], sizes = [4, 8, 8], strides = [1, 1, 1]} : vector<4x10x10xbf16> to vector<4x8x8xbf16>
    %30 = vector.shape_cast %29 : vector<4x8x8xbf16> to vector<4x64xbf16>
    %c32 = arith.constant 32 : index
    %c0_11 = arith.constant 0 : index
    %31 = vector.load %arg7[%c32, %c0_11] : memref<36x64xbf16, #tpu.memory_space<vmem>>, vector<4x64xbf16>
    tpu.vector_store %arg7[%c32, %c0_11], %30 {strides = array<i32>} : memref<36x64xbf16, #tpu.memory_space<vmem>>, vector<4x64xbf16>,
    %c0_12 = arith.constant 0 : index
    %c0_13 = arith.constant 0 : index
    %32 = vector.load %arg3[%c0_12, %c0_13] : memref<8x36xbf16, #tpu.memory_space<vmem>>, vector<8x36xbf16>
    %c0_14 = arith.constant 0 : index
    %c0_15 = arith.constant 0 : index
    %33 = vector.load %arg7[%c0_14, %c0_15] : memref<36x64xbf16, #tpu.memory_space<vmem>>, vector<36x64xbf16>
    %cst = arith.constant dense<0.000000e+00> : vector<8x64xf32>
    %34 = tpu.matmul %32, %33, %cst {dimension_numbers = #tpu.dot_dimension_numbers<[1], [0], [0], [1], [0, 0, 1, 1], [], []>} : vector<8x36xbf16>, vector<36x64xbf16>, vector<8x64xf32> -> vector<8x64xf32>
    %c0_16 = arith.constant 0 : index
    %c0_17 = arith.constant 0 : index
    %35 = vector.load %arg4[%c0_16, %c0_17] : memref<8x1xf32, #tpu.memory_space<vmem>>, vector<8x1xf32>
    %36 = vector.broadcast %35 : vector<8x1xf32> to vector<8x64xf32>
    %37 = arith.mulf %34, %36 : vector<8x64xf32>
    %c0_18 = arith.constant 0 : index
    %c0_19 = arith.constant 0 : index
    %38 = vector.load %arg5[%c0_18, %c0_19] : memref<8x1xf32, #tpu.memory_space<vmem>>, vector<8x1xf32>
    %39 = vector.broadcast %38 : vector<8x1xf32> to vector<8x64xf32>
    %40 = arith.addf %37, %39 : vector<8x64xf32>
    %41 = vector.shape_cast %40 : vector<8x64xf32> to vector<1x8x64xf32>
    %c0_20 = arith.constant 0 : index
    %c0_21 = arith.constant 0 : index
    %c0_22 = arith.constant 0 : index
    %42 = vector.load %arg6[%c0_20, %c0_21, %c0_22] : memref<1x8x64xf32, #tpu.memory_space<vmem>>, vector<1x8x64xf32>
    tpu.vector_store %arg6[%c0_20, %c0_21, %c0_22], %41 {strides = array<i32>} : memref<1x8x64xf32, #tpu.memory_space<vmem>>, vector<1x8x64xf32>,
    return
  }
  func.func @transform_0(%arg0: i32, %arg1: i32) -> (i32, i32, i32, i32) {
    %c0_i32 = arith.constant 0 : i32
    %c0_i32_0 = arith.constant 0 : i32
    %c0_i32_1 = arith.constant 0 : i32
    %c0_i32_2 = arith.constant 0 : i32
    return %arg0, %c0_i32, %c0_i32_0, %c0_i32_1 : i32, i32, i32, i32
  }
  func.func @transform_1(%arg0: i32, %arg1: i32) -> (i32, i32) {
    %c0_i32 = arith.constant 0 : i32
    %c0_i32_0 = arith.constant 0 : i32
    %c0_i32_1 = arith.constant 0 : i32
    return %c0_i32, %c0_i32_0 : i32, i32
  }
  func.func @transform_2(%arg0: i32, %arg1: i32) -> (i32, i32) {
    %c0_i32 = arith.constant 0 : i32
    %c0_i32_0 = arith.constant 0 : i32
    %c0_i32_1 = arith.constant 0 : i32
    return %c0_i32, %c0_i32_0 : i32, i32
  }
  func.func @transform_3(%arg0: i32, %arg1: i32) -> (i32, i32) {
    %c0_i32 = arith.constant 0 : i32
    %c0_i32_0 = arith.constant 0 : i32
    %c0_i32_1 = arith.constant 0 : i32
    return %c0_i32, %c0_i32_0 : i32, i32
  }
  func.func @transform_4(%arg0: i32, %arg1: i32) -> (i32, i32, i32) {
    %c0_i32 = arith.constant 0 : i32
    %c0_i32_0 = arith.constant 0 : i32
    return %arg0, %c0_i32, %arg1 : i32, i32, i32
  }
}

module attributes {stable_mosaic.version = 11 : i64} {
  func.func @_conv_stats_kernel(%arg0: i32, %arg1: i32, %arg2: memref<1x4x18x18xbf16, #tpu.memory_space<vmem>>, %arg3: memref<8x36xbf16, #tpu.memory_space<vmem>>, %arg4: memref<1x8x1xf32, #tpu.memory_space<vmem>>, %arg5: memref<1x8x1xf32, #tpu.memory_space<vmem>>, %arg6: memref<36x256xbf16, #tpu.memory_space<vmem>>) attributes {dimension_semantics = [#tpu.dimension_semantics<parallel>, #tpu.dimension_semantics<arbitrary>], iteration_bounds = array<i64: 2, 1>, scalar_prefetch = 0 : i64, scratch_operands = 1 : i64, tpu.core_type = #tpu.core_type<tc>, window_params = [{transform_indices = @transform_0, window_bounds = array<i64: 1, 4, 18, 18>}, {pipeline_mode = #tpu.pipeline_mode<synchronous>, transform_indices = @transform_1, window_bounds = array<i64: 8, 36>}, {transform_indices = @transform_2, window_bounds = array<i64: 1, 8, 1>}, {transform_indices = @transform_3, window_bounds = array<i64: 1, 8, 1>}]} {
    %c0_i32 = arith.constant 0 : i32
    %0 = arith.cmpi eq, %arg1, %c0_i32 : i32
    %1 = arith.extui %0 : i1 to i32
    %c0_i32_0 = arith.constant 0 : i32
    %2 = arith.cmpi ne, %1, %c0_i32_0 : i32
    scf.if %2 {
      %cst_31 = arith.constant 0.000000e+00 : f32
      %51 = vector.broadcast %cst_31 : f32 to vector<1x8x1xf32>
      %c0_32 = arith.constant 0 : index
      %c0_33 = arith.constant 0 : index
      %c0_34 = arith.constant 0 : index
      %52 = vector.load %arg4[%c0_32, %c0_33, %c0_34] : memref<1x8x1xf32, #tpu.memory_space<vmem>>, vector<1x8x1xf32>
      tpu.vector_store %arg4[%c0_32, %c0_33, %c0_34], %51 {strides = array<i32>} : memref<1x8x1xf32, #tpu.memory_space<vmem>>, vector<1x8x1xf32>,
      %cst_35 = arith.constant 0.000000e+00 : f32
      %53 = vector.broadcast %cst_35 : f32 to vector<1x8x1xf32>
      %c0_36 = arith.constant 0 : index
      %c0_37 = arith.constant 0 : index
      %c0_38 = arith.constant 0 : index
      %54 = vector.load %arg5[%c0_36, %c0_37, %c0_38] : memref<1x8x1xf32, #tpu.memory_space<vmem>>, vector<1x8x1xf32>
      tpu.vector_store %arg5[%c0_36, %c0_37, %c0_38], %53 {strides = array<i32>} : memref<1x8x1xf32, #tpu.memory_space<vmem>>, vector<1x8x1xf32>,
    } else {
    }
    %c16_i32 = arith.constant 16 : i32
    %3 = arith.muli %arg1, %c16_i32 : i32
    %4 = tpu.assume_multiple %3, 8 : i32
    %c0 = arith.constant 0 : index
    %c0_1 = arith.constant 0 : index
    %5 = arith.index_cast %4 : i32 to index
    %c0_2 = arith.constant 0 : index
    %6 = vector.load %arg2[%c0, %c0_1, %5, %c0_2] : memref<1x4x18x18xbf16, #tpu.memory_space<vmem>>, vector<1x4x18x18xbf16>
    %7 = vector.shape_cast %6 : vector<1x4x18x18xbf16> to vector<4x18x18xbf16>
    %8 = vector.extract_strided_slice %7 {offsets = [0, 0, 0], sizes = [4, 16, 16], strides = [1, 1, 1]} : vector<4x18x18xbf16> to vector<4x16x16xbf16>
    %9 = vector.shape_cast %8 : vector<4x16x16xbf16> to vector<4x256xbf16>
    %c0_3 = arith.constant 0 : index
    %c0_4 = arith.constant 0 : index
    %10 = vector.load %arg6[%c0_3, %c0_4] : memref<36x256xbf16, #tpu.memory_space<vmem>>, vector<4x256xbf16>
    tpu.vector_store %arg6[%c0_3, %c0_4], %9 {strides = array<i32>} : memref<36x256xbf16, #tpu.memory_space<vmem>>, vector<4x256xbf16>,
    %11 = vector.extract_strided_slice %7 {offsets = [0, 0, 1], sizes = [4, 16, 16], strides = [1, 1, 1]} : vector<4x18x18xbf16> to vector<4x16x16xbf16>
    %12 = vector.shape_cast %11 : vector<4x16x16xbf16> to vector<4x256xbf16>
    %c4 = arith.constant 4 : index
    %c0_5 = arith.constant 0 : index
    %13 = vector.load %arg6[%c4, %c0_5] : memref<36x256xbf16, #tpu.memory_space<vmem>>, vector<4x256xbf16>
    tpu.vector_store %arg6[%c4, %c0_5], %12 {strides = array<i32>} : memref<36x256xbf16, #tpu.memory_space<vmem>>, vector<4x256xbf16>,
    %14 = vector.extract_strided_slice %7 {offsets = [0, 0, 2], sizes = [4, 16, 16], strides = [1, 1, 1]} : vector<4x18x18xbf16> to vector<4x16x16xbf16>
    %15 = vector.shape_cast %14 : vector<4x16x16xbf16> to vector<4x256xbf16>
    %c8 = arith.constant 8 : index
    %c0_6 = arith.constant 0 : index
    %16 = vector.load %arg6[%c8, %c0_6] : memref<36x256xbf16, #tpu.memory_space<vmem>>, vector<4x256xbf16>
    tpu.vector_store %arg6[%c8, %c0_6], %15 {strides = array<i32>} : memref<36x256xbf16, #tpu.memory_space<vmem>>, vector<4x256xbf16>,
    %17 = vector.extract_strided_slice %7 {offsets = [0, 1, 0], sizes = [4, 16, 16], strides = [1, 1, 1]} : vector<4x18x18xbf16> to vector<4x16x16xbf16>
    %18 = vector.shape_cast %17 : vector<4x16x16xbf16> to vector<4x256xbf16>
    %c12 = arith.constant 12 : index
    %c0_7 = arith.constant 0 : index
    %19 = vector.load %arg6[%c12, %c0_7] : memref<36x256xbf16, #tpu.memory_space<vmem>>, vector<4x256xbf16>
    tpu.vector_store %arg6[%c12, %c0_7], %18 {strides = array<i32>} : memref<36x256xbf16, #tpu.memory_space<vmem>>, vector<4x256xbf16>,
    %20 = vector.extract_strided_slice %7 {offsets = [0, 1, 1], sizes = [4, 16, 16], strides = [1, 1, 1]} : vector<4x18x18xbf16> to vector<4x16x16xbf16>
    %21 = vector.shape_cast %20 : vector<4x16x16xbf16> to vector<4x256xbf16>
    %c16 = arith.constant 16 : index
    %c0_8 = arith.constant 0 : index
    %22 = vector.load %arg6[%c16, %c0_8] : memref<36x256xbf16, #tpu.memory_space<vmem>>, vector<4x256xbf16>
    tpu.vector_store %arg6[%c16, %c0_8], %21 {strides = array<i32>} : memref<36x256xbf16, #tpu.memory_space<vmem>>, vector<4x256xbf16>,
    %23 = vector.extract_strided_slice %7 {offsets = [0, 1, 2], sizes = [4, 16, 16], strides = [1, 1, 1]} : vector<4x18x18xbf16> to vector<4x16x16xbf16>
    %24 = vector.shape_cast %23 : vector<4x16x16xbf16> to vector<4x256xbf16>
    %c20 = arith.constant 20 : index
    %c0_9 = arith.constant 0 : index
    %25 = vector.load %arg6[%c20, %c0_9] : memref<36x256xbf16, #tpu.memory_space<vmem>>, vector<4x256xbf16>
    tpu.vector_store %arg6[%c20, %c0_9], %24 {strides = array<i32>} : memref<36x256xbf16, #tpu.memory_space<vmem>>, vector<4x256xbf16>,
    %26 = vector.extract_strided_slice %7 {offsets = [0, 2, 0], sizes = [4, 16, 16], strides = [1, 1, 1]} : vector<4x18x18xbf16> to vector<4x16x16xbf16>
    %27 = vector.shape_cast %26 : vector<4x16x16xbf16> to vector<4x256xbf16>
    %c24 = arith.constant 24 : index
    %c0_10 = arith.constant 0 : index
    %28 = vector.load %arg6[%c24, %c0_10] : memref<36x256xbf16, #tpu.memory_space<vmem>>, vector<4x256xbf16>
    tpu.vector_store %arg6[%c24, %c0_10], %27 {strides = array<i32>} : memref<36x256xbf16, #tpu.memory_space<vmem>>, vector<4x256xbf16>,
    %29 = vector.extract_strided_slice %7 {offsets = [0, 2, 1], sizes = [4, 16, 16], strides = [1, 1, 1]} : vector<4x18x18xbf16> to vector<4x16x16xbf16>
    %30 = vector.shape_cast %29 : vector<4x16x16xbf16> to vector<4x256xbf16>
    %c28 = arith.constant 28 : index
    %c0_11 = arith.constant 0 : index
    %31 = vector.load %arg6[%c28, %c0_11] : memref<36x256xbf16, #tpu.memory_space<vmem>>, vector<4x256xbf16>
    tpu.vector_store %arg6[%c28, %c0_11], %30 {strides = array<i32>} : memref<36x256xbf16, #tpu.memory_space<vmem>>, vector<4x256xbf16>,
    %32 = vector.extract_strided_slice %7 {offsets = [0, 2, 2], sizes = [4, 16, 16], strides = [1, 1, 1]} : vector<4x18x18xbf16> to vector<4x16x16xbf16>
    %33 = vector.shape_cast %32 : vector<4x16x16xbf16> to vector<4x256xbf16>
    %c32 = arith.constant 32 : index
    %c0_12 = arith.constant 0 : index
    %34 = vector.load %arg6[%c32, %c0_12] : memref<36x256xbf16, #tpu.memory_space<vmem>>, vector<4x256xbf16>
    tpu.vector_store %arg6[%c32, %c0_12], %33 {strides = array<i32>} : memref<36x256xbf16, #tpu.memory_space<vmem>>, vector<4x256xbf16>,
    %c0_13 = arith.constant 0 : index
    %c0_14 = arith.constant 0 : index
    %35 = vector.load %arg3[%c0_13, %c0_14] : memref<8x36xbf16, #tpu.memory_space<vmem>>, vector<8x36xbf16>
    %c0_15 = arith.constant 0 : index
    %c0_16 = arith.constant 0 : index
    %36 = vector.load %arg6[%c0_15, %c0_16] : memref<36x256xbf16, #tpu.memory_space<vmem>>, vector<36x256xbf16>
    %cst = arith.constant dense<0.000000e+00> : vector<8x256xf32>
    %37 = tpu.matmul %35, %36, %cst {dimension_numbers = #tpu.dot_dimension_numbers<[1], [0], [0], [1], [0, 0, 1, 1], [], []>} : vector<8x36xbf16>, vector<36x256xbf16>, vector<8x256xf32> -> vector<8x256xf32>
    %c0_17 = arith.constant 0 : index
    %c0_18 = arith.constant 0 : index
    %c0_19 = arith.constant 0 : index
    %38 = vector.load %arg4[%c0_17, %c0_18, %c0_19] : memref<1x8x1xf32, #tpu.memory_space<vmem>>, vector<1x8x1xf32>
    %cst_20 = arith.constant dense<0.000000e+00> : vector<8xf32>
    %39 = vector.multi_reduction <add>, %37, %cst_20 [1] : vector<8x256xf32> to vector<8xf32>
    %40 = vector.shape_cast %39 : vector<8xf32> to vector<8x1xf32>
    %41 = vector.shape_cast %40 : vector<8x1xf32> to vector<1x8x1xf32>
    %42 = arith.addf %38, %41 : vector<1x8x1xf32>
    %c0_21 = arith.constant 0 : index
    %c0_22 = arith.constant 0 : index
    %c0_23 = arith.constant 0 : index
    %43 = vector.load %arg4[%c0_21, %c0_22, %c0_23] : memref<1x8x1xf32, #tpu.memory_space<vmem>>, vector<1x8x1xf32>
    tpu.vector_store %arg4[%c0_21, %c0_22, %c0_23], %42 {strides = array<i32>} : memref<1x8x1xf32, #tpu.memory_space<vmem>>, vector<1x8x1xf32>,
    %c0_24 = arith.constant 0 : index
    %c0_25 = arith.constant 0 : index
    %c0_26 = arith.constant 0 : index
    %44 = vector.load %arg5[%c0_24, %c0_25, %c0_26] : memref<1x8x1xf32, #tpu.memory_space<vmem>>, vector<1x8x1xf32>
    %45 = arith.mulf %37, %37 : vector<8x256xf32>
    %cst_27 = arith.constant dense<0.000000e+00> : vector<8xf32>
    %46 = vector.multi_reduction <add>, %45, %cst_27 [1] : vector<8x256xf32> to vector<8xf32>
    %47 = vector.shape_cast %46 : vector<8xf32> to vector<8x1xf32>
    %48 = vector.shape_cast %47 : vector<8x1xf32> to vector<1x8x1xf32>
    %49 = arith.addf %44, %48 : vector<1x8x1xf32>
    %c0_28 = arith.constant 0 : index
    %c0_29 = arith.constant 0 : index
    %c0_30 = arith.constant 0 : index
    %50 = vector.load %arg5[%c0_28, %c0_29, %c0_30] : memref<1x8x1xf32, #tpu.memory_space<vmem>>, vector<1x8x1xf32>
    tpu.vector_store %arg5[%c0_28, %c0_29, %c0_30], %49 {strides = array<i32>} : memref<1x8x1xf32, #tpu.memory_space<vmem>>, vector<1x8x1xf32>,
    return
  }
  func.func @transform_0(%arg0: i32, %arg1: i32) -> (i32, i32, i32, i32) {
    %c0_i32 = arith.constant 0 : i32
    %c0_i32_0 = arith.constant 0 : i32
    %c0_i32_1 = arith.constant 0 : i32
    %c0_i32_2 = arith.constant 0 : i32
    return %arg0, %c0_i32, %c0_i32_0, %c0_i32_1 : i32, i32, i32, i32
  }
  func.func @transform_1(%arg0: i32, %arg1: i32) -> (i32, i32) {
    %c0_i32 = arith.constant 0 : i32
    %c0_i32_0 = arith.constant 0 : i32
    %c0_i32_1 = arith.constant 0 : i32
    return %c0_i32, %c0_i32_0 : i32, i32
  }
  func.func @transform_2(%arg0: i32, %arg1: i32) -> (i32, i32, i32) {
    %c0_i32 = arith.constant 0 : i32
    %c0_i32_0 = arith.constant 0 : i32
    %c0_i32_1 = arith.constant 0 : i32
    return %arg0, %c0_i32, %c0_i32_0 : i32, i32, i32
  }
  func.func @transform_3(%arg0: i32, %arg1: i32) -> (i32, i32, i32) {
    %c0_i32 = arith.constant 0 : i32
    %c0_i32_0 = arith.constant 0 : i32
    %c0_i32_1 = arith.constant 0 : i32
    return %arg0, %c0_i32, %c0_i32_0 : i32, i32, i32
  }
}

module attributes {stable_mosaic.version = 11 : i64} {
  func.func @_conv_norm_kernel(%arg0: i32, %arg1: i32, %arg2: memref<1x4x18x18xbf16, #tpu.memory_space<vmem>>, %arg3: memref<8x36xbf16, #tpu.memory_space<vmem>>, %arg4: memref<8x1xf32, #tpu.memory_space<vmem>>, %arg5: memref<8x1xf32, #tpu.memory_space<vmem>>, %arg6: memref<1x8x256xf32, #tpu.memory_space<vmem>>, %arg7: memref<36x256xbf16, #tpu.memory_space<vmem>>) attributes {dimension_semantics = [#tpu.dimension_semantics<parallel>, #tpu.dimension_semantics<parallel>], iteration_bounds = array<i64: 2, 1>, scalar_prefetch = 0 : i64, scratch_operands = 1 : i64, tpu.core_type = #tpu.core_type<tc>, window_params = [{transform_indices = @transform_0, window_bounds = array<i64: 1, 4, 18, 18>}, {pipeline_mode = #tpu.pipeline_mode<synchronous>, transform_indices = @transform_1, window_bounds = array<i64: 8, 36>}, {pipeline_mode = #tpu.pipeline_mode<synchronous>, transform_indices = @transform_2, window_bounds = array<i64: 8, 1>}, {pipeline_mode = #tpu.pipeline_mode<synchronous>, transform_indices = @transform_3, window_bounds = array<i64: 8, 1>}, {transform_indices = @transform_4, window_bounds = array<i64: 1, 8, 256>}]} {
    %c16_i32 = arith.constant 16 : i32
    %0 = arith.muli %arg1, %c16_i32 : i32
    %1 = tpu.assume_multiple %0, 8 : i32
    %c0 = arith.constant 0 : index
    %c0_0 = arith.constant 0 : index
    %2 = arith.index_cast %1 : i32 to index
    %c0_1 = arith.constant 0 : index
    %3 = vector.load %arg2[%c0, %c0_0, %2, %c0_1] : memref<1x4x18x18xbf16, #tpu.memory_space<vmem>>, vector<1x4x18x18xbf16>
    %4 = vector.shape_cast %3 : vector<1x4x18x18xbf16> to vector<4x18x18xbf16>
    %5 = vector.extract_strided_slice %4 {offsets = [0, 0, 0], sizes = [4, 16, 16], strides = [1, 1, 1]} : vector<4x18x18xbf16> to vector<4x16x16xbf16>
    %6 = vector.shape_cast %5 : vector<4x16x16xbf16> to vector<4x256xbf16>
    %c0_2 = arith.constant 0 : index
    %c0_3 = arith.constant 0 : index
    %7 = vector.load %arg7[%c0_2, %c0_3] : memref<36x256xbf16, #tpu.memory_space<vmem>>, vector<4x256xbf16>
    tpu.vector_store %arg7[%c0_2, %c0_3], %6 {strides = array<i32>} : memref<36x256xbf16, #tpu.memory_space<vmem>>, vector<4x256xbf16>,
    %8 = vector.extract_strided_slice %4 {offsets = [0, 0, 1], sizes = [4, 16, 16], strides = [1, 1, 1]} : vector<4x18x18xbf16> to vector<4x16x16xbf16>
    %9 = vector.shape_cast %8 : vector<4x16x16xbf16> to vector<4x256xbf16>
    %c4 = arith.constant 4 : index
    %c0_4 = arith.constant 0 : index
    %10 = vector.load %arg7[%c4, %c0_4] : memref<36x256xbf16, #tpu.memory_space<vmem>>, vector<4x256xbf16>
    tpu.vector_store %arg7[%c4, %c0_4], %9 {strides = array<i32>} : memref<36x256xbf16, #tpu.memory_space<vmem>>, vector<4x256xbf16>,
    %11 = vector.extract_strided_slice %4 {offsets = [0, 0, 2], sizes = [4, 16, 16], strides = [1, 1, 1]} : vector<4x18x18xbf16> to vector<4x16x16xbf16>
    %12 = vector.shape_cast %11 : vector<4x16x16xbf16> to vector<4x256xbf16>
    %c8 = arith.constant 8 : index
    %c0_5 = arith.constant 0 : index
    %13 = vector.load %arg7[%c8, %c0_5] : memref<36x256xbf16, #tpu.memory_space<vmem>>, vector<4x256xbf16>
    tpu.vector_store %arg7[%c8, %c0_5], %12 {strides = array<i32>} : memref<36x256xbf16, #tpu.memory_space<vmem>>, vector<4x256xbf16>,
    %14 = vector.extract_strided_slice %4 {offsets = [0, 1, 0], sizes = [4, 16, 16], strides = [1, 1, 1]} : vector<4x18x18xbf16> to vector<4x16x16xbf16>
    %15 = vector.shape_cast %14 : vector<4x16x16xbf16> to vector<4x256xbf16>
    %c12 = arith.constant 12 : index
    %c0_6 = arith.constant 0 : index
    %16 = vector.load %arg7[%c12, %c0_6] : memref<36x256xbf16, #tpu.memory_space<vmem>>, vector<4x256xbf16>
    tpu.vector_store %arg7[%c12, %c0_6], %15 {strides = array<i32>} : memref<36x256xbf16, #tpu.memory_space<vmem>>, vector<4x256xbf16>,
    %17 = vector.extract_strided_slice %4 {offsets = [0, 1, 1], sizes = [4, 16, 16], strides = [1, 1, 1]} : vector<4x18x18xbf16> to vector<4x16x16xbf16>
    %18 = vector.shape_cast %17 : vector<4x16x16xbf16> to vector<4x256xbf16>
    %c16 = arith.constant 16 : index
    %c0_7 = arith.constant 0 : index
    %19 = vector.load %arg7[%c16, %c0_7] : memref<36x256xbf16, #tpu.memory_space<vmem>>, vector<4x256xbf16>
    tpu.vector_store %arg7[%c16, %c0_7], %18 {strides = array<i32>} : memref<36x256xbf16, #tpu.memory_space<vmem>>, vector<4x256xbf16>,
    %20 = vector.extract_strided_slice %4 {offsets = [0, 1, 2], sizes = [4, 16, 16], strides = [1, 1, 1]} : vector<4x18x18xbf16> to vector<4x16x16xbf16>
    %21 = vector.shape_cast %20 : vector<4x16x16xbf16> to vector<4x256xbf16>
    %c20 = arith.constant 20 : index
    %c0_8 = arith.constant 0 : index
    %22 = vector.load %arg7[%c20, %c0_8] : memref<36x256xbf16, #tpu.memory_space<vmem>>, vector<4x256xbf16>
    tpu.vector_store %arg7[%c20, %c0_8], %21 {strides = array<i32>} : memref<36x256xbf16, #tpu.memory_space<vmem>>, vector<4x256xbf16>,
    %23 = vector.extract_strided_slice %4 {offsets = [0, 2, 0], sizes = [4, 16, 16], strides = [1, 1, 1]} : vector<4x18x18xbf16> to vector<4x16x16xbf16>
    %24 = vector.shape_cast %23 : vector<4x16x16xbf16> to vector<4x256xbf16>
    %c24 = arith.constant 24 : index
    %c0_9 = arith.constant 0 : index
    %25 = vector.load %arg7[%c24, %c0_9] : memref<36x256xbf16, #tpu.memory_space<vmem>>, vector<4x256xbf16>
    tpu.vector_store %arg7[%c24, %c0_9], %24 {strides = array<i32>} : memref<36x256xbf16, #tpu.memory_space<vmem>>, vector<4x256xbf16>,
    %26 = vector.extract_strided_slice %4 {offsets = [0, 2, 1], sizes = [4, 16, 16], strides = [1, 1, 1]} : vector<4x18x18xbf16> to vector<4x16x16xbf16>
    %27 = vector.shape_cast %26 : vector<4x16x16xbf16> to vector<4x256xbf16>
    %c28 = arith.constant 28 : index
    %c0_10 = arith.constant 0 : index
    %28 = vector.load %arg7[%c28, %c0_10] : memref<36x256xbf16, #tpu.memory_space<vmem>>, vector<4x256xbf16>
    tpu.vector_store %arg7[%c28, %c0_10], %27 {strides = array<i32>} : memref<36x256xbf16, #tpu.memory_space<vmem>>, vector<4x256xbf16>,
    %29 = vector.extract_strided_slice %4 {offsets = [0, 2, 2], sizes = [4, 16, 16], strides = [1, 1, 1]} : vector<4x18x18xbf16> to vector<4x16x16xbf16>
    %30 = vector.shape_cast %29 : vector<4x16x16xbf16> to vector<4x256xbf16>
    %c32 = arith.constant 32 : index
    %c0_11 = arith.constant 0 : index
    %31 = vector.load %arg7[%c32, %c0_11] : memref<36x256xbf16, #tpu.memory_space<vmem>>, vector<4x256xbf16>
    tpu.vector_store %arg7[%c32, %c0_11], %30 {strides = array<i32>} : memref<36x256xbf16, #tpu.memory_space<vmem>>, vector<4x256xbf16>,
    %c0_12 = arith.constant 0 : index
    %c0_13 = arith.constant 0 : index
    %32 = vector.load %arg3[%c0_12, %c0_13] : memref<8x36xbf16, #tpu.memory_space<vmem>>, vector<8x36xbf16>
    %c0_14 = arith.constant 0 : index
    %c0_15 = arith.constant 0 : index
    %33 = vector.load %arg7[%c0_14, %c0_15] : memref<36x256xbf16, #tpu.memory_space<vmem>>, vector<36x256xbf16>
    %cst = arith.constant dense<0.000000e+00> : vector<8x256xf32>
    %34 = tpu.matmul %32, %33, %cst {dimension_numbers = #tpu.dot_dimension_numbers<[1], [0], [0], [1], [0, 0, 1, 1], [], []>} : vector<8x36xbf16>, vector<36x256xbf16>, vector<8x256xf32> -> vector<8x256xf32>
    %c0_16 = arith.constant 0 : index
    %c0_17 = arith.constant 0 : index
    %35 = vector.load %arg4[%c0_16, %c0_17] : memref<8x1xf32, #tpu.memory_space<vmem>>, vector<8x1xf32>
    %36 = vector.broadcast %35 : vector<8x1xf32> to vector<8x256xf32>
    %37 = arith.mulf %34, %36 : vector<8x256xf32>
    %c0_18 = arith.constant 0 : index
    %c0_19 = arith.constant 0 : index
    %38 = vector.load %arg5[%c0_18, %c0_19] : memref<8x1xf32, #tpu.memory_space<vmem>>, vector<8x1xf32>
    %39 = vector.broadcast %38 : vector<8x1xf32> to vector<8x256xf32>
    %40 = arith.addf %37, %39 : vector<8x256xf32>
    %41 = vector.shape_cast %40 : vector<8x256xf32> to vector<1x8x256xf32>
    %c0_20 = arith.constant 0 : index
    %c0_21 = arith.constant 0 : index
    %c0_22 = arith.constant 0 : index
    %42 = vector.load %arg6[%c0_20, %c0_21, %c0_22] : memref<1x8x256xf32, #tpu.memory_space<vmem>>, vector<1x8x256xf32>
    tpu.vector_store %arg6[%c0_20, %c0_21, %c0_22], %41 {strides = array<i32>} : memref<1x8x256xf32, #tpu.memory_space<vmem>>, vector<1x8x256xf32>,
    return
  }
  func.func @transform_0(%arg0: i32, %arg1: i32) -> (i32, i32, i32, i32) {
    %c0_i32 = arith.constant 0 : i32
    %c0_i32_0 = arith.constant 0 : i32
    %c0_i32_1 = arith.constant 0 : i32
    %c0_i32_2 = arith.constant 0 : i32
    return %arg0, %c0_i32, %c0_i32_0, %c0_i32_1 : i32, i32, i32, i32
  }
  func.func @transform_1(%arg0: i32, %arg1: i32) -> (i32, i32) {
    %c0_i32 = arith.constant 0 : i32
    %c0_i32_0 = arith.constant 0 : i32
    %c0_i32_1 = arith.constant 0 : i32
    return %c0_i32, %c0_i32_0 : i32, i32
  }
  func.func @transform_2(%arg0: i32, %arg1: i32) -> (i32, i32) {
    %c0_i32 = arith.constant 0 : i32
    %c0_i32_0 = arith.constant 0 : i32
    %c0_i32_1 = arith.constant 0 : i32
    return %c0_i32, %c0_i32_0 : i32, i32
  }
  func.func @transform_3(%arg0: i32, %arg1: i32) -> (i32, i32) {
    %c0_i32 = arith.constant 0 : i32
    %c0_i32_0 = arith.constant 0 : i32
    %c0_i32_1 = arith.constant 0 : i32
    return %c0_i32, %c0_i32_0 : i32, i32
  }
  func.func @transform_4(%arg0: i32, %arg1: i32) -> (i32, i32, i32) {
    %c0_i32 = arith.constant 0 : i32
    %c0_i32_0 = arith.constant 0 : i32
    return %arg0, %c0_i32, %arg1 : i32, i32, i32
  }
}

</mosaic_0001>

<llo_original>
// kernel: first_octave_cb.6
$region0: #{first_octave_cb.6}
  #allocation0 [shape = 'u32[]', space=smem, size = 0x4, offset = 0x4, fixed_abs, tag = 'smem constant byte address 0x4 - core index']
  #allocation1 [shape = 'u32[144,128]{1,0:T(1,128)}', space=vmem, size = 0x12000, scoped, tag = 'internal scratch']
  #allocation2 [shape = 'bf16[36,64]{1,0:T(8,128)(2,1)}', space=vmem, size = 0x2800, scoped, tag = 'scratch operand']
  %s0 = inlined_call_operand.vmem [shape: bf16[2,4,10,10], index: 0, kind: input, shape index: {}]
  %s1 = inlined_call_operand.vmem [shape: bf16[8,36], index: 1, kind: input, shape index: {}]
  %s2 = inlined_call_operand.vmem [shape: f32[2,8,1], index: 2, kind: output, shape index: {0}]
  %s3 = inlined_call_operand.vmem [shape: f32[2,8,1], index: 3, kind: output, shape index: {1}]
  %4 = xla_tuple %s2, %s3
  %s5 = sld [smem:[#allocation0]]
  $region53: #{first_octave_cb.6} parent=0
    _
  %s7 = ssub.s32 1, %s5
  %s8 = scalar_select 0, %s7, %s5
  loop: start=0, step=1, limit=4
  $region2: #{first_octave_cb.6} parent=0 // loop_pre_header
    _
  $region3: #{first_octave_cb.6} parent=0 // loop_header
    %s10 = sphi 0, %s14
    %p11 = scmp.ge.s32.totalorder %s10, 4
    %s17 = sphi 0, %s29
    %s18 = sphi 0, %s25
    %s19 = sphi 0, %s17
    %s20 = sphi 0, %s18
    %s21 = sphi 0, %s19
    %s22 = sphi 0, %s20
    %s32 = sphi 0, %s34
    %s35 = sphi 0, %s32
    %s36 = sphi 0, %s35
    %s52 = sphi 0, %s36
    %s56 = sphi 0, %s56
    %s58 = sphi 0, %s56
    %s59 = sphi 0, %s58
    %s73 = sphi 0, %s59
    %s79 = sphi 0, %s81
    %s82 = sphi 0, %s79
    %s83 = sphi 0, %s82
    %s99 = sphi 0, %s83
    %s105 = sphi 0, %s107
    %s108 = sphi 0, %s105
    %s109 = sphi 0, %s108
    %s125 = sphi 0, %s109
  $region4: #{first_octave_cb.6} parent=0 // loop_header_branch
    %13 = sbr.rel (%p11) target = $region8
  $region5: #{first_octave_cb.6} parent=0 // loop_body
    %s15 = ssub.s32 %s10, 1
    %s16 = ssub.s32 %s10, 2
    %s23 = sadd.s32 1, %s18
    %p24 = scmp.ge.s32.totalorder %s23, 1
    %s25 = scalar_select %p24, 0, %s23
    %s26 = sadd.s32 1, %s17
    %s27 = scalar_select %p24, %s26, %s17
    %p28 = scmp.ge.s32.totalorder %s27, 2
    %s29 = scalar_select %p28, 0, %s27
    %s30 = ssub.s32 %s17, %s29
    %p31 = scmp.eq.s32.totalorder %s30, 0
    %s33 = sadd.s32 %s32, 1
    %s34 = scalar_select %p31, %s32, %s33
    %p37 = pneg %p31
    %p38 = scmp.eq.s32.totalorder %s10, 1
    %p39 = por %p37, %p38
    %p40 = scmp.ne.s32.totalorder %s32, %s35
    %p41 = scmp.eq.s32.totalorder %s10, 0
    %p42 = por %p40, %p41
    %p43 = scmp.ne.s32.totalorder %s32, %s35
    %p44 = scmp.eq.s32.totalorder %s15, 1
    %p45 = por %p43, %p44
    %p46 = scmp.ne.s32.totalorder %s35, %s36
    %p47 = scmp.eq.s32.totalorder %s15, 0
    %p48 = por %p46, %p47
    %p49 = scmp.ne.s32.totalorder %s35, %s36
    %p50 = scmp.eq.s32.totalorder %s16, 1
    %p51 = por %p49, %p50
    %p53 = scmp.ne.s32.totalorder %s36, %s52
    %p54 = scmp.eq.s32.totalorder %s16, 0
    %p55 = por %p53, %p54
    %s57 = sadd.s32 %s56, 1
    %p60 = scmp.eq.s32.totalorder %s10, 1
    %p61 = scmp.ne.s32.totalorder %s56, %s58
    %p62 = scmp.eq.s32.totalorder %s10, 0
    %p63 = por %p61, %p62
    %p64 = scmp.ne.s32.totalorder %s56, %s58
    %p65 = scmp.eq.s32.totalorder %s15, 1
    %p66 = por %p64, %p65
    %p67 = scmp.ne.s32.totalorder %s58, %s59
    %p68 = scmp.eq.s32.totalorder %s15, 0
    %p69 = por %p67, %p68
    %p70 = scmp.ne.s32.totalorder %s58, %s59
    %p71 = scmp.eq.s32.totalorder %s16, 1
    %p72 = por %p70, %p71
    %p74 = scmp.ne.s32.totalorder %s59, %s73
    %p75 = scmp.eq.s32.totalorder %s16, 0
    %p76 = por %p74, %p75
    %s77 = ssub.s32 %s17, %s29
    %p78 = scmp.eq.s32.totalorder %s77, 0
    %s80 = sadd.s32 %s79, 1
    %s81 = scalar_select %p78, %s79, %s80
    %p84 = pneg %p78
    %p85 = scmp.eq.s32.totalorder %s10, 1
    %p86 = por %p84, %p85
    %p87 = scmp.ne.s32.totalorder %s79, %s82
    %p88 = scmp.eq.s32.totalorder %s10, 0
    %p89 = por %p87, %p88
    %p90 = scmp.ne.s32.totalorder %s79, %s82
    %p91 = scmp.eq.s32.totalorder %s15, 1
    %p92 = por %p90, %p91
    %p93 = scmp.ne.s32.totalorder %s82, %s83
    %p94 = scmp.eq.s32.totalorder %s15, 0
    %p95 = por %p93, %p94
    %p96 = scmp.ne.s32.totalorder %s82, %s83
    %p97 = scmp.eq.s32.totalorder %s16, 1
    %p98 = por %p96, %p97
    %p100 = scmp.ne.s32.totalorder %s83, %s99
    %p101 = scmp.eq.s32.totalorder %s16, 0
    %p102 = por %p100, %p101
    %s103 = ssub.s32 %s17, %s29
    %p104 = scmp.eq.s32.totalorder %s103, 0
    %s106 = sadd.s32 %s105, 1
    %s107 = scalar_select %p104, %s105, %s106
    %p110 = pneg %p104
    %p111 = scmp.eq.s32.totalorder %s10, 1
    %p112 = por %p110, %p111
    %p113 = scmp.ne.s32.totalorder %s105, %s108
    %p114 = scmp.eq.s32.totalorder %s10, 0
    %p115 = por %p113, %p114
    %p116 = scmp.ne.s32.totalorder %s105, %s108
    %p117 = scmp.eq.s32.totalorder %s15, 1
    %p118 = por %p116, %p117
    %p119 = scmp.ne.s32.totalorder %s108, %s109
    %p120 = scmp.eq.s32.totalorder %s15, 0
    %p121 = por %p119, %p120
    %p122 = scmp.ne.s32.totalorder %s108, %s109
    %p123 = scmp.eq.s32.totalorder %s16, 1
    %p124 = por %p122, %p123
    %p126 = scmp.ne.s32.totalorder %s109, %s125
    %p127 = scmp.eq.s32.totalorder %s16, 0
    %p128 = por %p126, %p127
    %p129 = scmp.le.s32.totalorder 1, %s10
    %p130 = scmp.lt.s32.totalorder %s10, 3
    %p131 = pnand %p129, %p130
    %p132 = pneg %p131
    // Predicated region
    $region9: #{first_octave_cb.6} parent=5 // pred_check
      _
    $region10: #{first_octave_cb.6} parent=5 // pred_check_branch
      %134 = sbr.rel (%p131) target = $region12
    $region11: #{first_octave_cb.6} parent=5 // pred_region
      %s135 = ssub.s32 %s10, 1
      // Predicated region
      $region13: #{first_octave_cb.6} parent=11 // pred_check
        %p136 = pneg %p69
      $region14: #{first_octave_cb.6} parent=11 // pred_check_branch
        %138 = sbr.rel (%p136) target = $region16
      $region15: #{first_octave_cb.6} parent=11 // pred_region
        _
      $region16: #{first_octave_cb.6} parent=11 // pred_fallthru
        _
    $region12: #{first_octave_cb.6} parent=5 // pred_fallthru
      _
    %p139 = scmp.lt.s32.totalorder %s10, 2
    // Predicated region
    $region17: #{first_octave_cb.6} parent=5 // pred_check
      %p140 = pneg %p139
    $region18: #{first_octave_cb.6} parent=5 // pred_check_branch
      %142 = sbr.rel (%p140) target = $region20
    $region19: #{first_octave_cb.6} parent=5 // pred_region
      // Predicated region
      $region21: #{first_octave_cb.6} parent=19 // pred_check
        %p143 = pneg %p42
      $region22: #{first_octave_cb.6} parent=19 // pred_check_branch
        %145 = sbr.rel (%p143) target = $region24
      $region23: #{first_octave_cb.6} parent=19 // pred_region
        %p146 = scmp.lt.s32.totalorder %s17, 1
        %s147 = scalar_select %p146, %s17, 1
        %s148 = smul.addr %s147, 8
        %s149 = smul.addr %s148, 4
        %s150 = scalar_lea.vmem %s0, %s149
      $region24: #{first_octave_cb.6} parent=19 // pred_fallthru
        _
    $region20: #{first_octave_cb.6} parent=5 // pred_fallthru
      _
    %p151 = scmp.le.s32.totalorder 1, %s10
    %p152 = scmp.lt.s32.totalorder %s10, 3
    %p153 = pnand %p151, %p152
    %p154 = pneg %p153
    // Predicated region
    $region25: #{first_octave_cb.6} parent=5 // pred_check
      _
    $region26: #{first_octave_cb.6} parent=5 // pred_check_branch
      %156 = sbr.rel (%p153) target = $region28
    $region27: #{first_octave_cb.6} parent=5 // pred_region
      %s157 = ssub.s32 %s10, 1
      %p158 = scmp.lt.s32.totalorder %s19, 1
      %s159 = scalar_select %p158, %s19, 1
      %s160 = smul.addr %s159, 8
      %s161 = smul.addr %s160, 4
      %s162 = scalar_lea.vmem %s0, %s161
      %p163 = pneg %p48
      %p164 = pneg %p45
      %p165 = pneg %p69
      %p166 = pneg %p66
      %p167 = pneg %p95
      %p168 = pneg %p92
      %p169 = scmp.lt.s32.totalorder %s19, 1
      %s170 = scalar_select %p169, %s19, 1
      %s171 = smul.addr %s170, 8
      %s172 = scalar_lea.vmem %s2, %s171
      %p173 = pneg %p121
      %p174 = pneg %p118
      %p175 = scmp.lt.s32.totalorder %s19, 1
      %s176 = scalar_select %p175, %s19, 1
      %s177 = smul.addr %s176, 8
      %s178 = scalar_lea.vmem %s3, %s177
      %p179 = scmp.lt.s32.totalorder %s19, 1
      %s180 = scalar_select %p179, %s19, 1
      %s181 = smul.addr %s180, 8
      %s182 = smul.addr %s181, 4
      %s183 = scalar_lea.vmem %s0, %s182
      %p184 = scmp.lt.s32.totalorder %s19, 1
      %s185 = scalar_select %p184, %s19, 1
      %s186 = smul.addr %s185, 8
      %s187 = scalar_lea.vmem %s2, %s186
      %p188 = scmp.lt.s32.totalorder %s19, 1
      %s189 = scalar_select %p188, %s19, 1
      %s190 = smul.addr %s189, 8
      %s191 = scalar_lea.vmem %s3, %s190
      %p193 = scmp.eq.s32.totalorder %s20, 0
      // Predicated region
      $region29: #{first_octave_cb.6} parent=27 // pred_check
        %p194 = pneg %p193
      $region30: #{first_octave_cb.6} parent=27 // pred_check_branch
        %196 = sbr.rel (%p194) target = $region32
      $region31: #{first_octave_cb.6} parent=27 // pred_region
        %vm197 = vcmask 7168
        %198 = vst.msk [vmem:[%s187] sm:$0xff] %vm197, 0.0
        %199 = vst.msk [vmem:[%s191] sm:$0xff] %vm197, 0.0
      $region32: #{first_octave_cb.6} parent=27 // pred_fallthru
        _
      %s200 = smul.u32 %s20, 8
      %s201 = sshra.s32 %s200, 3
      %s202 = sand.u32 %s200, 7
      %s203 = smul.addr %s201, 4
      %s204 = scalar_lea.vmem %s183, %s203
      %v205 = vld [vmem:[%s204] sm:$0xf]
      %v206 = vld [vmem:[%s204 + $0x4] sm:$0x1]
      %v207 = vld [vmem:[%s204 + $0x8] sm:$0xf]
      %v208 = vld [vmem:[%s204 + $0xc] sm:$0x1]
      %v209 = vld [vmem:[%s204 + $0x10] sm:$0xf]
      %v210 = vld [vmem:[%s204 + $0x14] sm:$0x1]
      %v211 = vld [vmem:[%s204 + $0x18] sm:$0xf]
      %v212 = vld [vmem:[%s204 + $0x1c] sm:$0x1]
      %v215 = vpack.i.b16 %v207, %v205
      %v216 = vshrl.u32 %v205, 16
      %v217 = vshrl.u32 %v207, 16
      %v218 = vpack.i.b16 %v217, %v216
      %v221 = vpack.i.b16 %v211, %v209
      %v222 = vshrl.u32 %v209, 16
      %v223 = vshrl.u32 %v211, 16
      %v224 = vpack.i.b16 %v223, %v222
      %v227 = vunpack.c.l.s4 1983009808
      %v228 = vunpack.c.0.s8 %v227
      %v229 = vlaneseq
      %v230 = vshrl.u32 %v229, 7
      %v231 = vsub.s32 %v228, %v230
      %v232 = vrot.slane %v215, %v231
      %v235 = vunpack.c.l.s4 1983009808
      %v236 = vunpack.c.0.s8 %v235
      %v237 = vlaneseq
      %v238 = vshrl.u32 %v237, 7
      %v239 = vsub.s32 %v236, %v238
      %v240 = vrot.slane %v221, %v239
      %v241 = vcombine.low %v232, %v240
      %v242 = vcombine.high %v232, %v240
      %v244 = vunpack.c.l.s4 1934713408
      %v245 = vunpack.c.0.s8 %v244
      %v246 = vlaneseq
      %v247 = vshrl.u32 %v246, 7
      %v248 = vsub.s32 %v245, %v247
      %v249 = vrot.slane %v241, %v248
      %v251 = vunpack.c.l.s4 1934713408
      %v252 = vunpack.c.0.s8 %v251
      %v253 = vlaneseq
      %v254 = vshrl.u32 %v253, 7
      %v255 = vsub.s32 %v252, %v254
      %v256 = vrot.slane %v242, %v255
      %v257 = vcombine.high %v249, 0
      %v258 = vcombine.high %v256, 0
      %v261 = vunpack.c.l.s4 1983009808
      %v262 = vunpack.c.0.s8 %v261
      %v263 = vlaneseq
      %v264 = vshrl.u32 %v263, 7
      %v265 = vsub.s32 %v262, %v264
      %v266 = vrot.slane %v218, %v265
      %v269 = vunpack.c.l.s4 1983009808
      %v270 = vunpack.c.0.s8 %v269
      %v271 = vlaneseq
      %v272 = vshrl.u32 %v271, 7
      %v273 = vsub.s32 %v270, %v272
      %v274 = vrot.slane %v224, %v273
      %v275 = vcombine.low %v266, %v274
      %v276 = vcombine.high %v266, %v274
      %v278 = vunpack.c.l.s4 1934713408
      %v279 = vunpack.c.0.s8 %v278
      %v280 = vlaneseq
      %v281 = vshrl.u32 %v280, 7
      %v282 = vsub.s32 %v279, %v281
      %v283 = vrot.slane %v275, %v282
      %v285 = vunpack.c.l.s4 1934713408
      %v286 = vunpack.c.0.s8 %v285
      %v287 = vlaneseq
      %v288 = vshrl.u32 %v287, 7
      %v289 = vsub.s32 %v286, %v288
      %v290 = vrot.slane %v276, %v289
      %v291 = vcombine.high %v283, 0
      %v292 = vcombine.high %v290, 0
      %v294 = vunpack.c.l.b16 %v283
      %v295 = vpack.c.b16 %v294, %v294
      %296 = vrot.lane.b32.xlu0 %v295, 8
      %v297 = vpop.permute.xlu0 %296
      %v299 = vunpack.c.l.b16 %v257
      %v300 = vpack.c.b16 %v299, %v299
      %301 = vrot.lane.b32.xlu0 %v300, 16
      %v302 = vpop.permute.xlu0 %301
      %v304 = vunpack.c.l.b16 %v291
      %v305 = vpack.c.b16 %v304, %v304
      %306 = vrot.lane.b32.xlu0 %v305, 24
      %v307 = vpop.permute.xlu0 %306
      %v309 = vunpack.c.l.b16 %v256
      %v310 = vpack.c.b16 %v309, %v309
      %311 = vrot.lane.b32.xlu0 %v310, 32
      %v312 = vpop.permute.xlu0 %311
      %v314 = vunpack.c.l.b16 %v290
      %v315 = vpack.c.b16 %v314, %v314
      %316 = vrot.lane.b32.xlu0 %v315, 40
      %v317 = vpop.permute.xlu0 %316
      %v319 = vunpack.c.l.b16 %v258
      %v320 = vpack.c.b16 %v319, %v319
      %321 = vrot.lane.b32.xlu0 %v320, 48
      %v322 = vpop.permute.xlu0 %321
      %v324 = vunpack.c.l.b16 %v292
      %v325 = vpack.c.b16 %v324, %v324
      %326 = vrot.lane.b32.xlu0 %v325, 56
      %v327 = vpop.permute.xlu0 %326
      %vm328 = vcmask 64512
      %v331 = vsel %vm328, %v249, %v297
      %vm332 = vcmask 130048
      %v334 = vsel %vm332, %v331, %v302
      %vm335 = vcmask 195584
      %v337 = vsel %vm335, %v334, %v307
      %vm338 = vcmask 261120
      %v340 = vsel %vm338, %v337, %v312
      %vm341 = vcmask 326656
      %v343 = vsel %vm341, %v340, %v317
      %vm344 = vcmask 392192
      %v346 = vsel %vm344, %v343, %v322
      %vm347 = vcmask 457728
      %v349 = vsel %vm347, %v346, %v327
      %vm351 = vcmask 517120
      %352 = vst.msk [vmem:[#allocation2] sm:$0x3] %vm351, %v349
      %357 = vrot.lane.b32.xlu0 %v205, 127
      %v358 = vpop.permute.xlu0 %357
      %359 = vrot.lane.b32.xlu0 %v207, 127
      %v360 = vpop.permute.xlu0 %359
      %361 = vrot.lane.b32.xlu0 %v209, 127
      %v362 = vpop.permute.xlu0 %361
      %363 = vrot.lane.b32.xlu0 %v211, 127
      %v364 = vpop.permute.xlu0 %363
      %v367 = vpack.i.b16 %v360, %v358
      %v368 = vshrl.u32 %v358, 16
      %v369 = vshrl.u32 %v360, 16
      %v370 = vpack.i.b16 %v369, %v368
      %v373 = vpack.i.b16 %v364, %v362
      %v374 = vshrl.u32 %v362, 16
      %v375 = vshrl.u32 %v364, 16
      %v376 = vpack.i.b16 %v375, %v374
      %v379 = vunpack.c.l.s4 1983009808
      %v380 = vunpack.c.0.s8 %v379
      %v381 = vlaneseq
      %v382 = vshrl.u32 %v381, 7
      %v383 = vsub.s32 %v380, %v382
      %v384 = vrot.slane %v367, %v383
      %v387 = vunpack.c.l.s4 1983009808
      %v388 = vunpack.c.0.s8 %v387
      %v389 = vlaneseq
      %v390 = vshrl.u32 %v389, 7
      %v391 = vsub.s32 %v388, %v390
      %v392 = vrot.slane %v373, %v391
      %v393 = vcombine.low %v384, %v392
      %v394 = vcombine.high %v384, %v392
      %v396 = vunpack.c.l.s4 1934713408
      %v397 = vunpack.c.0.s8 %v396
      %v398 = vlaneseq
      %v399 = vshrl.u32 %v398, 7
      %v400 = vsub.s32 %v397, %v399
      %v401 = vrot.slane %v393, %v400
      %v403 = vunpack.c.l.s4 1934713408
      %v404 = vunpack.c.0.s8 %v403
      %v405 = vlaneseq
      %v406 = vshrl.u32 %v405, 7
      %v407 = vsub.s32 %v404, %v406
      %v408 = vrot.slane %v394, %v407
      %v409 = vcombine.high %v401, 0
      %v410 = vcombine.high %v408, 0
      %v413 = vunpack.c.l.s4 1983009808
      %v414 = vunpack.c.0.s8 %v413
      %v415 = vlaneseq
      %v416 = vshrl.u32 %v415, 7
      %v417 = vsub.s32 %v414, %v416
      %v418 = vrot.slane %v370, %v417
      %v421 = vunpack.c.l.s4 1983009808
      %v422 = vunpack.c.0.s8 %v421
      %v423 = vlaneseq
      %v424 = vshrl.u32 %v423, 7
      %v425 = vsub.s32 %v422, %v424
      %v426 = vrot.slane %v376, %v425
      %v427 = vcombine.low %v418, %v426
      %v428 = vcombine.high %v418, %v426
      %v430 = vunpack.c.l.s4 1934713408
      %v431 = vunpack.c.0.s8 %v430
      %v432 = vlaneseq
      %v433 = vshrl.u32 %v432, 7
      %v434 = vsub.s32 %v431, %v433
      %v435 = vrot.slane %v427, %v434
      %v437 = vunpack.c.l.s4 1934713408
      %v438 = vunpack.c.0.s8 %v437
      %v439 = vlaneseq
      %v440 = vshrl.u32 %v439, 7
      %v441 = vsub.s32 %v438, %v440
      %v442 = vrot.slane %v428, %v441
      %v443 = vcombine.high %v435, 0
      %v444 = vcombine.high %v442, 0
      %v446 = vunpack.c.l.b16 %v435
      %v447 = vpack.c.b16 %v446, %v446
      %448 = vrot.lane.b32.xlu0 %v447, 8
      %v449 = vpop.permute.xlu0 %448
      %v451 = vunpack.c.l.b16 %v409
      %v452 = vpack.c.b16 %v451, %v451
      %453 = vrot.lane.b32.xlu0 %v452, 16
      %v454 = vpop.permute.xlu0 %453
      %v456 = vunpack.c.l.b16 %v443
      %v457 = vpack.c.b16 %v456, %v456
      %458 = vrot.lane.b32.xlu0 %v457, 24
      %v459 = vpop.permute.xlu0 %458
      %v461 = vunpack.c.l.b16 %v408
      %v462 = vpack.c.b16 %v461, %v461
      %463 = vrot.lane.b32.xlu0 %v462, 32
      %v464 = vpop.permute.xlu0 %463
      %v466 = vunpack.c.l.b16 %v442
      %v467 = vpack.c.b16 %v466, %v466
      %468 = vrot.lane.b32.xlu0 %v467, 40
      %v469 = vpop.permute.xlu0 %468
      %v471 = vunpack.c.l.b16 %v410
      %v472 = vpack.c.b16 %v471, %v471
      %473 = vrot.lane.b32.xlu0 %v472, 48
      %v474 = vpop.permute.xlu0 %473
      %v476 = vunpack.c.l.b16 %v444
      %v477 = vpack.c.b16 %v476, %v476
      %478 = vrot.lane.b32.xlu0 %v477, 56
      %v479 = vpop.permute.xlu0 %478
      %v482 = vsel %vm328, %v401, %v449
      %v484 = vsel %vm332, %v482, %v454
      %v486 = vsel %vm335, %v484, %v459
      %v488 = vsel %vm338, %v486, %v464
      %v490 = vsel %vm341, %v488, %v469
      %v492 = vsel %vm344, %v490, %v474
      %v494 = vsel %vm347, %v492, %v479
      %v496 = vunpack.c.l.b16 %v494
      %v497 = vpack.c.b16 %v496, %v496
      %v498 = vrot.slane %v497, 6
      %vm500 = vcmask 519170
      %501 = vst.msk [vmem:[#allocation2] sm:$0xc] %vm500, %v498
      %502 = vrot.lane.b32.xlu0 %v205, 126
      %v503 = vpop.permute.xlu0 %502
      %504 = vrot.lane.b32.xlu0 %v207, 126
      %v505 = vpop.permute.xlu0 %504
      %506 = vrot.lane.b32.xlu0 %v209, 126
      %v507 = vpop.permute.xlu0 %506
      %508 = vrot.lane.b32.xlu0 %v211, 126
      %v509 = vpop.permute.xlu0 %508
      %v512 = vpack.i.b16 %v505, %v503
      %v513 = vshrl.u32 %v503, 16
      %v514 = vshrl.u32 %v505, 16
      %v515 = vpack.i.b16 %v514, %v513
      %v518 = vpack.i.b16 %v509, %v507
      %v519 = vshrl.u32 %v507, 16
      %v520 = vshrl.u32 %v509, 16
      %v521 = vpack.i.b16 %v520, %v519
      %v524 = vunpack.c.l.s4 1983009808
      %v525 = vunpack.c.0.s8 %v524
      %v526 = vlaneseq
      %v527 = vshrl.u32 %v526, 7
      %v528 = vsub.s32 %v525, %v527
      %v529 = vrot.slane %v512, %v528
      %v532 = vunpack.c.l.s4 1983009808
      %v533 = vunpack.c.0.s8 %v532
      %v534 = vlaneseq
      %v535 = vshrl.u32 %v534, 7
      %v536 = vsub.s32 %v533, %v535
      %v537 = vrot.slane %v518, %v536
      %v538 = vcombine.low %v529, %v537
      %v539 = vcombine.high %v529, %v537
      %v541 = vunpack.c.l.s4 1934713408
      %v542 = vunpack.c.0.s8 %v541
      %v543 = vlaneseq
      %v544 = vshrl.u32 %v543, 7
      %v545 = vsub.s32 %v542, %v544
      %v546 = vrot.slane %v538, %v545
      %v548 = vunpack.c.l.s4 1934713408
      %v549 = vunpack.c.0.s8 %v548
      %v550 = vlaneseq
      %v551 = vshrl.u32 %v550, 7
      %v552 = vsub.s32 %v549, %v551
      %v553 = vrot.slane %v539, %v552
      %v554 = vcombine.high %v546, 0
      %v555 = vcombine.high %v553, 0
      %v558 = vunpack.c.l.s4 1983009808
      %v559 = vunpack.c.0.s8 %v558
      %v560 = vlaneseq
      %v561 = vshrl.u32 %v560, 7
      %v562 = vsub.s32 %v559, %v561
      %v563 = vrot.slane %v515, %v562
      %v566 = vunpack.c.l.s4 1983009808
      %v567 = vunpack.c.0.s8 %v566
      %v568 = vlaneseq
      %v569 = vshrl.u32 %v568, 7
      %v570 = vsub.s32 %v567, %v569
      %v571 = vrot.slane %v521, %v570
      %v572 = vcombine.low %v563, %v571
      %v573 = vcombine.high %v563, %v571
      %v575 = vunpack.c.l.s4 1934713408
      %v576 = vunpack.c.0.s8 %v575
      %v577 = vlaneseq
      %v578 = vshrl.u32 %v577, 7
      %v579 = vsub.s32 %v576, %v578
      %v580 = vrot.slane %v572, %v579
      %v582 = vunpack.c.l.s4 1934713408
      %v583 = vunpack.c.0.s8 %v582
      %v584 = vlaneseq
      %v585 = vshrl.u32 %v584, 7
      %v586 = vsub.s32 %v583, %v585
      %v587 = vrot.slane %v573, %v586
      %v588 = vcombine.high %v580, 0
      %v589 = vcombine.high %v587, 0
      %v591 = vunpack.c.l.b16 %v580
      %v592 = vpack.c.b16 %v591, %v591
      %593 = vrot.lane.b32.xlu0 %v592, 8
      %v594 = vpop.permute.xlu0 %593
      %v596 = vunpack.c.l.b16 %v554
      %v597 = vpack.c.b16 %v596, %v596
      %598 = vrot.lane.b32.xlu0 %v597, 16
      %v599 = vpop.permute.xlu0 %598
      %v601 = vunpack.c.l.b16 %v588
      %v602 = vpack.c.b16 %v601, %v601
      %603 = vrot.lane.b32.xlu0 %v602, 24
      %v604 = vpop.permute.xlu0 %603
      %v606 = vunpack.c.l.b16 %v553
      %v607 = vpack.c.b16 %v606, %v606
      %608 = vrot.lane.b32.xlu0 %v607, 32
      %v609 = vpop.permute.xlu0 %608
      %v611 = vunpack.c.l.b16 %v587
      %v612 = vpack.c.b16 %v611, %v611
      %613 = vrot.lane.b32.xlu0 %v612, 40
      %v614 = vpop.permute.xlu0 %613
      %v616 = vunpack.c.l.b16 %v555
      %v617 = vpack.c.b16 %v616, %v616
      %618 = vrot.lane.b32.xlu0 %v617, 48
      %v619 = vpop.permute.xlu0 %618
      %v621 = vunpack.c.l.b16 %v589
      %v622 = vpack.c.b16 %v621, %v621
      %623 = vrot.lane.b32.xlu0 %v622, 56
      %v624 = vpop.permute.xlu0 %623
      %v627 = vsel %vm328, %v546, %v594
      %v629 = vsel %vm332, %v627, %v599
      %v631 = vsel %vm335, %v629, %v604
      %v633 = vsel %vm338, %v631, %v609
      %v635 = vsel %vm341, %v633, %v614
      %v637 = vsel %vm344, %v635, %v619
      %v639 = vsel %vm347, %v637, %v624
      %641 = vst.msk [vmem:[#allocation2 + $0x4] sm:$0x3] %vm351, %v639
      %vm642 = vsmask.f32 3328
      %vm643 = vsmask.f32 7440
      %vm644 = vmor %vm642, %vm643
      %v646 = vrot.slane %v216, 4
      %v647 = vshll.u32 %v205, 16
      %v649 = vrot.slane %v647, 5
      %v650 = vor.u32 %v646, %v649
      %v651 = vrot.slane %v650, 4
      %v653 = vshll.u32 %v206, 16
      %v655 = vrot.slane %v653, 5
      %v656 = vsel %vm644, %v651, %v655
      %v658 = vrot.slane %v217, 4
      %v659 = vshll.u32 %v207, 16
      %v661 = vrot.slane %v659, 5
      %v662 = vor.u32 %v658, %v661
      %v663 = vrot.slane %v662, 4
      %v665 = vshll.u32 %v208, 16
      %v667 = vrot.slane %v665, 5
      %v668 = vsel %vm644, %v663, %v667
      %v670 = vrot.slane %v222, 4
      %v671 = vshll.u32 %v209, 16
      %v673 = vrot.slane %v671, 5
      %v674 = vor.u32 %v670, %v673
      %v675 = vrot.slane %v674, 4
      %v677 = vshll.u32 %v210, 16
      %v679 = vrot.slane %v677, 5
      %v680 = vsel %vm644, %v675, %v679
      %v682 = vrot.slane %v223, 4
      %v683 = vshll.u32 %v211, 16
      %v685 = vrot.slane %v683, 5
      %v686 = vor.u32 %v682, %v685
      %v687 = vrot.slane %v686, 4
      %v689 = vshll.u32 %v212, 16
      %v691 = vrot.slane %v689, 5
      %v692 = vsel %vm644, %v687, %v691
      %v695 = vpack.i.b16 %v668, %v656
      %v696 = vshrl.u32 %v656, 16
      %v697 = vshrl.u32 %v668, 16
      %v698 = vpack.i.b16 %v697, %v696
      %v701 = vpack.i.b16 %v692, %v680
      %v702 = vshrl.u32 %v680, 16
      %v703 = vshrl.u32 %v692, 16
      %v704 = vpack.i.b16 %v703, %v702
      %v707 = vunpack.c.l.s4 1983009808
      %v708 = vunpack.c.0.s8 %v707
      %v709 = vlaneseq
      %v710 = vshrl.u32 %v709, 7
      %v711 = vsub.s32 %v708, %v710
      %v712 = vrot.slane %v695, %v711
      %v715 = vunpack.c.l.s4 1983009808
      %v716 = vunpack.c.0.s8 %v715
      %v717 = vlaneseq
      %v718 = vshrl.u32 %v717, 7
      %v719 = vsub.s32 %v716, %v718
      %v720 = vrot.slane %v701, %v719
      %v721 = vcombine.low %v712, %v720
      %v722 = vcombine.high %v712, %v720
      %v724 = vunpack.c.l.s4 1934713408
      %v725 = vunpack.c.0.s8 %v724
      %v726 = vlaneseq
      %v727 = vshrl.u32 %v726, 7
      %v728 = vsub.s32 %v725, %v727
      %v729 = vrot.slane %v721, %v728
      %v731 = vunpack.c.l.s4 1934713408
      %v732 = vunpack.c.0.s8 %v731
      %v733 = vlaneseq
      %v734 = vshrl.u32 %v733, 7
      %v735 = vsub.s32 %v732, %v734
      %v736 = vrot.slane %v722, %v735
      %v737 = vcombine.high %v729, 0
      %v738 = vcombine.high %v736, 0
      %v741 = vunpack.c.l.s4 1983009808
      %v742 = vunpack.c.0.s8 %v741
      %v743 = vlaneseq
      %v744 = vshrl.u32 %v743, 7
      %v745 = vsub.s32 %v742, %v744
      %v746 = vrot.slane %v698, %v745
      %v749 = vunpack.c.l.s4 1983009808
      %v750 = vunpack.c.0.s8 %v749
      %v751 = vlaneseq
      %v752 = vshrl.u32 %v751, 7
      %v753 = vsub.s32 %v750, %v752
      %v754 = vrot.slane %v704, %v753
      %v755 = vcombine.low %v746, %v754
      %v756 = vcombine.high %v746, %v754
      %v758 = vunpack.c.l.s4 1934713408
      %v759 = vunpack.c.0.s8 %v758
      %v760 = vlaneseq
      %v761 = vshrl.u32 %v760, 7
      %v762 = vsub.s32 %v759, %v761
      %v763 = vrot.slane %v755, %v762
      %v765 = vunpack.c.l.s4 1934713408
      %v766 = vunpack.c.0.s8 %v765
      %v767 = vlaneseq
      %v768 = vshrl.u32 %v767, 7
      %v769 = vsub.s32 %v766, %v768
      %v770 = vrot.slane %v756, %v769
      %v771 = vcombine.high %v763, 0
      %v772 = vcombine.high %v770, 0
      %v774 = vunpack.c.l.b16 %v763
      %v775 = vpack.c.b16 %v774, %v774
      %776 = vrot.lane.b32.xlu0 %v775, 8
      %v777 = vpop.permute.xlu0 %776
      %v779 = vunpack.c.l.b16 %v737
      %v780 = vpack.c.b16 %v779, %v779
      %781 = vrot.lane.b32.xlu0 %v780, 16
      %v782 = vpop.permute.xlu0 %781
      %v784 = vunpack.c.l.b16 %v771
      %v785 = vpack.c.b16 %v784, %v784
      %786 = vrot.lane.b32.xlu0 %v785, 24
      %v787 = vpop.permute.xlu0 %786
      %v789 = vunpack.c.l.b16 %v736
      %v790 = vpack.c.b16 %v789, %v789
      %791 = vrot.lane.b32.xlu0 %v790, 32
      %v792 = vpop.permute.xlu0 %791
      %v794 = vunpack.c.l.b16 %v770
      %v795 = vpack.c.b16 %v794, %v794
      %796 = vrot.lane.b32.xlu0 %v795, 40
      %v797 = vpop.permute.xlu0 %796
      %v799 = vunpack.c.l.b16 %v738
      %v800 = vpack.c.b16 %v799, %v799
      %801 = vrot.lane.b32.xlu0 %v800, 48
      %v802 = vpop.permute.xlu0 %801
      %v804 = vunpack.c.l.b16 %v772
      %v805 = vpack.c.b16 %v804, %v804
      %806 = vrot.lane.b32.xlu0 %v805, 56
      %v807 = vpop.permute.xlu0 %806
      %v810 = vsel %vm328, %v729, %v777
      %v812 = vsel %vm332, %v810, %v782
      %v814 = vsel %vm335, %v812, %v787
      %v816 = vsel %vm338, %v814, %v792
      %v818 = vsel %vm341, %v816, %v797
      %v820 = vsel %vm344, %v818, %v802
      %v822 = vsel %vm347, %v820, %v807
      %v824 = vunpack.c.l.b16 %v822
      %v825 = vpack.c.b16 %v824, %v824
      %v826 = vrot.slane %v825, 6
      %828 = vst.msk [vmem:[#allocation2 + $0x4] sm:$0xc] %vm500, %v826
      %829 = vrot.lane.b32.xlu0 %v656, 127
      %v830 = vpop.permute.xlu0 %829
      %831 = vrot.lane.b32.xlu0 %v668, 127
      %v832 = vpop.permute.xlu0 %831
      %833 = vrot.lane.b32.xlu0 %v680, 127
      %v834 = vpop.permute.xlu0 %833
      %835 = vrot.lane.b32.xlu0 %v692, 127
      %v836 = vpop.permute.xlu0 %835
      %v839 = vpack.i.b16 %v832, %v830
      %v840 = vshrl.u32 %v830, 16
      %v841 = vshrl.u32 %v832, 16
      %v842 = vpack.i.b16 %v841, %v840
      %v845 = vpack.i.b16 %v836, %v834
      %v846 = vshrl.u32 %v834, 16
      %v847 = vshrl.u32 %v836, 16
      %v848 = vpack.i.b16 %v847, %v846
      %v851 = vunpack.c.l.s4 1983009808
      %v852 = vunpack.c.0.s8 %v851
      %v853 = vlaneseq
      %v854 = vshrl.u32 %v853, 7
      %v855 = vsub.s32 %v852, %v854
      %v856 = vrot.slane %v839, %v855
      %v859 = vunpack.c.l.s4 1983009808
      %v860 = vunpack.c.0.s8 %v859
      %v861 = vlaneseq
      %v862 = vshrl.u32 %v861, 7
      %v863 = vsub.s32 %v860, %v862
      %v864 = vrot.slane %v845, %v863
      %v865 = vcombine.low %v856, %v864
      %v866 = vcombine.high %v856, %v864
      %v868 = vunpack.c.l.s4 1934713408
      %v869 = vunpack.c.0.s8 %v868
      %v870 = vlaneseq
      %v871 = vshrl.u32 %v870, 7
      %v872 = vsub.s32 %v869, %v871
      %v873 = vrot.slane %v865, %v872
      %v875 = vunpack.c.l.s4 1934713408
      %v876 = vunpack.c.0.s8 %v875
      %v877 = vlaneseq
      %v878 = vshrl.u32 %v877, 7
      %v879 = vsub.s32 %v876, %v878
      %v880 = vrot.slane %v866, %v879
      %v881 = vcombine.high %v873, 0
      %v882 = vcombine.high %v880, 0
      %v885 = vunpack.c.l.s4 1983009808
      %v886 = vunpack.c.0.s8 %v885
      %v887 = vlaneseq
      %v888 = vshrl.u32 %v887, 7
      %v889 = vsub.s32 %v886, %v888
      %v890 = vrot.slane %v842, %v889
      %v893 = vunpack.c.l.s4 1983009808
      %v894 = vunpack.c.0.s8 %v893
      %v895 = vlaneseq
      %v896 = vshrl.u32 %v895, 7
      %v897 = vsub.s32 %v894, %v896
      %v898 = vrot.slane %v848, %v897
      %v899 = vcombine.low %v890, %v898
      %v900 = vcombine.high %v890, %v898
      %v902 = vunpack.c.l.s4 1934713408
      %v903 = vunpack.c.0.s8 %v902
      %v904 = vlaneseq
      %v905 = vshrl.u32 %v904, 7
      %v906 = vsub.s32 %v903, %v905
      %v907 = vrot.slane %v899, %v906
      %v909 = vunpack.c.l.s4 1934713408
      %v910 = vunpack.c.0.s8 %v909
      %v911 = vlaneseq
      %v912 = vshrl.u32 %v911, 7
      %v913 = vsub.s32 %v910, %v912
      %v914 = vrot.slane %v900, %v913
      %v915 = vcombine.high %v907, 0
      %v916 = vcombine.high %v914, 0
      %v918 = vunpack.c.l.b16 %v907
      %v919 = vpack.c.b16 %v918, %v918
      %920 = vrot.lane.b32.xlu0 %v919, 8
      %v921 = vpop.permute.xlu0 %920
      %v923 = vunpack.c.l.b16 %v881
      %v924 = vpack.c.b16 %v923, %v923
      %925 = vrot.lane.b32.xlu0 %v924, 16
      %v926 = vpop.permute.xlu0 %925
      %v928 = vunpack.c.l.b16 %v915
      %v929 = vpack.c.b16 %v928, %v928
      %930 = vrot.lane.b32.xlu0 %v929, 24
      %v931 = vpop.permute.xlu0 %930
      %v933 = vunpack.c.l.b16 %v880
      %v934 = vpack.c.b16 %v933, %v933
      %935 = vrot.lane.b32.xlu0 %v934, 32
      %v936 = vpop.permute.xlu0 %935
      %v938 = vunpack.c.l.b16 %v914
      %v939 = vpack.c.b16 %v938, %v938
      %940 = vrot.lane.b32.xlu0 %v939, 40
      %v941 = vpop.permute.xlu0 %940
      %v943 = vunpack.c.l.b16 %v882
      %v944 = vpack.c.b16 %v943, %v943
      %945 = vrot.lane.b32.xlu0 %v944, 48
      %v946 = vpop.permute.xlu0 %945
      %v948 = vunpack.c.l.b16 %v916
      %v949 = vpack.c.b16 %v948, %v948
      %950 = vrot.lane.b32.xlu0 %v949, 56
      %v951 = vpop.permute.xlu0 %950
      %v954 = vsel %vm328, %v873, %v921
      %v956 = vsel %vm332, %v954, %v926
      %v958 = vsel %vm335, %v956, %v931
      %v960 = vsel %vm338, %v958, %v936
      %v962 = vsel %vm341, %v960, %v941
      %v964 = vsel %vm344, %v962, %v946
      %v966 = vsel %vm347, %v964, %v951
      %968 = vst.msk [vmem:[#allocation2 + $0x8] sm:$0x3] %vm351, %v966
      %969 = vrot.lane.b32.xlu0 %v656, 126
      %v970 = vpop.permute.xlu0 %969
      %971 = vrot.lane.b32.xlu0 %v668, 126
      %v972 = vpop.permute.xlu0 %971
      %973 = vrot.lane.b32.xlu0 %v680, 126
      %v974 = vpop.permute.xlu0 %973
      %975 = vrot.lane.b32.xlu0 %v692, 126
      %v976 = vpop.permute.xlu0 %975
      %v979 = vpack.i.b16 %v972, %v970
      %v980 = vshrl.u32 %v970, 16
      %v981 = vshrl.u32 %v972, 16
      %v982 = vpack.i.b16 %v981, %v980
      %v985 = vpack.i.b16 %v976, %v974
      %v986 = vshrl.u32 %v974, 16
      %v987 = vshrl.u32 %v976, 16
      %v988 = vpack.i.b16 %v987, %v986
      %v991 = vunpack.c.l.s4 1983009808
      %v992 = vunpack.c.0.s8 %v991
      %v993 = vlaneseq
      %v994 = vshrl.u32 %v993, 7
      %v995 = vsub.s32 %v992, %v994
      %v996 = vrot.slane %v979, %v995
      %v999 = vunpack.c.l.s4 1983009808
      %v1000 = vunpack.c.0.s8 %v999
      %v1001 = vlaneseq
      %v1002 = vshrl.u32 %v1001, 7
      %v1003 = vsub.s32 %v1000, %v1002
      %v1004 = vrot.slane %v985, %v1003
      %v1005 = vcombine.low %v996, %v1004
      %v1006 = vcombine.high %v996, %v1004
      %v1008 = vunpack.c.l.s4 1934713408
      %v1009 = vunpack.c.0.s8 %v1008
      %v1010 = vlaneseq
      %v1011 = vshrl.u32 %v1010, 7
      %v1012 = vsub.s32 %v1009, %v1011
      %v1013 = vrot.slane %v1005, %v1012
      %v1015 = vunpack.c.l.s4 1934713408
      %v1016 = vunpack.c.0.s8 %v1015
      %v1017 = vlaneseq
      %v1018 = vshrl.u32 %v1017, 7
      %v1019 = vsub.s32 %v1016, %v1018
      %v1020 = vrot.slane %v1006, %v1019
      %v1021 = vcombine.high %v1013, 0
      %v1022 = vcombine.high %v1020, 0
      %v1025 = vunpack.c.l.s4 1983009808
      %v1026 = vunpack.c.0.s8 %v1025
      %v1027 = vlaneseq
      %v1028 = vshrl.u32 %v1027, 7
      %v1029 = vsub.s32 %v1026, %v1028
      %v1030 = vrot.slane %v982, %v1029
      %v1033 = vunpack.c.l.s4 1983009808
      %v1034 = vunpack.c.0.s8 %v1033
      %v1035 = vlaneseq
      %v1036 = vshrl.u32 %v1035, 7
      %v1037 = vsub.s32 %v1034, %v1036
      %v1038 = vrot.slane %v988, %v1037
      %v1039 = vcombine.low %v1030, %v1038
      %v1040 = vcombine.high %v1030, %v1038
      %v1042 = vunpack.c.l.s4 1934713408
      %v1043 = vunpack.c.0.s8 %v1042
      %v1044 = vlaneseq
      %v1045 = vshrl.u32 %v1044, 7
      %v1046 = vsub.s32 %v1043, %v1045
      %v1047 = vrot.slane %v1039, %v1046
      %v1049 = vunpack.c.l.s4 1934713408
      %v1050 = vunpack.c.0.s8 %v1049
      %v1051 = vlaneseq
      %v1052 = vshrl.u32 %v1051, 7
      %v1053 = vsub.s32 %v1050, %v1052
      %v1054 = vrot.slane %v1040, %v1053
      %v1055 = vcombine.high %v1047, 0
      %v1056 = vcombine.high %v1054, 0
      %v1058 = vunpack.c.l.b16 %v1047
      %v1059 = vpack.c.b16 %v1058, %v1058
      %1060 = vrot.lane.b32.xlu0 %v1059, 8
      %v1061 = vpop.permute.xlu0 %1060
      %v1063 = vunpack.c.l.b16 %v1021
      %v1064 = vpack.c.b16 %v1063, %v1063
      %1065 = vrot.lane.b32.xlu0 %v1064, 16
      %v1066 = vpop.permute.xlu0 %1065
      %v1068 = vunpack.c.l.b16 %v1055
      %v1069 = vpack.c.b16 %v1068, %v1068
      %1070 = vrot.lane.b32.xlu0 %v1069, 24
      %v1071 = vpop.permute.xlu0 %1070
      %v1073 = vunpack.c.l.b16 %v1020
      %v1074 = vpack.c.b16 %v1073, %v1073
      %1075 = vrot.lane.b32.xlu0 %v1074, 32
      %v1076 = vpop.permute.xlu0 %1075
      %v1078 = vunpack.c.l.b16 %v1054
      %v1079 = vpack.c.b16 %v1078, %v1078
      %1080 = vrot.lane.b32.xlu0 %v1079, 40
      %v1081 = vpop.permute.xlu0 %1080
      %v1083 = vunpack.c.l.b16 %v1022
      %v1084 = vpack.c.b16 %v1083, %v1083
      %1085 = vrot.lane.b32.xlu0 %v1084, 48
      %v1086 = vpop.permute.xlu0 %1085
      %v1088 = vunpack.c.l.b16 %v1056
      %v1089 = vpack.c.b16 %v1088, %v1088
      %1090 = vrot.lane.b32.xlu0 %v1089, 56
      %v1091 = vpop.permute.xlu0 %1090
      %v1094 = vsel %vm328, %v1013, %v1061
      %v1096 = vsel %vm332, %v1094, %v1066
      %v1098 = vsel %vm335, %v1096, %v1071
      %v1100 = vsel %vm338, %v1098, %v1076
      %v1102 = vsel %vm341, %v1100, %v1081
      %v1104 = vsel %vm344, %v1102, %v1086
      %v1106 = vsel %vm347, %v1104, %v1091
      %v1108 = vunpack.c.l.b16 %v1106
      %v1109 = vpack.c.b16 %v1108, %v1108
      %v1110 = vrot.slane %v1109, 6
      %1112 = vst.msk [vmem:[#allocation2 + $0x8] sm:$0xc] %vm500, %v1110
      %vm1117 = vcmask 1042432
      %vm1118 = vcmask 1046532
      %vm1119 = vmor %vm1117, %vm1118
      %v1120 = vrot.slane %v205, 5
      %v1121 = vrot.slane %v1120, 4
      %v1122 = vrot.slane %v206, 5
      %v1123 = vsel %vm1119, %v1121, %v1122
      %v1124 = vrot.slane %v207, 5
      %v1125 = vrot.slane %v1124, 4
      %v1126 = vrot.slane %v208, 5
      %v1127 = vsel %vm1119, %v1125, %v1126
      %v1128 = vrot.slane %v209, 5
      %v1129 = vrot.slane %v1128, 4
      %v1130 = vrot.slane %v210, 5
      %v1131 = vsel %vm1119, %v1129, %v1130
      %v1132 = vrot.slane %v211, 5
      %v1133 = vrot.slane %v1132, 4
      %v1134 = vrot.slane %v212, 5
      %v1135 = vsel %vm1119, %v1133, %v1134
      %v1138 = vpack.i.b16 %v1127, %v1123
      %v1139 = vshrl.u32 %v1123, 16
      %v1140 = vshrl.u32 %v1127, 16
      %v1141 = vpack.i.b16 %v1140, %v1139
      %v1144 = vpack.i.b16 %v1135, %v1131
      %v1145 = vshrl.u32 %v1131, 16
      %v1146 = vshrl.u32 %v1135, 16
      %v1147 = vpack.i.b16 %v1146, %v1145
      %v1150 = vunpack.c.l.s4 1983009808
      %v1151 = vunpack.c.0.s8 %v1150
      %v1152 = vlaneseq
      %v1153 = vshrl.u32 %v1152, 7
      %v1154 = vsub.s32 %v1151, %v1153
      %v1155 = vrot.slane %v1138, %v1154
      %v1158 = vunpack.c.l.s4 1983009808
      %v1159 = vunpack.c.0.s8 %v1158
      %v1160 = vlaneseq
      %v1161 = vshrl.u32 %v1160, 7
      %v1162 = vsub.s32 %v1159, %v1161
      %v1163 = vrot.slane %v1144, %v1162
      %v1164 = vcombine.low %v1155, %v1163
      %v1165 = vcombine.high %v1155, %v1163
      %v1167 = vunpack.c.l.s4 1934713408
      %v1168 = vunpack.c.0.s8 %v1167
      %v1169 = vlaneseq
      %v1170 = vshrl.u32 %v1169, 7
      %v1171 = vsub.s32 %v1168, %v1170
      %v1172 = vrot.slane %v1164, %v1171
      %v1174 = vunpack.c.l.s4 1934713408
      %v1175 = vunpack.c.0.s8 %v1174
      %v1176 = vlaneseq
      %v1177 = vshrl.u32 %v1176, 7
      %v1178 = vsub.s32 %v1175, %v1177
      %v1179 = vrot.slane %v1165, %v1178
      %v1180 = vcombine.high %v1172, 0
      %v1181 = vcombine.high %v1179, 0
      %v1184 = vunpack.c.l.s4 1983009808
      %v1185 = vunpack.c.0.s8 %v1184
      %v1186 = vlaneseq
      %v1187 = vshrl.u32 %v1186, 7
      %v1188 = vsub.s32 %v1185, %v1187
      %v1189 = vrot.slane %v1141, %v1188
      %v1192 = vunpack.c.l.s4 1983009808
      %v1193 = vunpack.c.0.s8 %v1192
      %v1194 = vlaneseq
      %v1195 = vshrl.u32 %v1194, 7
      %v1196 = vsub.s32 %v1193, %v1195
      %v1197 = vrot.slane %v1147, %v1196
      %v1198 = vcombine.low %v1189, %v1197
      %v1199 = vcombine.high %v1189, %v1197
      %v1201 = vunpack.c.l.s4 1934713408
      %v1202 = vunpack.c.0.s8 %v1201
      %v1203 = vlaneseq
      %v1204 = vshrl.u32 %v1203, 7
      %v1205 = vsub.s32 %v1202, %v1204
      %v1206 = vrot.slane %v1198, %v1205
      %v1208 = vunpack.c.l.s4 1934713408
      %v1209 = vunpack.c.0.s8 %v1208
      %v1210 = vlaneseq
      %v1211 = vshrl.u32 %v1210, 7
      %v1212 = vsub.s32 %v1209, %v1211
      %v1213 = vrot.slane %v1199, %v1212
      %v1214 = vcombine.high %v1206, 0
      %v1215 = vcombine.high %v1213, 0
      %v1217 = vunpack.c.l.b16 %v1206
      %v1218 = vpack.c.b16 %v1217, %v1217
      %1219 = vrot.lane.b32.xlu0 %v1218, 8
      %v1220 = vpop.permute.xlu0 %1219
      %v1222 = vunpack.c.l.b16 %v1180
      %v1223 = vpack.c.b16 %v1222, %v1222
      %1224 = vrot.lane.b32.xlu0 %v1223, 16
      %v1225 = vpop.permute.xlu0 %1224
      %v1227 = vunpack.c.l.b16 %v1214
      %v1228 = vpack.c.b16 %v1227, %v1227
      %1229 = vrot.lane.b32.xlu0 %v1228, 24
      %v1230 = vpop.permute.xlu0 %1229
      %v1232 = vunpack.c.l.b16 %v1179
      %v1233 = vpack.c.b16 %v1232, %v1232
      %1234 = vrot.lane.b32.xlu0 %v1233, 32
      %v1235 = vpop.permute.xlu0 %1234
      %v1237 = vunpack.c.l.b16 %v1213
      %v1238 = vpack.c.b16 %v1237, %v1237
      %1239 = vrot.lane.b32.xlu0 %v1238, 40
      %v1240 = vpop.permute.xlu0 %1239
      %v1242 = vunpack.c.l.b16 %v1181
      %v1243 = vpack.c.b16 %v1242, %v1242
      %1244 = vrot.lane.b32.xlu0 %v1243, 48
      %v1245 = vpop.permute.xlu0 %1244
      %v1247 = vunpack.c.l.b16 %v1215
      %v1248 = vpack.c.b16 %v1247, %v1247
      %1249 = vrot.lane.b32.xlu0 %v1248, 56
      %v1250 = vpop.permute.xlu0 %1249
      %v1253 = vsel %vm328, %v1172, %v1220
      %v1255 = vsel %vm332, %v1253, %v1225
      %v1257 = vsel %vm335, %v1255, %v1230
      %v1259 = vsel %vm338, %v1257, %v1235
      %v1261 = vsel %vm341, %v1259, %v1240
      %v1263 = vsel %vm344, %v1261, %v1245
      %v1265 = vsel %vm347, %v1263, %v1250
      %1267 = vst.msk [vmem:[#allocation2 + $0xc] sm:$0x3] %vm351, %v1265
      %1268 = vrot.lane.b32.xlu0 %v1123, 127
      %v1269 = vpop.permute.xlu0 %1268
      %1270 = vrot.lane.b32.xlu0 %v1127, 127
      %v1271 = vpop.permute.xlu0 %1270
      %1272 = vrot.lane.b32.xlu0 %v1131, 127
      %v1273 = vpop.permute.xlu0 %1272
      %1274 = vrot.lane.b32.xlu0 %v1135, 127
      %v1275 = vpop.permute.xlu0 %1274
      %v1278 = vpack.i.b16 %v1271, %v1269
      %v1279 = vshrl.u32 %v1269, 16
      %v1280 = vshrl.u32 %v1271, 16
      %v1281 = vpack.i.b16 %v1280, %v1279
      %v1284 = vpack.i.b16 %v1275, %v1273
      %v1285 = vshrl.u32 %v1273, 16
      %v1286 = vshrl.u32 %v1275, 16
      %v1287 = vpack.i.b16 %v1286, %v1285
      %v1290 = vunpack.c.l.s4 1983009808
      %v1291 = vunpack.c.0.s8 %v1290
      %v1292 = vlaneseq
      %v1293 = vshrl.u32 %v1292, 7
      %v1294 = vsub.s32 %v1291, %v1293
      %v1295 = vrot.slane %v1278, %v1294
      %v1298 = vunpack.c.l.s4 1983009808
      %v1299 = vunpack.c.0.s8 %v1298
      %v1300 = vlaneseq
      %v1301 = vshrl.u32 %v1300, 7
      %v1302 = vsub.s32 %v1299, %v1301
      %v1303 = vrot.slane %v1284, %v1302
      %v1304 = vcombine.low %v1295, %v1303
      %v1305 = vcombine.high %v1295, %v1303
      %v1307 = vunpack.c.l.s4 1934713408
      %v1308 = vunpack.c.0.s8 %v1307
      %v1309 = vlaneseq
      %v1310 = vshrl.u32 %v1309, 7
      %v1311 = vsub.s32 %v1308, %v1310
      %v1312 = vrot.slane %v1304, %v1311
      %v1314 = vunpack.c.l.s4 1934713408
      %v1315 = vunpack.c.0.s8 %v1314
      %v1316 = vlaneseq
      %v1317 = vshrl.u32 %v1316, 7
      %v1318 = vsub.s32 %v1315, %v1317
      %v1319 = vrot.slane %v1305, %v1318
      %v1320 = vcombine.high %v1312, 0
      %v1321 = vcombine.high %v1319, 0
      %v1324 = vunpack.c.l.s4 1983009808
      %v1325 = vunpack.c.0.s8 %v1324
      %v1326 = vlaneseq
      %v1327 = vshrl.u32 %v1326, 7
      %v1328 = vsub.s32 %v1325, %v1327
      %v1329 = vrot.slane %v1281, %v1328
      %v1332 = vunpack.c.l.s4 1983009808
      %v1333 = vunpack.c.0.s8 %v1332
      %v1334 = vlaneseq
      %v1335 = vshrl.u32 %v1334, 7
      %v1336 = vsub.s32 %v1333, %v1335
      %v1337 = vrot.slane %v1287, %v1336
      %v1338 = vcombine.low %v1329, %v1337
      %v1339 = vcombine.high %v1329, %v1337
      %v1341 = vunpack.c.l.s4 1934713408
      %v1342 = vunpack.c.0.s8 %v1341
      %v1343 = vlaneseq
      %v1344 = vshrl.u32 %v1343, 7
      %v1345 = vsub.s32 %v1342, %v1344
      %v1346 = vrot.slane %v1338, %v1345
      %v1348 = vunpack.c.l.s4 1934713408
      %v1349 = vunpack.c.0.s8 %v1348
      %v1350 = vlaneseq
      %v1351 = vshrl.u32 %v1350, 7
      %v1352 = vsub.s32 %v1349, %v1351
      %v1353 = vrot.slane %v1339, %v1352
      %v1354 = vcombine.high %v1346, 0
      %v1355 = vcombine.high %v1353, 0
      %v1357 = vunpack.c.l.b16 %v1346
      %v1358 = vpack.c.b16 %v1357, %v1357
      %1359 = vrot.lane.b32.xlu0 %v1358, 8
      %v1360 = vpop.permute.xlu0 %1359
      %v1362 = vunpack.c.l.b16 %v1320
      %v1363 = vpack.c.b16 %v1362, %v1362
      %1364 = vrot.lane.b32.xlu0 %v1363, 16
      %v1365 = vpop.permute.xlu0 %1364
      %v1367 = vunpack.c.l.b16 %v1354
      %v1368 = vpack.c.b16 %v1367, %v1367
      %1369 = vrot.lane.b32.xlu0 %v1368, 24
      %v1370 = vpop.permute.xlu0 %1369
      %v1372 = vunpack.c.l.b16 %v1319
      %v1373 = vpack.c.b16 %v1372, %v1372
      %1374 = vrot.lane.b32.xlu0 %v1373, 32
      %v1375 = vpop.permute.xlu0 %1374
      %v1377 = vunpack.c.l.b16 %v1353
      %v1378 = vpack.c.b16 %v1377, %v1377
      %1379 = vrot.lane.b32.xlu0 %v1378, 40
      %v1380 = vpop.permute.xlu0 %1379
      %v1382 = vunpack.c.l.b16 %v1321
      %v1383 = vpack.c.b16 %v1382, %v1382
      %1384 = vrot.lane.b32.xlu0 %v1383, 48
      %v1385 = vpop.permute.xlu0 %1384
      %v1387 = vunpack.c.l.b16 %v1355
      %v1388 = vpack.c.b16 %v1387, %v1387
      %1389 = vrot.lane.b32.xlu0 %v1388, 56
      %v1390 = vpop.permute.xlu0 %1389
      %v1393 = vsel %vm328, %v1312, %v1360
      %v1395 = vsel %vm332, %v1393, %v1365
      %v1397 = vsel %vm335, %v1395, %v1370
      %v1399 = vsel %vm338, %v1397, %v1375
      %v1401 = vsel %vm341, %v1399, %v1380
      %v1403 = vsel %vm344, %v1401, %v1385
      %v1405 = vsel %vm347, %v1403, %v1390
      %v1407 = vunpack.c.l.b16 %v1405
      %v1408 = vpack.c.b16 %v1407, %v1407
      %v1409 = vrot.slane %v1408, 6
      %1411 = vst.msk [vmem:[#allocation2 + $0xc] sm:$0xc] %vm500, %v1409
      %1412 = vrot.lane.b32.xlu0 %v1123, 126
      %v1413 = vpop.permute.xlu0 %1412
      %1414 = vrot.lane.b32.xlu0 %v1127, 126
      %v1415 = vpop.permute.xlu0 %1414
      %1416 = vrot.lane.b32.xlu0 %v1131, 126
      %v1417 = vpop.permute.xlu0 %1416
      %1418 = vrot.lane.b32.xlu0 %v1135, 126
      %v1419 = vpop.permute.xlu0 %1418
      %v1422 = vpack.i.b16 %v1415, %v1413
      %v1423 = vshrl.u32 %v1413, 16
      %v1424 = vshrl.u32 %v1415, 16
      %v1425 = vpack.i.b16 %v1424, %v1423
      %v1428 = vpack.i.b16 %v1419, %v1417
      %v1429 = vshrl.u32 %v1417, 16
      %v1430 = vshrl.u32 %v1419, 16
      %v1431 = vpack.i.b16 %v1430, %v1429
      %v1434 = vunpack.c.l.s4 1983009808
      %v1435 = vunpack.c.0.s8 %v1434
      %v1436 = vlaneseq
      %v1437 = vshrl.u32 %v1436, 7
      %v1438 = vsub.s32 %v1435, %v1437
      %v1439 = vrot.slane %v1422, %v1438
      %v1442 = vunpack.c.l.s4 1983009808
      %v1443 = vunpack.c.0.s8 %v1442
      %v1444 = vlaneseq
      %v1445 = vshrl.u32 %v1444, 7
      %v1446 = vsub.s32 %v1443, %v1445
      %v1447 = vrot.slane %v1428, %v1446
      %v1448 = vcombine.low %v1439, %v1447
      %v1449 = vcombine.high %v1439, %v1447
      %v1451 = vunpack.c.l.s4 1934713408
      %v1452 = vunpack.c.0.s8 %v1451
      %v1453 = vlaneseq
      %v1454 = vshrl.u32 %v1453, 7
      %v1455 = vsub.s32 %v1452, %v1454
      %v1456 = vrot.slane %v1448, %v1455
      %v1458 = vunpack.c.l.s4 1934713408
      %v1459 = vunpack.c.0.s8 %v1458
      %v1460 = vlaneseq
      %v1461 = vshrl.u32 %v1460, 7
      %v1462 = vsub.s32 %v1459, %v1461
      %v1463 = vrot.slane %v1449, %v1462
      %v1464 = vcombine.high %v1456, 0
      %v1465 = vcombine.high %v1463, 0
      %v1468 = vunpack.c.l.s4 1983009808
      %v1469 = vunpack.c.0.s8 %v1468
      %v1470 = vlaneseq
      %v1471 = vshrl.u32 %v1470, 7
      %v1472 = vsub.s32 %v1469, %v1471
      %v1473 = vrot.slane %v1425, %v1472
      %v1476 = vunpack.c.l.s4 1983009808
      %v1477 = vunpack.c.0.s8 %v1476
      %v1478 = vlaneseq
      %v1479 = vshrl.u32 %v1478, 7
      %v1480 = vsub.s32 %v1477, %v1479
      %v1481 = vrot.slane %v1431, %v1480
      %v1482 = vcombine.low %v1473, %v1481
      %v1483 = vcombine.high %v1473, %v1481
      %v1485 = vunpack.c.l.s4 1934713408
      %v1486 = vunpack.c.0.s8 %v1485
      %v1487 = vlaneseq
      %v1488 = vshrl.u32 %v1487, 7
      %v1489 = vsub.s32 %v1486, %v1488
      %v1490 = vrot.slane %v1482, %v1489
      %v1492 = vunpack.c.l.s4 1934713408
      %v1493 = vunpack.c.0.s8 %v1492
      %v1494 = vlaneseq
      %v1495 = vshrl.u32 %v1494, 7
      %v1496 = vsub.s32 %v1493, %v1495
      %v1497 = vrot.slane %v1483, %v1496
      %v1498 = vcombine.high %v1490, 0
      %v1499 = vcombine.high %v1497, 0
      %v1501 = vunpack.c.l.b16 %v1490
      %v1502 = vpack.c.b16 %v1501, %v1501
      %1503 = vrot.lane.b32.xlu0 %v1502, 8
      %v1504 = vpop.permute.xlu0 %1503
      %v1506 = vunpack.c.l.b16 %v1464
      %v1507 = vpack.c.b16 %v1506, %v1506
      %1508 = vrot.lane.b32.xlu0 %v1507, 16
      %v1509 = vpop.permute.xlu0 %1508
      %v1511 = vunpack.c.l.b16 %v1498
      %v1512 = vpack.c.b16 %v1511, %v1511
      %1513 = vrot.lane.b32.xlu0 %v1512, 24
      %v1514 = vpop.permute.xlu0 %1513
      %v1516 = vunpack.c.l.b16 %v1463
      %v1517 = vpack.c.b16 %v1516, %v1516
      %1518 = vrot.lane.b32.xlu0 %v1517, 32
      %v1519 = vpop.permute.xlu0 %1518
      %v1521 = vunpack.c.l.b16 %v1497
      %v1522 = vpack.c.b16 %v1521, %v1521
      %1523 = vrot.lane.b32.xlu0 %v1522, 40
      %v1524 = vpop.permute.xlu0 %1523
      %v1526 = vunpack.c.l.b16 %v1465
      %v1527 = vpack.c.b16 %v1526, %v1526
      %1528 = vrot.lane.b32.xlu0 %v1527, 48
      %v1529 = vpop.permute.xlu0 %1528
      %v1531 = vunpack.c.l.b16 %v1499
      %v1532 = vpack.c.b16 %v1531, %v1531
      %1533 = vrot.lane.b32.xlu0 %v1532, 56
      %v1534 = vpop.permute.xlu0 %1533
      %v1537 = vsel %vm328, %v1456, %v1504
      %v1539 = vsel %vm332, %v1537, %v1509
      %v1541 = vsel %vm335, %v1539, %v1514
      %v1543 = vsel %vm338, %v1541, %v1519
      %v1545 = vsel %vm341, %v1543, %v1524
      %v1547 = vsel %vm344, %v1545, %v1529
      %v1549 = vsel %vm347, %v1547, %v1534
      %1551 = vst.msk [vmem:[#allocation2 + $0x10] sm:$0x3] %vm351, %v1549
      %v1552 = vld [vmem:[%s1] sm:$0xf]
      %v1553 = vld [vmem:[#allocation2] sm:$0xf]
      %v1554 = vld [vmem:[#allocation2 + $0x4] sm:$0xf]
      %v1555 = vld [vmem:[#allocation2 + $0x8] sm:$0xf]
      %v1556 = vld [vmem:[#allocation2 + $0xc] sm:$0xf]
      %v1557 = vld [vmem:[#allocation2 + $0x10] sm:$0x3]
      %v1563 = vunpack.c.l.b16 %v1553
      %v1564 = vunpack.c.l.b16 %v1554
      %v1565 = vunpack.c.l.b16 %v1555
      %v1566 = vunpack.c.l.b16 %v1556
      %v1567 = vunpack.c.l.b16 %v1557
      %v1568 = vpack.c.b16 %v1564, %v1563
      %v1569 = vpack.c.b16 %v1566, %v1565
      %v1570 = vpack.c.b16 %v1567, %v1567
      %vm1573 = vcmask 293888
      %v1575 = vsel %vm1573, %v1552, 0
      %vm1577 = vcmask 1041408
      %v1579 = vsel %vm1577, %v1570, 0
      %1581 = vmatprep.subr.bf16.mxu0 0
      %1582 = vmatpush1.bf16.msra.mxu0 0
      %1583 = vmatprep.subr.bf16.mxu0 0
      %1584 = vmatpush1.bf16.msra.mxu0 0
      %1585 = vmatprep.subr.bf16.mxu0 0
      %1586 = vmatpush1.bf16.msra.mxu0 0
      %1587 = vmatprep.subr.bf16.mxu0 0
      %1588 = vmatpush1.bf16.msra.mxu0 0
      %1589 = vmatprep.subr.bf16.mxu0 0
      %1590 = vmatpush1.bf16.msra.mxu0 0
      %1591 = vmatprep.subr.bf16.mxu0 0
      %1592 = vmatpush1.bf16.msra.mxu0 %v1579
      %1593 = vmatprep.subr.bf16.mxu0 0
      %1594 = vmatpush1.bf16.msra.mxu0 %v1569
      %1595 = vmatprep.subr.bf16.mxu0 0
      %1596 = vmatpush1.bf16.msra.mxu0 %v1568
      %1597 = vmatprep.subr.bf16.mxu0 0
      %1598 = vmatpush2.bf16.msra.mxu0 0
      %1599 = vmatprep.subr.bf16.mxu0 0
      %1600 = vmatpush2.bf16.msra.mxu0 0
      %1601 = vmatprep.subr.bf16.mxu0 0
      %1602 = vmatpush2.bf16.msra.mxu0 0
      %1603 = vmatprep.subr.bf16.mxu0 0
      %1604 = vmatpush2.bf16.msra.mxu0 0
      %1605 = vmatprep.subr.bf16.mxu0 0
      %1606 = vmatpush2.bf16.msra.mxu0 0
      %1607 = vmatprep.subr.bf16.mxu0 0
      %1608 = vmatpush2.bf16.msra.mxu0 0
      %1609 = vmatprep.subr.bf16.mxu0 0
      %1610 = vmatpush2.bf16.msra.mxu0 0
      %1611 = vmatprep.subr.bf16.mxu0 0
      %1612 = vmatpush2.bf16.msra.mxu0 0
      %1613 = vmatprep.mubr.bf16.mxu0 0
      %1614 = vmatmul.mubr.bf16.gmra.mxu0 %v1575
      %v1615 = vpop.f32.mrf.mxu0
      %v1616 = vadd.f32 0.0, %v1615
      %v1617 = vpop.f32.mrf.mxu0
      %v1618 = vpop.f32.mrf.mxu0
      %v1619 = vpop.f32.mrf.mxu0
      %1620 = vdwg.mxu0
      %v1621 = vld [vmem:[%s187] sm:$0xff]
      %vm1622 = vcmask 523264
      %v1623 = vsel %vm1622, %v1616, 0.0
      %1624 = vadd.xlane.f32.xlu0 %v1623
      %v1625 = vpop.xlane.xlu0 %1624
      %v1626 = vadd.f32 %v1621, %v1625
      %vm1627 = vcmask 7168
      %1628 = vst.msk [vmem:[%s187] sm:$0xff] %vm1627, %v1626
      %v1629 = vld [vmem:[%s191] sm:$0xff]
      %v1630 = vmul.f32 %v1616, %v1616
      %v1631 = vsel %vm1622, %v1630, 0.0
      %1632 = vadd.xlane.f32.xlu0 %v1631
      %v1633 = vpop.xlane.xlu0 %1632
      %v1634 = vadd.f32 %v1629, %v1633
      %1635 = vst.msk [vmem:[%s191] sm:$0xff] %vm1627, %v1634
      %p1636 = scmp.lt.s32.totalorder %s19, 1
      %s1637 = scalar_select %p1636, %s19, 1
      %s1638 = smul.addr %s1637, 8
      %s1639 = scalar_lea.vmem %s2, %s1638
      %p1640 = scmp.lt.s32.totalorder %s19, 1
      %s1641 = scalar_select %p1640, %s19, 1
      %s1642 = smul.addr %s1641, 8
      %s1643 = scalar_lea.vmem %s3, %s1642
      // Predicated region
      $region33: #{first_octave_cb.6} parent=27 // pred_check
        %p1644 = pneg %p92
      $region34: #{first_octave_cb.6} parent=27 // pred_check_branch
        %1646 = sbr.rel (%p1644) target = $region36
      $region35: #{first_octave_cb.6} parent=27 // pred_region
        _
      $region36: #{first_octave_cb.6} parent=27 // pred_fallthru
        _
      // Predicated region
      $region37: #{first_octave_cb.6} parent=27 // pred_check
        %p1647 = pneg %p118
      $region38: #{first_octave_cb.6} parent=27 // pred_check_branch
        %1649 = sbr.rel (%p1647) target = $region40
      $region39: #{first_octave_cb.6} parent=27 // pred_region
        _
      $region40: #{first_octave_cb.6} parent=27 // pred_fallthru
        _
    $region28: #{first_octave_cb.6} parent=5 // pred_fallthru
      _
    %p1650 = scmp.le.s32.totalorder 2, %s10
    // Predicated region
    $region41: #{first_octave_cb.6} parent=5 // pred_check
      %p1651 = pneg %p1650
    $region42: #{first_octave_cb.6} parent=5 // pred_check_branch
      %1653 = sbr.rel (%p1651) target = $region44
    $region43: #{first_octave_cb.6} parent=5 // pred_region
      %s1654 = ssub.s32 %s10, 2
      // Predicated region
      $region45: #{first_octave_cb.6} parent=43 // pred_check
        %p1655 = pneg %p98
      $region46: #{first_octave_cb.6} parent=43 // pred_check_branch
        %1657 = sbr.rel (%p1655) target = $region48
      $region47: #{first_octave_cb.6} parent=43 // pred_region
        %p1658 = scmp.lt.s32.totalorder %s21, 1
        %s1659 = scalar_select %p1658, %s21, 1
        %s1660 = smul.addr %s1659, 8
        %s1661 = scalar_lea.vmem %s2, %s1660
      $region48: #{first_octave_cb.6} parent=43 // pred_fallthru
        _
      // Predicated region
      $region49: #{first_octave_cb.6} parent=43 // pred_check
        %p1662 = pneg %p124
      $region50: #{first_octave_cb.6} parent=43 // pred_check_branch
        %1664 = sbr.rel (%p1662) target = $region52
      $region51: #{first_octave_cb.6} parent=43 // pred_region
        %p1665 = scmp.lt.s32.totalorder %s21, 1
        %s1666 = scalar_select %p1665, %s21, 1
        %s1667 = smul.addr %s1666, 8
        %s1668 = scalar_lea.vmem %s3, %s1667
      $region52: #{first_octave_cb.6} parent=43 // pred_fallthru
        _
    $region44: #{first_octave_cb.6} parent=5 // pred_fallthru
      _
  $region6: #{first_octave_cb.6} parent=0 // loop_footer
    %s14 = sadd.s32 1, %s10
  $region7: #{first_octave_cb.6} parent=0 // loop_footer_branch
    %9 = sbr.rel target = $region3
  $region8: #{first_octave_cb.6} parent=0 // loop_exit
    _

// kernel: first_octave_cb.7
$region0: #{first_octave_cb.7}
  #allocation0 [shape = 'u32[]', space=smem, size = 0x4, offset = 0x4, fixed_abs, tag = 'smem constant byte address 0x4 - core index']
  #allocation1 [shape = 'u32[144,128]{1,0:T(1,128)}', space=vmem, size = 0x12000, scoped, tag = 'internal scratch']
  #allocation2 [shape = 'bf16[36,64]{1,0:T(8,128)(2,1)}', space=vmem, size = 0x2800, scoped, tag = 'scratch operand']
  %s0 = inlined_call_operand.vmem [shape: bf16[2,4,10,10], index: 0, kind: input, shape index: {}]
  %s1 = inlined_call_operand.vmem [shape: bf16[8,36], index: 1, kind: input, shape index: {}]
  %s2 = inlined_call_operand.vmem [shape: f32[8,1], index: 2, kind: input, shape index: {}]
  %s3 = inlined_call_operand.vmem [shape: f32[8,1], index: 3, kind: input, shape index: {}]
  %s4 = inlined_call_operand.vmem [shape: f32[2,8,64], index: 4, kind: output, shape index: {}]
  %s5 = sld [smem:[#allocation0]]
  $region49: #{first_octave_cb.7} parent=0
    _
  %s7 = ssub.s32 1, %s5
  %s8 = scalar_select 0, %s7, %s5
  loop: start=0, step=1, limit=4
  $region2: #{first_octave_cb.7} parent=0 // loop_pre_header
    _
  $region3: #{first_octave_cb.7} parent=0 // loop_header
    %s10 = sphi 0, %s14
    %p11 = scmp.ge.s32.totalorder %s10, 4
    %s17 = sphi 0, %s29
    %s18 = sphi 0, %s25
    %s19 = sphi 0, %s17
    %s20 = sphi 0, %s18
    %s21 = sphi 0, %s19
    %s22 = sphi 0, %s20
    %s32 = sphi 0, %s34
    %s35 = sphi 0, %s32
    %s36 = sphi 0, %s35
    %s52 = sphi 0, %s36
    %s56 = sphi 0, %s56
    %s58 = sphi 0, %s56
    %s59 = sphi 0, %s58
    %s73 = sphi 0, %s59
    %s77 = sphi 0, %s77
    %s79 = sphi 0, %s77
    %s80 = sphi 0, %s79
    %s94 = sphi 0, %s80
    %s98 = sphi 0, %s98
    %s100 = sphi 0, %s98
    %s101 = sphi 0, %s100
    %s115 = sphi 0, %s101
    %s123 = sphi 0, %s125
    %s126 = sphi 0, %s123
    %s127 = sphi 0, %s126
    %s143 = sphi 0, %s127
  $region4: #{first_octave_cb.7} parent=0 // loop_header_branch
    %13 = sbr.rel (%p11) target = $region8
  $region5: #{first_octave_cb.7} parent=0 // loop_body
    %s15 = ssub.s32 %s10, 1
    %s16 = ssub.s32 %s10, 2
    %s23 = sadd.s32 1, %s18
    %p24 = scmp.ge.s32.totalorder %s23, 1
    %s25 = scalar_select %p24, 0, %s23
    %s26 = sadd.s32 1, %s17
    %s27 = scalar_select %p24, %s26, %s17
    %p28 = scmp.ge.s32.totalorder %s27, 2
    %s29 = scalar_select %p28, 0, %s27
    %s30 = ssub.s32 %s17, %s29
    %p31 = scmp.eq.s32.totalorder %s30, 0
    %s33 = sadd.s32 %s32, 1
    %s34 = scalar_select %p31, %s32, %s33
    %p37 = pneg %p31
    %p38 = scmp.eq.s32.totalorder %s10, 1
    %p39 = por %p37, %p38
    %p40 = scmp.ne.s32.totalorder %s32, %s35
    %p41 = scmp.eq.s32.totalorder %s10, 0
    %p42 = por %p40, %p41
    %p43 = scmp.ne.s32.totalorder %s32, %s35
    %p44 = scmp.eq.s32.totalorder %s15, 1
    %p45 = por %p43, %p44
    %p46 = scmp.ne.s32.totalorder %s35, %s36
    %p47 = scmp.eq.s32.totalorder %s15, 0
    %p48 = por %p46, %p47
    %p49 = scmp.ne.s32.totalorder %s35, %s36
    %p50 = scmp.eq.s32.totalorder %s16, 1
    %p51 = por %p49, %p50
    %p53 = scmp.ne.s32.totalorder %s36, %s52
    %p54 = scmp.eq.s32.totalorder %s16, 0
    %p55 = por %p53, %p54
    %s57 = sadd.s32 %s56, 1
    %p60 = scmp.eq.s32.totalorder %s10, 1
    %p61 = scmp.ne.s32.totalorder %s56, %s58
    %p62 = scmp.eq.s32.totalorder %s10, 0
    %p63 = por %p61, %p62
    %p64 = scmp.ne.s32.totalorder %s56, %s58
    %p65 = scmp.eq.s32.totalorder %s15, 1
    %p66 = por %p64, %p65
    %p67 = scmp.ne.s32.totalorder %s58, %s59
    %p68 = scmp.eq.s32.totalorder %s15, 0
    %p69 = por %p67, %p68
    %p70 = scmp.ne.s32.totalorder %s58, %s59
    %p71 = scmp.eq.s32.totalorder %s16, 1
    %p72 = por %p70, %p71
    %p74 = scmp.ne.s32.totalorder %s59, %s73
    %p75 = scmp.eq.s32.totalorder %s16, 0
    %p76 = por %p74, %p75
    %s78 = sadd.s32 %s77, 1
    %p81 = scmp.eq.s32.totalorder %s10, 1
    %p82 = scmp.ne.s32.totalorder %s77, %s79
    %p83 = scmp.eq.s32.totalorder %s10, 0
    %p84 = por %p82, %p83
    %p85 = scmp.ne.s32.totalorder %s77, %s79
    %p86 = scmp.eq.s32.totalorder %s15, 1
    %p87 = por %p85, %p86
    %p88 = scmp.ne.s32.totalorder %s79, %s80
    %p89 = scmp.eq.s32.totalorder %s15, 0
    %p90 = por %p88, %p89
    %p91 = scmp.ne.s32.totalorder %s79, %s80
    %p92 = scmp.eq.s32.totalorder %s16, 1
    %p93 = por %p91, %p92
    %p95 = scmp.ne.s32.totalorder %s80, %s94
    %p96 = scmp.eq.s32.totalorder %s16, 0
    %p97 = por %p95, %p96
    %s99 = sadd.s32 %s98, 1
    %p102 = scmp.eq.s32.totalorder %s10, 1
    %p103 = scmp.ne.s32.totalorder %s98, %s100
    %p104 = scmp.eq.s32.totalorder %s10, 0
    %p105 = por %p103, %p104
    %p106 = scmp.ne.s32.totalorder %s98, %s100
    %p107 = scmp.eq.s32.totalorder %s15, 1
    %p108 = por %p106, %p107
    %p109 = scmp.ne.s32.totalorder %s100, %s101
    %p110 = scmp.eq.s32.totalorder %s15, 0
    %p111 = por %p109, %p110
    %p112 = scmp.ne.s32.totalorder %s100, %s101
    %p113 = scmp.eq.s32.totalorder %s16, 1
    %p114 = por %p112, %p113
    %p116 = scmp.ne.s32.totalorder %s101, %s115
    %p117 = scmp.eq.s32.totalorder %s16, 0
    %p118 = por %p116, %p117
    %s119 = ssub.s32 %s17, %s29
    %s120 = ssub.s32 %s18, %s25
    %s121 = sor.u32 %s119, %s120
    %p122 = scmp.eq.s32.totalorder %s121, 0
    %s124 = sadd.s32 %s123, 1
    %s125 = scalar_select %p122, %s123, %s124
    %p128 = pneg %p122
    %p129 = scmp.eq.s32.totalorder %s10, 1
    %p130 = por %p128, %p129
    %p131 = scmp.ne.s32.totalorder %s123, %s126
    %p132 = scmp.eq.s32.totalorder %s10, 0
    %p133 = por %p131, %p132
    %p134 = scmp.ne.s32.totalorder %s123, %s126
    %p135 = scmp.eq.s32.totalorder %s15, 1
    %p136 = por %p134, %p135
    %p137 = scmp.ne.s32.totalorder %s126, %s127
    %p138 = scmp.eq.s32.totalorder %s15, 0
    %p139 = por %p137, %p138
    %p140 = scmp.ne.s32.totalorder %s126, %s127
    %p141 = scmp.eq.s32.totalorder %s16, 1
    %p142 = por %p140, %p141
    %p144 = scmp.ne.s32.totalorder %s127, %s143
    %p145 = scmp.eq.s32.totalorder %s16, 0
    %p146 = por %p144, %p145
    %p147 = scmp.le.s32.totalorder 1, %s10
    %p148 = scmp.lt.s32.totalorder %s10, 3
    %p149 = pnand %p147, %p148
    %p150 = pneg %p149
    // Predicated region
    $region9: #{first_octave_cb.7} parent=5 // pred_check
      _
    $region10: #{first_octave_cb.7} parent=5 // pred_check_branch
      %152 = sbr.rel (%p149) target = $region12
    $region11: #{first_octave_cb.7} parent=5 // pred_region
      %s153 = ssub.s32 %s10, 1
      // Predicated region
      $region13: #{first_octave_cb.7} parent=11 // pred_check
        %p154 = pneg %p69
      $region14: #{first_octave_cb.7} parent=11 // pred_check_branch
        %156 = sbr.rel (%p154) target = $region16
      $region15: #{first_octave_cb.7} parent=11 // pred_region
        _
      $region16: #{first_octave_cb.7} parent=11 // pred_fallthru
        _
      // Predicated region
      $region17: #{first_octave_cb.7} parent=11 // pred_check
        %p157 = pneg %p90
      $region18: #{first_octave_cb.7} parent=11 // pred_check_branch
        %159 = sbr.rel (%p157) target = $region20
      $region19: #{first_octave_cb.7} parent=11 // pred_region
        _
      $region20: #{first_octave_cb.7} parent=11 // pred_fallthru
        _
      // Predicated region
      $region21: #{first_octave_cb.7} parent=11 // pred_check
        %p160 = pneg %p111
      $region22: #{first_octave_cb.7} parent=11 // pred_check_branch
        %162 = sbr.rel (%p160) target = $region24
      $region23: #{first_octave_cb.7} parent=11 // pred_region
        _
      $region24: #{first_octave_cb.7} parent=11 // pred_fallthru
        _
    $region12: #{first_octave_cb.7} parent=5 // pred_fallthru
      _
    %p163 = scmp.lt.s32.totalorder %s10, 2
    // Predicated region
    $region25: #{first_octave_cb.7} parent=5 // pred_check
      %p164 = pneg %p163
    $region26: #{first_octave_cb.7} parent=5 // pred_check_branch
      %166 = sbr.rel (%p164) target = $region28
    $region27: #{first_octave_cb.7} parent=5 // pred_region
      // Predicated region
      $region29: #{first_octave_cb.7} parent=27 // pred_check
        %p167 = pneg %p42
      $region30: #{first_octave_cb.7} parent=27 // pred_check_branch
        %169 = sbr.rel (%p167) target = $region32
      $region31: #{first_octave_cb.7} parent=27 // pred_region
        %p170 = scmp.lt.s32.totalorder %s17, 1
        %s171 = scalar_select %p170, %s17, 1
        %s172 = smul.addr %s171, 8
        %s173 = smul.addr %s172, 4
        %s174 = scalar_lea.vmem %s0, %s173
      $region32: #{first_octave_cb.7} parent=27 // pred_fallthru
        _
    $region28: #{first_octave_cb.7} parent=5 // pred_fallthru
      _
    %p175 = scmp.le.s32.totalorder 1, %s10
    %p176 = scmp.lt.s32.totalorder %s10, 3
    %p177 = pnand %p175, %p176
    %p178 = pneg %p177
    // Predicated region
    $region33: #{first_octave_cb.7} parent=5 // pred_check
      _
    $region34: #{first_octave_cb.7} parent=5 // pred_check_branch
      %180 = sbr.rel (%p177) target = $region36
    $region35: #{first_octave_cb.7} parent=5 // pred_region
      %s181 = ssub.s32 %s10, 1
      %p182 = scmp.lt.s32.totalorder %s19, 1
      %s183 = scalar_select %p182, %s19, 1
      %s184 = smul.addr %s183, 8
      %s185 = smul.addr %s184, 4
      %s186 = scalar_lea.vmem %s0, %s185
      %p187 = pneg %p48
      %p188 = pneg %p45
      %p189 = pneg %p69
      %p190 = pneg %p66
      %p191 = pneg %p90
      %p192 = pneg %p87
      %p193 = pneg %p111
      %p194 = pneg %p108
      %p195 = pneg %p139
      %p196 = pneg %p136
      %p197 = scmp.lt.s32.totalorder %s19, 1
      %s198 = scalar_select %p197, %s19, 1
      %p199 = scmp.lt.s32.totalorder %s20, 0
      %s200 = scalar_select %p199, %s20, 0
      %s201 = sadd.s32 %s200, %s198
      %s202 = smul.addr %s201, 8
      %s203 = scalar_lea.vmem %s4, %s202
      %p204 = scmp.lt.s32.totalorder %s19, 1
      %s205 = scalar_select %p204, %s19, 1
      %s206 = smul.addr %s205, 8
      %s207 = smul.addr %s206, 4
      %s208 = scalar_lea.vmem %s0, %s207
      %p209 = scmp.lt.s32.totalorder %s19, 1
      %s210 = scalar_select %p209, %s19, 1
      %p211 = scmp.lt.s32.totalorder %s20, 0
      %s212 = scalar_select %p211, %s20, 0
      %s213 = sadd.s32 %s212, %s210
      %s214 = smul.addr %s213, 8
      %s215 = scalar_lea.vmem %s4, %s214
      %s217 = smul.u32 %s20, 8
      %s218 = sshra.s32 %s217, 3
      %s219 = sand.u32 %s217, 7
      %s220 = smul.addr %s218, 4
      %s221 = scalar_lea.vmem %s208, %s220
      %v222 = vld [vmem:[%s221] sm:$0xf]
      %v223 = vld [vmem:[%s221 + $0x4] sm:$0x1]
      %v224 = vld [vmem:[%s221 + $0x8] sm:$0xf]
      %v225 = vld [vmem:[%s221 + $0xc] sm:$0x1]
      %v226 = vld [vmem:[%s221 + $0x10] sm:$0xf]
      %v227 = vld [vmem:[%s221 + $0x14] sm:$0x1]
      %v228 = vld [vmem:[%s221 + $0x18] sm:$0xf]
      %v229 = vld [vmem:[%s221 + $0x1c] sm:$0x1]
      %v232 = vpack.i.b16 %v224, %v222
      %v233 = vshrl.u32 %v222, 16
      %v234 = vshrl.u32 %v224, 16
      %v235 = vpack.i.b16 %v234, %v233
      %v238 = vpack.i.b16 %v228, %v226
      %v239 = vshrl.u32 %v226, 16
      %v240 = vshrl.u32 %v228, 16
      %v241 = vpack.i.b16 %v240, %v239
      %v244 = vunpack.c.l.s4 1983009808
      %v245 = vunpack.c.0.s8 %v244
      %v246 = vlaneseq
      %v247 = vshrl.u32 %v246, 7
      %v248 = vsub.s32 %v245, %v247
      %v249 = vrot.slane %v232, %v248
      %v252 = vunpack.c.l.s4 1983009808
      %v253 = vunpack.c.0.s8 %v252
      %v254 = vlaneseq
      %v255 = vshrl.u32 %v254, 7
      %v256 = vsub.s32 %v253, %v255
      %v257 = vrot.slane %v238, %v256
      %v258 = vcombine.low %v249, %v257
      %v259 = vcombine.high %v249, %v257
      %v261 = vunpack.c.l.s4 1934713408
      %v262 = vunpack.c.0.s8 %v261
      %v263 = vlaneseq
      %v264 = vshrl.u32 %v263, 7
      %v265 = vsub.s32 %v262, %v264
      %v266 = vrot.slane %v258, %v265
      %v268 = vunpack.c.l.s4 1934713408
      %v269 = vunpack.c.0.s8 %v268
      %v270 = vlaneseq
      %v271 = vshrl.u32 %v270, 7
      %v272 = vsub.s32 %v269, %v271
      %v273 = vrot.slane %v259, %v272
      %v274 = vcombine.high %v266, 0
      %v275 = vcombine.high %v273, 0
      %v278 = vunpack.c.l.s4 1983009808
      %v279 = vunpack.c.0.s8 %v278
      %v280 = vlaneseq
      %v281 = vshrl.u32 %v280, 7
      %v282 = vsub.s32 %v279, %v281
      %v283 = vrot.slane %v235, %v282
      %v286 = vunpack.c.l.s4 1983009808
      %v287 = vunpack.c.0.s8 %v286
      %v288 = vlaneseq
      %v289 = vshrl.u32 %v288, 7
      %v290 = vsub.s32 %v287, %v289
      %v291 = vrot.slane %v241, %v290
      %v292 = vcombine.low %v283, %v291
      %v293 = vcombine.high %v283, %v291
      %v295 = vunpack.c.l.s4 1934713408
      %v296 = vunpack.c.0.s8 %v295
      %v297 = vlaneseq
      %v298 = vshrl.u32 %v297, 7
      %v299 = vsub.s32 %v296, %v298
      %v300 = vrot.slane %v292, %v299
      %v302 = vunpack.c.l.s4 1934713408
      %v303 = vunpack.c.0.s8 %v302
      %v304 = vlaneseq
      %v305 = vshrl.u32 %v304, 7
      %v306 = vsub.s32 %v303, %v305
      %v307 = vrot.slane %v293, %v306
      %v308 = vcombine.high %v300, 0
      %v309 = vcombine.high %v307, 0
      %v311 = vunpack.c.l.b16 %v300
      %v312 = vpack.c.b16 %v311, %v311
      %313 = vrot.lane.b32.xlu0 %v312, 8
      %v314 = vpop.permute.xlu0 %313
      %v316 = vunpack.c.l.b16 %v274
      %v317 = vpack.c.b16 %v316, %v316
      %318 = vrot.lane.b32.xlu0 %v317, 16
      %v319 = vpop.permute.xlu0 %318
      %v321 = vunpack.c.l.b16 %v308
      %v322 = vpack.c.b16 %v321, %v321
      %323 = vrot.lane.b32.xlu0 %v322, 24
      %v324 = vpop.permute.xlu0 %323
      %v326 = vunpack.c.l.b16 %v273
      %v327 = vpack.c.b16 %v326, %v326
      %328 = vrot.lane.b32.xlu0 %v327, 32
      %v329 = vpop.permute.xlu0 %328
      %v331 = vunpack.c.l.b16 %v307
      %v332 = vpack.c.b16 %v331, %v331
      %333 = vrot.lane.b32.xlu0 %v332, 40
      %v334 = vpop.permute.xlu0 %333
      %v336 = vunpack.c.l.b16 %v275
      %v337 = vpack.c.b16 %v336, %v336
      %338 = vrot.lane.b32.xlu0 %v337, 48
      %v339 = vpop.permute.xlu0 %338
      %v341 = vunpack.c.l.b16 %v309
      %v342 = vpack.c.b16 %v341, %v341
      %343 = vrot.lane.b32.xlu0 %v342, 56
      %v344 = vpop.permute.xlu0 %343
      %vm345 = vcmask 64512
      %v348 = vsel %vm345, %v266, %v314
      %vm349 = vcmask 130048
      %v351 = vsel %vm349, %v348, %v319
      %vm352 = vcmask 195584
      %v354 = vsel %vm352, %v351, %v324
      %vm355 = vcmask 261120
      %v357 = vsel %vm355, %v354, %v329
      %vm358 = vcmask 326656
      %v360 = vsel %vm358, %v357, %v334
      %vm361 = vcmask 392192
      %v363 = vsel %vm361, %v360, %v339
      %vm364 = vcmask 457728
      %v366 = vsel %vm364, %v363, %v344
      %vm368 = vcmask 517120
      %369 = vst.msk [vmem:[#allocation2] sm:$0x3] %vm368, %v366
      %374 = vrot.lane.b32.xlu0 %v222, 127
      %v375 = vpop.permute.xlu0 %374
      %376 = vrot.lane.b32.xlu0 %v224, 127
      %v377 = vpop.permute.xlu0 %376
      %378 = vrot.lane.b32.xlu0 %v226, 127
      %v379 = vpop.permute.xlu0 %378
      %380 = vrot.lane.b32.xlu0 %v228, 127
      %v381 = vpop.permute.xlu0 %380
      %v384 = vpack.i.b16 %v377, %v375
      %v385 = vshrl.u32 %v375, 16
      %v386 = vshrl.u32 %v377, 16
      %v387 = vpack.i.b16 %v386, %v385
      %v390 = vpack.i.b16 %v381, %v379
      %v391 = vshrl.u32 %v379, 16
      %v392 = vshrl.u32 %v381, 16
      %v393 = vpack.i.b16 %v392, %v391
      %v396 = vunpack.c.l.s4 1983009808
      %v397 = vunpack.c.0.s8 %v396
      %v398 = vlaneseq
      %v399 = vshrl.u32 %v398, 7
      %v400 = vsub.s32 %v397, %v399
      %v401 = vrot.slane %v384, %v400
      %v404 = vunpack.c.l.s4 1983009808
      %v405 = vunpack.c.0.s8 %v404
      %v406 = vlaneseq
      %v407 = vshrl.u32 %v406, 7
      %v408 = vsub.s32 %v405, %v407
      %v409 = vrot.slane %v390, %v408
      %v410 = vcombine.low %v401, %v409
      %v411 = vcombine.high %v401, %v409
      %v413 = vunpack.c.l.s4 1934713408
      %v414 = vunpack.c.0.s8 %v413
      %v415 = vlaneseq
      %v416 = vshrl.u32 %v415, 7
      %v417 = vsub.s32 %v414, %v416
      %v418 = vrot.slane %v410, %v417
      %v420 = vunpack.c.l.s4 1934713408
      %v421 = vunpack.c.0.s8 %v420
      %v422 = vlaneseq
      %v423 = vshrl.u32 %v422, 7
      %v424 = vsub.s32 %v421, %v423
      %v425 = vrot.slane %v411, %v424
      %v426 = vcombine.high %v418, 0
      %v427 = vcombine.high %v425, 0
      %v430 = vunpack.c.l.s4 1983009808
      %v431 = vunpack.c.0.s8 %v430
      %v432 = vlaneseq
      %v433 = vshrl.u32 %v432, 7
      %v434 = vsub.s32 %v431, %v433
      %v435 = vrot.slane %v387, %v434
      %v438 = vunpack.c.l.s4 1983009808
      %v439 = vunpack.c.0.s8 %v438
      %v440 = vlaneseq
      %v441 = vshrl.u32 %v440, 7
      %v442 = vsub.s32 %v439, %v441
      %v443 = vrot.slane %v393, %v442
      %v444 = vcombine.low %v435, %v443
      %v445 = vcombine.high %v435, %v443
      %v447 = vunpack.c.l.s4 1934713408
      %v448 = vunpack.c.0.s8 %v447
      %v449 = vlaneseq
      %v450 = vshrl.u32 %v449, 7
      %v451 = vsub.s32 %v448, %v450
      %v452 = vrot.slane %v444, %v451
      %v454 = vunpack.c.l.s4 1934713408
      %v455 = vunpack.c.0.s8 %v454
      %v456 = vlaneseq
      %v457 = vshrl.u32 %v456, 7
      %v458 = vsub.s32 %v455, %v457
      %v459 = vrot.slane %v445, %v458
      %v460 = vcombine.high %v452, 0
      %v461 = vcombine.high %v459, 0
      %v463 = vunpack.c.l.b16 %v452
      %v464 = vpack.c.b16 %v463, %v463
      %465 = vrot.lane.b32.xlu0 %v464, 8
      %v466 = vpop.permute.xlu0 %465
      %v468 = vunpack.c.l.b16 %v426
      %v469 = vpack.c.b16 %v468, %v468
      %470 = vrot.lane.b32.xlu0 %v469, 16
      %v471 = vpop.permute.xlu0 %470
      %v473 = vunpack.c.l.b16 %v460
      %v474 = vpack.c.b16 %v473, %v473
      %475 = vrot.lane.b32.xlu0 %v474, 24
      %v476 = vpop.permute.xlu0 %475
      %v478 = vunpack.c.l.b16 %v425
      %v479 = vpack.c.b16 %v478, %v478
      %480 = vrot.lane.b32.xlu0 %v479, 32
      %v481 = vpop.permute.xlu0 %480
      %v483 = vunpack.c.l.b16 %v459
      %v484 = vpack.c.b16 %v483, %v483
      %485 = vrot.lane.b32.xlu0 %v484, 40
      %v486 = vpop.permute.xlu0 %485
      %v488 = vunpack.c.l.b16 %v427
      %v489 = vpack.c.b16 %v488, %v488
      %490 = vrot.lane.b32.xlu0 %v489, 48
      %v491 = vpop.permute.xlu0 %490
      %v493 = vunpack.c.l.b16 %v461
      %v494 = vpack.c.b16 %v493, %v493
      %495 = vrot.lane.b32.xlu0 %v494, 56
      %v496 = vpop.permute.xlu0 %495
      %v499 = vsel %vm345, %v418, %v466
      %v501 = vsel %vm349, %v499, %v471
      %v503 = vsel %vm352, %v501, %v476
      %v505 = vsel %vm355, %v503, %v481
      %v507 = vsel %vm358, %v505, %v486
      %v509 = vsel %vm361, %v507, %v491
      %v511 = vsel %vm364, %v509, %v496
      %v513 = vunpack.c.l.b16 %v511
      %v514 = vpack.c.b16 %v513, %v513
      %v515 = vrot.slane %v514, 6
      %vm517 = vcmask 519170
      %518 = vst.msk [vmem:[#allocation2] sm:$0xc] %vm517, %v515
      %519 = vrot.lane.b32.xlu0 %v222, 126
      %v520 = vpop.permute.xlu0 %519
      %521 = vrot.lane.b32.xlu0 %v224, 126
      %v522 = vpop.permute.xlu0 %521
      %523 = vrot.lane.b32.xlu0 %v226, 126
      %v524 = vpop.permute.xlu0 %523
      %525 = vrot.lane.b32.xlu0 %v228, 126
      %v526 = vpop.permute.xlu0 %525
      %v529 = vpack.i.b16 %v522, %v520
      %v530 = vshrl.u32 %v520, 16
      %v531 = vshrl.u32 %v522, 16
      %v532 = vpack.i.b16 %v531, %v530
      %v535 = vpack.i.b16 %v526, %v524
      %v536 = vshrl.u32 %v524, 16
      %v537 = vshrl.u32 %v526, 16
      %v538 = vpack.i.b16 %v537, %v536
      %v541 = vunpack.c.l.s4 1983009808
      %v542 = vunpack.c.0.s8 %v541
      %v543 = vlaneseq
      %v544 = vshrl.u32 %v543, 7
      %v545 = vsub.s32 %v542, %v544
      %v546 = vrot.slane %v529, %v545
      %v549 = vunpack.c.l.s4 1983009808
      %v550 = vunpack.c.0.s8 %v549
      %v551 = vlaneseq
      %v552 = vshrl.u32 %v551, 7
      %v553 = vsub.s32 %v550, %v552
      %v554 = vrot.slane %v535, %v553
      %v555 = vcombine.low %v546, %v554
      %v556 = vcombine.high %v546, %v554
      %v558 = vunpack.c.l.s4 1934713408
      %v559 = vunpack.c.0.s8 %v558
      %v560 = vlaneseq
      %v561 = vshrl.u32 %v560, 7
      %v562 = vsub.s32 %v559, %v561
      %v563 = vrot.slane %v555, %v562
      %v565 = vunpack.c.l.s4 1934713408
      %v566 = vunpack.c.0.s8 %v565
      %v567 = vlaneseq
      %v568 = vshrl.u32 %v567, 7
      %v569 = vsub.s32 %v566, %v568
      %v570 = vrot.slane %v556, %v569
      %v571 = vcombine.high %v563, 0
      %v572 = vcombine.high %v570, 0
      %v575 = vunpack.c.l.s4 1983009808
      %v576 = vunpack.c.0.s8 %v575
      %v577 = vlaneseq
      %v578 = vshrl.u32 %v577, 7
      %v579 = vsub.s32 %v576, %v578
      %v580 = vrot.slane %v532, %v579
      %v583 = vunpack.c.l.s4 1983009808
      %v584 = vunpack.c.0.s8 %v583
      %v585 = vlaneseq
      %v586 = vshrl.u32 %v585, 7
      %v587 = vsub.s32 %v584, %v586
      %v588 = vrot.slane %v538, %v587
      %v589 = vcombine.low %v580, %v588
      %v590 = vcombine.high %v580, %v588
      %v592 = vunpack.c.l.s4 1934713408
      %v593 = vunpack.c.0.s8 %v592
      %v594 = vlaneseq
      %v595 = vshrl.u32 %v594, 7
      %v596 = vsub.s32 %v593, %v595
      %v597 = vrot.slane %v589, %v596
      %v599 = vunpack.c.l.s4 1934713408
      %v600 = vunpack.c.0.s8 %v599
      %v601 = vlaneseq
      %v602 = vshrl.u32 %v601, 7
      %v603 = vsub.s32 %v600, %v602
      %v604 = vrot.slane %v590, %v603
      %v605 = vcombine.high %v597, 0
      %v606 = vcombine.high %v604, 0
      %v608 = vunpack.c.l.b16 %v597
      %v609 = vpack.c.b16 %v608, %v608
      %610 = vrot.lane.b32.xlu0 %v609, 8
      %v611 = vpop.permute.xlu0 %610
      %v613 = vunpack.c.l.b16 %v571
      %v614 = vpack.c.b16 %v613, %v613
      %615 = vrot.lane.b32.xlu0 %v614, 16
      %v616 = vpop.permute.xlu0 %615
      %v618 = vunpack.c.l.b16 %v605
      %v619 = vpack.c.b16 %v618, %v618
      %620 = vrot.lane.b32.xlu0 %v619, 24
      %v621 = vpop.permute.xlu0 %620
      %v623 = vunpack.c.l.b16 %v570
      %v624 = vpack.c.b16 %v623, %v623
      %625 = vrot.lane.b32.xlu0 %v624, 32
      %v626 = vpop.permute.xlu0 %625
      %v628 = vunpack.c.l.b16 %v604
      %v629 = vpack.c.b16 %v628, %v628
      %630 = vrot.lane.b32.xlu0 %v629, 40
      %v631 = vpop.permute.xlu0 %630
      %v633 = vunpack.c.l.b16 %v572
      %v634 = vpack.c.b16 %v633, %v633
      %635 = vrot.lane.b32.xlu0 %v634, 48
      %v636 = vpop.permute.xlu0 %635
      %v638 = vunpack.c.l.b16 %v606
      %v639 = vpack.c.b16 %v638, %v638
      %640 = vrot.lane.b32.xlu0 %v639, 56
      %v641 = vpop.permute.xlu0 %640
      %v644 = vsel %vm345, %v563, %v611
      %v646 = vsel %vm349, %v644, %v616
      %v648 = vsel %vm352, %v646, %v621
      %v650 = vsel %vm355, %v648, %v626
      %v652 = vsel %vm358, %v650, %v631
      %v654 = vsel %vm361, %v652, %v636
      %v656 = vsel %vm364, %v654, %v641
      %658 = vst.msk [vmem:[#allocation2 + $0x4] sm:$0x3] %vm368, %v656
      %vm659 = vsmask.f32 3328
      %vm660 = vsmask.f32 7440
      %vm661 = vmor %vm659, %vm660
      %v663 = vrot.slane %v233, 4
      %v664 = vshll.u32 %v222, 16
      %v666 = vrot.slane %v664, 5
      %v667 = vor.u32 %v663, %v666
      %v668 = vrot.slane %v667, 4
      %v670 = vshll.u32 %v223, 16
      %v672 = vrot.slane %v670, 5
      %v673 = vsel %vm661, %v668, %v672
      %v675 = vrot.slane %v234, 4
      %v676 = vshll.u32 %v224, 16
      %v678 = vrot.slane %v676, 5
      %v679 = vor.u32 %v675, %v678
      %v680 = vrot.slane %v679, 4
      %v682 = vshll.u32 %v225, 16
      %v684 = vrot.slane %v682, 5
      %v685 = vsel %vm661, %v680, %v684
      %v687 = vrot.slane %v239, 4
      %v688 = vshll.u32 %v226, 16
      %v690 = vrot.slane %v688, 5
      %v691 = vor.u32 %v687, %v690
      %v692 = vrot.slane %v691, 4
      %v694 = vshll.u32 %v227, 16
      %v696 = vrot.slane %v694, 5
      %v697 = vsel %vm661, %v692, %v696
      %v699 = vrot.slane %v240, 4
      %v700 = vshll.u32 %v228, 16
      %v702 = vrot.slane %v700, 5
      %v703 = vor.u32 %v699, %v702
      %v704 = vrot.slane %v703, 4
      %v706 = vshll.u32 %v229, 16
      %v708 = vrot.slane %v706, 5
      %v709 = vsel %vm661, %v704, %v708
      %v712 = vpack.i.b16 %v685, %v673
      %v713 = vshrl.u32 %v673, 16
      %v714 = vshrl.u32 %v685, 16
      %v715 = vpack.i.b16 %v714, %v713
      %v718 = vpack.i.b16 %v709, %v697
      %v719 = vshrl.u32 %v697, 16
      %v720 = vshrl.u32 %v709, 16
      %v721 = vpack.i.b16 %v720, %v719
      %v724 = vunpack.c.l.s4 1983009808
      %v725 = vunpack.c.0.s8 %v724
      %v726 = vlaneseq
      %v727 = vshrl.u32 %v726, 7
      %v728 = vsub.s32 %v725, %v727
      %v729 = vrot.slane %v712, %v728
      %v732 = vunpack.c.l.s4 1983009808
      %v733 = vunpack.c.0.s8 %v732
      %v734 = vlaneseq
      %v735 = vshrl.u32 %v734, 7
      %v736 = vsub.s32 %v733, %v735
      %v737 = vrot.slane %v718, %v736
      %v738 = vcombine.low %v729, %v737
      %v739 = vcombine.high %v729, %v737
      %v741 = vunpack.c.l.s4 1934713408
      %v742 = vunpack.c.0.s8 %v741
      %v743 = vlaneseq
      %v744 = vshrl.u32 %v743, 7
      %v745 = vsub.s32 %v742, %v744
      %v746 = vrot.slane %v738, %v745
      %v748 = vunpack.c.l.s4 1934713408
      %v749 = vunpack.c.0.s8 %v748
      %v750 = vlaneseq
      %v751 = vshrl.u32 %v750, 7
      %v752 = vsub.s32 %v749, %v751
      %v753 = vrot.slane %v739, %v752
      %v754 = vcombine.high %v746, 0
      %v755 = vcombine.high %v753, 0
      %v758 = vunpack.c.l.s4 1983009808
      %v759 = vunpack.c.0.s8 %v758
      %v760 = vlaneseq
      %v761 = vshrl.u32 %v760, 7
      %v762 = vsub.s32 %v759, %v761
      %v763 = vrot.slane %v715, %v762
      %v766 = vunpack.c.l.s4 1983009808
      %v767 = vunpack.c.0.s8 %v766
      %v768 = vlaneseq
      %v769 = vshrl.u32 %v768, 7
      %v770 = vsub.s32 %v767, %v769
      %v771 = vrot.slane %v721, %v770
      %v772 = vcombine.low %v763, %v771
      %v773 = vcombine.high %v763, %v771
      %v775 = vunpack.c.l.s4 1934713408
      %v776 = vunpack.c.0.s8 %v775
      %v777 = vlaneseq
      %v778 = vshrl.u32 %v777, 7
      %v779 = vsub.s32 %v776, %v778
      %v780 = vrot.slane %v772, %v779
      %v782 = vunpack.c.l.s4 1934713408
      %v783 = vunpack.c.0.s8 %v782
      %v784 = vlaneseq
      %v785 = vshrl.u32 %v784, 7
      %v786 = vsub.s32 %v783, %v785
      %v787 = vrot.slane %v773, %v786
      %v788 = vcombine.high %v780, 0
      %v789 = vcombine.high %v787, 0
      %v791 = vunpack.c.l.b16 %v780
      %v792 = vpack.c.b16 %v791, %v791
      %793 = vrot.lane.b32.xlu0 %v792, 8
      %v794 = vpop.permute.xlu0 %793
      %v796 = vunpack.c.l.b16 %v754
      %v797 = vpack.c.b16 %v796, %v796
      %798 = vrot.lane.b32.xlu0 %v797, 16
      %v799 = vpop.permute.xlu0 %798
      %v801 = vunpack.c.l.b16 %v788
      %v802 = vpack.c.b16 %v801, %v801
      %803 = vrot.lane.b32.xlu0 %v802, 24
      %v804 = vpop.permute.xlu0 %803
      %v806 = vunpack.c.l.b16 %v753
      %v807 = vpack.c.b16 %v806, %v806
      %808 = vrot.lane.b32.xlu0 %v807, 32
      %v809 = vpop.permute.xlu0 %808
      %v811 = vunpack.c.l.b16 %v787
      %v812 = vpack.c.b16 %v811, %v811
      %813 = vrot.lane.b32.xlu0 %v812, 40
      %v814 = vpop.permute.xlu0 %813
      %v816 = vunpack.c.l.b16 %v755
      %v817 = vpack.c.b16 %v816, %v816
      %818 = vrot.lane.b32.xlu0 %v817, 48
      %v819 = vpop.permute.xlu0 %818
      %v821 = vunpack.c.l.b16 %v789
      %v822 = vpack.c.b16 %v821, %v821
      %823 = vrot.lane.b32.xlu0 %v822, 56
      %v824 = vpop.permute.xlu0 %823
      %v827 = vsel %vm345, %v746, %v794
      %v829 = vsel %vm349, %v827, %v799
      %v831 = vsel %vm352, %v829, %v804
      %v833 = vsel %vm355, %v831, %v809
      %v835 = vsel %vm358, %v833, %v814
      %v837 = vsel %vm361, %v835, %v819
      %v839 = vsel %vm364, %v837, %v824
      %v841 = vunpack.c.l.b16 %v839
      %v842 = vpack.c.b16 %v841, %v841
      %v843 = vrot.slane %v842, 6
      %845 = vst.msk [vmem:[#allocation2 + $0x4] sm:$0xc] %vm517, %v843
      %846 = vrot.lane.b32.xlu0 %v673, 127
      %v847 = vpop.permute.xlu0 %846
      %848 = vrot.lane.b32.xlu0 %v685, 127
      %v849 = vpop.permute.xlu0 %848
      %850 = vrot.lane.b32.xlu0 %v697, 127
      %v851 = vpop.permute.xlu0 %850
      %852 = vrot.lane.b32.xlu0 %v709, 127
      %v853 = vpop.permute.xlu0 %852
      %v856 = vpack.i.b16 %v849, %v847
      %v857 = vshrl.u32 %v847, 16
      %v858 = vshrl.u32 %v849, 16
      %v859 = vpack.i.b16 %v858, %v857
      %v862 = vpack.i.b16 %v853, %v851
      %v863 = vshrl.u32 %v851, 16
      %v864 = vshrl.u32 %v853, 16
      %v865 = vpack.i.b16 %v864, %v863
      %v868 = vunpack.c.l.s4 1983009808
      %v869 = vunpack.c.0.s8 %v868
      %v870 = vlaneseq
      %v871 = vshrl.u32 %v870, 7
      %v872 = vsub.s32 %v869, %v871
      %v873 = vrot.slane %v856, %v872
      %v876 = vunpack.c.l.s4 1983009808
      %v877 = vunpack.c.0.s8 %v876
      %v878 = vlaneseq
      %v879 = vshrl.u32 %v878, 7
      %v880 = vsub.s32 %v877, %v879
      %v881 = vrot.slane %v862, %v880
      %v882 = vcombine.low %v873, %v881
      %v883 = vcombine.high %v873, %v881
      %v885 = vunpack.c.l.s4 1934713408
      %v886 = vunpack.c.0.s8 %v885
      %v887 = vlaneseq
      %v888 = vshrl.u32 %v887, 7
      %v889 = vsub.s32 %v886, %v888
      %v890 = vrot.slane %v882, %v889
      %v892 = vunpack.c.l.s4 1934713408
      %v893 = vunpack.c.0.s8 %v892
      %v894 = vlaneseq
      %v895 = vshrl.u32 %v894, 7
      %v896 = vsub.s32 %v893, %v895
      %v897 = vrot.slane %v883, %v896
      %v898 = vcombine.high %v890, 0
      %v899 = vcombine.high %v897, 0
      %v902 = vunpack.c.l.s4 1983009808
      %v903 = vunpack.c.0.s8 %v902
      %v904 = vlaneseq
      %v905 = vshrl.u32 %v904, 7
      %v906 = vsub.s32 %v903, %v905
      %v907 = vrot.slane %v859, %v906
      %v910 = vunpack.c.l.s4 1983009808
      %v911 = vunpack.c.0.s8 %v910
      %v912 = vlaneseq
      %v913 = vshrl.u32 %v912, 7
      %v914 = vsub.s32 %v911, %v913
      %v915 = vrot.slane %v865, %v914
      %v916 = vcombine.low %v907, %v915
      %v917 = vcombine.high %v907, %v915
      %v919 = vunpack.c.l.s4 1934713408
      %v920 = vunpack.c.0.s8 %v919
      %v921 = vlaneseq
      %v922 = vshrl.u32 %v921, 7
      %v923 = vsub.s32 %v920, %v922
      %v924 = vrot.slane %v916, %v923
      %v926 = vunpack.c.l.s4 1934713408
      %v927 = vunpack.c.0.s8 %v926
      %v928 = vlaneseq
      %v929 = vshrl.u32 %v928, 7
      %v930 = vsub.s32 %v927, %v929
      %v931 = vrot.slane %v917, %v930
      %v932 = vcombine.high %v924, 0
      %v933 = vcombine.high %v931, 0
      %v935 = vunpack.c.l.b16 %v924
      %v936 = vpack.c.b16 %v935, %v935
      %937 = vrot.lane.b32.xlu0 %v936, 8
      %v938 = vpop.permute.xlu0 %937
      %v940 = vunpack.c.l.b16 %v898
      %v941 = vpack.c.b16 %v940, %v940
      %942 = vrot.lane.b32.xlu0 %v941, 16
      %v943 = vpop.permute.xlu0 %942
      %v945 = vunpack.c.l.b16 %v932
      %v946 = vpack.c.b16 %v945, %v945
      %947 = vrot.lane.b32.xlu0 %v946, 24
      %v948 = vpop.permute.xlu0 %947
      %v950 = vunpack.c.l.b16 %v897
      %v951 = vpack.c.b16 %v950, %v950
      %952 = vrot.lane.b32.xlu0 %v951, 32
      %v953 = vpop.permute.xlu0 %952
      %v955 = vunpack.c.l.b16 %v931
      %v956 = vpack.c.b16 %v955, %v955
      %957 = vrot.lane.b32.xlu0 %v956, 40
      %v958 = vpop.permute.xlu0 %957
      %v960 = vunpack.c.l.b16 %v899
      %v961 = vpack.c.b16 %v960, %v960
      %962 = vrot.lane.b32.xlu0 %v961, 48
      %v963 = vpop.permute.xlu0 %962
      %v965 = vunpack.c.l.b16 %v933
      %v966 = vpack.c.b16 %v965, %v965
      %967 = vrot.lane.b32.xlu0 %v966, 56
      %v968 = vpop.permute.xlu0 %967
      %v971 = vsel %vm345, %v890, %v938
      %v973 = vsel %vm349, %v971, %v943
      %v975 = vsel %vm352, %v973, %v948
      %v977 = vsel %vm355, %v975, %v953
      %v979 = vsel %vm358, %v977, %v958
      %v981 = vsel %vm361, %v979, %v963
      %v983 = vsel %vm364, %v981, %v968
      %985 = vst.msk [vmem:[#allocation2 + $0x8] sm:$0x3] %vm368, %v983
      %986 = vrot.lane.b32.xlu0 %v673, 126
      %v987 = vpop.permute.xlu0 %986
      %988 = vrot.lane.b32.xlu0 %v685, 126
      %v989 = vpop.permute.xlu0 %988
      %990 = vrot.lane.b32.xlu0 %v697, 126
      %v991 = vpop.permute.xlu0 %990
      %992 = vrot.lane.b32.xlu0 %v709, 126
      %v993 = vpop.permute.xlu0 %992
      %v996 = vpack.i.b16 %v989, %v987
      %v997 = vshrl.u32 %v987, 16
      %v998 = vshrl.u32 %v989, 16
      %v999 = vpack.i.b16 %v998, %v997
      %v1002 = vpack.i.b16 %v993, %v991
      %v1003 = vshrl.u32 %v991, 16
      %v1004 = vshrl.u32 %v993, 16
      %v1005 = vpack.i.b16 %v1004, %v1003
      %v1008 = vunpack.c.l.s4 1983009808
      %v1009 = vunpack.c.0.s8 %v1008
      %v1010 = vlaneseq
      %v1011 = vshrl.u32 %v1010, 7
      %v1012 = vsub.s32 %v1009, %v1011
      %v1013 = vrot.slane %v996, %v1012
      %v1016 = vunpack.c.l.s4 1983009808
      %v1017 = vunpack.c.0.s8 %v1016
      %v1018 = vlaneseq
      %v1019 = vshrl.u32 %v1018, 7
      %v1020 = vsub.s32 %v1017, %v1019
      %v1021 = vrot.slane %v1002, %v1020
      %v1022 = vcombine.low %v1013, %v1021
      %v1023 = vcombine.high %v1013, %v1021
      %v1025 = vunpack.c.l.s4 1934713408
      %v1026 = vunpack.c.0.s8 %v1025
      %v1027 = vlaneseq
      %v1028 = vshrl.u32 %v1027, 7
      %v1029 = vsub.s32 %v1026, %v1028
      %v1030 = vrot.slane %v1022, %v1029
      %v1032 = vunpack.c.l.s4 1934713408
      %v1033 = vunpack.c.0.s8 %v1032
      %v1034 = vlaneseq
      %v1035 = vshrl.u32 %v1034, 7
      %v1036 = vsub.s32 %v1033, %v1035
      %v1037 = vrot.slane %v1023, %v1036
      %v1038 = vcombine.high %v1030, 0
      %v1039 = vcombine.high %v1037, 0
      %v1042 = vunpack.c.l.s4 1983009808
      %v1043 = vunpack.c.0.s8 %v1042
      %v1044 = vlaneseq
      %v1045 = vshrl.u32 %v1044, 7
      %v1046 = vsub.s32 %v1043, %v1045
      %v1047 = vrot.slane %v999, %v1046
      %v1050 = vunpack.c.l.s4 1983009808
      %v1051 = vunpack.c.0.s8 %v1050
      %v1052 = vlaneseq
      %v1053 = vshrl.u32 %v1052, 7
      %v1054 = vsub.s32 %v1051, %v1053
      %v1055 = vrot.slane %v1005, %v1054
      %v1056 = vcombine.low %v1047, %v1055
      %v1057 = vcombine.high %v1047, %v1055
      %v1059 = vunpack.c.l.s4 1934713408
      %v1060 = vunpack.c.0.s8 %v1059
      %v1061 = vlaneseq
      %v1062 = vshrl.u32 %v1061, 7
      %v1063 = vsub.s32 %v1060, %v1062
      %v1064 = vrot.slane %v1056, %v1063
      %v1066 = vunpack.c.l.s4 1934713408
      %v1067 = vunpack.c.0.s8 %v1066
      %v1068 = vlaneseq
      %v1069 = vshrl.u32 %v1068, 7
      %v1070 = vsub.s32 %v1067, %v1069
      %v1071 = vrot.slane %v1057, %v1070
      %v1072 = vcombine.high %v1064, 0
      %v1073 = vcombine.high %v1071, 0
      %v1075 = vunpack.c.l.b16 %v1064
      %v1076 = vpack.c.b16 %v1075, %v1075
      %1077 = vrot.lane.b32.xlu0 %v1076, 8
      %v1078 = vpop.permute.xlu0 %1077
      %v1080 = vunpack.c.l.b16 %v1038
      %v1081 = vpack.c.b16 %v1080, %v1080
      %1082 = vrot.lane.b32.xlu0 %v1081, 16
      %v1083 = vpop.permute.xlu0 %1082
      %v1085 = vunpack.c.l.b16 %v1072
      %v1086 = vpack.c.b16 %v1085, %v1085
      %1087 = vrot.lane.b32.xlu0 %v1086, 24
      %v1088 = vpop.permute.xlu0 %1087
      %v1090 = vunpack.c.l.b16 %v1037
      %v1091 = vpack.c.b16 %v1090, %v1090
      %1092 = vrot.lane.b32.xlu0 %v1091, 32
      %v1093 = vpop.permute.xlu0 %1092
      %v1095 = vunpack.c.l.b16 %v1071
      %v1096 = vpack.c.b16 %v1095, %v1095
      %1097 = vrot.lane.b32.xlu0 %v1096, 40
      %v1098 = vpop.permute.xlu0 %1097
      %v1100 = vunpack.c.l.b16 %v1039
      %v1101 = vpack.c.b16 %v1100, %v1100
      %1102 = vrot.lane.b32.xlu0 %v1101, 48
      %v1103 = vpop.permute.xlu0 %1102
      %v1105 = vunpack.c.l.b16 %v1073
      %v1106 = vpack.c.b16 %v1105, %v1105
      %1107 = vrot.lane.b32.xlu0 %v1106, 56
      %v1108 = vpop.permute.xlu0 %1107
      %v1111 = vsel %vm345, %v1030, %v1078
      %v1113 = vsel %vm349, %v1111, %v1083
      %v1115 = vsel %vm352, %v1113, %v1088
      %v1117 = vsel %vm355, %v1115, %v1093
      %v1119 = vsel %vm358, %v1117, %v1098
      %v1121 = vsel %vm361, %v1119, %v1103
      %v1123 = vsel %vm364, %v1121, %v1108
      %v1125 = vunpack.c.l.b16 %v1123
      %v1126 = vpack.c.b16 %v1125, %v1125
      %v1127 = vrot.slane %v1126, 6
      %1129 = vst.msk [vmem:[#allocation2 + $0x8] sm:$0xc] %vm517, %v1127
      %vm1134 = vcmask 1042432
      %vm1135 = vcmask 1046532
      %vm1136 = vmor %vm1134, %vm1135
      %v1137 = vrot.slane %v222, 5
      %v1138 = vrot.slane %v1137, 4
      %v1139 = vrot.slane %v223, 5
      %v1140 = vsel %vm1136, %v1138, %v1139
      %v1141 = vrot.slane %v224, 5
      %v1142 = vrot.slane %v1141, 4
      %v1143 = vrot.slane %v225, 5
      %v1144 = vsel %vm1136, %v1142, %v1143
      %v1145 = vrot.slane %v226, 5
      %v1146 = vrot.slane %v1145, 4
      %v1147 = vrot.slane %v227, 5
      %v1148 = vsel %vm1136, %v1146, %v1147
      %v1149 = vrot.slane %v228, 5
      %v1150 = vrot.slane %v1149, 4
      %v1151 = vrot.slane %v229, 5
      %v1152 = vsel %vm1136, %v1150, %v1151
      %v1155 = vpack.i.b16 %v1144, %v1140
      %v1156 = vshrl.u32 %v1140, 16
      %v1157 = vshrl.u32 %v1144, 16
      %v1158 = vpack.i.b16 %v1157, %v1156
      %v1161 = vpack.i.b16 %v1152, %v1148
      %v1162 = vshrl.u32 %v1148, 16
      %v1163 = vshrl.u32 %v1152, 16
      %v1164 = vpack.i.b16 %v1163, %v1162
      %v1167 = vunpack.c.l.s4 1983009808
      %v1168 = vunpack.c.0.s8 %v1167
      %v1169 = vlaneseq
      %v1170 = vshrl.u32 %v1169, 7
      %v1171 = vsub.s32 %v1168, %v1170
      %v1172 = vrot.slane %v1155, %v1171
      %v1175 = vunpack.c.l.s4 1983009808
      %v1176 = vunpack.c.0.s8 %v1175
      %v1177 = vlaneseq
      %v1178 = vshrl.u32 %v1177, 7
      %v1179 = vsub.s32 %v1176, %v1178
      %v1180 = vrot.slane %v1161, %v1179
      %v1181 = vcombine.low %v1172, %v1180
      %v1182 = vcombine.high %v1172, %v1180
      %v1184 = vunpack.c.l.s4 1934713408
      %v1185 = vunpack.c.0.s8 %v1184
      %v1186 = vlaneseq
      %v1187 = vshrl.u32 %v1186, 7
      %v1188 = vsub.s32 %v1185, %v1187
      %v1189 = vrot.slane %v1181, %v1188
      %v1191 = vunpack.c.l.s4 1934713408
      %v1192 = vunpack.c.0.s8 %v1191
      %v1193 = vlaneseq
      %v1194 = vshrl.u32 %v1193, 7
      %v1195 = vsub.s32 %v1192, %v1194
      %v1196 = vrot.slane %v1182, %v1195
      %v1197 = vcombine.high %v1189, 0
      %v1198 = vcombine.high %v1196, 0
      %v1201 = vunpack.c.l.s4 1983009808
      %v1202 = vunpack.c.0.s8 %v1201
      %v1203 = vlaneseq
      %v1204 = vshrl.u32 %v1203, 7
      %v1205 = vsub.s32 %v1202, %v1204
      %v1206 = vrot.slane %v1158, %v1205
      %v1209 = vunpack.c.l.s4 1983009808
      %v1210 = vunpack.c.0.s8 %v1209
      %v1211 = vlaneseq
      %v1212 = vshrl.u32 %v1211, 7
      %v1213 = vsub.s32 %v1210, %v1212
      %v1214 = vrot.slane %v1164, %v1213
      %v1215 = vcombine.low %v1206, %v1214
      %v1216 = vcombine.high %v1206, %v1214
      %v1218 = vunpack.c.l.s4 1934713408
      %v1219 = vunpack.c.0.s8 %v1218
      %v1220 = vlaneseq
      %v1221 = vshrl.u32 %v1220, 7
      %v1222 = vsub.s32 %v1219, %v1221
      %v1223 = vrot.slane %v1215, %v1222
      %v1225 = vunpack.c.l.s4 1934713408
      %v1226 = vunpack.c.0.s8 %v1225
      %v1227 = vlaneseq
      %v1228 = vshrl.u32 %v1227, 7
      %v1229 = vsub.s32 %v1226, %v1228
      %v1230 = vrot.slane %v1216, %v1229
      %v1231 = vcombine.high %v1223, 0
      %v1232 = vcombine.high %v1230, 0
      %v1234 = vunpack.c.l.b16 %v1223
      %v1235 = vpack.c.b16 %v1234, %v1234
      %1236 = vrot.lane.b32.xlu0 %v1235, 8
      %v1237 = vpop.permute.xlu0 %1236
      %v1239 = vunpack.c.l.b16 %v1197
      %v1240 = vpack.c.b16 %v1239, %v1239
      %1241 = vrot.lane.b32.xlu0 %v1240, 16
      %v1242 = vpop.permute.xlu0 %1241
      %v1244 = vunpack.c.l.b16 %v1231
      %v1245 = vpack.c.b16 %v1244, %v1244
      %1246 = vrot.lane.b32.xlu0 %v1245, 24
      %v1247 = vpop.permute.xlu0 %1246
      %v1249 = vunpack.c.l.b16 %v1196
      %v1250 = vpack.c.b16 %v1249, %v1249
      %1251 = vrot.lane.b32.xlu0 %v1250, 32
      %v1252 = vpop.permute.xlu0 %1251
      %v1254 = vunpack.c.l.b16 %v1230
      %v1255 = vpack.c.b16 %v1254, %v1254
      %1256 = vrot.lane.b32.xlu0 %v1255, 40
      %v1257 = vpop.permute.xlu0 %1256
      %v1259 = vunpack.c.l.b16 %v1198
      %v1260 = vpack.c.b16 %v1259, %v1259
      %1261 = vrot.lane.b32.xlu0 %v1260, 48
      %v1262 = vpop.permute.xlu0 %1261
      %v1264 = vunpack.c.l.b16 %v1232
      %v1265 = vpack.c.b16 %v1264, %v1264
      %1266 = vrot.lane.b32.xlu0 %v1265, 56
      %v1267 = vpop.permute.xlu0 %1266
      %v1270 = vsel %vm345, %v1189, %v1237
      %v1272 = vsel %vm349, %v1270, %v1242
      %v1274 = vsel %vm352, %v1272, %v1247
      %v1276 = vsel %vm355, %v1274, %v1252
      %v1278 = vsel %vm358, %v1276, %v1257
      %v1280 = vsel %vm361, %v1278, %v1262
      %v1282 = vsel %vm364, %v1280, %v1267
      %1284 = vst.msk [vmem:[#allocation2 + $0xc] sm:$0x3] %vm368, %v1282
      %1285 = vrot.lane.b32.xlu0 %v1140, 127
      %v1286 = vpop.permute.xlu0 %1285
      %1287 = vrot.lane.b32.xlu0 %v1144, 127
      %v1288 = vpop.permute.xlu0 %1287
      %1289 = vrot.lane.b32.xlu0 %v1148, 127
      %v1290 = vpop.permute.xlu0 %1289
      %1291 = vrot.lane.b32.xlu0 %v1152, 127
      %v1292 = vpop.permute.xlu0 %1291
      %v1295 = vpack.i.b16 %v1288, %v1286
      %v1296 = vshrl.u32 %v1286, 16
      %v1297 = vshrl.u32 %v1288, 16
      %v1298 = vpack.i.b16 %v1297, %v1296
      %v1301 = vpack.i.b16 %v1292, %v1290
      %v1302 = vshrl.u32 %v1290, 16
      %v1303 = vshrl.u32 %v1292, 16
      %v1304 = vpack.i.b16 %v1303, %v1302
      %v1307 = vunpack.c.l.s4 1983009808
      %v1308 = vunpack.c.0.s8 %v1307
      %v1309 = vlaneseq
      %v1310 = vshrl.u32 %v1309, 7
      %v1311 = vsub.s32 %v1308, %v1310
      %v1312 = vrot.slane %v1295, %v1311
      %v1315 = vunpack.c.l.s4 1983009808
      %v1316 = vunpack.c.0.s8 %v1315
      %v1317 = vlaneseq
      %v1318 = vshrl.u32 %v1317, 7
      %v1319 = vsub.s32 %v1316, %v1318
      %v1320 = vrot.slane %v1301, %v1319
      %v1321 = vcombine.low %v1312, %v1320
      %v1322 = vcombine.high %v1312, %v1320
      %v1324 = vunpack.c.l.s4 1934713408
      %v1325 = vunpack.c.0.s8 %v1324
      %v1326 = vlaneseq
      %v1327 = vshrl.u32 %v1326, 7
      %v1328 = vsub.s32 %v1325, %v1327
      %v1329 = vrot.slane %v1321, %v1328
      %v1331 = vunpack.c.l.s4 1934713408
      %v1332 = vunpack.c.0.s8 %v1331
      %v1333 = vlaneseq
      %v1334 = vshrl.u32 %v1333, 7
      %v1335 = vsub.s32 %v1332, %v1334
      %v1336 = vrot.slane %v1322, %v1335
      %v1337 = vcombine.high %v1329, 0
      %v1338 = vcombine.high %v1336, 0
      %v1341 = vunpack.c.l.s4 1983009808
      %v1342 = vunpack.c.0.s8 %v1341
      %v1343 = vlaneseq
      %v1344 = vshrl.u32 %v1343, 7
      %v1345 = vsub.s32 %v1342, %v1344
      %v1346 = vrot.slane %v1298, %v1345
      %v1349 = vunpack.c.l.s4 1983009808
      %v1350 = vunpack.c.0.s8 %v1349
      %v1351 = vlaneseq
      %v1352 = vshrl.u32 %v1351, 7
      %v1353 = vsub.s32 %v1350, %v1352
      %v1354 = vrot.slane %v1304, %v1353
      %v1355 = vcombine.low %v1346, %v1354
      %v1356 = vcombine.high %v1346, %v1354
      %v1358 = vunpack.c.l.s4 1934713408
      %v1359 = vunpack.c.0.s8 %v1358
      %v1360 = vlaneseq
      %v1361 = vshrl.u32 %v1360, 7
      %v1362 = vsub.s32 %v1359, %v1361
      %v1363 = vrot.slane %v1355, %v1362
      %v1365 = vunpack.c.l.s4 1934713408
      %v1366 = vunpack.c.0.s8 %v1365
      %v1367 = vlaneseq
      %v1368 = vshrl.u32 %v1367, 7
      %v1369 = vsub.s32 %v1366, %v1368
      %v1370 = vrot.slane %v1356, %v1369
      %v1371 = vcombine.high %v1363, 0
      %v1372 = vcombine.high %v1370, 0
      %v1374 = vunpack.c.l.b16 %v1363
      %v1375 = vpack.c.b16 %v1374, %v1374
      %1376 = vrot.lane.b32.xlu0 %v1375, 8
      %v1377 = vpop.permute.xlu0 %1376
      %v1379 = vunpack.c.l.b16 %v1337
      %v1380 = vpack.c.b16 %v1379, %v1379
      %1381 = vrot.lane.b32.xlu0 %v1380, 16
      %v1382 = vpop.permute.xlu0 %1381
      %v1384 = vunpack.c.l.b16 %v1371
      %v1385 = vpack.c.b16 %v1384, %v1384
      %1386 = vrot.lane.b32.xlu0 %v1385, 24
      %v1387 = vpop.permute.xlu0 %1386
      %v1389 = vunpack.c.l.b16 %v1336
      %v1390 = vpack.c.b16 %v1389, %v1389
      %1391 = vrot.lane.b32.xlu0 %v1390, 32
      %v1392 = vpop.permute.xlu0 %1391
      %v1394 = vunpack.c.l.b16 %v1370
      %v1395 = vpack.c.b16 %v1394, %v1394
      %1396 = vrot.lane.b32.xlu0 %v1395, 40
      %v1397 = vpop.permute.xlu0 %1396
      %v1399 = vunpack.c.l.b16 %v1338
      %v1400 = vpack.c.b16 %v1399, %v1399
      %1401 = vrot.lane.b32.xlu0 %v1400, 48
      %v1402 = vpop.permute.xlu0 %1401
      %v1404 = vunpack.c.l.b16 %v1372
      %v1405 = vpack.c.b16 %v1404, %v1404
      %1406 = vrot.lane.b32.xlu0 %v1405, 56
      %v1407 = vpop.permute.xlu0 %1406
      %v1410 = vsel %vm345, %v1329, %v1377
      %v1412 = vsel %vm349, %v1410, %v1382
      %v1414 = vsel %vm352, %v1412, %v1387
      %v1416 = vsel %vm355, %v1414, %v1392
      %v1418 = vsel %vm358, %v1416, %v1397
      %v1420 = vsel %vm361, %v1418, %v1402
      %v1422 = vsel %vm364, %v1420, %v1407
      %v1424 = vunpack.c.l.b16 %v1422
      %v1425 = vpack.c.b16 %v1424, %v1424
      %v1426 = vrot.slane %v1425, 6
      %1428 = vst.msk [vmem:[#allocation2 + $0xc] sm:$0xc] %vm517, %v1426
      %1429 = vrot.lane.b32.xlu0 %v1140, 126
      %v1430 = vpop.permute.xlu0 %1429
      %1431 = vrot.lane.b32.xlu0 %v1144, 126
      %v1432 = vpop.permute.xlu0 %1431
      %1433 = vrot.lane.b32.xlu0 %v1148, 126
      %v1434 = vpop.permute.xlu0 %1433
      %1435 = vrot.lane.b32.xlu0 %v1152, 126
      %v1436 = vpop.permute.xlu0 %1435
      %v1439 = vpack.i.b16 %v1432, %v1430
      %v1440 = vshrl.u32 %v1430, 16
      %v1441 = vshrl.u32 %v1432, 16
      %v1442 = vpack.i.b16 %v1441, %v1440
      %v1445 = vpack.i.b16 %v1436, %v1434
      %v1446 = vshrl.u32 %v1434, 16
      %v1447 = vshrl.u32 %v1436, 16
      %v1448 = vpack.i.b16 %v1447, %v1446
      %v1451 = vunpack.c.l.s4 1983009808
      %v1452 = vunpack.c.0.s8 %v1451
      %v1453 = vlaneseq
      %v1454 = vshrl.u32 %v1453, 7
      %v1455 = vsub.s32 %v1452, %v1454
      %v1456 = vrot.slane %v1439, %v1455
      %v1459 = vunpack.c.l.s4 1983009808
      %v1460 = vunpack.c.0.s8 %v1459
      %v1461 = vlaneseq
      %v1462 = vshrl.u32 %v1461, 7
      %v1463 = vsub.s32 %v1460, %v1462
      %v1464 = vrot.slane %v1445, %v1463
      %v1465 = vcombine.low %v1456, %v1464
      %v1466 = vcombine.high %v1456, %v1464
      %v1468 = vunpack.c.l.s4 1934713408
      %v1469 = vunpack.c.0.s8 %v1468
      %v1470 = vlaneseq
      %v1471 = vshrl.u32 %v1470, 7
      %v1472 = vsub.s32 %v1469, %v1471
      %v1473 = vrot.slane %v1465, %v1472
      %v1475 = vunpack.c.l.s4 1934713408
      %v1476 = vunpack.c.0.s8 %v1475
      %v1477 = vlaneseq
      %v1478 = vshrl.u32 %v1477, 7
      %v1479 = vsub.s32 %v1476, %v1478
      %v1480 = vrot.slane %v1466, %v1479
      %v1481 = vcombine.high %v1473, 0
      %v1482 = vcombine.high %v1480, 0
      %v1485 = vunpack.c.l.s4 1983009808
      %v1486 = vunpack.c.0.s8 %v1485
      %v1487 = vlaneseq
      %v1488 = vshrl.u32 %v1487, 7
      %v1489 = vsub.s32 %v1486, %v1488
      %v1490 = vrot.slane %v1442, %v1489
      %v1493 = vunpack.c.l.s4 1983009808
      %v1494 = vunpack.c.0.s8 %v1493
      %v1495 = vlaneseq
      %v1496 = vshrl.u32 %v1495, 7
      %v1497 = vsub.s32 %v1494, %v1496
      %v1498 = vrot.slane %v1448, %v1497
      %v1499 = vcombine.low %v1490, %v1498
      %v1500 = vcombine.high %v1490, %v1498
      %v1502 = vunpack.c.l.s4 1934713408
      %v1503 = vunpack.c.0.s8 %v1502
      %v1504 = vlaneseq
      %v1505 = vshrl.u32 %v1504, 7
      %v1506 = vsub.s32 %v1503, %v1505
      %v1507 = vrot.slane %v1499, %v1506
      %v1509 = vunpack.c.l.s4 1934713408
      %v1510 = vunpack.c.0.s8 %v1509
      %v1511 = vlaneseq
      %v1512 = vshrl.u32 %v1511, 7
      %v1513 = vsub.s32 %v1510, %v1512
      %v1514 = vrot.slane %v1500, %v1513
      %v1515 = vcombine.high %v1507, 0
      %v1516 = vcombine.high %v1514, 0
      %v1518 = vunpack.c.l.b16 %v1507
      %v1519 = vpack.c.b16 %v1518, %v1518
      %1520 = vrot.lane.b32.xlu0 %v1519, 8
      %v1521 = vpop.permute.xlu0 %1520
      %v1523 = vunpack.c.l.b16 %v1481
      %v1524 = vpack.c.b16 %v1523, %v1523
      %1525 = vrot.lane.b32.xlu0 %v1524, 16
      %v1526 = vpop.permute.xlu0 %1525
      %v1528 = vunpack.c.l.b16 %v1515
      %v1529 = vpack.c.b16 %v1528, %v1528
      %1530 = vrot.lane.b32.xlu0 %v1529, 24
      %v1531 = vpop.permute.xlu0 %1530
      %v1533 = vunpack.c.l.b16 %v1480
      %v1534 = vpack.c.b16 %v1533, %v1533
      %1535 = vrot.lane.b32.xlu0 %v1534, 32
      %v1536 = vpop.permute.xlu0 %1535
      %v1538 = vunpack.c.l.b16 %v1514
      %v1539 = vpack.c.b16 %v1538, %v1538
      %1540 = vrot.lane.b32.xlu0 %v1539, 40
      %v1541 = vpop.permute.xlu0 %1540
      %v1543 = vunpack.c.l.b16 %v1482
      %v1544 = vpack.c.b16 %v1543, %v1543
      %1545 = vrot.lane.b32.xlu0 %v1544, 48
      %v1546 = vpop.permute.xlu0 %1545
      %v1548 = vunpack.c.l.b16 %v1516
      %v1549 = vpack.c.b16 %v1548, %v1548
      %1550 = vrot.lane.b32.xlu0 %v1549, 56
      %v1551 = vpop.permute.xlu0 %1550
      %v1554 = vsel %vm345, %v1473, %v1521
      %v1556 = vsel %vm349, %v1554, %v1526
      %v1558 = vsel %vm352, %v1556, %v1531
      %v1560 = vsel %vm355, %v1558, %v1536
      %v1562 = vsel %vm358, %v1560, %v1541
      %v1564 = vsel %vm361, %v1562, %v1546
      %v1566 = vsel %vm364, %v1564, %v1551
      %1568 = vst.msk [vmem:[#allocation2 + $0x10] sm:$0x3] %vm368, %v1566
      %v1569 = vld [vmem:[%s1] sm:$0xf]
      %v1570 = vld [vmem:[#allocation2] sm:$0xf]
      %v1571 = vld [vmem:[#allocation2 + $0x4] sm:$0xf]
      %v1572 = vld [vmem:[#allocation2 + $0x8] sm:$0xf]
      %v1573 = vld [vmem:[#allocation2 + $0xc] sm:$0xf]
      %v1574 = vld [vmem:[#allocation2 + $0x10] sm:$0x3]
      %v1580 = vunpack.c.l.b16 %v1570
      %v1581 = vunpack.c.l.b16 %v1571
      %v1582 = vunpack.c.l.b16 %v1572
      %v1583 = vunpack.c.l.b16 %v1573
      %v1584 = vunpack.c.l.b16 %v1574
      %v1585 = vpack.c.b16 %v1581, %v1580
      %v1586 = vpack.c.b16 %v1583, %v1582
      %v1587 = vpack.c.b16 %v1584, %v1584
      %vm1590 = vcmask 293888
      %v1592 = vsel %vm1590, %v1569, 0
      %vm1594 = vcmask 1041408
      %v1596 = vsel %vm1594, %v1587, 0
      %1598 = vmatprep.subr.bf16.mxu0 0
      %1599 = vmatpush1.bf16.msra.mxu0 0
      %1600 = vmatprep.subr.bf16.mxu0 0
      %1601 = vmatpush1.bf16.msra.mxu0 0
      %1602 = vmatprep.subr.bf16.mxu0 0
      %1603 = vmatpush1.bf16.msra.mxu0 0
      %1604 = vmatprep.subr.bf16.mxu0 0
      %1605 = vmatpush1.bf16.msra.mxu0 0
      %1606 = vmatprep.subr.bf16.mxu0 0
      %1607 = vmatpush1.bf16.msra.mxu0 0
      %1608 = vmatprep.subr.bf16.mxu0 0
      %1609 = vmatpush1.bf16.msra.mxu0 %v1596
      %1610 = vmatprep.subr.bf16.mxu0 0
      %1611 = vmatpush1.bf16.msra.mxu0 %v1586
      %1612 = vmatprep.subr.bf16.mxu0 0
      %1613 = vmatpush1.bf16.msra.mxu0 %v1585
      %1614 = vmatprep.subr.bf16.mxu0 0
      %1615 = vmatpush2.bf16.msra.mxu0 0
      %1616 = vmatprep.subr.bf16.mxu0 0
      %1617 = vmatpush2.bf16.msra.mxu0 0
      %1618 = vmatprep.subr.bf16.mxu0 0
      %1619 = vmatpush2.bf16.msra.mxu0 0
      %1620 = vmatprep.subr.bf16.mxu0 0
      %1621 = vmatpush2.bf16.msra.mxu0 0
      %1622 = vmatprep.subr.bf16.mxu0 0
      %1623 = vmatpush2.bf16.msra.mxu0 0
      %1624 = vmatprep.subr.bf16.mxu0 0
      %1625 = vmatpush2.bf16.msra.mxu0 0
      %1626 = vmatprep.subr.bf16.mxu0 0
      %1627 = vmatpush2.bf16.msra.mxu0 0
      %1628 = vmatprep.subr.bf16.mxu0 0
      %1629 = vmatpush2.bf16.msra.mxu0 0
      %1630 = vmatprep.mubr.bf16.mxu0 0
      %1631 = vmatmul.mubr.bf16.gmra.mxu0 %v1592
      %v1632 = vpop.f32.mrf.mxu0
      %v1633 = vadd.f32 0.0, %v1632
      %v1634 = vpop.f32.mrf.mxu0
      %v1635 = vpop.f32.mrf.mxu0
      %v1636 = vpop.f32.mrf.mxu0
      %1637 = vdwg.mxu0
      %v1638 = vld [vmem:[%s2] sm:$0xff]
      %1640 = vset.pattern.permute.xlu0 0
      %1641 = vperm.xlu0 %1640, %v1638
      %v1642 = vpop.permute.xlu0 %1641
      %v1644 = vmul.f32 %v1633, %v1642
      %v1645 = vld [vmem:[%s3] sm:$0xff]
      %1647 = vset.pattern.permute.xlu0 0
      %1648 = vperm.xlu0 %1647, %v1645
      %v1649 = vpop.permute.xlu0 %1648
      %v1651 = vadd.f32 %v1644, %v1649
      %vm1652 = vcmask 523264
      %1653 = vst.msk [vmem:[%s215] sm:$0xff] %vm1652, %v1651
      %p1654 = scmp.lt.s32.totalorder %s19, 1
      %s1655 = scalar_select %p1654, %s19, 1
      %p1656 = scmp.lt.s32.totalorder %s20, 0
      %s1657 = scalar_select %p1656, %s20, 0
      %s1658 = sadd.s32 %s1657, %s1655
      %s1659 = smul.addr %s1658, 8
      %s1660 = scalar_lea.vmem %s4, %s1659
      // Predicated region
      $region37: #{first_octave_cb.7} parent=35 // pred_check
        %p1661 = pneg %p136
      $region38: #{first_octave_cb.7} parent=35 // pred_check_branch
        %1663 = sbr.rel (%p1661) target = $region40
      $region39: #{first_octave_cb.7} parent=35 // pred_region
        _
      $region40: #{first_octave_cb.7} parent=35 // pred_fallthru
        _
    $region36: #{first_octave_cb.7} parent=5 // pred_fallthru
      _
    %p1664 = scmp.le.s32.totalorder 2, %s10
    // Predicated region
    $region41: #{first_octave_cb.7} parent=5 // pred_check
      %p1665 = pneg %p1664
    $region42: #{first_octave_cb.7} parent=5 // pred_check_branch
      %1667 = sbr.rel (%p1665) target = $region44
    $region43: #{first_octave_cb.7} parent=5 // pred_region
      %s1668 = ssub.s32 %s10, 2
      // Predicated region
      $region45: #{first_octave_cb.7} parent=43 // pred_check
        %p1669 = pneg %p142
      $region46: #{first_octave_cb.7} parent=43 // pred_check_branch
        %1671 = sbr.rel (%p1669) target = $region48
      $region47: #{first_octave_cb.7} parent=43 // pred_region
        %p1672 = scmp.lt.s32.totalorder %s21, 1
        %s1673 = scalar_select %p1672, %s21, 1
        %p1674 = scmp.lt.s32.totalorder %s22, 0
        %s1675 = scalar_select %p1674, %s22, 0
        %s1676 = sadd.s32 %s1675, %s1673
        %s1677 = smul.addr %s1676, 8
        %s1678 = scalar_lea.vmem %s4, %s1677
      $region48: #{first_octave_cb.7} parent=43 // pred_fallthru
        _
    $region44: #{first_octave_cb.7} parent=5 // pred_fallthru
      _
  $region6: #{first_octave_cb.7} parent=0 // loop_footer
    %s14 = sadd.s32 1, %s10
  $region7: #{first_octave_cb.7} parent=0 // loop_footer_branch
    %9 = sbr.rel target = $region3
  $region8: #{first_octave_cb.7} parent=0 // loop_exit
    _

// kernel: first_octave_cb.4
$region0: #{first_octave_cb.4}
  #allocation0 [shape = 'u32[]', space=smem, size = 0x4, offset = 0x4, fixed_abs, tag = 'smem constant byte address 0x4 - core index']
  #allocation1 [shape = 'u32[144,128]{1,0:T(1,128)}', space=vmem, size = 0x12000, scoped, tag = 'internal scratch']
  #allocation2 [shape = 'bf16[36,256]{1,0:T(8,128)(2,1)}', space=vmem, size = 0x5000, scoped, tag = 'scratch operand']
  %s0 = inlined_call_operand.vmem [shape: bf16[2,4,18,18], index: 0, kind: input, shape index: {}]
  %s1 = inlined_call_operand.vmem [shape: bf16[8,36], index: 1, kind: input, shape index: {}]
  %s2 = inlined_call_operand.vmem [shape: f32[2,8,1], index: 2, kind: output, shape index: {0}]
  %s3 = inlined_call_operand.vmem [shape: f32[2,8,1], index: 3, kind: output, shape index: {1}]
  %4 = xla_tuple %s2, %s3
  %s5 = sld [smem:[#allocation0]]
  $region53: #{first_octave_cb.4} parent=0
    _
  %s7 = ssub.s32 1, %s5
  %s8 = scalar_select 0, %s7, %s5
  loop: start=0, step=1, limit=4
  $region2: #{first_octave_cb.4} parent=0 // loop_pre_header
    _
  $region3: #{first_octave_cb.4} parent=0 // loop_header
    %s10 = sphi 0, %s14
    %p11 = scmp.ge.s32.totalorder %s10, 4
    %s17 = sphi 0, %s29
    %s18 = sphi 0, %s25
    %s19 = sphi 0, %s17
    %s20 = sphi 0, %s18
    %s21 = sphi 0, %s19
    %s22 = sphi 0, %s20
    %s32 = sphi 0, %s34
    %s35 = sphi 0, %s32
    %s36 = sphi 0, %s35
    %s52 = sphi 0, %s36
    %s56 = sphi 0, %s56
    %s58 = sphi 0, %s56
    %s59 = sphi 0, %s58
    %s73 = sphi 0, %s59
    %s79 = sphi 0, %s81
    %s82 = sphi 0, %s79
    %s83 = sphi 0, %s82
    %s99 = sphi 0, %s83
    %s105 = sphi 0, %s107
    %s108 = sphi 0, %s105
    %s109 = sphi 0, %s108
    %s125 = sphi 0, %s109
  $region4: #{first_octave_cb.4} parent=0 // loop_header_branch
    %13 = sbr.rel (%p11) target = $region8
  $region5: #{first_octave_cb.4} parent=0 // loop_body
    %s15 = ssub.s32 %s10, 1
    %s16 = ssub.s32 %s10, 2
    %s23 = sadd.s32 1, %s18
    %p24 = scmp.ge.s32.totalorder %s23, 1
    %s25 = scalar_select %p24, 0, %s23
    %s26 = sadd.s32 1, %s17
    %s27 = scalar_select %p24, %s26, %s17
    %p28 = scmp.ge.s32.totalorder %s27, 2
    %s29 = scalar_select %p28, 0, %s27
    %s30 = ssub.s32 %s17, %s29
    %p31 = scmp.eq.s32.totalorder %s30, 0
    %s33 = sadd.s32 %s32, 1
    %s34 = scalar_select %p31, %s32, %s33
    %p37 = pneg %p31
    %p38 = scmp.eq.s32.totalorder %s10, 1
    %p39 = por %p37, %p38
    %p40 = scmp.ne.s32.totalorder %s32, %s35
    %p41 = scmp.eq.s32.totalorder %s10, 0
    %p42 = por %p40, %p41
    %p43 = scmp.ne.s32.totalorder %s32, %s35
    %p44 = scmp.eq.s32.totalorder %s15, 1
    %p45 = por %p43, %p44
    %p46 = scmp.ne.s32.totalorder %s35, %s36
    %p47 = scmp.eq.s32.totalorder %s15, 0
    %p48 = por %p46, %p47
    %p49 = scmp.ne.s32.totalorder %s35, %s36
    %p50 = scmp.eq.s32.totalorder %s16, 1
    %p51 = por %p49, %p50
    %p53 = scmp.ne.s32.totalorder %s36, %s52
    %p54 = scmp.eq.s32.totalorder %s16, 0
    %p55 = por %p53, %p54
    %s57 = sadd.s32 %s56, 1
    %p60 = scmp.eq.s32.totalorder %s10, 1
    %p61 = scmp.ne.s32.totalorder %s56, %s58
    %p62 = scmp.eq.s32.totalorder %s10, 0
    %p63 = por %p61, %p62
    %p64 = scmp.ne.s32.totalorder %s56, %s58
    %p65 = scmp.eq.s32.totalorder %s15, 1
    %p66 = por %p64, %p65
    %p67 = scmp.ne.s32.totalorder %s58, %s59
    %p68 = scmp.eq.s32.totalorder %s15, 0
    %p69 = por %p67, %p68
    %p70 = scmp.ne.s32.totalorder %s58, %s59
    %p71 = scmp.eq.s32.totalorder %s16, 1
    %p72 = por %p70, %p71
    %p74 = scmp.ne.s32.totalorder %s59, %s73
    %p75 = scmp.eq.s32.totalorder %s16, 0
    %p76 = por %p74, %p75
    %s77 = ssub.s32 %s17, %s29
    %p78 = scmp.eq.s32.totalorder %s77, 0
    %s80 = sadd.s32 %s79, 1
    %s81 = scalar_select %p78, %s79, %s80
    %p84 = pneg %p78
    %p85 = scmp.eq.s32.totalorder %s10, 1
    %p86 = por %p84, %p85
    %p87 = scmp.ne.s32.totalorder %s79, %s82
    %p88 = scmp.eq.s32.totalorder %s10, 0
    %p89 = por %p87, %p88
    %p90 = scmp.ne.s32.totalorder %s79, %s82
    %p91 = scmp.eq.s32.totalorder %s15, 1
    %p92 = por %p90, %p91
    %p93 = scmp.ne.s32.totalorder %s82, %s83
    %p94 = scmp.eq.s32.totalorder %s15, 0
    %p95 = por %p93, %p94
    %p96 = scmp.ne.s32.totalorder %s82, %s83
    %p97 = scmp.eq.s32.totalorder %s16, 1
    %p98 = por %p96, %p97
    %p100 = scmp.ne.s32.totalorder %s83, %s99
    %p101 = scmp.eq.s32.totalorder %s16, 0
    %p102 = por %p100, %p101
    %s103 = ssub.s32 %s17, %s29
    %p104 = scmp.eq.s32.totalorder %s103, 0
    %s106 = sadd.s32 %s105, 1
    %s107 = scalar_select %p104, %s105, %s106
    %p110 = pneg %p104
    %p111 = scmp.eq.s32.totalorder %s10, 1
    %p112 = por %p110, %p111
    %p113 = scmp.ne.s32.totalorder %s105, %s108
    %p114 = scmp.eq.s32.totalorder %s10, 0
    %p115 = por %p113, %p114
    %p116 = scmp.ne.s32.totalorder %s105, %s108
    %p117 = scmp.eq.s32.totalorder %s15, 1
    %p118 = por %p116, %p117
    %p119 = scmp.ne.s32.totalorder %s108, %s109
    %p120 = scmp.eq.s32.totalorder %s15, 0
    %p121 = por %p119, %p120
    %p122 = scmp.ne.s32.totalorder %s108, %s109
    %p123 = scmp.eq.s32.totalorder %s16, 1
    %p124 = por %p122, %p123
    %p126 = scmp.ne.s32.totalorder %s109, %s125
    %p127 = scmp.eq.s32.totalorder %s16, 0
    %p128 = por %p126, %p127
    %p129 = scmp.le.s32.totalorder 1, %s10
    %p130 = scmp.lt.s32.totalorder %s10, 3
    %p131 = pnand %p129, %p130
    %p132 = pneg %p131
    // Predicated region
    $region9: #{first_octave_cb.4} parent=5 // pred_check
      _
    $region10: #{first_octave_cb.4} parent=5 // pred_check_branch
      %134 = sbr.rel (%p131) target = $region12
    $region11: #{first_octave_cb.4} parent=5 // pred_region
      %s135 = ssub.s32 %s10, 1
      // Predicated region
      $region13: #{first_octave_cb.4} parent=11 // pred_check
        %p136 = pneg %p69
      $region14: #{first_octave_cb.4} parent=11 // pred_check_branch
        %138 = sbr.rel (%p136) target = $region16
      $region15: #{first_octave_cb.4} parent=11 // pred_region
        _
      $region16: #{first_octave_cb.4} parent=11 // pred_fallthru
        _
    $region12: #{first_octave_cb.4} parent=5 // pred_fallthru
      _
    %p139 = scmp.lt.s32.totalorder %s10, 2
    // Predicated region
    $region17: #{first_octave_cb.4} parent=5 // pred_check
      %p140 = pneg %p139
    $region18: #{first_octave_cb.4} parent=5 // pred_check_branch
      %142 = sbr.rel (%p140) target = $region20
    $region19: #{first_octave_cb.4} parent=5 // pred_region
      // Predicated region
      $region21: #{first_octave_cb.4} parent=19 // pred_check
        %p143 = pneg %p42
      $region22: #{first_octave_cb.4} parent=19 // pred_check_branch
        %145 = sbr.rel (%p143) target = $region24
      $region23: #{first_octave_cb.4} parent=19 // pred_region
        %p146 = scmp.lt.s32.totalorder %s17, 1
        %s147 = scalar_select %p146, %s17, 1
        %s148 = smul.addr %s147, 12
        %s149 = smul.addr %s148, 4
        %s150 = scalar_lea.vmem %s0, %s149
      $region24: #{first_octave_cb.4} parent=19 // pred_fallthru
        _
    $region20: #{first_octave_cb.4} parent=5 // pred_fallthru
      _
    %p151 = scmp.le.s32.totalorder 1, %s10
    %p152 = scmp.lt.s32.totalorder %s10, 3
    %p153 = pnand %p151, %p152
    %p154 = pneg %p153
    // Predicated region
    $region25: #{first_octave_cb.4} parent=5 // pred_check
      _
    $region26: #{first_octave_cb.4} parent=5 // pred_check_branch
      %156 = sbr.rel (%p153) target = $region28
    $region27: #{first_octave_cb.4} parent=5 // pred_region
      %s157 = ssub.s32 %s10, 1
      %p158 = scmp.lt.s32.totalorder %s19, 1
      %s159 = scalar_select %p158, %s19, 1
      %s160 = smul.addr %s159, 12
      %s161 = smul.addr %s160, 4
      %s162 = scalar_lea.vmem %s0, %s161
      %p163 = pneg %p48
      %p164 = pneg %p45
      %p165 = pneg %p69
      %p166 = pneg %p66
      %p167 = pneg %p95
      %p168 = pneg %p92
      %p169 = scmp.lt.s32.totalorder %s19, 1
      %s170 = scalar_select %p169, %s19, 1
      %s171 = smul.addr %s170, 8
      %s172 = scalar_lea.vmem %s2, %s171
      %p173 = pneg %p121
      %p174 = pneg %p118
      %p175 = scmp.lt.s32.totalorder %s19, 1
      %s176 = scalar_select %p175, %s19, 1
      %s177 = smul.addr %s176, 8
      %s178 = scalar_lea.vmem %s3, %s177
      %p179 = scmp.lt.s32.totalorder %s19, 1
      %s180 = scalar_select %p179, %s19, 1
      %s181 = smul.addr %s180, 12
      %s182 = smul.addr %s181, 4
      %s183 = scalar_lea.vmem %s0, %s182
      %p184 = scmp.lt.s32.totalorder %s19, 1
      %s185 = scalar_select %p184, %s19, 1
      %s186 = smul.addr %s185, 8
      %s187 = scalar_lea.vmem %s2, %s186
      %p188 = scmp.lt.s32.totalorder %s19, 1
      %s189 = scalar_select %p188, %s19, 1
      %s190 = smul.addr %s189, 8
      %s191 = scalar_lea.vmem %s3, %s190
      %p193 = scmp.eq.s32.totalorder %s20, 0
      // Predicated region
      $region29: #{first_octave_cb.4} parent=27 // pred_check
        %p194 = pneg %p193
      $region30: #{first_octave_cb.4} parent=27 // pred_check_branch
        %196 = sbr.rel (%p194) target = $region32
      $region31: #{first_octave_cb.4} parent=27 // pred_region
        %vm197 = vcmask 7168
        %198 = vst.msk [vmem:[%s187] sm:$0xff] %vm197, 0.0
        %199 = vst.msk [vmem:[%s191] sm:$0xff] %vm197, 0.0
      $region32: #{first_octave_cb.4} parent=27 // pred_fallthru
        _
      %s200 = smul.u32 %s20, 16
      %s201 = sshra.s32 %s200, 3
      %s202 = sand.u32 %s200, 7
      %s203 = smul.addr %s201, 4
      %s204 = scalar_lea.vmem %s183, %s203
      %v205 = vld [vmem:[%s204] sm:$0xf]
      %v206 = vld [vmem:[%s204 + $0x4] sm:$0xf]
      %v207 = vld [vmem:[%s204 + $0x8] sm:$0x1]
      %v208 = vld [vmem:[%s204 + $0xc] sm:$0xf]
      %v209 = vld [vmem:[%s204 + $0x10] sm:$0xf]
      %v210 = vld [vmem:[%s204 + $0x14] sm:$0x1]
      %v211 = vld [vmem:[%s204 + $0x18] sm:$0xf]
      %v212 = vld [vmem:[%s204 + $0x1c] sm:$0xf]
      %v213 = vld [vmem:[%s204 + $0x20] sm:$0x1]
      %v214 = vld [vmem:[%s204 + $0x24] sm:$0xf]
      %v215 = vld [vmem:[%s204 + $0x28] sm:$0xf]
      %v216 = vld [vmem:[%s204 + $0x2c] sm:$0x1]
      %v219 = vpack.i.b16 %v208, %v205
      %v220 = vshrl.u32 %v205, 16
      %v221 = vshrl.u32 %v208, 16
      %v222 = vpack.i.b16 %v221, %v220
      %v225 = vpack.i.b16 %v214, %v211
      %v226 = vshrl.u32 %v211, 16
      %v227 = vshrl.u32 %v214, 16
      %v228 = vpack.i.b16 %v227, %v226
      %v231 = vpack.i.b16 %v209, %v206
      %v232 = vshrl.u32 %v206, 16
      %v233 = vshrl.u32 %v209, 16
      %v234 = vpack.i.b16 %v233, %v232
      %v237 = vpack.i.b16 %v215, %v212
      %v238 = vshrl.u32 %v212, 16
      %v239 = vshrl.u32 %v215, 16
      %v240 = vpack.i.b16 %v239, %v238
      %v243 = vunpack.c.l.s4 1983009808
      %v244 = vunpack.c.0.s8 %v243
      %v245 = vlaneseq
      %v246 = vshrl.u32 %v245, 7
      %v247 = vsub.s32 %v244, %v246
      %v248 = vrot.slane %v219, %v247
      %v251 = vunpack.c.l.s4 1983009808
      %v252 = vunpack.c.0.s8 %v251
      %v253 = vlaneseq
      %v254 = vshrl.u32 %v253, 7
      %v255 = vsub.s32 %v252, %v254
      %v256 = vrot.slane %v225, %v255
      %v257 = vcombine.low %v248, %v256
      %v258 = vcombine.high %v248, %v256
      %v260 = vunpack.c.l.s4 1934713408
      %v261 = vunpack.c.0.s8 %v260
      %v262 = vlaneseq
      %v263 = vshrl.u32 %v262, 7
      %v264 = vsub.s32 %v261, %v263
      %v265 = vrot.slane %v257, %v264
      %v267 = vunpack.c.l.s4 1934713408
      %v268 = vunpack.c.0.s8 %v267
      %v269 = vlaneseq
      %v270 = vshrl.u32 %v269, 7
      %v271 = vsub.s32 %v268, %v270
      %v272 = vrot.slane %v258, %v271
      %v273 = vcombine.high %v265, 0
      %v274 = vcombine.high %v272, 0
      %v277 = vunpack.c.l.s4 1983009808
      %v278 = vunpack.c.0.s8 %v277
      %v279 = vlaneseq
      %v280 = vshrl.u32 %v279, 7
      %v281 = vsub.s32 %v278, %v280
      %v282 = vrot.slane %v222, %v281
      %v285 = vunpack.c.l.s4 1983009808
      %v286 = vunpack.c.0.s8 %v285
      %v287 = vlaneseq
      %v288 = vshrl.u32 %v287, 7
      %v289 = vsub.s32 %v286, %v288
      %v290 = vrot.slane %v228, %v289
      %v291 = vcombine.low %v282, %v290
      %v292 = vcombine.high %v282, %v290
      %v294 = vunpack.c.l.s4 1934713408
      %v295 = vunpack.c.0.s8 %v294
      %v296 = vlaneseq
      %v297 = vshrl.u32 %v296, 7
      %v298 = vsub.s32 %v295, %v297
      %v299 = vrot.slane %v291, %v298
      %v301 = vunpack.c.l.s4 1934713408
      %v302 = vunpack.c.0.s8 %v301
      %v303 = vlaneseq
      %v304 = vshrl.u32 %v303, 7
      %v305 = vsub.s32 %v302, %v304
      %v306 = vrot.slane %v292, %v305
      %v307 = vcombine.high %v299, 0
      %v308 = vcombine.high %v306, 0
      %v311 = vunpack.c.l.s4 1983009808
      %v312 = vunpack.c.0.s8 %v311
      %v313 = vlaneseq
      %v314 = vshrl.u32 %v313, 7
      %v315 = vsub.s32 %v312, %v314
      %v316 = vrot.slane %v231, %v315
      %v319 = vunpack.c.l.s4 1983009808
      %v320 = vunpack.c.0.s8 %v319
      %v321 = vlaneseq
      %v322 = vshrl.u32 %v321, 7
      %v323 = vsub.s32 %v320, %v322
      %v324 = vrot.slane %v237, %v323
      %v325 = vcombine.low %v316, %v324
      %v326 = vcombine.high %v316, %v324
      %v328 = vunpack.c.l.s4 1934713408
      %v329 = vunpack.c.0.s8 %v328
      %v330 = vlaneseq
      %v331 = vshrl.u32 %v330, 7
      %v332 = vsub.s32 %v329, %v331
      %v333 = vrot.slane %v325, %v332
      %v335 = vunpack.c.l.s4 1934713408
      %v336 = vunpack.c.0.s8 %v335
      %v337 = vlaneseq
      %v338 = vshrl.u32 %v337, 7
      %v339 = vsub.s32 %v336, %v338
      %v340 = vrot.slane %v326, %v339
      %v341 = vcombine.high %v333, 0
      %v342 = vcombine.high %v340, 0
      %v345 = vunpack.c.l.s4 1983009808
      %v346 = vunpack.c.0.s8 %v345
      %v347 = vlaneseq
      %v348 = vshrl.u32 %v347, 7
      %v349 = vsub.s32 %v346, %v348
      %v350 = vrot.slane %v234, %v349
      %v353 = vunpack.c.l.s4 1983009808
      %v354 = vunpack.c.0.s8 %v353
      %v355 = vlaneseq
      %v356 = vshrl.u32 %v355, 7
      %v357 = vsub.s32 %v354, %v356
      %v358 = vrot.slane %v240, %v357
      %v359 = vcombine.low %v350, %v358
      %v360 = vcombine.high %v350, %v358
      %v362 = vunpack.c.l.s4 1934713408
      %v363 = vunpack.c.0.s8 %v362
      %v364 = vlaneseq
      %v365 = vshrl.u32 %v364, 7
      %v366 = vsub.s32 %v363, %v365
      %v367 = vrot.slane %v359, %v366
      %v369 = vunpack.c.l.s4 1934713408
      %v370 = vunpack.c.0.s8 %v369
      %v371 = vlaneseq
      %v372 = vshrl.u32 %v371, 7
      %v373 = vsub.s32 %v370, %v372
      %v374 = vrot.slane %v360, %v373
      %v375 = vcombine.high %v367, 0
      %v376 = vcombine.high %v374, 0
      %v378 = vunpack.c.l.b16 %v299
      %v379 = vpack.c.b16 %v378, %v378
      %380 = vrot.lane.b32.xlu0 %v379, 16
      %v381 = vpop.permute.xlu0 %380
      %v383 = vunpack.c.l.b16 %v273
      %v384 = vpack.c.b16 %v383, %v383
      %385 = vrot.lane.b32.xlu0 %v384, 32
      %v386 = vpop.permute.xlu0 %385
      %v388 = vunpack.c.l.b16 %v307
      %v389 = vpack.c.b16 %v388, %v388
      %390 = vrot.lane.b32.xlu0 %v389, 48
      %v391 = vpop.permute.xlu0 %390
      %v393 = vunpack.c.l.b16 %v272
      %v394 = vpack.c.b16 %v393, %v393
      %395 = vrot.lane.b32.xlu0 %v394, 64
      %v396 = vpop.permute.xlu0 %395
      %v398 = vunpack.c.l.b16 %v306
      %v399 = vpack.c.b16 %v398, %v398
      %400 = vrot.lane.b32.xlu0 %v399, 80
      %v401 = vpop.permute.xlu0 %400
      %v403 = vunpack.c.l.b16 %v274
      %v404 = vpack.c.b16 %v403, %v403
      %405 = vrot.lane.b32.xlu0 %v404, 96
      %v406 = vpop.permute.xlu0 %405
      %v408 = vunpack.c.l.b16 %v308
      %v409 = vpack.c.b16 %v408, %v408
      %410 = vrot.lane.b32.xlu0 %v409, 112
      %v411 = vpop.permute.xlu0 %410
      %v413 = vunpack.c.l.b16 %v367
      %v414 = vpack.c.b16 %v413, %v413
      %415 = vrot.lane.b32.xlu0 %v414, 16
      %v416 = vpop.permute.xlu0 %415
      %v418 = vunpack.c.l.b16 %v341
      %v419 = vpack.c.b16 %v418, %v418
      %420 = vrot.lane.b32.xlu0 %v419, 32
      %v421 = vpop.permute.xlu0 %420
      %v423 = vunpack.c.l.b16 %v375
      %v424 = vpack.c.b16 %v423, %v423
      %425 = vrot.lane.b32.xlu0 %v424, 48
      %v426 = vpop.permute.xlu0 %425
      %v428 = vunpack.c.l.b16 %v340
      %v429 = vpack.c.b16 %v428, %v428
      %430 = vrot.lane.b32.xlu0 %v429, 64
      %v431 = vpop.permute.xlu0 %430
      %v433 = vunpack.c.l.b16 %v374
      %v434 = vpack.c.b16 %v433, %v433
      %435 = vrot.lane.b32.xlu0 %v434, 80
      %v436 = vpop.permute.xlu0 %435
      %v438 = vunpack.c.l.b16 %v342
      %v439 = vpack.c.b16 %v438, %v438
      %440 = vrot.lane.b32.xlu0 %v439, 96
      %v441 = vpop.permute.xlu0 %440
      %v443 = vunpack.c.l.b16 %v376
      %v444 = vpack.c.b16 %v443, %v443
      %445 = vrot.lane.b32.xlu0 %v444, 112
      %v446 = vpop.permute.xlu0 %445
      %vm447 = vcmask 130048
      %v450 = vsel %vm447, %v265, %v381
      %vm451 = vcmask 261120
      %v453 = vsel %vm451, %v450, %v386
      %vm454 = vcmask 392192
      %v456 = vsel %vm454, %v453, %v391
      %vm457 = vcmask 523264
      %v459 = vsel %vm457, %v456, %v396
      %vm460 = vcmask 654336
      %v462 = vsel %vm460, %v459, %v401
      %vm463 = vcmask 785408
      %v465 = vsel %vm463, %v462, %v406
      %vm466 = vcmask 916480
      %v468 = vsel %vm466, %v465, %v411
      %v471 = vsel %vm447, %v333, %v416
      %v473 = vsel %vm451, %v471, %v421
      %v475 = vsel %vm454, %v473, %v426
      %v477 = vsel %vm457, %v475, %v431
      %v479 = vsel %vm460, %v477, %v436
      %v481 = vsel %vm463, %v479, %v441
      %v483 = vsel %vm466, %v481, %v446
      %v486 = vunpack.c.l.b16 %v468
      %v487 = vunpack.c.l.b16 %v483
      %v488 = vpack.c.b16 %v487, %v486
      %490 = vst [vmem:[#allocation2] sm:$0x33] %v488
      %499 = vrot.lane.b32.xlu0 %v205, 127
      %v500 = vpop.permute.xlu0 %499
      %501 = vrot.lane.b32.xlu0 %v206, 127
      %v502 = vpop.permute.xlu0 %501
      %503 = vrot.lane.b32.xlu0 %v208, 127
      %v504 = vpop.permute.xlu0 %503
      %505 = vrot.lane.b32.xlu0 %v209, 127
      %v506 = vpop.permute.xlu0 %505
      %507 = vrot.lane.b32.xlu0 %v211, 127
      %v508 = vpop.permute.xlu0 %507
      %509 = vrot.lane.b32.xlu0 %v212, 127
      %v510 = vpop.permute.xlu0 %509
      %511 = vrot.lane.b32.xlu0 %v214, 127
      %v512 = vpop.permute.xlu0 %511
      %513 = vrot.lane.b32.xlu0 %v215, 127
      %v514 = vpop.permute.xlu0 %513
      %v517 = vpack.i.b16 %v504, %v500
      %v518 = vshrl.u32 %v500, 16
      %v519 = vshrl.u32 %v504, 16
      %v520 = vpack.i.b16 %v519, %v518
      %v523 = vpack.i.b16 %v512, %v508
      %v524 = vshrl.u32 %v508, 16
      %v525 = vshrl.u32 %v512, 16
      %v526 = vpack.i.b16 %v525, %v524
      %v529 = vpack.i.b16 %v506, %v502
      %v530 = vshrl.u32 %v502, 16
      %v531 = vshrl.u32 %v506, 16
      %v532 = vpack.i.b16 %v531, %v530
      %v535 = vpack.i.b16 %v514, %v510
      %v536 = vshrl.u32 %v510, 16
      %v537 = vshrl.u32 %v514, 16
      %v538 = vpack.i.b16 %v537, %v536
      %v541 = vunpack.c.l.s4 1983009808
      %v542 = vunpack.c.0.s8 %v541
      %v543 = vlaneseq
      %v544 = vshrl.u32 %v543, 7
      %v545 = vsub.s32 %v542, %v544
      %v546 = vrot.slane %v517, %v545
      %v549 = vunpack.c.l.s4 1983009808
      %v550 = vunpack.c.0.s8 %v549
      %v551 = vlaneseq
      %v552 = vshrl.u32 %v551, 7
      %v553 = vsub.s32 %v550, %v552
      %v554 = vrot.slane %v523, %v553
      %v555 = vcombine.low %v546, %v554
      %v556 = vcombine.high %v546, %v554
      %v558 = vunpack.c.l.s4 1934713408
      %v559 = vunpack.c.0.s8 %v558
      %v560 = vlaneseq
      %v561 = vshrl.u32 %v560, 7
      %v562 = vsub.s32 %v559, %v561
      %v563 = vrot.slane %v555, %v562
      %v565 = vunpack.c.l.s4 1934713408
      %v566 = vunpack.c.0.s8 %v565
      %v567 = vlaneseq
      %v568 = vshrl.u32 %v567, 7
      %v569 = vsub.s32 %v566, %v568
      %v570 = vrot.slane %v556, %v569
      %v571 = vcombine.high %v563, 0
      %v572 = vcombine.high %v570, 0
      %v575 = vunpack.c.l.s4 1983009808
      %v576 = vunpack.c.0.s8 %v575
      %v577 = vlaneseq
      %v578 = vshrl.u32 %v577, 7
      %v579 = vsub.s32 %v576, %v578
      %v580 = vrot.slane %v520, %v579
      %v583 = vunpack.c.l.s4 1983009808
      %v584 = vunpack.c.0.s8 %v583
      %v585 = vlaneseq
      %v586 = vshrl.u32 %v585, 7
      %v587 = vsub.s32 %v584, %v586
      %v588 = vrot.slane %v526, %v587
      %v589 = vcombine.low %v580, %v588
      %v590 = vcombine.high %v580, %v588
      %v592 = vunpack.c.l.s4 1934713408
      %v593 = vunpack.c.0.s8 %v592
      %v594 = vlaneseq
      %v595 = vshrl.u32 %v594, 7
      %v596 = vsub.s32 %v593, %v595
      %v597 = vrot.slane %v589, %v596
      %v599 = vunpack.c.l.s4 1934713408
      %v600 = vunpack.c.0.s8 %v599
      %v601 = vlaneseq
      %v602 = vshrl.u32 %v601, 7
      %v603 = vsub.s32 %v600, %v602
      %v604 = vrot.slane %v590, %v603
      %v605 = vcombine.high %v597, 0
      %v606 = vcombine.high %v604, 0
      %v609 = vunpack.c.l.s4 1983009808
      %v610 = vunpack.c.0.s8 %v609
      %v611 = vlaneseq
      %v612 = vshrl.u32 %v611, 7
      %v613 = vsub.s32 %v610, %v612
      %v614 = vrot.slane %v529, %v613
      %v617 = vunpack.c.l.s4 1983009808
      %v618 = vunpack.c.0.s8 %v617
      %v619 = vlaneseq
      %v620 = vshrl.u32 %v619, 7
      %v621 = vsub.s32 %v618, %v620
      %v622 = vrot.slane %v535, %v621
      %v623 = vcombine.low %v614, %v622
      %v624 = vcombine.high %v614, %v622
      %v626 = vunpack.c.l.s4 1934713408
      %v627 = vunpack.c.0.s8 %v626
      %v628 = vlaneseq
      %v629 = vshrl.u32 %v628, 7
      %v630 = vsub.s32 %v627, %v629
      %v631 = vrot.slane %v623, %v630
      %v633 = vunpack.c.l.s4 1934713408
      %v634 = vunpack.c.0.s8 %v633
      %v635 = vlaneseq
      %v636 = vshrl.u32 %v635, 7
      %v637 = vsub.s32 %v634, %v636
      %v638 = vrot.slane %v624, %v637
      %v639 = vcombine.high %v631, 0
      %v640 = vcombine.high %v638, 0
      %v643 = vunpack.c.l.s4 1983009808
      %v644 = vunpack.c.0.s8 %v643
      %v645 = vlaneseq
      %v646 = vshrl.u32 %v645, 7
      %v647 = vsub.s32 %v644, %v646
      %v648 = vrot.slane %v532, %v647
      %v651 = vunpack.c.l.s4 1983009808
      %v652 = vunpack.c.0.s8 %v651
      %v653 = vlaneseq
      %v654 = vshrl.u32 %v653, 7
      %v655 = vsub.s32 %v652, %v654
      %v656 = vrot.slane %v538, %v655
      %v657 = vcombine.low %v648, %v656
      %v658 = vcombine.high %v648, %v656
      %v660 = vunpack.c.l.s4 1934713408
      %v661 = vunpack.c.0.s8 %v660
      %v662 = vlaneseq
      %v663 = vshrl.u32 %v662, 7
      %v664 = vsub.s32 %v661, %v663
      %v665 = vrot.slane %v657, %v664
      %v667 = vunpack.c.l.s4 1934713408
      %v668 = vunpack.c.0.s8 %v667
      %v669 = vlaneseq
      %v670 = vshrl.u32 %v669, 7
      %v671 = vsub.s32 %v668, %v670
      %v672 = vrot.slane %v658, %v671
      %v673 = vcombine.high %v665, 0
      %v674 = vcombine.high %v672, 0
      %v676 = vunpack.c.l.b16 %v597
      %v677 = vpack.c.b16 %v676, %v676
      %678 = vrot.lane.b32.xlu0 %v677, 16
      %v679 = vpop.permute.xlu0 %678
      %v681 = vunpack.c.l.b16 %v571
      %v682 = vpack.c.b16 %v681, %v681
      %683 = vrot.lane.b32.xlu0 %v682, 32
      %v684 = vpop.permute.xlu0 %683
      %v686 = vunpack.c.l.b16 %v605
      %v687 = vpack.c.b16 %v686, %v686
      %688 = vrot.lane.b32.xlu0 %v687, 48
      %v689 = vpop.permute.xlu0 %688
      %v691 = vunpack.c.l.b16 %v570
      %v692 = vpack.c.b16 %v691, %v691
      %693 = vrot.lane.b32.xlu0 %v692, 64
      %v694 = vpop.permute.xlu0 %693
      %v696 = vunpack.c.l.b16 %v604
      %v697 = vpack.c.b16 %v696, %v696
      %698 = vrot.lane.b32.xlu0 %v697, 80
      %v699 = vpop.permute.xlu0 %698
      %v701 = vunpack.c.l.b16 %v572
      %v702 = vpack.c.b16 %v701, %v701
      %703 = vrot.lane.b32.xlu0 %v702, 96
      %v704 = vpop.permute.xlu0 %703
      %v706 = vunpack.c.l.b16 %v606
      %v707 = vpack.c.b16 %v706, %v706
      %708 = vrot.lane.b32.xlu0 %v707, 112
      %v709 = vpop.permute.xlu0 %708
      %v711 = vunpack.c.l.b16 %v665
      %v712 = vpack.c.b16 %v711, %v711
      %713 = vrot.lane.b32.xlu0 %v712, 16
      %v714 = vpop.permute.xlu0 %713
      %v716 = vunpack.c.l.b16 %v639
      %v717 = vpack.c.b16 %v716, %v716
      %718 = vrot.lane.b32.xlu0 %v717, 32
      %v719 = vpop.permute.xlu0 %718
      %v721 = vunpack.c.l.b16 %v673
      %v722 = vpack.c.b16 %v721, %v721
      %723 = vrot.lane.b32.xlu0 %v722, 48
      %v724 = vpop.permute.xlu0 %723
      %v726 = vunpack.c.l.b16 %v638
      %v727 = vpack.c.b16 %v726, %v726
      %728 = vrot.lane.b32.xlu0 %v727, 64
      %v729 = vpop.permute.xlu0 %728
      %v731 = vunpack.c.l.b16 %v672
      %v732 = vpack.c.b16 %v731, %v731
      %733 = vrot.lane.b32.xlu0 %v732, 80
      %v734 = vpop.permute.xlu0 %733
      %v736 = vunpack.c.l.b16 %v640
      %v737 = vpack.c.b16 %v736, %v736
      %738 = vrot.lane.b32.xlu0 %v737, 96
      %v739 = vpop.permute.xlu0 %738
      %v741 = vunpack.c.l.b16 %v674
      %v742 = vpack.c.b16 %v741, %v741
      %743 = vrot.lane.b32.xlu0 %v742, 112
      %v744 = vpop.permute.xlu0 %743
      %v747 = vsel %vm447, %v563, %v679
      %v749 = vsel %vm451, %v747, %v684
      %v751 = vsel %vm454, %v749, %v689
      %v753 = vsel %vm457, %v751, %v694
      %v755 = vsel %vm460, %v753, %v699
      %v757 = vsel %vm463, %v755, %v704
      %v759 = vsel %vm466, %v757, %v709
      %v762 = vsel %vm447, %v631, %v714
      %v764 = vsel %vm451, %v762, %v719
      %v766 = vsel %vm454, %v764, %v724
      %v768 = vsel %vm457, %v766, %v729
      %v770 = vsel %vm460, %v768, %v734
      %v772 = vsel %vm463, %v770, %v739
      %v774 = vsel %vm466, %v772, %v744
      %v777 = vunpack.c.l.b16 %v759
      %v778 = vunpack.c.l.b16 %v774
      %v779 = vpack.c.b16 %v778, %v777
      %v780 = vrot.slane %v779, 6
      %782 = vst [vmem:[#allocation2] sm:$0xcc] %v780
      %783 = vrot.lane.b32.xlu0 %v205, 126
      %v784 = vpop.permute.xlu0 %783
      %785 = vrot.lane.b32.xlu0 %v206, 126
      %v786 = vpop.permute.xlu0 %785
      %787 = vrot.lane.b32.xlu0 %v208, 126
      %v788 = vpop.permute.xlu0 %787
      %789 = vrot.lane.b32.xlu0 %v209, 126
      %v790 = vpop.permute.xlu0 %789
      %791 = vrot.lane.b32.xlu0 %v211, 126
      %v792 = vpop.permute.xlu0 %791
      %793 = vrot.lane.b32.xlu0 %v212, 126
      %v794 = vpop.permute.xlu0 %793
      %795 = vrot.lane.b32.xlu0 %v214, 126
      %v796 = vpop.permute.xlu0 %795
      %797 = vrot.lane.b32.xlu0 %v215, 126
      %v798 = vpop.permute.xlu0 %797
      %v801 = vpack.i.b16 %v788, %v784
      %v802 = vshrl.u32 %v784, 16
      %v803 = vshrl.u32 %v788, 16
      %v804 = vpack.i.b16 %v803, %v802
      %v807 = vpack.i.b16 %v796, %v792
      %v808 = vshrl.u32 %v792, 16
      %v809 = vshrl.u32 %v796, 16
      %v810 = vpack.i.b16 %v809, %v808
      %v813 = vpack.i.b16 %v790, %v786
      %v814 = vshrl.u32 %v786, 16
      %v815 = vshrl.u32 %v790, 16
      %v816 = vpack.i.b16 %v815, %v814
      %v819 = vpack.i.b16 %v798, %v794
      %v820 = vshrl.u32 %v794, 16
      %v821 = vshrl.u32 %v798, 16
      %v822 = vpack.i.b16 %v821, %v820
      %v825 = vunpack.c.l.s4 1983009808
      %v826 = vunpack.c.0.s8 %v825
      %v827 = vlaneseq
      %v828 = vshrl.u32 %v827, 7
      %v829 = vsub.s32 %v826, %v828
      %v830 = vrot.slane %v801, %v829
      %v833 = vunpack.c.l.s4 1983009808
      %v834 = vunpack.c.0.s8 %v833
      %v835 = vlaneseq
      %v836 = vshrl.u32 %v835, 7
      %v837 = vsub.s32 %v834, %v836
      %v838 = vrot.slane %v807, %v837
      %v839 = vcombine.low %v830, %v838
      %v840 = vcombine.high %v830, %v838
      %v842 = vunpack.c.l.s4 1934713408
      %v843 = vunpack.c.0.s8 %v842
      %v844 = vlaneseq
      %v845 = vshrl.u32 %v844, 7
      %v846 = vsub.s32 %v843, %v845
      %v847 = vrot.slane %v839, %v846
      %v849 = vunpack.c.l.s4 1934713408
      %v850 = vunpack.c.0.s8 %v849
      %v851 = vlaneseq
      %v852 = vshrl.u32 %v851, 7
      %v853 = vsub.s32 %v850, %v852
      %v854 = vrot.slane %v840, %v853
      %v855 = vcombine.high %v847, 0
      %v856 = vcombine.high %v854, 0
      %v859 = vunpack.c.l.s4 1983009808
      %v860 = vunpack.c.0.s8 %v859
      %v861 = vlaneseq
      %v862 = vshrl.u32 %v861, 7
      %v863 = vsub.s32 %v860, %v862
      %v864 = vrot.slane %v804, %v863
      %v867 = vunpack.c.l.s4 1983009808
      %v868 = vunpack.c.0.s8 %v867
      %v869 = vlaneseq
      %v870 = vshrl.u32 %v869, 7
      %v871 = vsub.s32 %v868, %v870
      %v872 = vrot.slane %v810, %v871
      %v873 = vcombine.low %v864, %v872
      %v874 = vcombine.high %v864, %v872
      %v876 = vunpack.c.l.s4 1934713408
      %v877 = vunpack.c.0.s8 %v876
      %v878 = vlaneseq
      %v879 = vshrl.u32 %v878, 7
      %v880 = vsub.s32 %v877, %v879
      %v881 = vrot.slane %v873, %v880
      %v883 = vunpack.c.l.s4 1934713408
      %v884 = vunpack.c.0.s8 %v883
      %v885 = vlaneseq
      %v886 = vshrl.u32 %v885, 7
      %v887 = vsub.s32 %v884, %v886
      %v888 = vrot.slane %v874, %v887
      %v889 = vcombine.high %v881, 0
      %v890 = vcombine.high %v888, 0
      %v893 = vunpack.c.l.s4 1983009808
      %v894 = vunpack.c.0.s8 %v893
      %v895 = vlaneseq
      %v896 = vshrl.u32 %v895, 7
      %v897 = vsub.s32 %v894, %v896
      %v898 = vrot.slane %v813, %v897
      %v901 = vunpack.c.l.s4 1983009808
      %v902 = vunpack.c.0.s8 %v901
      %v903 = vlaneseq
      %v904 = vshrl.u32 %v903, 7
      %v905 = vsub.s32 %v902, %v904
      %v906 = vrot.slane %v819, %v905
      %v907 = vcombine.low %v898, %v906
      %v908 = vcombine.high %v898, %v906
      %v910 = vunpack.c.l.s4 1934713408
      %v911 = vunpack.c.0.s8 %v910
      %v912 = vlaneseq
      %v913 = vshrl.u32 %v912, 7
      %v914 = vsub.s32 %v911, %v913
      %v915 = vrot.slane %v907, %v914
      %v917 = vunpack.c.l.s4 1934713408
      %v918 = vunpack.c.0.s8 %v917
      %v919 = vlaneseq
      %v920 = vshrl.u32 %v919, 7
      %v921 = vsub.s32 %v918, %v920
      %v922 = vrot.slane %v908, %v921
      %v923 = vcombine.high %v915, 0
      %v924 = vcombine.high %v922, 0
      %v927 = vunpack.c.l.s4 1983009808
      %v928 = vunpack.c.0.s8 %v927
      %v929 = vlaneseq
      %v930 = vshrl.u32 %v929, 7
      %v931 = vsub.s32 %v928, %v930
      %v932 = vrot.slane %v816, %v931
      %v935 = vunpack.c.l.s4 1983009808
      %v936 = vunpack.c.0.s8 %v935
      %v937 = vlaneseq
      %v938 = vshrl.u32 %v937, 7
      %v939 = vsub.s32 %v936, %v938
      %v940 = vrot.slane %v822, %v939
      %v941 = vcombine.low %v932, %v940
      %v942 = vcombine.high %v932, %v940
      %v944 = vunpack.c.l.s4 1934713408
      %v945 = vunpack.c.0.s8 %v944
      %v946 = vlaneseq
      %v947 = vshrl.u32 %v946, 7
      %v948 = vsub.s32 %v945, %v947
      %v949 = vrot.slane %v941, %v948
      %v951 = vunpack.c.l.s4 1934713408
      %v952 = vunpack.c.0.s8 %v951
      %v953 = vlaneseq
      %v954 = vshrl.u32 %v953, 7
      %v955 = vsub.s32 %v952, %v954
      %v956 = vrot.slane %v942, %v955
      %v957 = vcombine.high %v949, 0
      %v958 = vcombine.high %v956, 0
      %v960 = vunpack.c.l.b16 %v881
      %v961 = vpack.c.b16 %v960, %v960
      %962 = vrot.lane.b32.xlu0 %v961, 16
      %v963 = vpop.permute.xlu0 %962
      %v965 = vunpack.c.l.b16 %v855
      %v966 = vpack.c.b16 %v965, %v965
      %967 = vrot.lane.b32.xlu0 %v966, 32
      %v968 = vpop.permute.xlu0 %967
      %v970 = vunpack.c.l.b16 %v889
      %v971 = vpack.c.b16 %v970, %v970
      %972 = vrot.lane.b32.xlu0 %v971, 48
      %v973 = vpop.permute.xlu0 %972
      %v975 = vunpack.c.l.b16 %v854
      %v976 = vpack.c.b16 %v975, %v975
      %977 = vrot.lane.b32.xlu0 %v976, 64
      %v978 = vpop.permute.xlu0 %977
      %v980 = vunpack.c.l.b16 %v888
      %v981 = vpack.c.b16 %v980, %v980
      %982 = vrot.lane.b32.xlu0 %v981, 80
      %v983 = vpop.permute.xlu0 %982
      %v985 = vunpack.c.l.b16 %v856
      %v986 = vpack.c.b16 %v985, %v985
      %987 = vrot.lane.b32.xlu0 %v986, 96
      %v988 = vpop.permute.xlu0 %987
      %v990 = vunpack.c.l.b16 %v890
      %v991 = vpack.c.b16 %v990, %v990
      %992 = vrot.lane.b32.xlu0 %v991, 112
      %v993 = vpop.permute.xlu0 %992
      %v995 = vunpack.c.l.b16 %v949
      %v996 = vpack.c.b16 %v995, %v995
      %997 = vrot.lane.b32.xlu0 %v996, 16
      %v998 = vpop.permute.xlu0 %997
      %v1000 = vunpack.c.l.b16 %v923
      %v1001 = vpack.c.b16 %v1000, %v1000
      %1002 = vrot.lane.b32.xlu0 %v1001, 32
      %v1003 = vpop.permute.xlu0 %1002
      %v1005 = vunpack.c.l.b16 %v957
      %v1006 = vpack.c.b16 %v1005, %v1005
      %1007 = vrot.lane.b32.xlu0 %v1006, 48
      %v1008 = vpop.permute.xlu0 %1007
      %v1010 = vunpack.c.l.b16 %v922
      %v1011 = vpack.c.b16 %v1010, %v1010
      %1012 = vrot.lane.b32.xlu0 %v1011, 64
      %v1013 = vpop.permute.xlu0 %1012
      %v1015 = vunpack.c.l.b16 %v956
      %v1016 = vpack.c.b16 %v1015, %v1015
      %1017 = vrot.lane.b32.xlu0 %v1016, 80
      %v1018 = vpop.permute.xlu0 %1017
      %v1020 = vunpack.c.l.b16 %v924
      %v1021 = vpack.c.b16 %v1020, %v1020
      %1022 = vrot.lane.b32.xlu0 %v1021, 96
      %v1023 = vpop.permute.xlu0 %1022
      %v1025 = vunpack.c.l.b16 %v958
      %v1026 = vpack.c.b16 %v1025, %v1025
      %1027 = vrot.lane.b32.xlu0 %v1026, 112
      %v1028 = vpop.permute.xlu0 %1027
      %v1031 = vsel %vm447, %v847, %v963
      %v1033 = vsel %vm451, %v1031, %v968
      %v1035 = vsel %vm454, %v1033, %v973
      %v1037 = vsel %vm457, %v1035, %v978
      %v1039 = vsel %vm460, %v1037, %v983
      %v1041 = vsel %vm463, %v1039, %v988
      %v1043 = vsel %vm466, %v1041, %v993
      %v1046 = vsel %vm447, %v915, %v998
      %v1048 = vsel %vm451, %v1046, %v1003
      %v1050 = vsel %vm454, %v1048, %v1008
      %v1052 = vsel %vm457, %v1050, %v1013
      %v1054 = vsel %vm460, %v1052, %v1018
      %v1056 = vsel %vm463, %v1054, %v1023
      %v1058 = vsel %vm466, %v1056, %v1028
      %v1061 = vunpack.c.l.b16 %v1043
      %v1062 = vunpack.c.l.b16 %v1058
      %v1063 = vpack.c.b16 %v1062, %v1061
      %1065 = vst [vmem:[#allocation2 + $0x8] sm:$0x33] %v1063
      %vm1066 = vsmask.f32 3328
      %vm1067 = vsmask.f32 7440
      %vm1068 = vmor %vm1066, %vm1067
      %v1070 = vrot.slane %v220, 4
      %v1071 = vshll.u32 %v205, 16
      %v1073 = vrot.slane %v1071, 5
      %v1074 = vor.u32 %v1070, %v1073
      %v1075 = vrot.slane %v1074, 4
      %v1076 = vshll.u32 %v206, 16
      %v1078 = vrot.slane %v1076, 5
      %v1079 = vsel %vm1068, %v1075, %v1078
      %v1081 = vrot.slane %v232, 4
      %v1082 = vor.u32 %v1081, %v1078
      %v1083 = vrot.slane %v1082, 4
      %v1085 = vshll.u32 %v207, 16
      %v1087 = vrot.slane %v1085, 5
      %v1088 = vsel %vm1068, %v1083, %v1087
      %v1090 = vrot.slane %v221, 4
      %v1091 = vshll.u32 %v208, 16
      %v1093 = vrot.slane %v1091, 5
      %v1094 = vor.u32 %v1090, %v1093
      %v1095 = vrot.slane %v1094, 4
      %v1096 = vshll.u32 %v209, 16
      %v1098 = vrot.slane %v1096, 5
      %v1099 = vsel %vm1068, %v1095, %v1098
      %v1101 = vrot.slane %v233, 4
      %v1102 = vor.u32 %v1101, %v1098
      %v1103 = vrot.slane %v1102, 4
      %v1105 = vshll.u32 %v210, 16
      %v1107 = vrot.slane %v1105, 5
      %v1108 = vsel %vm1068, %v1103, %v1107
      %v1110 = vrot.slane %v226, 4
      %v1111 = vshll.u32 %v211, 16
      %v1113 = vrot.slane %v1111, 5
      %v1114 = vor.u32 %v1110, %v1113
      %v1115 = vrot.slane %v1114, 4
      %v1116 = vshll.u32 %v212, 16
      %v1118 = vrot.slane %v1116, 5
      %v1119 = vsel %vm1068, %v1115, %v1118
      %v1121 = vrot.slane %v238, 4
      %v1122 = vor.u32 %v1121, %v1118
      %v1123 = vrot.slane %v1122, 4
      %v1125 = vshll.u32 %v213, 16
      %v1127 = vrot.slane %v1125, 5
      %v1128 = vsel %vm1068, %v1123, %v1127
      %v1130 = vrot.slane %v227, 4
      %v1131 = vshll.u32 %v214, 16
      %v1133 = vrot.slane %v1131, 5
      %v1134 = vor.u32 %v1130, %v1133
      %v1135 = vrot.slane %v1134, 4
      %v1136 = vshll.u32 %v215, 16
      %v1138 = vrot.slane %v1136, 5
      %v1139 = vsel %vm1068, %v1135, %v1138
      %v1141 = vrot.slane %v239, 4
      %v1142 = vor.u32 %v1141, %v1138
      %v1143 = vrot.slane %v1142, 4
      %v1145 = vshll.u32 %v216, 16
      %v1147 = vrot.slane %v1145, 5
      %v1148 = vsel %vm1068, %v1143, %v1147
      %v1151 = vpack.i.b16 %v1099, %v1079
      %v1152 = vshrl.u32 %v1079, 16
      %v1153 = vshrl.u32 %v1099, 16
      %v1154 = vpack.i.b16 %v1153, %v1152
      %v1157 = vpack.i.b16 %v1139, %v1119
      %v1158 = vshrl.u32 %v1119, 16
      %v1159 = vshrl.u32 %v1139, 16
      %v1160 = vpack.i.b16 %v1159, %v1158
      %v1163 = vpack.i.b16 %v1108, %v1088
      %v1164 = vshrl.u32 %v1088, 16
      %v1165 = vshrl.u32 %v1108, 16
      %v1166 = vpack.i.b16 %v1165, %v1164
      %v1169 = vpack.i.b16 %v1148, %v1128
      %v1170 = vshrl.u32 %v1128, 16
      %v1171 = vshrl.u32 %v1148, 16
      %v1172 = vpack.i.b16 %v1171, %v1170
      %v1175 = vunpack.c.l.s4 1983009808
      %v1176 = vunpack.c.0.s8 %v1175
      %v1177 = vlaneseq
      %v1178 = vshrl.u32 %v1177, 7
      %v1179 = vsub.s32 %v1176, %v1178
      %v1180 = vrot.slane %v1151, %v1179
      %v1183 = vunpack.c.l.s4 1983009808
      %v1184 = vunpack.c.0.s8 %v1183
      %v1185 = vlaneseq
      %v1186 = vshrl.u32 %v1185, 7
      %v1187 = vsub.s32 %v1184, %v1186
      %v1188 = vrot.slane %v1157, %v1187
      %v1189 = vcombine.low %v1180, %v1188
      %v1190 = vcombine.high %v1180, %v1188
      %v1192 = vunpack.c.l.s4 1934713408
      %v1193 = vunpack.c.0.s8 %v1192
      %v1194 = vlaneseq
      %v1195 = vshrl.u32 %v1194, 7
      %v1196 = vsub.s32 %v1193, %v1195
      %v1197 = vrot.slane %v1189, %v1196
      %v1199 = vunpack.c.l.s4 1934713408
      %v1200 = vunpack.c.0.s8 %v1199
      %v1201 = vlaneseq
      %v1202 = vshrl.u32 %v1201, 7
      %v1203 = vsub.s32 %v1200, %v1202
      %v1204 = vrot.slane %v1190, %v1203
      %v1205 = vcombine.high %v1197, 0
      %v1206 = vcombine.high %v1204, 0
      %v1209 = vunpack.c.l.s4 1983009808
      %v1210 = vunpack.c.0.s8 %v1209
      %v1211 = vlaneseq
      %v1212 = vshrl.u32 %v1211, 7
      %v1213 = vsub.s32 %v1210, %v1212
      %v1214 = vrot.slane %v1154, %v1213
      %v1217 = vunpack.c.l.s4 1983009808
      %v1218 = vunpack.c.0.s8 %v1217
      %v1219 = vlaneseq
      %v1220 = vshrl.u32 %v1219, 7
      %v1221 = vsub.s32 %v1218, %v1220
      %v1222 = vrot.slane %v1160, %v1221
      %v1223 = vcombine.low %v1214, %v1222
      %v1224 = vcombine.high %v1214, %v1222
      %v1226 = vunpack.c.l.s4 1934713408
      %v1227 = vunpack.c.0.s8 %v1226
      %v1228 = vlaneseq
      %v1229 = vshrl.u32 %v1228, 7
      %v1230 = vsub.s32 %v1227, %v1229
      %v1231 = vrot.slane %v1223, %v1230
      %v1233 = vunpack.c.l.s4 1934713408
      %v1234 = vunpack.c.0.s8 %v1233
      %v1235 = vlaneseq
      %v1236 = vshrl.u32 %v1235, 7
      %v1237 = vsub.s32 %v1234, %v1236
      %v1238 = vrot.slane %v1224, %v1237
      %v1239 = vcombine.high %v1231, 0
      %v1240 = vcombine.high %v1238, 0
      %v1243 = vunpack.c.l.s4 1983009808
      %v1244 = vunpack.c.0.s8 %v1243
      %v1245 = vlaneseq
      %v1246 = vshrl.u32 %v1245, 7
      %v1247 = vsub.s32 %v1244, %v1246
      %v1248 = vrot.slane %v1163, %v1247
      %v1251 = vunpack.c.l.s4 1983009808
      %v1252 = vunpack.c.0.s8 %v1251
      %v1253 = vlaneseq
      %v1254 = vshrl.u32 %v1253, 7
      %v1255 = vsub.s32 %v1252, %v1254
      %v1256 = vrot.slane %v1169, %v1255
      %v1257 = vcombine.low %v1248, %v1256
      %v1258 = vcombine.high %v1248, %v1256
      %v1260 = vunpack.c.l.s4 1934713408
      %v1261 = vunpack.c.0.s8 %v1260
      %v1262 = vlaneseq
      %v1263 = vshrl.u32 %v1262, 7
      %v1264 = vsub.s32 %v1261, %v1263
      %v1265 = vrot.slane %v1257, %v1264
      %v1267 = vunpack.c.l.s4 1934713408
      %v1268 = vunpack.c.0.s8 %v1267
      %v1269 = vlaneseq
      %v1270 = vshrl.u32 %v1269, 7
      %v1271 = vsub.s32 %v1268, %v1270
      %v1272 = vrot.slane %v1258, %v1271
      %v1273 = vcombine.high %v1265, 0
      %v1274 = vcombine.high %v1272, 0
      %v1277 = vunpack.c.l.s4 1983009808
      %v1278 = vunpack.c.0.s8 %v1277
      %v1279 = vlaneseq
      %v1280 = vshrl.u32 %v1279, 7
      %v1281 = vsub.s32 %v1278, %v1280
      %v1282 = vrot.slane %v1166, %v1281
      %v1285 = vunpack.c.l.s4 1983009808
      %v1286 = vunpack.c.0.s8 %v1285
      %v1287 = vlaneseq
      %v1288 = vshrl.u32 %v1287, 7
      %v1289 = vsub.s32 %v1286, %v1288
      %v1290 = vrot.slane %v1172, %v1289
      %v1291 = vcombine.low %v1282, %v1290
      %v1292 = vcombine.high %v1282, %v1290
      %v1294 = vunpack.c.l.s4 1934713408
      %v1295 = vunpack.c.0.s8 %v1294
      %v1296 = vlaneseq
      %v1297 = vshrl.u32 %v1296, 7
      %v1298 = vsub.s32 %v1295, %v1297
      %v1299 = vrot.slane %v1291, %v1298
      %v1301 = vunpack.c.l.s4 1934713408
      %v1302 = vunpack.c.0.s8 %v1301
      %v1303 = vlaneseq
      %v1304 = vshrl.u32 %v1303, 7
      %v1305 = vsub.s32 %v1302, %v1304
      %v1306 = vrot.slane %v1292, %v1305
      %v1307 = vcombine.high %v1299, 0
      %v1308 = vcombine.high %v1306, 0
      %v1310 = vunpack.c.l.b16 %v1231
      %v1311 = vpack.c.b16 %v1310, %v1310
      %1312 = vrot.lane.b32.xlu0 %v1311, 16
      %v1313 = vpop.permute.xlu0 %1312
      %v1315 = vunpack.c.l.b16 %v1205
      %v1316 = vpack.c.b16 %v1315, %v1315
      %1317 = vrot.lane.b32.xlu0 %v1316, 32
      %v1318 = vpop.permute.xlu0 %1317
      %v1320 = vunpack.c.l.b16 %v1239
      %v1321 = vpack.c.b16 %v1320, %v1320
      %1322 = vrot.lane.b32.xlu0 %v1321, 48
      %v1323 = vpop.permute.xlu0 %1322
      %v1325 = vunpack.c.l.b16 %v1204
      %v1326 = vpack.c.b16 %v1325, %v1325
      %1327 = vrot.lane.b32.xlu0 %v1326, 64
      %v1328 = vpop.permute.xlu0 %1327
      %v1330 = vunpack.c.l.b16 %v1238
      %v1331 = vpack.c.b16 %v1330, %v1330
      %1332 = vrot.lane.b32.xlu0 %v1331, 80
      %v1333 = vpop.permute.xlu0 %1332
      %v1335 = vunpack.c.l.b16 %v1206
      %v1336 = vpack.c.b16 %v1335, %v1335
      %1337 = vrot.lane.b32.xlu0 %v1336, 96
      %v1338 = vpop.permute.xlu0 %1337
      %v1340 = vunpack.c.l.b16 %v1240
      %v1341 = vpack.c.b16 %v1340, %v1340
      %1342 = vrot.lane.b32.xlu0 %v1341, 112
      %v1343 = vpop.permute.xlu0 %1342
      %v1345 = vunpack.c.l.b16 %v1299
      %v1346 = vpack.c.b16 %v1345, %v1345
      %1347 = vrot.lane.b32.xlu0 %v1346, 16
      %v1348 = vpop.permute.xlu0 %1347
      %v1350 = vunpack.c.l.b16 %v1273
      %v1351 = vpack.c.b16 %v1350, %v1350
      %1352 = vrot.lane.b32.xlu0 %v1351, 32
      %v1353 = vpop.permute.xlu0 %1352
      %v1355 = vunpack.c.l.b16 %v1307
      %v1356 = vpack.c.b16 %v1355, %v1355
      %1357 = vrot.lane.b32.xlu0 %v1356, 48
      %v1358 = vpop.permute.xlu0 %1357
      %v1360 = vunpack.c.l.b16 %v1272
      %v1361 = vpack.c.b16 %v1360, %v1360
      %1362 = vrot.lane.b32.xlu0 %v1361, 64
      %v1363 = vpop.permute.xlu0 %1362
      %v1365 = vunpack.c.l.b16 %v1306
      %v1366 = vpack.c.b16 %v1365, %v1365
      %1367 = vrot.lane.b32.xlu0 %v1366, 80
      %v1368 = vpop.permute.xlu0 %1367
      %v1370 = vunpack.c.l.b16 %v1274
      %v1371 = vpack.c.b16 %v1370, %v1370
      %1372 = vrot.lane.b32.xlu0 %v1371, 96
      %v1373 = vpop.permute.xlu0 %1372
      %v1375 = vunpack.c.l.b16 %v1308
      %v1376 = vpack.c.b16 %v1375, %v1375
      %1377 = vrot.lane.b32.xlu0 %v1376, 112
      %v1378 = vpop.permute.xlu0 %1377
      %v1381 = vsel %vm447, %v1197, %v1313
      %v1383 = vsel %vm451, %v1381, %v1318
      %v1385 = vsel %vm454, %v1383, %v1323
      %v1387 = vsel %vm457, %v1385, %v1328
      %v1389 = vsel %vm460, %v1387, %v1333
      %v1391 = vsel %vm463, %v1389, %v1338
      %v1393 = vsel %vm466, %v1391, %v1343
      %v1396 = vsel %vm447, %v1265, %v1348
      %v1398 = vsel %vm451, %v1396, %v1353
      %v1400 = vsel %vm454, %v1398, %v1358
      %v1402 = vsel %vm457, %v1400, %v1363
      %v1404 = vsel %vm460, %v1402, %v1368
      %v1406 = vsel %vm463, %v1404, %v1373
      %v1408 = vsel %vm466, %v1406, %v1378
      %v1411 = vunpack.c.l.b16 %v1393
      %v1412 = vunpack.c.l.b16 %v1408
      %v1413 = vpack.c.b16 %v1412, %v1411
      %v1414 = vrot.slane %v1413, 6
      %1416 = vst [vmem:[#allocation2 + $0x8] sm:$0xcc] %v1414
      %1417 = vrot.lane.b32.xlu0 %v1079, 127
      %v1418 = vpop.permute.xlu0 %1417
      %1419 = vrot.lane.b32.xlu0 %v1088, 127
      %v1420 = vpop.permute.xlu0 %1419
      %1421 = vrot.lane.b32.xlu0 %v1099, 127
      %v1422 = vpop.permute.xlu0 %1421
      %1423 = vrot.lane.b32.xlu0 %v1108, 127
      %v1424 = vpop.permute.xlu0 %1423
      %1425 = vrot.lane.b32.xlu0 %v1119, 127
      %v1426 = vpop.permute.xlu0 %1425
      %1427 = vrot.lane.b32.xlu0 %v1128, 127
      %v1428 = vpop.permute.xlu0 %1427
      %1429 = vrot.lane.b32.xlu0 %v1139, 127
      %v1430 = vpop.permute.xlu0 %1429
      %1431 = vrot.lane.b32.xlu0 %v1148, 127
      %v1432 = vpop.permute.xlu0 %1431
      %v1435 = vpack.i.b16 %v1422, %v1418
      %v1436 = vshrl.u32 %v1418, 16
      %v1437 = vshrl.u32 %v1422, 16
      %v1438 = vpack.i.b16 %v1437, %v1436
      %v1441 = vpack.i.b16 %v1430, %v1426
      %v1442 = vshrl.u32 %v1426, 16
      %v1443 = vshrl.u32 %v1430, 16
      %v1444 = vpack.i.b16 %v1443, %v1442
      %v1447 = vpack.i.b16 %v1424, %v1420
      %v1448 = vshrl.u32 %v1420, 16
      %v1449 = vshrl.u32 %v1424, 16
      %v1450 = vpack.i.b16 %v1449, %v1448
      %v1453 = vpack.i.b16 %v1432, %v1428
      %v1454 = vshrl.u32 %v1428, 16
      %v1455 = vshrl.u32 %v1432, 16
      %v1456 = vpack.i.b16 %v1455, %v1454
      %v1459 = vunpack.c.l.s4 1983009808
      %v1460 = vunpack.c.0.s8 %v1459
      %v1461 = vlaneseq
      %v1462 = vshrl.u32 %v1461, 7
      %v1463 = vsub.s32 %v1460, %v1462
      %v1464 = vrot.slane %v1435, %v1463
      %v1467 = vunpack.c.l.s4 1983009808
      %v1468 = vunpack.c.0.s8 %v1467
      %v1469 = vlaneseq
      %v1470 = vshrl.u32 %v1469, 7
      %v1471 = vsub.s32 %v1468, %v1470
      %v1472 = vrot.slane %v1441, %v1471
      %v1473 = vcombine.low %v1464, %v1472
      %v1474 = vcombine.high %v1464, %v1472
      %v1476 = vunpack.c.l.s4 1934713408
      %v1477 = vunpack.c.0.s8 %v1476
      %v1478 = vlaneseq
      %v1479 = vshrl.u32 %v1478, 7
      %v1480 = vsub.s32 %v1477, %v1479
      %v1481 = vrot.slane %v1473, %v1480
      %v1483 = vunpack.c.l.s4 1934713408
      %v1484 = vunpack.c.0.s8 %v1483
      %v1485 = vlaneseq
      %v1486 = vshrl.u32 %v1485, 7
      %v1487 = vsub.s32 %v1484, %v1486
      %v1488 = vrot.slane %v1474, %v1487
      %v1489 = vcombine.high %v1481, 0
      %v1490 = vcombine.high %v1488, 0
      %v1493 = vunpack.c.l.s4 1983009808
      %v1494 = vunpack.c.0.s8 %v1493
      %v1495 = vlaneseq
      %v1496 = vshrl.u32 %v1495, 7
      %v1497 = vsub.s32 %v1494, %v1496
      %v1498 = vrot.slane %v1438, %v1497
      %v1501 = vunpack.c.l.s4 1983009808
      %v1502 = vunpack.c.0.s8 %v1501
      %v1503 = vlaneseq
      %v1504 = vshrl.u32 %v1503, 7
      %v1505 = vsub.s32 %v1502, %v1504
      %v1506 = vrot.slane %v1444, %v1505
      %v1507 = vcombine.low %v1498, %v1506
      %v1508 = vcombine.high %v1498, %v1506
      %v1510 = vunpack.c.l.s4 1934713408
      %v1511 = vunpack.c.0.s8 %v1510
      %v1512 = vlaneseq
      %v1513 = vshrl.u32 %v1512, 7
      %v1514 = vsub.s32 %v1511, %v1513
      %v1515 = vrot.slane %v1507, %v1514
      %v1517 = vunpack.c.l.s4 1934713408
      %v1518 = vunpack.c.0.s8 %v1517
      %v1519 = vlaneseq
      %v1520 = vshrl.u32 %v1519, 7
      %v1521 = vsub.s32 %v1518, %v1520
      %v1522 = vrot.slane %v1508, %v1521
      %v1523 = vcombine.high %v1515, 0
      %v1524 = vcombine.high %v1522, 0
      %v1527 = vunpack.c.l.s4 1983009808
      %v1528 = vunpack.c.0.s8 %v1527
      %v1529 = vlaneseq
      %v1530 = vshrl.u32 %v1529, 7
      %v1531 = vsub.s32 %v1528, %v1530
      %v1532 = vrot.slane %v1447, %v1531
      %v1535 = vunpack.c.l.s4 1983009808
      %v1536 = vunpack.c.0.s8 %v1535
      %v1537 = vlaneseq
      %v1538 = vshrl.u32 %v1537, 7
      %v1539 = vsub.s32 %v1536, %v1538
      %v1540 = vrot.slane %v1453, %v1539
      %v1541 = vcombine.low %v1532, %v1540
      %v1542 = vcombine.high %v1532, %v1540
      %v1544 = vunpack.c.l.s4 1934713408
      %v1545 = vunpack.c.0.s8 %v1544
      %v1546 = vlaneseq
      %v1547 = vshrl.u32 %v1546, 7
      %v1548 = vsub.s32 %v1545, %v1547
      %v1549 = vrot.slane %v1541, %v1548
      %v1551 = vunpack.c.l.s4 1934713408
      %v1552 = vunpack.c.0.s8 %v1551
      %v1553 = vlaneseq
      %v1554 = vshrl.u32 %v1553, 7
      %v1555 = vsub.s32 %v1552, %v1554
      %v1556 = vrot.slane %v1542, %v1555
      %v1557 = vcombine.high %v1549, 0
      %v1558 = vcombine.high %v1556, 0
      %v1561 = vunpack.c.l.s4 1983009808
      %v1562 = vunpack.c.0.s8 %v1561
      %v1563 = vlaneseq
      %v1564 = vshrl.u32 %v1563, 7
      %v1565 = vsub.s32 %v1562, %v1564
      %v1566 = vrot.slane %v1450, %v1565
      %v1569 = vunpack.c.l.s4 1983009808
      %v1570 = vunpack.c.0.s8 %v1569
      %v1571 = vlaneseq
      %v1572 = vshrl.u32 %v1571, 7
      %v1573 = vsub.s32 %v1570, %v1572
      %v1574 = vrot.slane %v1456, %v1573
      %v1575 = vcombine.low %v1566, %v1574
      %v1576 = vcombine.high %v1566, %v1574
      %v1578 = vunpack.c.l.s4 1934713408
      %v1579 = vunpack.c.0.s8 %v1578
      %v1580 = vlaneseq
      %v1581 = vshrl.u32 %v1580, 7
      %v1582 = vsub.s32 %v1579, %v1581
      %v1583 = vrot.slane %v1575, %v1582
      %v1585 = vunpack.c.l.s4 1934713408
      %v1586 = vunpack.c.0.s8 %v1585
      %v1587 = vlaneseq
      %v1588 = vshrl.u32 %v1587, 7
      %v1589 = vsub.s32 %v1586, %v1588
      %v1590 = vrot.slane %v1576, %v1589
      %v1591 = vcombine.high %v1583, 0
      %v1592 = vcombine.high %v1590, 0
      %v1594 = vunpack.c.l.b16 %v1515
      %v1595 = vpack.c.b16 %v1594, %v1594
      %1596 = vrot.lane.b32.xlu0 %v1595, 16
      %v1597 = vpop.permute.xlu0 %1596
      %v1599 = vunpack.c.l.b16 %v1489
      %v1600 = vpack.c.b16 %v1599, %v1599
      %1601 = vrot.lane.b32.xlu0 %v1600, 32
      %v1602 = vpop.permute.xlu0 %1601
      %v1604 = vunpack.c.l.b16 %v1523
      %v1605 = vpack.c.b16 %v1604, %v1604
      %1606 = vrot.lane.b32.xlu0 %v1605, 48
      %v1607 = vpop.permute.xlu0 %1606
      %v1609 = vunpack.c.l.b16 %v1488
      %v1610 = vpack.c.b16 %v1609, %v1609
      %1611 = vrot.lane.b32.xlu0 %v1610, 64
      %v1612 = vpop.permute.xlu0 %1611
      %v1614 = vunpack.c.l.b16 %v1522
      %v1615 = vpack.c.b16 %v1614, %v1614
      %1616 = vrot.lane.b32.xlu0 %v1615, 80
      %v1617 = vpop.permute.xlu0 %1616
      %v1619 = vunpack.c.l.b16 %v1490
      %v1620 = vpack.c.b16 %v1619, %v1619
      %1621 = vrot.lane.b32.xlu0 %v1620, 96
      %v1622 = vpop.permute.xlu0 %1621
      %v1624 = vunpack.c.l.b16 %v1524
      %v1625 = vpack.c.b16 %v1624, %v1624
      %1626 = vrot.lane.b32.xlu0 %v1625, 112
      %v1627 = vpop.permute.xlu0 %1626
      %v1629 = vunpack.c.l.b16 %v1583
      %v1630 = vpack.c.b16 %v1629, %v1629
      %1631 = vrot.lane.b32.xlu0 %v1630, 16
      %v1632 = vpop.permute.xlu0 %1631
      %v1634 = vunpack.c.l.b16 %v1557
      %v1635 = vpack.c.b16 %v1634, %v1634
      %1636 = vrot.lane.b32.xlu0 %v1635, 32
      %v1637 = vpop.permute.xlu0 %1636
      %v1639 = vunpack.c.l.b16 %v1591
      %v1640 = vpack.c.b16 %v1639, %v1639
      %1641 = vrot.lane.b32.xlu0 %v1640, 48
      %v1642 = vpop.permute.xlu0 %1641
      %v1644 = vunpack.c.l.b16 %v1556
      %v1645 = vpack.c.b16 %v1644, %v1644
      %1646 = vrot.lane.b32.xlu0 %v1645, 64
      %v1647 = vpop.permute.xlu0 %1646
      %v1649 = vunpack.c.l.b16 %v1590
      %v1650 = vpack.c.b16 %v1649, %v1649
      %1651 = vrot.lane.b32.xlu0 %v1650, 80
      %v1652 = vpop.permute.xlu0 %1651
      %v1654 = vunpack.c.l.b16 %v1558
      %v1655 = vpack.c.b16 %v1654, %v1654
      %1656 = vrot.lane.b32.xlu0 %v1655, 96
      %v1657 = vpop.permute.xlu0 %1656
      %v1659 = vunpack.c.l.b16 %v1592
      %v1660 = vpack.c.b16 %v1659, %v1659
      %1661 = vrot.lane.b32.xlu0 %v1660, 112
      %v1662 = vpop.permute.xlu0 %1661
      %v1665 = vsel %vm447, %v1481, %v1597
      %v1667 = vsel %vm451, %v1665, %v1602
      %v1669 = vsel %vm454, %v1667, %v1607
      %v1671 = vsel %vm457, %v1669, %v1612
      %v1673 = vsel %vm460, %v1671, %v1617
      %v1675 = vsel %vm463, %v1673, %v1622
      %v1677 = vsel %vm466, %v1675, %v1627
      %v1680 = vsel %vm447, %v1549, %v1632
      %v1682 = vsel %vm451, %v1680, %v1637
      %v1684 = vsel %vm454, %v1682, %v1642
      %v1686 = vsel %vm457, %v1684, %v1647
      %v1688 = vsel %vm460, %v1686, %v1652
      %v1690 = vsel %vm463, %v1688, %v1657
      %v1692 = vsel %vm466, %v1690, %v1662
      %v1695 = vunpack.c.l.b16 %v1677
      %v1696 = vunpack.c.l.b16 %v1692
      %v1697 = vpack.c.b16 %v1696, %v1695
      %1699 = vst [vmem:[#allocation2 + $0x10] sm:$0x33] %v1697
      %1700 = vrot.lane.b32.xlu0 %v1079, 126
      %v1701 = vpop.permute.xlu0 %1700
      %1702 = vrot.lane.b32.xlu0 %v1088, 126
      %v1703 = vpop.permute.xlu0 %1702
      %1704 = vrot.lane.b32.xlu0 %v1099, 126
      %v1705 = vpop.permute.xlu0 %1704
      %1706 = vrot.lane.b32.xlu0 %v1108, 126
      %v1707 = vpop.permute.xlu0 %1706
      %1708 = vrot.lane.b32.xlu0 %v1119, 126
      %v1709 = vpop.permute.xlu0 %1708
      %1710 = vrot.lane.b32.xlu0 %v1128, 126
      %v1711 = vpop.permute.xlu0 %1710
      %1712 = vrot.lane.b32.xlu0 %v1139, 126
      %v1713 = vpop.permute.xlu0 %1712
      %1714 = vrot.lane.b32.xlu0 %v1148, 126
      %v1715 = vpop.permute.xlu0 %1714
      %v1718 = vpack.i.b16 %v1705, %v1701
      %v1719 = vshrl.u32 %v1701, 16
      %v1720 = vshrl.u32 %v1705, 16
      %v1721 = vpack.i.b16 %v1720, %v1719
      %v1724 = vpack.i.b16 %v1713, %v1709
      %v1725 = vshrl.u32 %v1709, 16
      %v1726 = vshrl.u32 %v1713, 16
      %v1727 = vpack.i.b16 %v1726, %v1725
      %v1730 = vpack.i.b16 %v1707, %v1703
      %v1731 = vshrl.u32 %v1703, 16
      %v1732 = vshrl.u32 %v1707, 16
      %v1733 = vpack.i.b16 %v1732, %v1731
      %v1736 = vpack.i.b16 %v1715, %v1711
      %v1737 = vshrl.u32 %v1711, 16
      %v1738 = vshrl.u32 %v1715, 16
      %v1739 = vpack.i.b16 %v1738, %v1737
      %v1742 = vunpack.c.l.s4 1983009808
      %v1743 = vunpack.c.0.s8 %v1742
      %v1744 = vlaneseq
      %v1745 = vshrl.u32 %v1744, 7
      %v1746 = vsub.s32 %v1743, %v1745
      %v1747 = vrot.slane %v1718, %v1746
      %v1750 = vunpack.c.l.s4 1983009808
      %v1751 = vunpack.c.0.s8 %v1750
      %v1752 = vlaneseq
      %v1753 = vshrl.u32 %v1752, 7
      %v1754 = vsub.s32 %v1751, %v1753
      %v1755 = vrot.slane %v1724, %v1754
      %v1756 = vcombine.low %v1747, %v1755
      %v1757 = vcombine.high %v1747, %v1755
      %v1759 = vunpack.c.l.s4 1934713408
      %v1760 = vunpack.c.0.s8 %v1759
      %v1761 = vlaneseq
      %v1762 = vshrl.u32 %v1761, 7
      %v1763 = vsub.s32 %v1760, %v1762
      %v1764 = vrot.slane %v1756, %v1763
      %v1766 = vunpack.c.l.s4 1934713408
      %v1767 = vunpack.c.0.s8 %v1766
      %v1768 = vlaneseq
      %v1769 = vshrl.u32 %v1768, 7
      %v1770 = vsub.s32 %v1767, %v1769
      %v1771 = vrot.slane %v1757, %v1770
      %v1772 = vcombine.high %v1764, 0
      %v1773 = vcombine.high %v1771, 0
      %v1776 = vunpack.c.l.s4 1983009808
      %v1777 = vunpack.c.0.s8 %v1776
      %v1778 = vlaneseq
      %v1779 = vshrl.u32 %v1778, 7
      %v1780 = vsub.s32 %v1777, %v1779
      %v1781 = vrot.slane %v1721, %v1780
      %v1784 = vunpack.c.l.s4 1983009808
      %v1785 = vunpack.c.0.s8 %v1784
      %v1786 = vlaneseq
      %v1787 = vshrl.u32 %v1786, 7
      %v1788 = vsub.s32 %v1785, %v1787
      %v1789 = vrot.slane %v1727, %v1788
      %v1790 = vcombine.low %v1781, %v1789
      %v1791 = vcombine.high %v1781, %v1789
      %v1793 = vunpack.c.l.s4 1934713408
      %v1794 = vunpack.c.0.s8 %v1793
      %v1795 = vlaneseq
      %v1796 = vshrl.u32 %v1795, 7
      %v1797 = vsub.s32 %v1794, %v1796
      %v1798 = vrot.slane %v1790, %v1797
      %v1800 = vunpack.c.l.s4 1934713408
      %v1801 = vunpack.c.0.s8 %v1800
      %v1802 = vlaneseq
      %v1803 = vshrl.u32 %v1802, 7
      %v1804 = vsub.s32 %v1801, %v1803
      %v1805 = vrot.slane %v1791, %v1804
      %v1806 = vcombine.high %v1798, 0
      %v1807 = vcombine.high %v1805, 0
      %v1810 = vunpack.c.l.s4 1983009808
      %v1811 = vunpack.c.0.s8 %v1810
      %v1812 = vlaneseq
      %v1813 = vshrl.u32 %v1812, 7
      %v1814 = vsub.s32 %v1811, %v1813
      %v1815 = vrot.slane %v1730, %v1814
      %v1818 = vunpack.c.l.s4 1983009808
      %v1819 = vunpack.c.0.s8 %v1818
      %v1820 = vlaneseq
      %v1821 = vshrl.u32 %v1820, 7
      %v1822 = vsub.s32 %v1819, %v1821
      %v1823 = vrot.slane %v1736, %v1822
      %v1824 = vcombine.low %v1815, %v1823
      %v1825 = vcombine.high %v1815, %v1823
      %v1827 = vunpack.c.l.s4 1934713408
      %v1828 = vunpack.c.0.s8 %v1827
      %v1829 = vlaneseq
      %v1830 = vshrl.u32 %v1829, 7
      %v1831 = vsub.s32 %v1828, %v1830
      %v1832 = vrot.slane %v1824, %v1831
      %v1834 = vunpack.c.l.s4 1934713408
      %v1835 = vunpack.c.0.s8 %v1834
      %v1836 = vlaneseq
      %v1837 = vshrl.u32 %v1836, 7
      %v1838 = vsub.s32 %v1835, %v1837
      %v1839 = vrot.slane %v1825, %v1838
      %v1840 = vcombine.high %v1832, 0
      %v1841 = vcombine.high %v1839, 0
      %v1844 = vunpack.c.l.s4 1983009808
      %v1845 = vunpack.c.0.s8 %v1844
      %v1846 = vlaneseq
      %v1847 = vshrl.u32 %v1846, 7
      %v1848 = vsub.s32 %v1845, %v1847
      %v1849 = vrot.slane %v1733, %v1848
      %v1852 = vunpack.c.l.s4 1983009808
      %v1853 = vunpack.c.0.s8 %v1852
      %v1854 = vlaneseq
      %v1855 = vshrl.u32 %v1854, 7
      %v1856 = vsub.s32 %v1853, %v1855
      %v1857 = vrot.slane %v1739, %v1856
      %v1858 = vcombine.low %v1849, %v1857
      %v1859 = vcombine.high %v1849, %v1857
      %v1861 = vunpack.c.l.s4 1934713408
      %v1862 = vunpack.c.0.s8 %v1861
      %v1863 = vlaneseq
      %v1864 = vshrl.u32 %v1863, 7
      %v1865 = vsub.s32 %v1862, %v1864
      %v1866 = vrot.slane %v1858, %v1865
      %v1868 = vunpack.c.l.s4 1934713408
      %v1869 = vunpack.c.0.s8 %v1868
      %v1870 = vlaneseq
      %v1871 = vshrl.u32 %v1870, 7
      %v1872 = vsub.s32 %v1869, %v1871
      %v1873 = vrot.slane %v1859, %v1872
      %v1874 = vcombine.high %v1866, 0
      %v1875 = vcombine.high %v1873, 0
      %v1877 = vunpack.c.l.b16 %v1798
      %v1878 = vpack.c.b16 %v1877, %v1877
      %1879 = vrot.lane.b32.xlu0 %v1878, 16
      %v1880 = vpop.permute.xlu0 %1879
      %v1882 = vunpack.c.l.b16 %v1772
      %v1883 = vpack.c.b16 %v1882, %v1882
      %1884 = vrot.lane.b32.xlu0 %v1883, 32
      %v1885 = vpop.permute.xlu0 %1884
      %v1887 = vunpack.c.l.b16 %v1806
      %v1888 = vpack.c.b16 %v1887, %v1887
      %1889 = vrot.lane.b32.xlu0 %v1888, 48
      %v1890 = vpop.permute.xlu0 %1889
      %v1892 = vunpack.c.l.b16 %v1771
      %v1893 = vpack.c.b16 %v1892, %v1892
      %1894 = vrot.lane.b32.xlu0 %v1893, 64
      %v1895 = vpop.permute.xlu0 %1894
      %v1897 = vunpack.c.l.b16 %v1805
      %v1898 = vpack.c.b16 %v1897, %v1897
      %1899 = vrot.lane.b32.xlu0 %v1898, 80
      %v1900 = vpop.permute.xlu0 %1899
      %v1902 = vunpack.c.l.b16 %v1773
      %v1903 = vpack.c.b16 %v1902, %v1902
      %1904 = vrot.lane.b32.xlu0 %v1903, 96
      %v1905 = vpop.permute.xlu0 %1904
      %v1907 = vunpack.c.l.b16 %v1807
      %v1908 = vpack.c.b16 %v1907, %v1907
      %1909 = vrot.lane.b32.xlu0 %v1908, 112
      %v1910 = vpop.permute.xlu0 %1909
      %v1912 = vunpack.c.l.b16 %v1866
      %v1913 = vpack.c.b16 %v1912, %v1912
      %1914 = vrot.lane.b32.xlu0 %v1913, 16
      %v1915 = vpop.permute.xlu0 %1914
      %v1917 = vunpack.c.l.b16 %v1840
      %v1918 = vpack.c.b16 %v1917, %v1917
      %1919 = vrot.lane.b32.xlu0 %v1918, 32
      %v1920 = vpop.permute.xlu0 %1919
      %v1922 = vunpack.c.l.b16 %v1874
      %v1923 = vpack.c.b16 %v1922, %v1922
      %1924 = vrot.lane.b32.xlu0 %v1923, 48
      %v1925 = vpop.permute.xlu0 %1924
      %v1927 = vunpack.c.l.b16 %v1839
      %v1928 = vpack.c.b16 %v1927, %v1927
      %1929 = vrot.lane.b32.xlu0 %v1928, 64
      %v1930 = vpop.permute.xlu0 %1929
      %v1932 = vunpack.c.l.b16 %v1873
      %v1933 = vpack.c.b16 %v1932, %v1932
      %1934 = vrot.lane.b32.xlu0 %v1933, 80
      %v1935 = vpop.permute.xlu0 %1934
      %v1937 = vunpack.c.l.b16 %v1841
      %v1938 = vpack.c.b16 %v1937, %v1937
      %1939 = vrot.lane.b32.xlu0 %v1938, 96
      %v1940 = vpop.permute.xlu0 %1939
      %v1942 = vunpack.c.l.b16 %v1875
      %v1943 = vpack.c.b16 %v1942, %v1942
      %1944 = vrot.lane.b32.xlu0 %v1943, 112
      %v1945 = vpop.permute.xlu0 %1944
      %v1948 = vsel %vm447, %v1764, %v1880
      %v1950 = vsel %vm451, %v1948, %v1885
      %v1952 = vsel %vm454, %v1950, %v1890
      %v1954 = vsel %vm457, %v1952, %v1895
      %v1956 = vsel %vm460, %v1954, %v1900
      %v1958 = vsel %vm463, %v1956, %v1905
      %v1960 = vsel %vm466, %v1958, %v1910
      %v1963 = vsel %vm447, %v1832, %v1915
      %v1965 = vsel %vm451, %v1963, %v1920
      %v1967 = vsel %vm454, %v1965, %v1925
      %v1969 = vsel %vm457, %v1967, %v1930
      %v1971 = vsel %vm460, %v1969, %v1935
      %v1973 = vsel %vm463, %v1971, %v1940
      %v1975 = vsel %vm466, %v1973, %v1945
      %v1978 = vunpack.c.l.b16 %v1960
      %v1979 = vunpack.c.l.b16 %v1975
      %v1980 = vpack.c.b16 %v1979, %v1978
      %v1981 = vrot.slane %v1980, 6
      %1983 = vst [vmem:[#allocation2 + $0x10] sm:$0xcc] %v1981
      %vm1988 = vcmask 1042432
      %vm1989 = vcmask 1046532
      %vm1990 = vmor %vm1988, %vm1989
      %v1991 = vrot.slane %v205, 5
      %v1992 = vrot.slane %v1991, 4
      %v1993 = vrot.slane %v206, 5
      %v1994 = vsel %vm1990, %v1992, %v1993
      %v1995 = vrot.slane %v1993, 4
      %v1996 = vrot.slane %v207, 5
      %v1997 = vsel %vm1990, %v1995, %v1996
      %v1998 = vrot.slane %v208, 5
      %v1999 = vrot.slane %v1998, 4
      %v2000 = vrot.slane %v209, 5
      %v2001 = vsel %vm1990, %v1999, %v2000
      %v2002 = vrot.slane %v2000, 4
      %v2003 = vrot.slane %v210, 5
      %v2004 = vsel %vm1990, %v2002, %v2003
      %v2005 = vrot.slane %v211, 5
      %v2006 = vrot.slane %v2005, 4
      %v2007 = vrot.slane %v212, 5
      %v2008 = vsel %vm1990, %v2006, %v2007
      %v2009 = vrot.slane %v2007, 4
      %v2010 = vrot.slane %v213, 5
      %v2011 = vsel %vm1990, %v2009, %v2010
      %v2012 = vrot.slane %v214, 5
      %v2013 = vrot.slane %v2012, 4
      %v2014 = vrot.slane %v215, 5
      %v2015 = vsel %vm1990, %v2013, %v2014
      %v2016 = vrot.slane %v2014, 4
      %v2017 = vrot.slane %v216, 5
      %v2018 = vsel %vm1990, %v2016, %v2017
      %v2021 = vpack.i.b16 %v2001, %v1994
      %v2022 = vshrl.u32 %v1994, 16
      %v2023 = vshrl.u32 %v2001, 16
      %v2024 = vpack.i.b16 %v2023, %v2022
      %v2027 = vpack.i.b16 %v2015, %v2008
      %v2028 = vshrl.u32 %v2008, 16
      %v2029 = vshrl.u32 %v2015, 16
      %v2030 = vpack.i.b16 %v2029, %v2028
      %v2033 = vpack.i.b16 %v2004, %v1997
      %v2034 = vshrl.u32 %v1997, 16
      %v2035 = vshrl.u32 %v2004, 16
      %v2036 = vpack.i.b16 %v2035, %v2034
      %v2039 = vpack.i.b16 %v2018, %v2011
      %v2040 = vshrl.u32 %v2011, 16
      %v2041 = vshrl.u32 %v2018, 16
      %v2042 = vpack.i.b16 %v2041, %v2040
      %v2045 = vunpack.c.l.s4 1983009808
      %v2046 = vunpack.c.0.s8 %v2045
      %v2047 = vlaneseq
      %v2048 = vshrl.u32 %v2047, 7
      %v2049 = vsub.s32 %v2046, %v2048
      %v2050 = vrot.slane %v2021, %v2049
      %v2053 = vunpack.c.l.s4 1983009808
      %v2054 = vunpack.c.0.s8 %v2053
      %v2055 = vlaneseq
      %v2056 = vshrl.u32 %v2055, 7
      %v2057 = vsub.s32 %v2054, %v2056
      %v2058 = vrot.slane %v2027, %v2057
      %v2059 = vcombine.low %v2050, %v2058
      %v2060 = vcombine.high %v2050, %v2058
      %v2062 = vunpack.c.l.s4 1934713408
      %v2063 = vunpack.c.0.s8 %v2062
      %v2064 = vlaneseq
      %v2065 = vshrl.u32 %v2064, 7
      %v2066 = vsub.s32 %v2063, %v2065
      %v2067 = vrot.slane %v2059, %v2066
      %v2069 = vunpack.c.l.s4 1934713408
      %v2070 = vunpack.c.0.s8 %v2069
      %v2071 = vlaneseq
      %v2072 = vshrl.u32 %v2071, 7
      %v2073 = vsub.s32 %v2070, %v2072
      %v2074 = vrot.slane %v2060, %v2073
      %v2075 = vcombine.high %v2067, 0
      %v2076 = vcombine.high %v2074, 0
      %v2079 = vunpack.c.l.s4 1983009808
      %v2080 = vunpack.c.0.s8 %v2079
      %v2081 = vlaneseq
      %v2082 = vshrl.u32 %v2081, 7
      %v2083 = vsub.s32 %v2080, %v2082
      %v2084 = vrot.slane %v2024, %v2083
      %v2087 = vunpack.c.l.s4 1983009808
      %v2088 = vunpack.c.0.s8 %v2087
      %v2089 = vlaneseq
      %v2090 = vshrl.u32 %v2089, 7
      %v2091 = vsub.s32 %v2088, %v2090
      %v2092 = vrot.slane %v2030, %v2091
      %v2093 = vcombine.low %v2084, %v2092
      %v2094 = vcombine.high %v2084, %v2092
      %v2096 = vunpack.c.l.s4 1934713408
      %v2097 = vunpack.c.0.s8 %v2096
      %v2098 = vlaneseq
      %v2099 = vshrl.u32 %v2098, 7
      %v2100 = vsub.s32 %v2097, %v2099
      %v2101 = vrot.slane %v2093, %v2100
      %v2103 = vunpack.c.l.s4 1934713408
      %v2104 = vunpack.c.0.s8 %v2103
      %v2105 = vlaneseq
      %v2106 = vshrl.u32 %v2105, 7
      %v2107 = vsub.s32 %v2104, %v2106
      %v2108 = vrot.slane %v2094, %v2107
      %v2109 = vcombine.high %v2101, 0
      %v2110 = vcombine.high %v2108, 0
      %v2113 = vunpack.c.l.s4 1983009808
      %v2114 = vunpack.c.0.s8 %v2113
      %v2115 = vlaneseq
      %v2116 = vshrl.u32 %v2115, 7
      %v2117 = vsub.s32 %v2114, %v2116
      %v2118 = vrot.slane %v2033, %v2117
      %v2121 = vunpack.c.l.s4 1983009808
      %v2122 = vunpack.c.0.s8 %v2121
      %v2123 = vlaneseq
      %v2124 = vshrl.u32 %v2123, 7
      %v2125 = vsub.s32 %v2122, %v2124
      %v2126 = vrot.slane %v2039, %v2125
      %v2127 = vcombine.low %v2118, %v2126
      %v2128 = vcombine.high %v2118, %v2126
      %v2130 = vunpack.c.l.s4 1934713408
      %v2131 = vunpack.c.0.s8 %v2130
      %v2132 = vlaneseq
      %v2133 = vshrl.u32 %v2132, 7
      %v2134 = vsub.s32 %v2131, %v2133
      %v2135 = vrot.slane %v2127, %v2134
      %v2137 = vunpack.c.l.s4 1934713408
      %v2138 = vunpack.c.0.s8 %v2137
      %v2139 = vlaneseq
      %v2140 = vshrl.u32 %v2139, 7
      %v2141 = vsub.s32 %v2138, %v2140
      %v2142 = vrot.slane %v2128, %v2141
      %v2143 = vcombine.high %v2135, 0
      %v2144 = vcombine.high %v2142, 0
      %v2147 = vunpack.c.l.s4 1983009808
      %v2148 = vunpack.c.0.s8 %v2147
      %v2149 = vlaneseq
      %v2150 = vshrl.u32 %v2149, 7
      %v2151 = vsub.s32 %v2148, %v2150
      %v2152 = vrot.slane %v2036, %v2151
      %v2155 = vunpack.c.l.s4 1983009808
      %v2156 = vunpack.c.0.s8 %v2155
      %v2157 = vlaneseq
      %v2158 = vshrl.u32 %v2157, 7
      %v2159 = vsub.s32 %v2156, %v2158
      %v2160 = vrot.slane %v2042, %v2159
      %v2161 = vcombine.low %v2152, %v2160
      %v2162 = vcombine.high %v2152, %v2160
      %v2164 = vunpack.c.l.s4 1934713408
      %v2165 = vunpack.c.0.s8 %v2164
      %v2166 = vlaneseq
      %v2167 = vshrl.u32 %v2166, 7
      %v2168 = vsub.s32 %v2165, %v2167
      %v2169 = vrot.slane %v2161, %v2168
      %v2171 = vunpack.c.l.s4 1934713408
      %v2172 = vunpack.c.0.s8 %v2171
      %v2173 = vlaneseq
      %v2174 = vshrl.u32 %v2173, 7
      %v2175 = vsub.s32 %v2172, %v2174
      %v2176 = vrot.slane %v2162, %v2175
      %v2177 = vcombine.high %v2169, 0
      %v2178 = vcombine.high %v2176, 0
      %v2180 = vunpack.c.l.b16 %v2101
      %v2181 = vpack.c.b16 %v2180, %v2180
      %2182 = vrot.lane.b32.xlu0 %v2181, 16
      %v2183 = vpop.permute.xlu0 %2182
      %v2185 = vunpack.c.l.b16 %v2075
      %v2186 = vpack.c.b16 %v2185, %v2185
      %2187 = vrot.lane.b32.xlu0 %v2186, 32
      %v2188 = vpop.permute.xlu0 %2187
      %v2190 = vunpack.c.l.b16 %v2109
      %v2191 = vpack.c.b16 %v2190, %v2190
      %2192 = vrot.lane.b32.xlu0 %v2191, 48
      %v2193 = vpop.permute.xlu0 %2192
      %v2195 = vunpack.c.l.b16 %v2074
      %v2196 = vpack.c.b16 %v2195, %v2195
      %2197 = vrot.lane.b32.xlu0 %v2196, 64
      %v2198 = vpop.permute.xlu0 %2197
      %v2200 = vunpack.c.l.b16 %v2108
      %v2201 = vpack.c.b16 %v2200, %v2200
      %2202 = vrot.lane.b32.xlu0 %v2201, 80
      %v2203 = vpop.permute.xlu0 %2202
      %v2205 = vunpack.c.l.b16 %v2076
      %v2206 = vpack.c.b16 %v2205, %v2205
      %2207 = vrot.lane.b32.xlu0 %v2206, 96
      %v2208 = vpop.permute.xlu0 %2207
      %v2210 = vunpack.c.l.b16 %v2110
      %v2211 = vpack.c.b16 %v2210, %v2210
      %2212 = vrot.lane.b32.xlu0 %v2211, 112
      %v2213 = vpop.permute.xlu0 %2212
      %v2215 = vunpack.c.l.b16 %v2169
      %v2216 = vpack.c.b16 %v2215, %v2215
      %2217 = vrot.lane.b32.xlu0 %v2216, 16
      %v2218 = vpop.permute.xlu0 %2217
      %v2220 = vunpack.c.l.b16 %v2143
      %v2221 = vpack.c.b16 %v2220, %v2220
      %2222 = vrot.lane.b32.xlu0 %v2221, 32
      %v2223 = vpop.permute.xlu0 %2222
      %v2225 = vunpack.c.l.b16 %v2177
      %v2226 = vpack.c.b16 %v2225, %v2225
      %2227 = vrot.lane.b32.xlu0 %v2226, 48
      %v2228 = vpop.permute.xlu0 %2227
      %v2230 = vunpack.c.l.b16 %v2142
      %v2231 = vpack.c.b16 %v2230, %v2230
      %2232 = vrot.lane.b32.xlu0 %v2231, 64
      %v2233 = vpop.permute.xlu0 %2232
      %v2235 = vunpack.c.l.b16 %v2176
      %v2236 = vpack.c.b16 %v2235, %v2235
      %2237 = vrot.lane.b32.xlu0 %v2236, 80
      %v2238 = vpop.permute.xlu0 %2237
      %v2240 = vunpack.c.l.b16 %v2144
      %v2241 = vpack.c.b16 %v2240, %v2240
      %2242 = vrot.lane.b32.xlu0 %v2241, 96
      %v2243 = vpop.permute.xlu0 %2242
      %v2245 = vunpack.c.l.b16 %v2178
      %v2246 = vpack.c.b16 %v2245, %v2245
      %2247 = vrot.lane.b32.xlu0 %v2246, 112
      %v2248 = vpop.permute.xlu0 %2247
      %v2251 = vsel %vm447, %v2067, %v2183
      %v2253 = vsel %vm451, %v2251, %v2188
      %v2255 = vsel %vm454, %v2253, %v2193
      %v2257 = vsel %vm457, %v2255, %v2198
      %v2259 = vsel %vm460, %v2257, %v2203
      %v2261 = vsel %vm463, %v2259, %v2208
      %v2263 = vsel %vm466, %v2261, %v2213
      %v2266 = vsel %vm447, %v2135, %v2218
      %v2268 = vsel %vm451, %v2266, %v2223
      %v2270 = vsel %vm454, %v2268, %v2228
      %v2272 = vsel %vm457, %v2270, %v2233
      %v2274 = vsel %vm460, %v2272, %v2238
      %v2276 = vsel %vm463, %v2274, %v2243
      %v2278 = vsel %vm466, %v2276, %v2248
      %v2281 = vunpack.c.l.b16 %v2263
      %v2282 = vunpack.c.l.b16 %v2278
      %v2283 = vpack.c.b16 %v2282, %v2281
      %2285 = vst [vmem:[#allocation2 + $0x18] sm:$0x33] %v2283
      %2286 = vrot.lane.b32.xlu0 %v1994, 127
      %v2287 = vpop.permute.xlu0 %2286
      %2288 = vrot.lane.b32.xlu0 %v1997, 127
      %v2289 = vpop.permute.xlu0 %2288
      %2290 = vrot.lane.b32.xlu0 %v2001, 127
      %v2291 = vpop.permute.xlu0 %2290
      %2292 = vrot.lane.b32.xlu0 %v2004, 127
      %v2293 = vpop.permute.xlu0 %2292
      %2294 = vrot.lane.b32.xlu0 %v2008, 127
      %v2295 = vpop.permute.xlu0 %2294
      %2296 = vrot.lane.b32.xlu0 %v2011, 127
      %v2297 = vpop.permute.xlu0 %2296
      %2298 = vrot.lane.b32.xlu0 %v2015, 127
      %v2299 = vpop.permute.xlu0 %2298
      %2300 = vrot.lane.b32.xlu0 %v2018, 127
      %v2301 = vpop.permute.xlu0 %2300
      %v2304 = vpack.i.b16 %v2291, %v2287
      %v2305 = vshrl.u32 %v2287, 16
      %v2306 = vshrl.u32 %v2291, 16
      %v2307 = vpack.i.b16 %v2306, %v2305
      %v2310 = vpack.i.b16 %v2299, %v2295
      %v2311 = vshrl.u32 %v2295, 16
      %v2312 = vshrl.u32 %v2299, 16
      %v2313 = vpack.i.b16 %v2312, %v2311
      %v2316 = vpack.i.b16 %v2293, %v2289
      %v2317 = vshrl.u32 %v2289, 16
      %v2318 = vshrl.u32 %v2293, 16
      %v2319 = vpack.i.b16 %v2318, %v2317
      %v2322 = vpack.i.b16 %v2301, %v2297
      %v2323 = vshrl.u32 %v2297, 16
      %v2324 = vshrl.u32 %v2301, 16
      %v2325 = vpack.i.b16 %v2324, %v2323
      %v2328 = vunpack.c.l.s4 1983009808
      %v2329 = vunpack.c.0.s8 %v2328
      %v2330 = vlaneseq
      %v2331 = vshrl.u32 %v2330, 7
      %v2332 = vsub.s32 %v2329, %v2331
      %v2333 = vrot.slane %v2304, %v2332
      %v2336 = vunpack.c.l.s4 1983009808
      %v2337 = vunpack.c.0.s8 %v2336
      %v2338 = vlaneseq
      %v2339 = vshrl.u32 %v2338, 7
      %v2340 = vsub.s32 %v2337, %v2339
      %v2341 = vrot.slane %v2310, %v2340
      %v2342 = vcombine.low %v2333, %v2341
      %v2343 = vcombine.high %v2333, %v2341
      %v2345 = vunpack.c.l.s4 1934713408
      %v2346 = vunpack.c.0.s8 %v2345
      %v2347 = vlaneseq
      %v2348 = vshrl.u32 %v2347, 7
      %v2349 = vsub.s32 %v2346, %v2348
      %v2350 = vrot.slane %v2342, %v2349
      %v2352 = vunpack.c.l.s4 1934713408
      %v2353 = vunpack.c.0.s8 %v2352
      %v2354 = vlaneseq
      %v2355 = vshrl.u32 %v2354, 7
      %v2356 = vsub.s32 %v2353, %v2355
      %v2357 = vrot.slane %v2343, %v2356
      %v2358 = vcombine.high %v2350, 0
      %v2359 = vcombine.high %v2357, 0
      %v2362 = vunpack.c.l.s4 1983009808
      %v2363 = vunpack.c.0.s8 %v2362
      %v2364 = vlaneseq
      %v2365 = vshrl.u32 %v2364, 7
      %v2366 = vsub.s32 %v2363, %v2365
      %v2367 = vrot.slane %v2307, %v2366
      %v2370 = vunpack.c.l.s4 1983009808
      %v2371 = vunpack.c.0.s8 %v2370
      %v2372 = vlaneseq
      %v2373 = vshrl.u32 %v2372, 7
      %v2374 = vsub.s32 %v2371, %v2373
      %v2375 = vrot.slane %v2313, %v2374
      %v2376 = vcombine.low %v2367, %v2375
      %v2377 = vcombine.high %v2367, %v2375
      %v2379 = vunpack.c.l.s4 1934713408
      %v2380 = vunpack.c.0.s8 %v2379
      %v2381 = vlaneseq
      %v2382 = vshrl.u32 %v2381, 7
      %v2383 = vsub.s32 %v2380, %v2382
      %v2384 = vrot.slane %v2376, %v2383
      %v2386 = vunpack.c.l.s4 1934713408
      %v2387 = vunpack.c.0.s8 %v2386
      %v2388 = vlaneseq
      %v2389 = vshrl.u32 %v2388, 7
      %v2390 = vsub.s32 %v2387, %v2389
      %v2391 = vrot.slane %v2377, %v2390
      %v2392 = vcombine.high %v2384, 0
      %v2393 = vcombine.high %v2391, 0
      %v2396 = vunpack.c.l.s4 1983009808
      %v2397 = vunpack.c.0.s8 %v2396
      %v2398 = vlaneseq
      %v2399 = vshrl.u32 %v2398, 7
      %v2400 = vsub.s32 %v2397, %v2399
      %v2401 = vrot.slane %v2316, %v2400
      %v2404 = vunpack.c.l.s4 1983009808
      %v2405 = vunpack.c.0.s8 %v2404
      %v2406 = vlaneseq
      %v2407 = vshrl.u32 %v2406, 7
      %v2408 = vsub.s32 %v2405, %v2407
      %v2409 = vrot.slane %v2322, %v2408
      %v2410 = vcombine.low %v2401, %v2409
      %v2411 = vcombine.high %v2401, %v2409
      %v2413 = vunpack.c.l.s4 1934713408
      %v2414 = vunpack.c.0.s8 %v2413
      %v2415 = vlaneseq
      %v2416 = vshrl.u32 %v2415, 7
      %v2417 = vsub.s32 %v2414, %v2416
      %v2418 = vrot.slane %v2410, %v2417
      %v2420 = vunpack.c.l.s4 1934713408
      %v2421 = vunpack.c.0.s8 %v2420
      %v2422 = vlaneseq
      %v2423 = vshrl.u32 %v2422, 7
      %v2424 = vsub.s32 %v2421, %v2423
      %v2425 = vrot.slane %v2411, %v2424
      %v2426 = vcombine.high %v2418, 0
      %v2427 = vcombine.high %v2425, 0
      %v2430 = vunpack.c.l.s4 1983009808
      %v2431 = vunpack.c.0.s8 %v2430
      %v2432 = vlaneseq
      %v2433 = vshrl.u32 %v2432, 7
      %v2434 = vsub.s32 %v2431, %v2433
      %v2435 = vrot.slane %v2319, %v2434
      %v2438 = vunpack.c.l.s4 1983009808
      %v2439 = vunpack.c.0.s8 %v2438
      %v2440 = vlaneseq
      %v2441 = vshrl.u32 %v2440, 7
      %v2442 = vsub.s32 %v2439, %v2441
      %v2443 = vrot.slane %v2325, %v2442
      %v2444 = vcombine.low %v2435, %v2443
      %v2445 = vcombine.high %v2435, %v2443
      %v2447 = vunpack.c.l.s4 1934713408
      %v2448 = vunpack.c.0.s8 %v2447
      %v2449 = vlaneseq
      %v2450 = vshrl.u32 %v2449, 7
      %v2451 = vsub.s32 %v2448, %v2450
      %v2452 = vrot.slane %v2444, %v2451
      %v2454 = vunpack.c.l.s4 1934713408
      %v2455 = vunpack.c.0.s8 %v2454
      %v2456 = vlaneseq
      %v2457 = vshrl.u32 %v2456, 7
      %v2458 = vsub.s32 %v2455, %v2457
      %v2459 = vrot.slane %v2445, %v2458
      %v2460 = vcombine.high %v2452, 0
      %v2461 = vcombine.high %v2459, 0
      %v2463 = vunpack.c.l.b16 %v2384
      %v2464 = vpack.c.b16 %v2463, %v2463
      %2465 = vrot.lane.b32.xlu0 %v2464, 16
      %v2466 = vpop.permute.xlu0 %2465
      %v2468 = vunpack.c.l.b16 %v2358
      %v2469 = vpack.c.b16 %v2468, %v2468
      %2470 = vrot.lane.b32.xlu0 %v2469, 32
      %v2471 = vpop.permute.xlu0 %2470
      %v2473 = vunpack.c.l.b16 %v2392
      %v2474 = vpack.c.b16 %v2473, %v2473
      %2475 = vrot.lane.b32.xlu0 %v2474, 48
      %v2476 = vpop.permute.xlu0 %2475
      %v2478 = vunpack.c.l.b16 %v2357
      %v2479 = vpack.c.b16 %v2478, %v2478
      %2480 = vrot.lane.b32.xlu0 %v2479, 64
      %v2481 = vpop.permute.xlu0 %2480
      %v2483 = vunpack.c.l.b16 %v2391
      %v2484 = vpack.c.b16 %v2483, %v2483
      %2485 = vrot.lane.b32.xlu0 %v2484, 80
      %v2486 = vpop.permute.xlu0 %2485
      %v2488 = vunpack.c.l.b16 %v2359
      %v2489 = vpack.c.b16 %v2488, %v2488
      %2490 = vrot.lane.b32.xlu0 %v2489, 96
      %v2491 = vpop.permute.xlu0 %2490
      %v2493 = vunpack.c.l.b16 %v2393
      %v2494 = vpack.c.b16 %v2493, %v2493
      %2495 = vrot.lane.b32.xlu0 %v2494, 112
      %v2496 = vpop.permute.xlu0 %2495
      %v2498 = vunpack.c.l.b16 %v2452
      %v2499 = vpack.c.b16 %v2498, %v2498
      %2500 = vrot.lane.b32.xlu0 %v2499, 16
      %v2501 = vpop.permute.xlu0 %2500
      %v2503 = vunpack.c.l.b16 %v2426
      %v2504 = vpack.c.b16 %v2503, %v2503
      %2505 = vrot.lane.b32.xlu0 %v2504, 32
      %v2506 = vpop.permute.xlu0 %2505
      %v2508 = vunpack.c.l.b16 %v2460
      %v2509 = vpack.c.b16 %v2508, %v2508
      %2510 = vrot.lane.b32.xlu0 %v2509, 48
      %v2511 = vpop.permute.xlu0 %2510
      %v2513 = vunpack.c.l.b16 %v2425
      %v2514 = vpack.c.b16 %v2513, %v2513
      %2515 = vrot.lane.b32.xlu0 %v2514, 64
      %v2516 = vpop.permute.xlu0 %2515
      %v2518 = vunpack.c.l.b16 %v2459
      %v2519 = vpack.c.b16 %v2518, %v2518
      %2520 = vrot.lane.b32.xlu0 %v2519, 80
      %v2521 = vpop.permute.xlu0 %2520
      %v2523 = vunpack.c.l.b16 %v2427
      %v2524 = vpack.c.b16 %v2523, %v2523
      %2525 = vrot.lane.b32.xlu0 %v2524, 96
      %v2526 = vpop.permute.xlu0 %2525
      %v2528 = vunpack.c.l.b16 %v2461
      %v2529 = vpack.c.b16 %v2528, %v2528
      %2530 = vrot.lane.b32.xlu0 %v2529, 112
      %v2531 = vpop.permute.xlu0 %2530
      %v2534 = vsel %vm447, %v2350, %v2466
      %v2536 = vsel %vm451, %v2534, %v2471
      %v2538 = vsel %vm454, %v2536, %v2476
      %v2540 = vsel %vm457, %v2538, %v2481
      %v2542 = vsel %vm460, %v2540, %v2486
      %v2544 = vsel %vm463, %v2542, %v2491
      %v2546 = vsel %vm466, %v2544, %v2496
      %v2549 = vsel %vm447, %v2418, %v2501
      %v2551 = vsel %vm451, %v2549, %v2506
      %v2553 = vsel %vm454, %v2551, %v2511
      %v2555 = vsel %vm457, %v2553, %v2516
      %v2557 = vsel %vm460, %v2555, %v2521
      %v2559 = vsel %vm463, %v2557, %v2526
      %v2561 = vsel %vm466, %v2559, %v2531
      %v2564 = vunpack.c.l.b16 %v2546
      %v2565 = vunpack.c.l.b16 %v2561
      %v2566 = vpack.c.b16 %v2565, %v2564
      %v2567 = vrot.slane %v2566, 6
      %2569 = vst [vmem:[#allocation2 + $0x18] sm:$0xcc] %v2567
      %2570 = vrot.lane.b32.xlu0 %v1994, 126
      %v2571 = vpop.permute.xlu0 %2570
      %2572 = vrot.lane.b32.xlu0 %v1997, 126
      %v2573 = vpop.permute.xlu0 %2572
      %2574 = vrot.lane.b32.xlu0 %v2001, 126
      %v2575 = vpop.permute.xlu0 %2574
      %2576 = vrot.lane.b32.xlu0 %v2004, 126
      %v2577 = vpop.permute.xlu0 %2576
      %2578 = vrot.lane.b32.xlu0 %v2008, 126
      %v2579 = vpop.permute.xlu0 %2578
      %2580 = vrot.lane.b32.xlu0 %v2011, 126
      %v2581 = vpop.permute.xlu0 %2580
      %2582 = vrot.lane.b32.xlu0 %v2015, 126
      %v2583 = vpop.permute.xlu0 %2582
      %2584 = vrot.lane.b32.xlu0 %v2018, 126
      %v2585 = vpop.permute.xlu0 %2584
      %v2588 = vpack.i.b16 %v2575, %v2571
      %v2589 = vshrl.u32 %v2571, 16
      %v2590 = vshrl.u32 %v2575, 16
      %v2591 = vpack.i.b16 %v2590, %v2589
      %v2594 = vpack.i.b16 %v2583, %v2579
      %v2595 = vshrl.u32 %v2579, 16
      %v2596 = vshrl.u32 %v2583, 16
      %v2597 = vpack.i.b16 %v2596, %v2595
      %v2600 = vpack.i.b16 %v2577, %v2573
      %v2601 = vshrl.u32 %v2573, 16
      %v2602 = vshrl.u32 %v2577, 16
      %v2603 = vpack.i.b16 %v2602, %v2601
      %v2606 = vpack.i.b16 %v2585, %v2581
      %v2607 = vshrl.u32 %v2581, 16
      %v2608 = vshrl.u32 %v2585, 16
      %v2609 = vpack.i.b16 %v2608, %v2607
      %v2612 = vunpack.c.l.s4 1983009808
      %v2613 = vunpack.c.0.s8 %v2612
      %v2614 = vlaneseq
      %v2615 = vshrl.u32 %v2614, 7
      %v2616 = vsub.s32 %v2613, %v2615
      %v2617 = vrot.slane %v2588, %v2616
      %v2620 = vunpack.c.l.s4 1983009808
      %v2621 = vunpack.c.0.s8 %v2620
      %v2622 = vlaneseq
      %v2623 = vshrl.u32 %v2622, 7
      %v2624 = vsub.s32 %v2621, %v2623
      %v2625 = vrot.slane %v2594, %v2624
      %v2626 = vcombine.low %v2617, %v2625
      %v2627 = vcombine.high %v2617, %v2625
      %v2629 = vunpack.c.l.s4 1934713408
      %v2630 = vunpack.c.0.s8 %v2629
      %v2631 = vlaneseq
      %v2632 = vshrl.u32 %v2631, 7
      %v2633 = vsub.s32 %v2630, %v2632
      %v2634 = vrot.slane %v2626, %v2633
      %v2636 = vunpack.c.l.s4 1934713408
      %v2637 = vunpack.c.0.s8 %v2636
      %v2638 = vlaneseq
      %v2639 = vshrl.u32 %v2638, 7
      %v2640 = vsub.s32 %v2637, %v2639
      %v2641 = vrot.slane %v2627, %v2640
      %v2642 = vcombine.high %v2634, 0
      %v2643 = vcombine.high %v2641, 0
      %v2646 = vunpack.c.l.s4 1983009808
      %v2647 = vunpack.c.0.s8 %v2646
      %v2648 = vlaneseq
      %v2649 = vshrl.u32 %v2648, 7
      %v2650 = vsub.s32 %v2647, %v2649
      %v2651 = vrot.slane %v2591, %v2650
      %v2654 = vunpack.c.l.s4 1983009808
      %v2655 = vunpack.c.0.s8 %v2654
      %v2656 = vlaneseq
      %v2657 = vshrl.u32 %v2656, 7
      %v2658 = vsub.s32 %v2655, %v2657
      %v2659 = vrot.slane %v2597, %v2658
      %v2660 = vcombine.low %v2651, %v2659
      %v2661 = vcombine.high %v2651, %v2659
      %v2663 = vunpack.c.l.s4 1934713408
      %v2664 = vunpack.c.0.s8 %v2663
      %v2665 = vlaneseq
      %v2666 = vshrl.u32 %v2665, 7
      %v2667 = vsub.s32 %v2664, %v2666
      %v2668 = vrot.slane %v2660, %v2667
      %v2670 = vunpack.c.l.s4 1934713408
      %v2671 = vunpack.c.0.s8 %v2670
      %v2672 = vlaneseq
      %v2673 = vshrl.u32 %v2672, 7
      %v2674 = vsub.s32 %v2671, %v2673
      %v2675 = vrot.slane %v2661, %v2674
      %v2676 = vcombine.high %v2668, 0
      %v2677 = vcombine.high %v2675, 0
      %v2680 = vunpack.c.l.s4 1983009808
      %v2681 = vunpack.c.0.s8 %v2680
      %v2682 = vlaneseq
      %v2683 = vshrl.u32 %v2682, 7
      %v2684 = vsub.s32 %v2681, %v2683
      %v2685 = vrot.slane %v2600, %v2684
      %v2688 = vunpack.c.l.s4 1983009808
      %v2689 = vunpack.c.0.s8 %v2688
      %v2690 = vlaneseq
      %v2691 = vshrl.u32 %v2690, 7
      %v2692 = vsub.s32 %v2689, %v2691
      %v2693 = vrot.slane %v2606, %v2692
      %v2694 = vcombine.low %v2685, %v2693
      %v2695 = vcombine.high %v2685, %v2693
      %v2697 = vunpack.c.l.s4 1934713408
      %v2698 = vunpack.c.0.s8 %v2697
      %v2699 = vlaneseq
      %v2700 = vshrl.u32 %v2699, 7
      %v2701 = vsub.s32 %v2698, %v2700
      %v2702 = vrot.slane %v2694, %v2701
      %v2704 = vunpack.c.l.s4 1934713408
      %v2705 = vunpack.c.0.s8 %v2704
      %v2706 = vlaneseq
      %v2707 = vshrl.u32 %v2706, 7
      %v2708 = vsub.s32 %v2705, %v2707
      %v2709 = vrot.slane %v2695, %v2708
      %v2710 = vcombine.high %v2702, 0
      %v2711 = vcombine.high %v2709, 0
      %v2714 = vunpack.c.l.s4 1983009808
      %v2715 = vunpack.c.0.s8 %v2714
      %v2716 = vlaneseq
      %v2717 = vshrl.u32 %v2716, 7
      %v2718 = vsub.s32 %v2715, %v2717
      %v2719 = vrot.slane %v2603, %v2718
      %v2722 = vunpack.c.l.s4 1983009808
      %v2723 = vunpack.c.0.s8 %v2722
      %v2724 = vlaneseq
      %v2725 = vshrl.u32 %v2724, 7
      %v2726 = vsub.s32 %v2723, %v2725
      %v2727 = vrot.slane %v2609, %v2726
      %v2728 = vcombine.low %v2719, %v2727
      %v2729 = vcombine.high %v2719, %v2727
      %v2731 = vunpack.c.l.s4 1934713408
      %v2732 = vunpack.c.0.s8 %v2731
      %v2733 = vlaneseq
      %v2734 = vshrl.u32 %v2733, 7
      %v2735 = vsub.s32 %v2732, %v2734
      %v2736 = vrot.slane %v2728, %v2735
      %v2738 = vunpack.c.l.s4 1934713408
      %v2739 = vunpack.c.0.s8 %v2738
      %v2740 = vlaneseq
      %v2741 = vshrl.u32 %v2740, 7
      %v2742 = vsub.s32 %v2739, %v2741
      %v2743 = vrot.slane %v2729, %v2742
      %v2744 = vcombine.high %v2736, 0
      %v2745 = vcombine.high %v2743, 0
      %v2747 = vunpack.c.l.b16 %v2668
      %v2748 = vpack.c.b16 %v2747, %v2747
      %2749 = vrot.lane.b32.xlu0 %v2748, 16
      %v2750 = vpop.permute.xlu0 %2749
      %v2752 = vunpack.c.l.b16 %v2642
      %v2753 = vpack.c.b16 %v2752, %v2752
      %2754 = vrot.lane.b32.xlu0 %v2753, 32
      %v2755 = vpop.permute.xlu0 %2754
      %v2757 = vunpack.c.l.b16 %v2676
      %v2758 = vpack.c.b16 %v2757, %v2757
      %2759 = vrot.lane.b32.xlu0 %v2758, 48
      %v2760 = vpop.permute.xlu0 %2759
      %v2762 = vunpack.c.l.b16 %v2641
      %v2763 = vpack.c.b16 %v2762, %v2762
      %2764 = vrot.lane.b32.xlu0 %v2763, 64
      %v2765 = vpop.permute.xlu0 %2764
      %v2767 = vunpack.c.l.b16 %v2675
      %v2768 = vpack.c.b16 %v2767, %v2767
      %2769 = vrot.lane.b32.xlu0 %v2768, 80
      %v2770 = vpop.permute.xlu0 %2769
      %v2772 = vunpack.c.l.b16 %v2643
      %v2773 = vpack.c.b16 %v2772, %v2772
      %2774 = vrot.lane.b32.xlu0 %v2773, 96
      %v2775 = vpop.permute.xlu0 %2774
      %v2777 = vunpack.c.l.b16 %v2677
      %v2778 = vpack.c.b16 %v2777, %v2777
      %2779 = vrot.lane.b32.xlu0 %v2778, 112
      %v2780 = vpop.permute.xlu0 %2779
      %v2782 = vunpack.c.l.b16 %v2736
      %v2783 = vpack.c.b16 %v2782, %v2782
      %2784 = vrot.lane.b32.xlu0 %v2783, 16
      %v2785 = vpop.permute.xlu0 %2784
      %v2787 = vunpack.c.l.b16 %v2710
      %v2788 = vpack.c.b16 %v2787, %v2787
      %2789 = vrot.lane.b32.xlu0 %v2788, 32
      %v2790 = vpop.permute.xlu0 %2789
      %v2792 = vunpack.c.l.b16 %v2744
      %v2793 = vpack.c.b16 %v2792, %v2792
      %2794 = vrot.lane.b32.xlu0 %v2793, 48
      %v2795 = vpop.permute.xlu0 %2794
      %v2797 = vunpack.c.l.b16 %v2709
      %v2798 = vpack.c.b16 %v2797, %v2797
      %2799 = vrot.lane.b32.xlu0 %v2798, 64
      %v2800 = vpop.permute.xlu0 %2799
      %v2802 = vunpack.c.l.b16 %v2743
      %v2803 = vpack.c.b16 %v2802, %v2802
      %2804 = vrot.lane.b32.xlu0 %v2803, 80
      %v2805 = vpop.permute.xlu0 %2804
      %v2807 = vunpack.c.l.b16 %v2711
      %v2808 = vpack.c.b16 %v2807, %v2807
      %2809 = vrot.lane.b32.xlu0 %v2808, 96
      %v2810 = vpop.permute.xlu0 %2809
      %v2812 = vunpack.c.l.b16 %v2745
      %v2813 = vpack.c.b16 %v2812, %v2812
      %2814 = vrot.lane.b32.xlu0 %v2813, 112
      %v2815 = vpop.permute.xlu0 %2814
      %v2818 = vsel %vm447, %v2634, %v2750
      %v2820 = vsel %vm451, %v2818, %v2755
      %v2822 = vsel %vm454, %v2820, %v2760
      %v2824 = vsel %vm457, %v2822, %v2765
      %v2826 = vsel %vm460, %v2824, %v2770
      %v2828 = vsel %vm463, %v2826, %v2775
      %v2830 = vsel %vm466, %v2828, %v2780
      %v2833 = vsel %vm447, %v2702, %v2785
      %v2835 = vsel %vm451, %v2833, %v2790
      %v2837 = vsel %vm454, %v2835, %v2795
      %v2839 = vsel %vm457, %v2837, %v2800
      %v2841 = vsel %vm460, %v2839, %v2805
      %v2843 = vsel %vm463, %v2841, %v2810
      %v2845 = vsel %vm466, %v2843, %v2815
      %v2848 = vunpack.c.l.b16 %v2830
      %v2849 = vunpack.c.l.b16 %v2845
      %v2850 = vpack.c.b16 %v2849, %v2848
      %2852 = vst [vmem:[#allocation2 + $0x20] sm:$0x33] %v2850
      %v2853 = vld [vmem:[%s1] sm:$0xf]
      %v2854 = vld [vmem:[#allocation2] sm:$0xff]
      %v2855 = vld [vmem:[#allocation2 + $0x8] sm:$0xff]
      %v2856 = vld [vmem:[#allocation2 + $0x10] sm:$0xff]
      %v2857 = vld [vmem:[#allocation2 + $0x18] sm:$0xff]
      %v2858 = vld [vmem:[#allocation2 + $0x20] sm:$0x33]
      %v2864 = vunpack.c.l.b16 %v2854
      %v2865 = vunpack.c.h.b16 %v2854
      %v2866 = vunpack.c.l.b16 %v2855
      %v2867 = vunpack.c.h.b16 %v2855
      %v2868 = vunpack.c.l.b16 %v2856
      %v2869 = vunpack.c.h.b16 %v2856
      %v2870 = vunpack.c.l.b16 %v2857
      %v2871 = vunpack.c.h.b16 %v2857
      %v2872 = vunpack.c.l.b16 %v2858
      %v2873 = vunpack.c.h.b16 %v2858
      %v2874 = vpack.c.b16 %v2866, %v2864
      %v2875 = vpack.c.b16 %v2867, %v2865
      %v2876 = vpack.c.b16 %v2870, %v2868
      %v2877 = vpack.c.b16 %v2871, %v2869
      %v2878 = vpack.c.b16 %v2872, %v2872
      %v2879 = vpack.c.b16 %v2873, %v2873
      %vm2884 = vcmask 293888
      %v2886 = vsel %vm2884, %v2853, 0
      %vm2888 = vcmask 1041408
      %v2890 = vsel %vm2888, %v2878, 0
      %v2893 = vsel %vm2888, %v2879, 0
      %2895 = vmatprep.subr.bf16.mxu0 0
      %2896 = vmatpush1.bf16.msra.mxu0 0
      %2897 = vmatprep.subr.bf16.mxu0 0
      %2898 = vmatpush1.bf16.msra.mxu0 0
      %2899 = vmatprep.subr.bf16.mxu0 0
      %2900 = vmatpush1.bf16.msra.mxu0 0
      %2901 = vmatprep.subr.bf16.mxu0 0
      %2902 = vmatpush1.bf16.msra.mxu0 0
      %2903 = vmatprep.subr.bf16.mxu0 0
      %2904 = vmatpush1.bf16.msra.mxu0 0
      %2905 = vmatprep.subr.bf16.mxu0 %v2893
      %2906 = vmatpush1.bf16.msra.mxu0 %v2890
      %2907 = vmatprep.subr.bf16.mxu0 %v2877
      %2908 = vmatpush1.bf16.msra.mxu0 %v2876
      %2909 = vmatprep.subr.bf16.mxu0 %v2875
      %2910 = vmatpush1.bf16.msra.mxu0 %v2874
      %2911 = vmatprep.subr.bf16.mxu0 0
      %2912 = vmatpush2.bf16.msra.mxu0 0
      %2913 = vmatprep.subr.bf16.mxu0 0
      %2914 = vmatpush2.bf16.msra.mxu0 0
      %2915 = vmatprep.subr.bf16.mxu0 0
      %2916 = vmatpush2.bf16.msra.mxu0 0
      %2917 = vmatprep.subr.bf16.mxu0 0
      %2918 = vmatpush2.bf16.msra.mxu0 0
      %2919 = vmatprep.subr.bf16.mxu0 0
      %2920 = vmatpush2.bf16.msra.mxu0 0
      %2921 = vmatprep.subr.bf16.mxu0 0
      %2922 = vmatpush2.bf16.msra.mxu0 0
      %2923 = vmatprep.subr.bf16.mxu0 0
      %2924 = vmatpush2.bf16.msra.mxu0 0
      %2925 = vmatprep.subr.bf16.mxu0 0
      %2926 = vmatpush2.bf16.msra.mxu0 0
      %2927 = vmatprep.mubr.bf16.mxu0 0
      %2928 = vmatmul.mubr.bf16.gmra.mxu0 %v2886
      %v2929 = vpop.f32.mrf.mxu0
      %v2930 = vadd.f32 0.0, %v2929
      %v2931 = vpop.f32.mrf.mxu0
      %v2932 = vadd.f32 0.0, %v2931
      %v2933 = vpop.f32.mrf.mxu0
      %v2934 = vpop.f32.mrf.mxu0
      %2935 = vdwg.mxu0
      %v2936 = vld [vmem:[%s187] sm:$0xff]
      %v2937 = vadd.f32 %v2930, %v2932
      %2938 = vadd.xlane.f32.xlu0 %v2937
      %v2939 = vpop.xlane.xlu0 %2938
      %v2940 = vadd.f32 %v2936, %v2939
      %vm2941 = vcmask 7168
      %2942 = vst.msk [vmem:[%s187] sm:$0xff] %vm2941, %v2940
      %v2943 = vld [vmem:[%s191] sm:$0xff]
      %v2944 = vmul.f32 %v2930, %v2930
      %v2945 = vmul.f32 %v2932, %v2932
      %v2946 = vadd.f32 %v2944, %v2945
      %2947 = vadd.xlane.f32.xlu0 %v2946
      %v2948 = vpop.xlane.xlu0 %2947
      %v2949 = vadd.f32 %v2943, %v2948
      %2950 = vst.msk [vmem:[%s191] sm:$0xff] %vm2941, %v2949
      %p2951 = scmp.lt.s32.totalorder %s19, 1
      %s2952 = scalar_select %p2951, %s19, 1
      %s2953 = smul.addr %s2952, 8
      %s2954 = scalar_lea.vmem %s2, %s2953
      %p2955 = scmp.lt.s32.totalorder %s19, 1
      %s2956 = scalar_select %p2955, %s19, 1
      %s2957 = smul.addr %s2956, 8
      %s2958 = scalar_lea.vmem %s3, %s2957
      // Predicated region
      $region33: #{first_octave_cb.4} parent=27 // pred_check
        %p2959 = pneg %p92
      $region34: #{first_octave_cb.4} parent=27 // pred_check_branch
        %2961 = sbr.rel (%p2959) target = $region36
      $region35: #{first_octave_cb.4} parent=27 // pred_region
        _
      $region36: #{first_octave_cb.4} parent=27 // pred_fallthru
        _
      // Predicated region
      $region37: #{first_octave_cb.4} parent=27 // pred_check
        %p2962 = pneg %p118
      $region38: #{first_octave_cb.4} parent=27 // pred_check_branch
        %2964 = sbr.rel (%p2962) target = $region40
      $region39: #{first_octave_cb.4} parent=27 // pred_region
        _
      $region40: #{first_octave_cb.4} parent=27 // pred_fallthru
        _
    $region28: #{first_octave_cb.4} parent=5 // pred_fallthru
      _
    %p2965 = scmp.le.s32.totalorder 2, %s10
    // Predicated region
    $region41: #{first_octave_cb.4} parent=5 // pred_check
      %p2966 = pneg %p2965
    $region42: #{first_octave_cb.4} parent=5 // pred_check_branch
      %2968 = sbr.rel (%p2966) target = $region44
    $region43: #{first_octave_cb.4} parent=5 // pred_region
      %s2969 = ssub.s32 %s10, 2
      // Predicated region
      $region45: #{first_octave_cb.4} parent=43 // pred_check
        %p2970 = pneg %p98
      $region46: #{first_octave_cb.4} parent=43 // pred_check_branch
        %2972 = sbr.rel (%p2970) target = $region48
      $region47: #{first_octave_cb.4} parent=43 // pred_region
        %p2973 = scmp.lt.s32.totalorder %s21, 1
        %s2974 = scalar_select %p2973, %s21, 1
        %s2975 = smul.addr %s2974, 8
        %s2976 = scalar_lea.vmem %s2, %s2975
      $region48: #{first_octave_cb.4} parent=43 // pred_fallthru
        _
      // Predicated region
      $region49: #{first_octave_cb.4} parent=43 // pred_check
        %p2977 = pneg %p124
      $region50: #{first_octave_cb.4} parent=43 // pred_check_branch
        %2979 = sbr.rel (%p2977) target = $region52
      $region51: #{first_octave_cb.4} parent=43 // pred_region
        %p2980 = scmp.lt.s32.totalorder %s21, 1
        %s2981 = scalar_select %p2980, %s21, 1
        %s2982 = smul.addr %s2981, 8
        %s2983 = scalar_lea.vmem %s3, %s2982
      $region52: #{first_octave_cb.4} parent=43 // pred_fallthru
        _
    $region44: #{first_octave_cb.4} parent=5 // pred_fallthru
      _
  $region6: #{first_octave_cb.4} parent=0 // loop_footer
    %s14 = sadd.s32 1, %s10
  $region7: #{first_octave_cb.4} parent=0 // loop_footer_branch
    %9 = sbr.rel target = $region3
  $region8: #{first_octave_cb.4} parent=0 // loop_exit
    _

// kernel: first_octave_cb.5
$region0: #{first_octave_cb.5}
  #allocation0 [shape = 'u32[]', space=smem, size = 0x4, offset = 0x4, fixed_abs, tag = 'smem constant byte address 0x4 - core index']
  #allocation1 [shape = 'u32[144,128]{1,0:T(1,128)}', space=vmem, size = 0x12000, scoped, tag = 'internal scratch']
  #allocation2 [shape = 'bf16[36,256]{1,0:T(8,128)(2,1)}', space=vmem, size = 0x5000, scoped, tag = 'scratch operand']
  %s0 = inlined_call_operand.vmem [shape: bf16[2,4,18,18], index: 0, kind: input, shape index: {}]
  %s1 = inlined_call_operand.vmem [shape: bf16[8,36], index: 1, kind: input, shape index: {}]
  %s2 = inlined_call_operand.vmem [shape: f32[8,1], index: 2, kind: input, shape index: {}]
  %s3 = inlined_call_operand.vmem [shape: f32[8,1], index: 3, kind: input, shape index: {}]
  %s4 = inlined_call_operand.vmem [shape: f32[2,8,256], index: 4, kind: output, shape index: {}]
  %s5 = sld [smem:[#allocation0]]
  $region49: #{first_octave_cb.5} parent=0
    _
  %s7 = ssub.s32 1, %s5
  %s8 = scalar_select 0, %s7, %s5
  loop: start=0, step=1, limit=4
  $region2: #{first_octave_cb.5} parent=0 // loop_pre_header
    _
  $region3: #{first_octave_cb.5} parent=0 // loop_header
    %s10 = sphi 0, %s14
    %p11 = scmp.ge.s32.totalorder %s10, 4
    %s17 = sphi 0, %s29
    %s18 = sphi 0, %s25
    %s19 = sphi 0, %s17
    %s20 = sphi 0, %s18
    %s21 = sphi 0, %s19
    %s22 = sphi 0, %s20
    %s32 = sphi 0, %s34
    %s35 = sphi 0, %s32
    %s36 = sphi 0, %s35
    %s52 = sphi 0, %s36
    %s56 = sphi 0, %s56
    %s58 = sphi 0, %s56
    %s59 = sphi 0, %s58
    %s73 = sphi 0, %s59
    %s77 = sphi 0, %s77
    %s79 = sphi 0, %s77
    %s80 = sphi 0, %s79
    %s94 = sphi 0, %s80
    %s98 = sphi 0, %s98
    %s100 = sphi 0, %s98
    %s101 = sphi 0, %s100
    %s115 = sphi 0, %s101
    %s123 = sphi 0, %s125
    %s126 = sphi 0, %s123
    %s127 = sphi 0, %s126
    %s143 = sphi 0, %s127
  $region4: #{first_octave_cb.5} parent=0 // loop_header_branch
    %13 = sbr.rel (%p11) target = $region8
  $region5: #{first_octave_cb.5} parent=0 // loop_body
    %s15 = ssub.s32 %s10, 1
    %s16 = ssub.s32 %s10, 2
    %s23 = sadd.s32 1, %s18
    %p24 = scmp.ge.s32.totalorder %s23, 1
    %s25 = scalar_select %p24, 0, %s23
    %s26 = sadd.s32 1, %s17
    %s27 = scalar_select %p24, %s26, %s17
    %p28 = scmp.ge.s32.totalorder %s27, 2
    %s29 = scalar_select %p28, 0, %s27
    %s30 = ssub.s32 %s17, %s29
    %p31 = scmp.eq.s32.totalorder %s30, 0
    %s33 = sadd.s32 %s32, 1
    %s34 = scalar_select %p31, %s32, %s33
    %p37 = pneg %p31
    %p38 = scmp.eq.s32.totalorder %s10, 1
    %p39 = por %p37, %p38
    %p40 = scmp.ne.s32.totalorder %s32, %s35
    %p41 = scmp.eq.s32.totalorder %s10, 0
    %p42 = por %p40, %p41
    %p43 = scmp.ne.s32.totalorder %s32, %s35
    %p44 = scmp.eq.s32.totalorder %s15, 1
    %p45 = por %p43, %p44
    %p46 = scmp.ne.s32.totalorder %s35, %s36
    %p47 = scmp.eq.s32.totalorder %s15, 0
    %p48 = por %p46, %p47
    %p49 = scmp.ne.s32.totalorder %s35, %s36
    %p50 = scmp.eq.s32.totalorder %s16, 1
    %p51 = por %p49, %p50
    %p53 = scmp.ne.s32.totalorder %s36, %s52
    %p54 = scmp.eq.s32.totalorder %s16, 0
    %p55 = por %p53, %p54
    %s57 = sadd.s32 %s56, 1
    %p60 = scmp.eq.s32.totalorder %s10, 1
    %p61 = scmp.ne.s32.totalorder %s56, %s58
    %p62 = scmp.eq.s32.totalorder %s10, 0
    %p63 = por %p61, %p62
    %p64 = scmp.ne.s32.totalorder %s56, %s58
    %p65 = scmp.eq.s32.totalorder %s15, 1
    %p66 = por %p64, %p65
    %p67 = scmp.ne.s32.totalorder %s58, %s59
    %p68 = scmp.eq.s32.totalorder %s15, 0
    %p69 = por %p67, %p68
    %p70 = scmp.ne.s32.totalorder %s58, %s59
    %p71 = scmp.eq.s32.totalorder %s16, 1
    %p72 = por %p70, %p71
    %p74 = scmp.ne.s32.totalorder %s59, %s73
    %p75 = scmp.eq.s32.totalorder %s16, 0
    %p76 = por %p74, %p75
    %s78 = sadd.s32 %s77, 1
    %p81 = scmp.eq.s32.totalorder %s10, 1
    %p82 = scmp.ne.s32.totalorder %s77, %s79
    %p83 = scmp.eq.s32.totalorder %s10, 0
    %p84 = por %p82, %p83
    %p85 = scmp.ne.s32.totalorder %s77, %s79
    %p86 = scmp.eq.s32.totalorder %s15, 1
    %p87 = por %p85, %p86
    %p88 = scmp.ne.s32.totalorder %s79, %s80
    %p89 = scmp.eq.s32.totalorder %s15, 0
    %p90 = por %p88, %p89
    %p91 = scmp.ne.s32.totalorder %s79, %s80
    %p92 = scmp.eq.s32.totalorder %s16, 1
    %p93 = por %p91, %p92
    %p95 = scmp.ne.s32.totalorder %s80, %s94
    %p96 = scmp.eq.s32.totalorder %s16, 0
    %p97 = por %p95, %p96
    %s99 = sadd.s32 %s98, 1
    %p102 = scmp.eq.s32.totalorder %s10, 1
    %p103 = scmp.ne.s32.totalorder %s98, %s100
    %p104 = scmp.eq.s32.totalorder %s10, 0
    %p105 = por %p103, %p104
    %p106 = scmp.ne.s32.totalorder %s98, %s100
    %p107 = scmp.eq.s32.totalorder %s15, 1
    %p108 = por %p106, %p107
    %p109 = scmp.ne.s32.totalorder %s100, %s101
    %p110 = scmp.eq.s32.totalorder %s15, 0
    %p111 = por %p109, %p110
    %p112 = scmp.ne.s32.totalorder %s100, %s101
    %p113 = scmp.eq.s32.totalorder %s16, 1
    %p114 = por %p112, %p113
    %p116 = scmp.ne.s32.totalorder %s101, %s115
    %p117 = scmp.eq.s32.totalorder %s16, 0
    %p118 = por %p116, %p117
    %s119 = ssub.s32 %s17, %s29
    %s120 = ssub.s32 %s18, %s25
    %s121 = sor.u32 %s119, %s120
    %p122 = scmp.eq.s32.totalorder %s121, 0
    %s124 = sadd.s32 %s123, 1
    %s125 = scalar_select %p122, %s123, %s124
    %p128 = pneg %p122
    %p129 = scmp.eq.s32.totalorder %s10, 1
    %p130 = por %p128, %p129
    %p131 = scmp.ne.s32.totalorder %s123, %s126
    %p132 = scmp.eq.s32.totalorder %s10, 0
    %p133 = por %p131, %p132
    %p134 = scmp.ne.s32.totalorder %s123, %s126
    %p135 = scmp.eq.s32.totalorder %s15, 1
    %p136 = por %p134, %p135
    %p137 = scmp.ne.s32.totalorder %s126, %s127
    %p138 = scmp.eq.s32.totalorder %s15, 0
    %p139 = por %p137, %p138
    %p140 = scmp.ne.s32.totalorder %s126, %s127
    %p141 = scmp.eq.s32.totalorder %s16, 1
    %p142 = por %p140, %p141
    %p144 = scmp.ne.s32.totalorder %s127, %s143
    %p145 = scmp.eq.s32.totalorder %s16, 0
    %p146 = por %p144, %p145
    %p147 = scmp.le.s32.totalorder 1, %s10
    %p148 = scmp.lt.s32.totalorder %s10, 3
    %p149 = pnand %p147, %p148
    %p150 = pneg %p149
    // Predicated region
    $region9: #{first_octave_cb.5} parent=5 // pred_check
      _
    $region10: #{first_octave_cb.5} parent=5 // pred_check_branch
      %152 = sbr.rel (%p149) target = $region12
    $region11: #{first_octave_cb.5} parent=5 // pred_region
      %s153 = ssub.s32 %s10, 1
      // Predicated region
      $region13: #{first_octave_cb.5} parent=11 // pred_check
        %p154 = pneg %p69
      $region14: #{first_octave_cb.5} parent=11 // pred_check_branch
        %156 = sbr.rel (%p154) target = $region16
      $region15: #{first_octave_cb.5} parent=11 // pred_region
        _
      $region16: #{first_octave_cb.5} parent=11 // pred_fallthru
        _
      // Predicated region
      $region17: #{first_octave_cb.5} parent=11 // pred_check
        %p157 = pneg %p90
      $region18: #{first_octave_cb.5} parent=11 // pred_check_branch
        %159 = sbr.rel (%p157) target = $region20
      $region19: #{first_octave_cb.5} parent=11 // pred_region
        _
      $region20: #{first_octave_cb.5} parent=11 // pred_fallthru
        _
      // Predicated region
      $region21: #{first_octave_cb.5} parent=11 // pred_check
        %p160 = pneg %p111
      $region22: #{first_octave_cb.5} parent=11 // pred_check_branch
        %162 = sbr.rel (%p160) target = $region24
      $region23: #{first_octave_cb.5} parent=11 // pred_region
        _
      $region24: #{first_octave_cb.5} parent=11 // pred_fallthru
        _
    $region12: #{first_octave_cb.5} parent=5 // pred_fallthru
      _
    %p163 = scmp.lt.s32.totalorder %s10, 2
    // Predicated region
    $region25: #{first_octave_cb.5} parent=5 // pred_check
      %p164 = pneg %p163
    $region26: #{first_octave_cb.5} parent=5 // pred_check_branch
      %166 = sbr.rel (%p164) target = $region28
    $region27: #{first_octave_cb.5} parent=5 // pred_region
      // Predicated region
      $region29: #{first_octave_cb.5} parent=27 // pred_check
        %p167 = pneg %p42
      $region30: #{first_octave_cb.5} parent=27 // pred_check_branch
        %169 = sbr.rel (%p167) target = $region32
      $region31: #{first_octave_cb.5} parent=27 // pred_region
        %p170 = scmp.lt.s32.totalorder %s17, 1
        %s171 = scalar_select %p170, %s17, 1
        %s172 = smul.addr %s171, 12
        %s173 = smul.addr %s172, 4
        %s174 = scalar_lea.vmem %s0, %s173
      $region32: #{first_octave_cb.5} parent=27 // pred_fallthru
        _
    $region28: #{first_octave_cb.5} parent=5 // pred_fallthru
      _
    %p175 = scmp.le.s32.totalorder 1, %s10
    %p176 = scmp.lt.s32.totalorder %s10, 3
    %p177 = pnand %p175, %p176
    %p178 = pneg %p177
    // Predicated region
    $region33: #{first_octave_cb.5} parent=5 // pred_check
      _
    $region34: #{first_octave_cb.5} parent=5 // pred_check_branch
      %180 = sbr.rel (%p177) target = $region36
    $region35: #{first_octave_cb.5} parent=5 // pred_region
      %s181 = ssub.s32 %s10, 1
      %p182 = scmp.lt.s32.totalorder %s19, 1
      %s183 = scalar_select %p182, %s19, 1
      %s184 = smul.addr %s183, 12
      %s185 = smul.addr %s184, 4
      %s186 = scalar_lea.vmem %s0, %s185
      %p187 = pneg %p48
      %p188 = pneg %p45
      %p189 = pneg %p69
      %p190 = pneg %p66
      %p191 = pneg %p90
      %p192 = pneg %p87
      %p193 = pneg %p111
      %p194 = pneg %p108
      %p195 = pneg %p139
      %p196 = pneg %p136
      %s197 = smul.u32 2, %s20
      %p198 = scmp.lt.s32.totalorder %s19, 1
      %s199 = scalar_select %p198, %s19, 1
      %p200 = scmp.lt.s32.totalorder %s197, 1
      %s201 = scalar_select %p200, %s197, 1
      %s202 = smul.addr %s199, 2
      %s203 = sadd.s32 %s201, %s202
      %s204 = smul.addr %s203, 8
      %s205 = scalar_lea.vmem %s4, %s204
      %p206 = scmp.lt.s32.totalorder %s19, 1
      %s207 = scalar_select %p206, %s19, 1
      %s208 = smul.addr %s207, 12
      %s209 = smul.addr %s208, 4
      %s210 = scalar_lea.vmem %s0, %s209
      %s211 = smul.u32 2, %s20
      %p212 = scmp.lt.s32.totalorder %s19, 1
      %s213 = scalar_select %p212, %s19, 1
      %p214 = scmp.lt.s32.totalorder %s211, 1
      %s215 = scalar_select %p214, %s211, 1
      %s216 = smul.addr %s213, 2
      %s217 = sadd.s32 %s215, %s216
      %s218 = smul.addr %s217, 8
      %s219 = scalar_lea.vmem %s4, %s218
      %s220 = smul.u32 2, %s20
      %s222 = smul.u32 %s20, 16
      %s223 = sshra.s32 %s222, 3
      %s224 = sand.u32 %s222, 7
      %s225 = smul.addr %s223, 4
      %s226 = scalar_lea.vmem %s210, %s225
      %v227 = vld [vmem:[%s226] sm:$0xf]
      %v228 = vld [vmem:[%s226 + $0x4] sm:$0xf]
      %v229 = vld [vmem:[%s226 + $0x8] sm:$0x1]
      %v230 = vld [vmem:[%s226 + $0xc] sm:$0xf]
      %v231 = vld [vmem:[%s226 + $0x10] sm:$0xf]
      %v232 = vld [vmem:[%s226 + $0x14] sm:$0x1]
      %v233 = vld [vmem:[%s226 + $0x18] sm:$0xf]
      %v234 = vld [vmem:[%s226 + $0x1c] sm:$0xf]
      %v235 = vld [vmem:[%s226 + $0x20] sm:$0x1]
      %v236 = vld [vmem:[%s226 + $0x24] sm:$0xf]
      %v237 = vld [vmem:[%s226 + $0x28] sm:$0xf]
      %v238 = vld [vmem:[%s226 + $0x2c] sm:$0x1]
      %v241 = vpack.i.b16 %v230, %v227
      %v242 = vshrl.u32 %v227, 16
      %v243 = vshrl.u32 %v230, 16
      %v244 = vpack.i.b16 %v243, %v242
      %v247 = vpack.i.b16 %v236, %v233
      %v248 = vshrl.u32 %v233, 16
      %v249 = vshrl.u32 %v236, 16
      %v250 = vpack.i.b16 %v249, %v248
      %v253 = vpack.i.b16 %v231, %v228
      %v254 = vshrl.u32 %v228, 16
      %v255 = vshrl.u32 %v231, 16
      %v256 = vpack.i.b16 %v255, %v254
      %v259 = vpack.i.b16 %v237, %v234
      %v260 = vshrl.u32 %v234, 16
      %v261 = vshrl.u32 %v237, 16
      %v262 = vpack.i.b16 %v261, %v260
      %v265 = vunpack.c.l.s4 1983009808
      %v266 = vunpack.c.0.s8 %v265
      %v267 = vlaneseq
      %v268 = vshrl.u32 %v267, 7
      %v269 = vsub.s32 %v266, %v268
      %v270 = vrot.slane %v241, %v269
      %v273 = vunpack.c.l.s4 1983009808
      %v274 = vunpack.c.0.s8 %v273
      %v275 = vlaneseq
      %v276 = vshrl.u32 %v275, 7
      %v277 = vsub.s32 %v274, %v276
      %v278 = vrot.slane %v247, %v277
      %v279 = vcombine.low %v270, %v278
      %v280 = vcombine.high %v270, %v278
      %v282 = vunpack.c.l.s4 1934713408
      %v283 = vunpack.c.0.s8 %v282
      %v284 = vlaneseq
      %v285 = vshrl.u32 %v284, 7
      %v286 = vsub.s32 %v283, %v285
      %v287 = vrot.slane %v279, %v286
      %v289 = vunpack.c.l.s4 1934713408
      %v290 = vunpack.c.0.s8 %v289
      %v291 = vlaneseq
      %v292 = vshrl.u32 %v291, 7
      %v293 = vsub.s32 %v290, %v292
      %v294 = vrot.slane %v280, %v293
      %v295 = vcombine.high %v287, 0
      %v296 = vcombine.high %v294, 0
      %v299 = vunpack.c.l.s4 1983009808
      %v300 = vunpack.c.0.s8 %v299
      %v301 = vlaneseq
      %v302 = vshrl.u32 %v301, 7
      %v303 = vsub.s32 %v300, %v302
      %v304 = vrot.slane %v244, %v303
      %v307 = vunpack.c.l.s4 1983009808
      %v308 = vunpack.c.0.s8 %v307
      %v309 = vlaneseq
      %v310 = vshrl.u32 %v309, 7
      %v311 = vsub.s32 %v308, %v310
      %v312 = vrot.slane %v250, %v311
      %v313 = vcombine.low %v304, %v312
      %v314 = vcombine.high %v304, %v312
      %v316 = vunpack.c.l.s4 1934713408
      %v317 = vunpack.c.0.s8 %v316
      %v318 = vlaneseq
      %v319 = vshrl.u32 %v318, 7
      %v320 = vsub.s32 %v317, %v319
      %v321 = vrot.slane %v313, %v320
      %v323 = vunpack.c.l.s4 1934713408
      %v324 = vunpack.c.0.s8 %v323
      %v325 = vlaneseq
      %v326 = vshrl.u32 %v325, 7
      %v327 = vsub.s32 %v324, %v326
      %v328 = vrot.slane %v314, %v327
      %v329 = vcombine.high %v321, 0
      %v330 = vcombine.high %v328, 0
      %v333 = vunpack.c.l.s4 1983009808
      %v334 = vunpack.c.0.s8 %v333
      %v335 = vlaneseq
      %v336 = vshrl.u32 %v335, 7
      %v337 = vsub.s32 %v334, %v336
      %v338 = vrot.slane %v253, %v337
      %v341 = vunpack.c.l.s4 1983009808
      %v342 = vunpack.c.0.s8 %v341
      %v343 = vlaneseq
      %v344 = vshrl.u32 %v343, 7
      %v345 = vsub.s32 %v342, %v344
      %v346 = vrot.slane %v259, %v345
      %v347 = vcombine.low %v338, %v346
      %v348 = vcombine.high %v338, %v346
      %v350 = vunpack.c.l.s4 1934713408
      %v351 = vunpack.c.0.s8 %v350
      %v352 = vlaneseq
      %v353 = vshrl.u32 %v352, 7
      %v354 = vsub.s32 %v351, %v353
      %v355 = vrot.slane %v347, %v354
      %v357 = vunpack.c.l.s4 1934713408
      %v358 = vunpack.c.0.s8 %v357
      %v359 = vlaneseq
      %v360 = vshrl.u32 %v359, 7
      %v361 = vsub.s32 %v358, %v360
      %v362 = vrot.slane %v348, %v361
      %v363 = vcombine.high %v355, 0
      %v364 = vcombine.high %v362, 0
      %v367 = vunpack.c.l.s4 1983009808
      %v368 = vunpack.c.0.s8 %v367
      %v369 = vlaneseq
      %v370 = vshrl.u32 %v369, 7
      %v371 = vsub.s32 %v368, %v370
      %v372 = vrot.slane %v256, %v371
      %v375 = vunpack.c.l.s4 1983009808
      %v376 = vunpack.c.0.s8 %v375
      %v377 = vlaneseq
      %v378 = vshrl.u32 %v377, 7
      %v379 = vsub.s32 %v376, %v378
      %v380 = vrot.slane %v262, %v379
      %v381 = vcombine.low %v372, %v380
      %v382 = vcombine.high %v372, %v380
      %v384 = vunpack.c.l.s4 1934713408
      %v385 = vunpack.c.0.s8 %v384
      %v386 = vlaneseq
      %v387 = vshrl.u32 %v386, 7
      %v388 = vsub.s32 %v385, %v387
      %v389 = vrot.slane %v381, %v388
      %v391 = vunpack.c.l.s4 1934713408
      %v392 = vunpack.c.0.s8 %v391
      %v393 = vlaneseq
      %v394 = vshrl.u32 %v393, 7
      %v395 = vsub.s32 %v392, %v394
      %v396 = vrot.slane %v382, %v395
      %v397 = vcombine.high %v389, 0
      %v398 = vcombine.high %v396, 0
      %v400 = vunpack.c.l.b16 %v321
      %v401 = vpack.c.b16 %v400, %v400
      %402 = vrot.lane.b32.xlu0 %v401, 16
      %v403 = vpop.permute.xlu0 %402
      %v405 = vunpack.c.l.b16 %v295
      %v406 = vpack.c.b16 %v405, %v405
      %407 = vrot.lane.b32.xlu0 %v406, 32
      %v408 = vpop.permute.xlu0 %407
      %v410 = vunpack.c.l.b16 %v329
      %v411 = vpack.c.b16 %v410, %v410
      %412 = vrot.lane.b32.xlu0 %v411, 48
      %v413 = vpop.permute.xlu0 %412
      %v415 = vunpack.c.l.b16 %v294
      %v416 = vpack.c.b16 %v415, %v415
      %417 = vrot.lane.b32.xlu0 %v416, 64
      %v418 = vpop.permute.xlu0 %417
      %v420 = vunpack.c.l.b16 %v328
      %v421 = vpack.c.b16 %v420, %v420
      %422 = vrot.lane.b32.xlu0 %v421, 80
      %v423 = vpop.permute.xlu0 %422
      %v425 = vunpack.c.l.b16 %v296
      %v426 = vpack.c.b16 %v425, %v425
      %427 = vrot.lane.b32.xlu0 %v426, 96
      %v428 = vpop.permute.xlu0 %427
      %v430 = vunpack.c.l.b16 %v330
      %v431 = vpack.c.b16 %v430, %v430
      %432 = vrot.lane.b32.xlu0 %v431, 112
      %v433 = vpop.permute.xlu0 %432
      %v435 = vunpack.c.l.b16 %v389
      %v436 = vpack.c.b16 %v435, %v435
      %437 = vrot.lane.b32.xlu0 %v436, 16
      %v438 = vpop.permute.xlu0 %437
      %v440 = vunpack.c.l.b16 %v363
      %v441 = vpack.c.b16 %v440, %v440
      %442 = vrot.lane.b32.xlu0 %v441, 32
      %v443 = vpop.permute.xlu0 %442
      %v445 = vunpack.c.l.b16 %v397
      %v446 = vpack.c.b16 %v445, %v445
      %447 = vrot.lane.b32.xlu0 %v446, 48
      %v448 = vpop.permute.xlu0 %447
      %v450 = vunpack.c.l.b16 %v362
      %v451 = vpack.c.b16 %v450, %v450
      %452 = vrot.lane.b32.xlu0 %v451, 64
      %v453 = vpop.permute.xlu0 %452
      %v455 = vunpack.c.l.b16 %v396
      %v456 = vpack.c.b16 %v455, %v455
      %457 = vrot.lane.b32.xlu0 %v456, 80
      %v458 = vpop.permute.xlu0 %457
      %v460 = vunpack.c.l.b16 %v364
      %v461 = vpack.c.b16 %v460, %v460
      %462 = vrot.lane.b32.xlu0 %v461, 96
      %v463 = vpop.permute.xlu0 %462
      %v465 = vunpack.c.l.b16 %v398
      %v466 = vpack.c.b16 %v465, %v465
      %467 = vrot.lane.b32.xlu0 %v466, 112
      %v468 = vpop.permute.xlu0 %467
      %vm469 = vcmask 130048
      %v472 = vsel %vm469, %v287, %v403
      %vm473 = vcmask 261120
      %v475 = vsel %vm473, %v472, %v408
      %vm476 = vcmask 392192
      %v478 = vsel %vm476, %v475, %v413
      %vm479 = vcmask 523264
      %v481 = vsel %vm479, %v478, %v418
      %vm482 = vcmask 654336
      %v484 = vsel %vm482, %v481, %v423
      %vm485 = vcmask 785408
      %v487 = vsel %vm485, %v484, %v428
      %vm488 = vcmask 916480
      %v490 = vsel %vm488, %v487, %v433
      %v493 = vsel %vm469, %v355, %v438
      %v495 = vsel %vm473, %v493, %v443
      %v497 = vsel %vm476, %v495, %v448
      %v499 = vsel %vm479, %v497, %v453
      %v501 = vsel %vm482, %v499, %v458
      %v503 = vsel %vm485, %v501, %v463
      %v505 = vsel %vm488, %v503, %v468
      %v508 = vunpack.c.l.b16 %v490
      %v509 = vunpack.c.l.b16 %v505
      %v510 = vpack.c.b16 %v509, %v508
      %512 = vst [vmem:[#allocation2] sm:$0x33] %v510
      %521 = vrot.lane.b32.xlu0 %v227, 127
      %v522 = vpop.permute.xlu0 %521
      %523 = vrot.lane.b32.xlu0 %v228, 127
      %v524 = vpop.permute.xlu0 %523
      %525 = vrot.lane.b32.xlu0 %v230, 127
      %v526 = vpop.permute.xlu0 %525
      %527 = vrot.lane.b32.xlu0 %v231, 127
      %v528 = vpop.permute.xlu0 %527
      %529 = vrot.lane.b32.xlu0 %v233, 127
      %v530 = vpop.permute.xlu0 %529
      %531 = vrot.lane.b32.xlu0 %v234, 127
      %v532 = vpop.permute.xlu0 %531
      %533 = vrot.lane.b32.xlu0 %v236, 127
      %v534 = vpop.permute.xlu0 %533
      %535 = vrot.lane.b32.xlu0 %v237, 127
      %v536 = vpop.permute.xlu0 %535
      %v539 = vpack.i.b16 %v526, %v522
      %v540 = vshrl.u32 %v522, 16
      %v541 = vshrl.u32 %v526, 16
      %v542 = vpack.i.b16 %v541, %v540
      %v545 = vpack.i.b16 %v534, %v530
      %v546 = vshrl.u32 %v530, 16
      %v547 = vshrl.u32 %v534, 16
      %v548 = vpack.i.b16 %v547, %v546
      %v551 = vpack.i.b16 %v528, %v524
      %v552 = vshrl.u32 %v524, 16
      %v553 = vshrl.u32 %v528, 16
      %v554 = vpack.i.b16 %v553, %v552
      %v557 = vpack.i.b16 %v536, %v532
      %v558 = vshrl.u32 %v532, 16
      %v559 = vshrl.u32 %v536, 16
      %v560 = vpack.i.b16 %v559, %v558
      %v563 = vunpack.c.l.s4 1983009808
      %v564 = vunpack.c.0.s8 %v563
      %v565 = vlaneseq
      %v566 = vshrl.u32 %v565, 7
      %v567 = vsub.s32 %v564, %v566
      %v568 = vrot.slane %v539, %v567
      %v571 = vunpack.c.l.s4 1983009808
      %v572 = vunpack.c.0.s8 %v571
      %v573 = vlaneseq
      %v574 = vshrl.u32 %v573, 7
      %v575 = vsub.s32 %v572, %v574
      %v576 = vrot.slane %v545, %v575
      %v577 = vcombine.low %v568, %v576
      %v578 = vcombine.high %v568, %v576
      %v580 = vunpack.c.l.s4 1934713408
      %v581 = vunpack.c.0.s8 %v580
      %v582 = vlaneseq
      %v583 = vshrl.u32 %v582, 7
      %v584 = vsub.s32 %v581, %v583
      %v585 = vrot.slane %v577, %v584
      %v587 = vunpack.c.l.s4 1934713408
      %v588 = vunpack.c.0.s8 %v587
      %v589 = vlaneseq
      %v590 = vshrl.u32 %v589, 7
      %v591 = vsub.s32 %v588, %v590
      %v592 = vrot.slane %v578, %v591
      %v593 = vcombine.high %v585, 0
      %v594 = vcombine.high %v592, 0
      %v597 = vunpack.c.l.s4 1983009808
      %v598 = vunpack.c.0.s8 %v597
      %v599 = vlaneseq
      %v600 = vshrl.u32 %v599, 7
      %v601 = vsub.s32 %v598, %v600
      %v602 = vrot.slane %v542, %v601
      %v605 = vunpack.c.l.s4 1983009808
      %v606 = vunpack.c.0.s8 %v605
      %v607 = vlaneseq
      %v608 = vshrl.u32 %v607, 7
      %v609 = vsub.s32 %v606, %v608
      %v610 = vrot.slane %v548, %v609
      %v611 = vcombine.low %v602, %v610
      %v612 = vcombine.high %v602, %v610
      %v614 = vunpack.c.l.s4 1934713408
      %v615 = vunpack.c.0.s8 %v614
      %v616 = vlaneseq
      %v617 = vshrl.u32 %v616, 7
      %v618 = vsub.s32 %v615, %v617
      %v619 = vrot.slane %v611, %v618
      %v621 = vunpack.c.l.s4 1934713408
      %v622 = vunpack.c.0.s8 %v621
      %v623 = vlaneseq
      %v624 = vshrl.u32 %v623, 7
      %v625 = vsub.s32 %v622, %v624
      %v626 = vrot.slane %v612, %v625
      %v627 = vcombine.high %v619, 0
      %v628 = vcombine.high %v626, 0
      %v631 = vunpack.c.l.s4 1983009808
      %v632 = vunpack.c.0.s8 %v631
      %v633 = vlaneseq
      %v634 = vshrl.u32 %v633, 7
      %v635 = vsub.s32 %v632, %v634
      %v636 = vrot.slane %v551, %v635
      %v639 = vunpack.c.l.s4 1983009808
      %v640 = vunpack.c.0.s8 %v639
      %v641 = vlaneseq
      %v642 = vshrl.u32 %v641, 7
      %v643 = vsub.s32 %v640, %v642
      %v644 = vrot.slane %v557, %v643
      %v645 = vcombine.low %v636, %v644
      %v646 = vcombine.high %v636, %v644
      %v648 = vunpack.c.l.s4 1934713408
      %v649 = vunpack.c.0.s8 %v648
      %v650 = vlaneseq
      %v651 = vshrl.u32 %v650, 7
      %v652 = vsub.s32 %v649, %v651
      %v653 = vrot.slane %v645, %v652
      %v655 = vunpack.c.l.s4 1934713408
      %v656 = vunpack.c.0.s8 %v655
      %v657 = vlaneseq
      %v658 = vshrl.u32 %v657, 7
      %v659 = vsub.s32 %v656, %v658
      %v660 = vrot.slane %v646, %v659
      %v661 = vcombine.high %v653, 0
      %v662 = vcombine.high %v660, 0
      %v665 = vunpack.c.l.s4 1983009808
      %v666 = vunpack.c.0.s8 %v665
      %v667 = vlaneseq
      %v668 = vshrl.u32 %v667, 7
      %v669 = vsub.s32 %v666, %v668
      %v670 = vrot.slane %v554, %v669
      %v673 = vunpack.c.l.s4 1983009808
      %v674 = vunpack.c.0.s8 %v673
      %v675 = vlaneseq
      %v676 = vshrl.u32 %v675, 7
      %v677 = vsub.s32 %v674, %v676
      %v678 = vrot.slane %v560, %v677
      %v679 = vcombine.low %v670, %v678
      %v680 = vcombine.high %v670, %v678
      %v682 = vunpack.c.l.s4 1934713408
      %v683 = vunpack.c.0.s8 %v682
      %v684 = vlaneseq
      %v685 = vshrl.u32 %v684, 7
      %v686 = vsub.s32 %v683, %v685
      %v687 = vrot.slane %v679, %v686
      %v689 = vunpack.c.l.s4 1934713408
      %v690 = vunpack.c.0.s8 %v689
      %v691 = vlaneseq
      %v692 = vshrl.u32 %v691, 7
      %v693 = vsub.s32 %v690, %v692
      %v694 = vrot.slane %v680, %v693
      %v695 = vcombine.high %v687, 0
      %v696 = vcombine.high %v694, 0
      %v698 = vunpack.c.l.b16 %v619
      %v699 = vpack.c.b16 %v698, %v698
      %700 = vrot.lane.b32.xlu0 %v699, 16
      %v701 = vpop.permute.xlu0 %700
      %v703 = vunpack.c.l.b16 %v593
      %v704 = vpack.c.b16 %v703, %v703
      %705 = vrot.lane.b32.xlu0 %v704, 32
      %v706 = vpop.permute.xlu0 %705
      %v708 = vunpack.c.l.b16 %v627
      %v709 = vpack.c.b16 %v708, %v708
      %710 = vrot.lane.b32.xlu0 %v709, 48
      %v711 = vpop.permute.xlu0 %710
      %v713 = vunpack.c.l.b16 %v592
      %v714 = vpack.c.b16 %v713, %v713
      %715 = vrot.lane.b32.xlu0 %v714, 64
      %v716 = vpop.permute.xlu0 %715
      %v718 = vunpack.c.l.b16 %v626
      %v719 = vpack.c.b16 %v718, %v718
      %720 = vrot.lane.b32.xlu0 %v719, 80
      %v721 = vpop.permute.xlu0 %720
      %v723 = vunpack.c.l.b16 %v594
      %v724 = vpack.c.b16 %v723, %v723
      %725 = vrot.lane.b32.xlu0 %v724, 96
      %v726 = vpop.permute.xlu0 %725
      %v728 = vunpack.c.l.b16 %v628
      %v729 = vpack.c.b16 %v728, %v728
      %730 = vrot.lane.b32.xlu0 %v729, 112
      %v731 = vpop.permute.xlu0 %730
      %v733 = vunpack.c.l.b16 %v687
      %v734 = vpack.c.b16 %v733, %v733
      %735 = vrot.lane.b32.xlu0 %v734, 16
      %v736 = vpop.permute.xlu0 %735
      %v738 = vunpack.c.l.b16 %v661
      %v739 = vpack.c.b16 %v738, %v738
      %740 = vrot.lane.b32.xlu0 %v739, 32
      %v741 = vpop.permute.xlu0 %740
      %v743 = vunpack.c.l.b16 %v695
      %v744 = vpack.c.b16 %v743, %v743
      %745 = vrot.lane.b32.xlu0 %v744, 48
      %v746 = vpop.permute.xlu0 %745
      %v748 = vunpack.c.l.b16 %v660
      %v749 = vpack.c.b16 %v748, %v748
      %750 = vrot.lane.b32.xlu0 %v749, 64
      %v751 = vpop.permute.xlu0 %750
      %v753 = vunpack.c.l.b16 %v694
      %v754 = vpack.c.b16 %v753, %v753
      %755 = vrot.lane.b32.xlu0 %v754, 80
      %v756 = vpop.permute.xlu0 %755
      %v758 = vunpack.c.l.b16 %v662
      %v759 = vpack.c.b16 %v758, %v758
      %760 = vrot.lane.b32.xlu0 %v759, 96
      %v761 = vpop.permute.xlu0 %760
      %v763 = vunpack.c.l.b16 %v696
      %v764 = vpack.c.b16 %v763, %v763
      %765 = vrot.lane.b32.xlu0 %v764, 112
      %v766 = vpop.permute.xlu0 %765
      %v769 = vsel %vm469, %v585, %v701
      %v771 = vsel %vm473, %v769, %v706
      %v773 = vsel %vm476, %v771, %v711
      %v775 = vsel %vm479, %v773, %v716
      %v777 = vsel %vm482, %v775, %v721
      %v779 = vsel %vm485, %v777, %v726
      %v781 = vsel %vm488, %v779, %v731
      %v784 = vsel %vm469, %v653, %v736
      %v786 = vsel %vm473, %v784, %v741
      %v788 = vsel %vm476, %v786, %v746
      %v790 = vsel %vm479, %v788, %v751
      %v792 = vsel %vm482, %v790, %v756
      %v794 = vsel %vm485, %v792, %v761
      %v796 = vsel %vm488, %v794, %v766
      %v799 = vunpack.c.l.b16 %v781
      %v800 = vunpack.c.l.b16 %v796
      %v801 = vpack.c.b16 %v800, %v799
      %v802 = vrot.slane %v801, 6
      %804 = vst [vmem:[#allocation2] sm:$0xcc] %v802
      %805 = vrot.lane.b32.xlu0 %v227, 126
      %v806 = vpop.permute.xlu0 %805
      %807 = vrot.lane.b32.xlu0 %v228, 126
      %v808 = vpop.permute.xlu0 %807
      %809 = vrot.lane.b32.xlu0 %v230, 126
      %v810 = vpop.permute.xlu0 %809
      %811 = vrot.lane.b32.xlu0 %v231, 126
      %v812 = vpop.permute.xlu0 %811
      %813 = vrot.lane.b32.xlu0 %v233, 126
      %v814 = vpop.permute.xlu0 %813
      %815 = vrot.lane.b32.xlu0 %v234, 126
      %v816 = vpop.permute.xlu0 %815
      %817 = vrot.lane.b32.xlu0 %v236, 126
      %v818 = vpop.permute.xlu0 %817
      %819 = vrot.lane.b32.xlu0 %v237, 126
      %v820 = vpop.permute.xlu0 %819
      %v823 = vpack.i.b16 %v810, %v806
      %v824 = vshrl.u32 %v806, 16
      %v825 = vshrl.u32 %v810, 16
      %v826 = vpack.i.b16 %v825, %v824
      %v829 = vpack.i.b16 %v818, %v814
      %v830 = vshrl.u32 %v814, 16
      %v831 = vshrl.u32 %v818, 16
      %v832 = vpack.i.b16 %v831, %v830
      %v835 = vpack.i.b16 %v812, %v808
      %v836 = vshrl.u32 %v808, 16
      %v837 = vshrl.u32 %v812, 16
      %v838 = vpack.i.b16 %v837, %v836
      %v841 = vpack.i.b16 %v820, %v816
      %v842 = vshrl.u32 %v816, 16
      %v843 = vshrl.u32 %v820, 16
      %v844 = vpack.i.b16 %v843, %v842
      %v847 = vunpack.c.l.s4 1983009808
      %v848 = vunpack.c.0.s8 %v847
      %v849 = vlaneseq
      %v850 = vshrl.u32 %v849, 7
      %v851 = vsub.s32 %v848, %v850
      %v852 = vrot.slane %v823, %v851
      %v855 = vunpack.c.l.s4 1983009808
      %v856 = vunpack.c.0.s8 %v855
      %v857 = vlaneseq
      %v858 = vshrl.u32 %v857, 7
      %v859 = vsub.s32 %v856, %v858
      %v860 = vrot.slane %v829, %v859
      %v861 = vcombine.low %v852, %v860
      %v862 = vcombine.high %v852, %v860
      %v864 = vunpack.c.l.s4 1934713408
      %v865 = vunpack.c.0.s8 %v864
      %v866 = vlaneseq
      %v867 = vshrl.u32 %v866, 7
      %v868 = vsub.s32 %v865, %v867
      %v869 = vrot.slane %v861, %v868
      %v871 = vunpack.c.l.s4 1934713408
      %v872 = vunpack.c.0.s8 %v871
      %v873 = vlaneseq
      %v874 = vshrl.u32 %v873, 7
      %v875 = vsub.s32 %v872, %v874
      %v876 = vrot.slane %v862, %v875
      %v877 = vcombine.high %v869, 0
      %v878 = vcombine.high %v876, 0
      %v881 = vunpack.c.l.s4 1983009808
      %v882 = vunpack.c.0.s8 %v881
      %v883 = vlaneseq
      %v884 = vshrl.u32 %v883, 7
      %v885 = vsub.s32 %v882, %v884
      %v886 = vrot.slane %v826, %v885
      %v889 = vunpack.c.l.s4 1983009808
      %v890 = vunpack.c.0.s8 %v889
      %v891 = vlaneseq
      %v892 = vshrl.u32 %v891, 7
      %v893 = vsub.s32 %v890, %v892
      %v894 = vrot.slane %v832, %v893
      %v895 = vcombine.low %v886, %v894
      %v896 = vcombine.high %v886, %v894
      %v898 = vunpack.c.l.s4 1934713408
      %v899 = vunpack.c.0.s8 %v898
      %v900 = vlaneseq
      %v901 = vshrl.u32 %v900, 7
      %v902 = vsub.s32 %v899, %v901
      %v903 = vrot.slane %v895, %v902
      %v905 = vunpack.c.l.s4 1934713408
      %v906 = vunpack.c.0.s8 %v905
      %v907 = vlaneseq
      %v908 = vshrl.u32 %v907, 7
      %v909 = vsub.s32 %v906, %v908
      %v910 = vrot.slane %v896, %v909
      %v911 = vcombine.high %v903, 0
      %v912 = vcombine.high %v910, 0
      %v915 = vunpack.c.l.s4 1983009808
      %v916 = vunpack.c.0.s8 %v915
      %v917 = vlaneseq
      %v918 = vshrl.u32 %v917, 7
      %v919 = vsub.s32 %v916, %v918
      %v920 = vrot.slane %v835, %v919
      %v923 = vunpack.c.l.s4 1983009808
      %v924 = vunpack.c.0.s8 %v923
      %v925 = vlaneseq
      %v926 = vshrl.u32 %v925, 7
      %v927 = vsub.s32 %v924, %v926
      %v928 = vrot.slane %v841, %v927
      %v929 = vcombine.low %v920, %v928
      %v930 = vcombine.high %v920, %v928
      %v932 = vunpack.c.l.s4 1934713408
      %v933 = vunpack.c.0.s8 %v932
      %v934 = vlaneseq
      %v935 = vshrl.u32 %v934, 7
      %v936 = vsub.s32 %v933, %v935
      %v937 = vrot.slane %v929, %v936
      %v939 = vunpack.c.l.s4 1934713408
      %v940 = vunpack.c.0.s8 %v939
      %v941 = vlaneseq
      %v942 = vshrl.u32 %v941, 7
      %v943 = vsub.s32 %v940, %v942
      %v944 = vrot.slane %v930, %v943
      %v945 = vcombine.high %v937, 0
      %v946 = vcombine.high %v944, 0
      %v949 = vunpack.c.l.s4 1983009808
      %v950 = vunpack.c.0.s8 %v949
      %v951 = vlaneseq
      %v952 = vshrl.u32 %v951, 7
      %v953 = vsub.s32 %v950, %v952
      %v954 = vrot.slane %v838, %v953
      %v957 = vunpack.c.l.s4 1983009808
      %v958 = vunpack.c.0.s8 %v957
      %v959 = vlaneseq
      %v960 = vshrl.u32 %v959, 7
      %v961 = vsub.s32 %v958, %v960
      %v962 = vrot.slane %v844, %v961
      %v963 = vcombine.low %v954, %v962
      %v964 = vcombine.high %v954, %v962
      %v966 = vunpack.c.l.s4 1934713408
      %v967 = vunpack.c.0.s8 %v966
      %v968 = vlaneseq
      %v969 = vshrl.u32 %v968, 7
      %v970 = vsub.s32 %v967, %v969
      %v971 = vrot.slane %v963, %v970
      %v973 = vunpack.c.l.s4 1934713408
      %v974 = vunpack.c.0.s8 %v973
      %v975 = vlaneseq
      %v976 = vshrl.u32 %v975, 7
      %v977 = vsub.s32 %v974, %v976
      %v978 = vrot.slane %v964, %v977
      %v979 = vcombine.high %v971, 0
      %v980 = vcombine.high %v978, 0
      %v982 = vunpack.c.l.b16 %v903
      %v983 = vpack.c.b16 %v982, %v982
      %984 = vrot.lane.b32.xlu0 %v983, 16
      %v985 = vpop.permute.xlu0 %984
      %v987 = vunpack.c.l.b16 %v877
      %v988 = vpack.c.b16 %v987, %v987
      %989 = vrot.lane.b32.xlu0 %v988, 32
      %v990 = vpop.permute.xlu0 %989
      %v992 = vunpack.c.l.b16 %v911
      %v993 = vpack.c.b16 %v992, %v992
      %994 = vrot.lane.b32.xlu0 %v993, 48
      %v995 = vpop.permute.xlu0 %994
      %v997 = vunpack.c.l.b16 %v876
      %v998 = vpack.c.b16 %v997, %v997
      %999 = vrot.lane.b32.xlu0 %v998, 64
      %v1000 = vpop.permute.xlu0 %999
      %v1002 = vunpack.c.l.b16 %v910
      %v1003 = vpack.c.b16 %v1002, %v1002
      %1004 = vrot.lane.b32.xlu0 %v1003, 80
      %v1005 = vpop.permute.xlu0 %1004
      %v1007 = vunpack.c.l.b16 %v878
      %v1008 = vpack.c.b16 %v1007, %v1007
      %1009 = vrot.lane.b32.xlu0 %v1008, 96
      %v1010 = vpop.permute.xlu0 %1009
      %v1012 = vunpack.c.l.b16 %v912
      %v1013 = vpack.c.b16 %v1012, %v1012
      %1014 = vrot.lane.b32.xlu0 %v1013, 112
      %v1015 = vpop.permute.xlu0 %1014
      %v1017 = vunpack.c.l.b16 %v971
      %v1018 = vpack.c.b16 %v1017, %v1017
      %1019 = vrot.lane.b32.xlu0 %v1018, 16
      %v1020 = vpop.permute.xlu0 %1019
      %v1022 = vunpack.c.l.b16 %v945
      %v1023 = vpack.c.b16 %v1022, %v1022
      %1024 = vrot.lane.b32.xlu0 %v1023, 32
      %v1025 = vpop.permute.xlu0 %1024
      %v1027 = vunpack.c.l.b16 %v979
      %v1028 = vpack.c.b16 %v1027, %v1027
      %1029 = vrot.lane.b32.xlu0 %v1028, 48
      %v1030 = vpop.permute.xlu0 %1029
      %v1032 = vunpack.c.l.b16 %v944
      %v1033 = vpack.c.b16 %v1032, %v1032
      %1034 = vrot.lane.b32.xlu0 %v1033, 64
      %v1035 = vpop.permute.xlu0 %1034
      %v1037 = vunpack.c.l.b16 %v978
      %v1038 = vpack.c.b16 %v1037, %v1037
      %1039 = vrot.lane.b32.xlu0 %v1038, 80
      %v1040 = vpop.permute.xlu0 %1039
      %v1042 = vunpack.c.l.b16 %v946
      %v1043 = vpack.c.b16 %v1042, %v1042
      %1044 = vrot.lane.b32.xlu0 %v1043, 96
      %v1045 = vpop.permute.xlu0 %1044
      %v1047 = vunpack.c.l.b16 %v980
      %v1048 = vpack.c.b16 %v1047, %v1047
      %1049 = vrot.lane.b32.xlu0 %v1048, 112
      %v1050 = vpop.permute.xlu0 %1049
      %v1053 = vsel %vm469, %v869, %v985
      %v1055 = vsel %vm473, %v1053, %v990
      %v1057 = vsel %vm476, %v1055, %v995
      %v1059 = vsel %vm479, %v1057, %v1000
      %v1061 = vsel %vm482, %v1059, %v1005
      %v1063 = vsel %vm485, %v1061, %v1010
      %v1065 = vsel %vm488, %v1063, %v1015
      %v1068 = vsel %vm469, %v937, %v1020
      %v1070 = vsel %vm473, %v1068, %v1025
      %v1072 = vsel %vm476, %v1070, %v1030
      %v1074 = vsel %vm479, %v1072, %v1035
      %v1076 = vsel %vm482, %v1074, %v1040
      %v1078 = vsel %vm485, %v1076, %v1045
      %v1080 = vsel %vm488, %v1078, %v1050
      %v1083 = vunpack.c.l.b16 %v1065
      %v1084 = vunpack.c.l.b16 %v1080
      %v1085 = vpack.c.b16 %v1084, %v1083
      %1087 = vst [vmem:[#allocation2 + $0x8] sm:$0x33] %v1085
      %vm1088 = vsmask.f32 3328
      %vm1089 = vsmask.f32 7440
      %vm1090 = vmor %vm1088, %vm1089
      %v1092 = vrot.slane %v242, 4
      %v1093 = vshll.u32 %v227, 16
      %v1095 = vrot.slane %v1093, 5
      %v1096 = vor.u32 %v1092, %v1095
      %v1097 = vrot.slane %v1096, 4
      %v1098 = vshll.u32 %v228, 16
      %v1100 = vrot.slane %v1098, 5
      %v1101 = vsel %vm1090, %v1097, %v1100
      %v1103 = vrot.slane %v254, 4
      %v1104 = vor.u32 %v1103, %v1100
      %v1105 = vrot.slane %v1104, 4
      %v1107 = vshll.u32 %v229, 16
      %v1109 = vrot.slane %v1107, 5
      %v1110 = vsel %vm1090, %v1105, %v1109
      %v1112 = vrot.slane %v243, 4
      %v1113 = vshll.u32 %v230, 16
      %v1115 = vrot.slane %v1113, 5
      %v1116 = vor.u32 %v1112, %v1115
      %v1117 = vrot.slane %v1116, 4
      %v1118 = vshll.u32 %v231, 16
      %v1120 = vrot.slane %v1118, 5
      %v1121 = vsel %vm1090, %v1117, %v1120
      %v1123 = vrot.slane %v255, 4
      %v1124 = vor.u32 %v1123, %v1120
      %v1125 = vrot.slane %v1124, 4
      %v1127 = vshll.u32 %v232, 16
      %v1129 = vrot.slane %v1127, 5
      %v1130 = vsel %vm1090, %v1125, %v1129
      %v1132 = vrot.slane %v248, 4
      %v1133 = vshll.u32 %v233, 16
      %v1135 = vrot.slane %v1133, 5
      %v1136 = vor.u32 %v1132, %v1135
      %v1137 = vrot.slane %v1136, 4
      %v1138 = vshll.u32 %v234, 16
      %v1140 = vrot.slane %v1138, 5
      %v1141 = vsel %vm1090, %v1137, %v1140
      %v1143 = vrot.slane %v260, 4
      %v1144 = vor.u32 %v1143, %v1140
      %v1145 = vrot.slane %v1144, 4
      %v1147 = vshll.u32 %v235, 16
      %v1149 = vrot.slane %v1147, 5
      %v1150 = vsel %vm1090, %v1145, %v1149
      %v1152 = vrot.slane %v249, 4
      %v1153 = vshll.u32 %v236, 16
      %v1155 = vrot.slane %v1153, 5
      %v1156 = vor.u32 %v1152, %v1155
      %v1157 = vrot.slane %v1156, 4
      %v1158 = vshll.u32 %v237, 16
      %v1160 = vrot.slane %v1158, 5
      %v1161 = vsel %vm1090, %v1157, %v1160
      %v1163 = vrot.slane %v261, 4
      %v1164 = vor.u32 %v1163, %v1160
      %v1165 = vrot.slane %v1164, 4
      %v1167 = vshll.u32 %v238, 16
      %v1169 = vrot.slane %v1167, 5
      %v1170 = vsel %vm1090, %v1165, %v1169
      %v1173 = vpack.i.b16 %v1121, %v1101
      %v1174 = vshrl.u32 %v1101, 16
      %v1175 = vshrl.u32 %v1121, 16
      %v1176 = vpack.i.b16 %v1175, %v1174
      %v1179 = vpack.i.b16 %v1161, %v1141
      %v1180 = vshrl.u32 %v1141, 16
      %v1181 = vshrl.u32 %v1161, 16
      %v1182 = vpack.i.b16 %v1181, %v1180
      %v1185 = vpack.i.b16 %v1130, %v1110
      %v1186 = vshrl.u32 %v1110, 16
      %v1187 = vshrl.u32 %v1130, 16
      %v1188 = vpack.i.b16 %v1187, %v1186
      %v1191 = vpack.i.b16 %v1170, %v1150
      %v1192 = vshrl.u32 %v1150, 16
      %v1193 = vshrl.u32 %v1170, 16
      %v1194 = vpack.i.b16 %v1193, %v1192
      %v1197 = vunpack.c.l.s4 1983009808
      %v1198 = vunpack.c.0.s8 %v1197
      %v1199 = vlaneseq
      %v1200 = vshrl.u32 %v1199, 7
      %v1201 = vsub.s32 %v1198, %v1200
      %v1202 = vrot.slane %v1173, %v1201
      %v1205 = vunpack.c.l.s4 1983009808
      %v1206 = vunpack.c.0.s8 %v1205
      %v1207 = vlaneseq
      %v1208 = vshrl.u32 %v1207, 7
      %v1209 = vsub.s32 %v1206, %v1208
      %v1210 = vrot.slane %v1179, %v1209
      %v1211 = vcombine.low %v1202, %v1210
      %v1212 = vcombine.high %v1202, %v1210
      %v1214 = vunpack.c.l.s4 1934713408
      %v1215 = vunpack.c.0.s8 %v1214
      %v1216 = vlaneseq
      %v1217 = vshrl.u32 %v1216, 7
      %v1218 = vsub.s32 %v1215, %v1217
      %v1219 = vrot.slane %v1211, %v1218
      %v1221 = vunpack.c.l.s4 1934713408
      %v1222 = vunpack.c.0.s8 %v1221
      %v1223 = vlaneseq
      %v1224 = vshrl.u32 %v1223, 7
      %v1225 = vsub.s32 %v1222, %v1224
      %v1226 = vrot.slane %v1212, %v1225
      %v1227 = vcombine.high %v1219, 0
      %v1228 = vcombine.high %v1226, 0
      %v1231 = vunpack.c.l.s4 1983009808
      %v1232 = vunpack.c.0.s8 %v1231
      %v1233 = vlaneseq
      %v1234 = vshrl.u32 %v1233, 7
      %v1235 = vsub.s32 %v1232, %v1234
      %v1236 = vrot.slane %v1176, %v1235
      %v1239 = vunpack.c.l.s4 1983009808
      %v1240 = vunpack.c.0.s8 %v1239
      %v1241 = vlaneseq
      %v1242 = vshrl.u32 %v1241, 7
      %v1243 = vsub.s32 %v1240, %v1242
      %v1244 = vrot.slane %v1182, %v1243
      %v1245 = vcombine.low %v1236, %v1244
      %v1246 = vcombine.high %v1236, %v1244
      %v1248 = vunpack.c.l.s4 1934713408
      %v1249 = vunpack.c.0.s8 %v1248
      %v1250 = vlaneseq
      %v1251 = vshrl.u32 %v1250, 7
      %v1252 = vsub.s32 %v1249, %v1251
      %v1253 = vrot.slane %v1245, %v1252
      %v1255 = vunpack.c.l.s4 1934713408
      %v1256 = vunpack.c.0.s8 %v1255
      %v1257 = vlaneseq
      %v1258 = vshrl.u32 %v1257, 7
      %v1259 = vsub.s32 %v1256, %v1258
      %v1260 = vrot.slane %v1246, %v1259
      %v1261 = vcombine.high %v1253, 0
      %v1262 = vcombine.high %v1260, 0
      %v1265 = vunpack.c.l.s4 1983009808
      %v1266 = vunpack.c.0.s8 %v1265
      %v1267 = vlaneseq
      %v1268 = vshrl.u32 %v1267, 7
      %v1269 = vsub.s32 %v1266, %v1268
      %v1270 = vrot.slane %v1185, %v1269
      %v1273 = vunpack.c.l.s4 1983009808
      %v1274 = vunpack.c.0.s8 %v1273
      %v1275 = vlaneseq
      %v1276 = vshrl.u32 %v1275, 7
      %v1277 = vsub.s32 %v1274, %v1276
      %v1278 = vrot.slane %v1191, %v1277
      %v1279 = vcombine.low %v1270, %v1278
      %v1280 = vcombine.high %v1270, %v1278
      %v1282 = vunpack.c.l.s4 1934713408
      %v1283 = vunpack.c.0.s8 %v1282
      %v1284 = vlaneseq
      %v1285 = vshrl.u32 %v1284, 7
      %v1286 = vsub.s32 %v1283, %v1285
      %v1287 = vrot.slane %v1279, %v1286
      %v1289 = vunpack.c.l.s4 1934713408
      %v1290 = vunpack.c.0.s8 %v1289
      %v1291 = vlaneseq
      %v1292 = vshrl.u32 %v1291, 7
      %v1293 = vsub.s32 %v1290, %v1292
      %v1294 = vrot.slane %v1280, %v1293
      %v1295 = vcombine.high %v1287, 0
      %v1296 = vcombine.high %v1294, 0
      %v1299 = vunpack.c.l.s4 1983009808
      %v1300 = vunpack.c.0.s8 %v1299
      %v1301 = vlaneseq
      %v1302 = vshrl.u32 %v1301, 7
      %v1303 = vsub.s32 %v1300, %v1302
      %v1304 = vrot.slane %v1188, %v1303
      %v1307 = vunpack.c.l.s4 1983009808
      %v1308 = vunpack.c.0.s8 %v1307
      %v1309 = vlaneseq
      %v1310 = vshrl.u32 %v1309, 7
      %v1311 = vsub.s32 %v1308, %v1310
      %v1312 = vrot.slane %v1194, %v1311
      %v1313 = vcombine.low %v1304, %v1312
      %v1314 = vcombine.high %v1304, %v1312
      %v1316 = vunpack.c.l.s4 1934713408
      %v1317 = vunpack.c.0.s8 %v1316
      %v1318 = vlaneseq
      %v1319 = vshrl.u32 %v1318, 7
      %v1320 = vsub.s32 %v1317, %v1319
      %v1321 = vrot.slane %v1313, %v1320
      %v1323 = vunpack.c.l.s4 1934713408
      %v1324 = vunpack.c.0.s8 %v1323
      %v1325 = vlaneseq
      %v1326 = vshrl.u32 %v1325, 7
      %v1327 = vsub.s32 %v1324, %v1326
      %v1328 = vrot.slane %v1314, %v1327
      %v1329 = vcombine.high %v1321, 0
      %v1330 = vcombine.high %v1328, 0
      %v1332 = vunpack.c.l.b16 %v1253
      %v1333 = vpack.c.b16 %v1332, %v1332
      %1334 = vrot.lane.b32.xlu0 %v1333, 16
      %v1335 = vpop.permute.xlu0 %1334
      %v1337 = vunpack.c.l.b16 %v1227
      %v1338 = vpack.c.b16 %v1337, %v1337
      %1339 = vrot.lane.b32.xlu0 %v1338, 32
      %v1340 = vpop.permute.xlu0 %1339
      %v1342 = vunpack.c.l.b16 %v1261
      %v1343 = vpack.c.b16 %v1342, %v1342
      %1344 = vrot.lane.b32.xlu0 %v1343, 48
      %v1345 = vpop.permute.xlu0 %1344
      %v1347 = vunpack.c.l.b16 %v1226
      %v1348 = vpack.c.b16 %v1347, %v1347
      %1349 = vrot.lane.b32.xlu0 %v1348, 64
      %v1350 = vpop.permute.xlu0 %1349
      %v1352 = vunpack.c.l.b16 %v1260
      %v1353 = vpack.c.b16 %v1352, %v1352
      %1354 = vrot.lane.b32.xlu0 %v1353, 80
      %v1355 = vpop.permute.xlu0 %1354
      %v1357 = vunpack.c.l.b16 %v1228
      %v1358 = vpack.c.b16 %v1357, %v1357
      %1359 = vrot.lane.b32.xlu0 %v1358, 96
      %v1360 = vpop.permute.xlu0 %1359
      %v1362 = vunpack.c.l.b16 %v1262
      %v1363 = vpack.c.b16 %v1362, %v1362
      %1364 = vrot.lane.b32.xlu0 %v1363, 112
      %v1365 = vpop.permute.xlu0 %1364
      %v1367 = vunpack.c.l.b16 %v1321
      %v1368 = vpack.c.b16 %v1367, %v1367
      %1369 = vrot.lane.b32.xlu0 %v1368, 16
      %v1370 = vpop.permute.xlu0 %1369
      %v1372 = vunpack.c.l.b16 %v1295
      %v1373 = vpack.c.b16 %v1372, %v1372
      %1374 = vrot.lane.b32.xlu0 %v1373, 32
      %v1375 = vpop.permute.xlu0 %1374
      %v1377 = vunpack.c.l.b16 %v1329
      %v1378 = vpack.c.b16 %v1377, %v1377
      %1379 = vrot.lane.b32.xlu0 %v1378, 48
      %v1380 = vpop.permute.xlu0 %1379
      %v1382 = vunpack.c.l.b16 %v1294
      %v1383 = vpack.c.b16 %v1382, %v1382
      %1384 = vrot.lane.b32.xlu0 %v1383, 64
      %v1385 = vpop.permute.xlu0 %1384
      %v1387 = vunpack.c.l.b16 %v1328
      %v1388 = vpack.c.b16 %v1387, %v1387
      %1389 = vrot.lane.b32.xlu0 %v1388, 80
      %v1390 = vpop.permute.xlu0 %1389
      %v1392 = vunpack.c.l.b16 %v1296
      %v1393 = vpack.c.b16 %v1392, %v1392
      %1394 = vrot.lane.b32.xlu0 %v1393, 96
      %v1395 = vpop.permute.xlu0 %1394
      %v1397 = vunpack.c.l.b16 %v1330
      %v1398 = vpack.c.b16 %v1397, %v1397
      %1399 = vrot.lane.b32.xlu0 %v1398, 112
      %v1400 = vpop.permute.xlu0 %1399
      %v1403 = vsel %vm469, %v1219, %v1335
      %v1405 = vsel %vm473, %v1403, %v1340
      %v1407 = vsel %vm476, %v1405, %v1345
      %v1409 = vsel %vm479, %v1407, %v1350
      %v1411 = vsel %vm482, %v1409, %v1355
      %v1413 = vsel %vm485, %v1411, %v1360
      %v1415 = vsel %vm488, %v1413, %v1365
      %v1418 = vsel %vm469, %v1287, %v1370
      %v1420 = vsel %vm473, %v1418, %v1375
      %v1422 = vsel %vm476, %v1420, %v1380
      %v1424 = vsel %vm479, %v1422, %v1385
      %v1426 = vsel %vm482, %v1424, %v1390
      %v1428 = vsel %vm485, %v1426, %v1395
      %v1430 = vsel %vm488, %v1428, %v1400
      %v1433 = vunpack.c.l.b16 %v1415
      %v1434 = vunpack.c.l.b16 %v1430
      %v1435 = vpack.c.b16 %v1434, %v1433
      %v1436 = vrot.slane %v1435, 6
      %1438 = vst [vmem:[#allocation2 + $0x8] sm:$0xcc] %v1436
      %1439 = vrot.lane.b32.xlu0 %v1101, 127
      %v1440 = vpop.permute.xlu0 %1439
      %1441 = vrot.lane.b32.xlu0 %v1110, 127
      %v1442 = vpop.permute.xlu0 %1441
      %1443 = vrot.lane.b32.xlu0 %v1121, 127
      %v1444 = vpop.permute.xlu0 %1443
      %1445 = vrot.lane.b32.xlu0 %v1130, 127
      %v1446 = vpop.permute.xlu0 %1445
      %1447 = vrot.lane.b32.xlu0 %v1141, 127
      %v1448 = vpop.permute.xlu0 %1447
      %1449 = vrot.lane.b32.xlu0 %v1150, 127
      %v1450 = vpop.permute.xlu0 %1449
      %1451 = vrot.lane.b32.xlu0 %v1161, 127
      %v1452 = vpop.permute.xlu0 %1451
      %1453 = vrot.lane.b32.xlu0 %v1170, 127
      %v1454 = vpop.permute.xlu0 %1453
      %v1457 = vpack.i.b16 %v1444, %v1440
      %v1458 = vshrl.u32 %v1440, 16
      %v1459 = vshrl.u32 %v1444, 16
      %v1460 = vpack.i.b16 %v1459, %v1458
      %v1463 = vpack.i.b16 %v1452, %v1448
      %v1464 = vshrl.u32 %v1448, 16
      %v1465 = vshrl.u32 %v1452, 16
      %v1466 = vpack.i.b16 %v1465, %v1464
      %v1469 = vpack.i.b16 %v1446, %v1442
      %v1470 = vshrl.u32 %v1442, 16
      %v1471 = vshrl.u32 %v1446, 16
      %v1472 = vpack.i.b16 %v1471, %v1470
      %v1475 = vpack.i.b16 %v1454, %v1450
      %v1476 = vshrl.u32 %v1450, 16
      %v1477 = vshrl.u32 %v1454, 16
      %v1478 = vpack.i.b16 %v1477, %v1476
      %v1481 = vunpack.c.l.s4 1983009808
      %v1482 = vunpack.c.0.s8 %v1481
      %v1483 = vlaneseq
      %v1484 = vshrl.u32 %v1483, 7
      %v1485 = vsub.s32 %v1482, %v1484
      %v1486 = vrot.slane %v1457, %v1485
      %v1489 = vunpack.c.l.s4 1983009808
      %v1490 = vunpack.c.0.s8 %v1489
      %v1491 = vlaneseq
      %v1492 = vshrl.u32 %v1491, 7
      %v1493 = vsub.s32 %v1490, %v1492
      %v1494 = vrot.slane %v1463, %v1493
      %v1495 = vcombine.low %v1486, %v1494
      %v1496 = vcombine.high %v1486, %v1494
      %v1498 = vunpack.c.l.s4 1934713408
      %v1499 = vunpack.c.0.s8 %v1498
      %v1500 = vlaneseq
      %v1501 = vshrl.u32 %v1500, 7
      %v1502 = vsub.s32 %v1499, %v1501
      %v1503 = vrot.slane %v1495, %v1502
      %v1505 = vunpack.c.l.s4 1934713408
      %v1506 = vunpack.c.0.s8 %v1505
      %v1507 = vlaneseq
      %v1508 = vshrl.u32 %v1507, 7
      %v1509 = vsub.s32 %v1506, %v1508
      %v1510 = vrot.slane %v1496, %v1509
      %v1511 = vcombine.high %v1503, 0
      %v1512 = vcombine.high %v1510, 0
      %v1515 = vunpack.c.l.s4 1983009808
      %v1516 = vunpack.c.0.s8 %v1515
      %v1517 = vlaneseq
      %v1518 = vshrl.u32 %v1517, 7
      %v1519 = vsub.s32 %v1516, %v1518
      %v1520 = vrot.slane %v1460, %v1519
      %v1523 = vunpack.c.l.s4 1983009808
      %v1524 = vunpack.c.0.s8 %v1523
      %v1525 = vlaneseq
      %v1526 = vshrl.u32 %v1525, 7
      %v1527 = vsub.s32 %v1524, %v1526
      %v1528 = vrot.slane %v1466, %v1527
      %v1529 = vcombine.low %v1520, %v1528
      %v1530 = vcombine.high %v1520, %v1528
      %v1532 = vunpack.c.l.s4 1934713408
      %v1533 = vunpack.c.0.s8 %v1532
      %v1534 = vlaneseq
      %v1535 = vshrl.u32 %v1534, 7
      %v1536 = vsub.s32 %v1533, %v1535
      %v1537 = vrot.slane %v1529, %v1536
      %v1539 = vunpack.c.l.s4 1934713408
      %v1540 = vunpack.c.0.s8 %v1539
      %v1541 = vlaneseq
      %v1542 = vshrl.u32 %v1541, 7
      %v1543 = vsub.s32 %v1540, %v1542
      %v1544 = vrot.slane %v1530, %v1543
      %v1545 = vcombine.high %v1537, 0
      %v1546 = vcombine.high %v1544, 0
      %v1549 = vunpack.c.l.s4 1983009808
      %v1550 = vunpack.c.0.s8 %v1549
      %v1551 = vlaneseq
      %v1552 = vshrl.u32 %v1551, 7
      %v1553 = vsub.s32 %v1550, %v1552
      %v1554 = vrot.slane %v1469, %v1553
      %v1557 = vunpack.c.l.s4 1983009808
      %v1558 = vunpack.c.0.s8 %v1557
      %v1559 = vlaneseq
      %v1560 = vshrl.u32 %v1559, 7
      %v1561 = vsub.s32 %v1558, %v1560
      %v1562 = vrot.slane %v1475, %v1561
      %v1563 = vcombine.low %v1554, %v1562
      %v1564 = vcombine.high %v1554, %v1562
      %v1566 = vunpack.c.l.s4 1934713408
      %v1567 = vunpack.c.0.s8 %v1566
      %v1568 = vlaneseq
      %v1569 = vshrl.u32 %v1568, 7
      %v1570 = vsub.s32 %v1567, %v1569
      %v1571 = vrot.slane %v1563, %v1570
      %v1573 = vunpack.c.l.s4 1934713408
      %v1574 = vunpack.c.0.s8 %v1573
      %v1575 = vlaneseq
      %v1576 = vshrl.u32 %v1575, 7
      %v1577 = vsub.s32 %v1574, %v1576
      %v1578 = vrot.slane %v1564, %v1577
      %v1579 = vcombine.high %v1571, 0
      %v1580 = vcombine.high %v1578, 0
      %v1583 = vunpack.c.l.s4 1983009808
      %v1584 = vunpack.c.0.s8 %v1583
      %v1585 = vlaneseq
      %v1586 = vshrl.u32 %v1585, 7
      %v1587 = vsub.s32 %v1584, %v1586
      %v1588 = vrot.slane %v1472, %v1587
      %v1591 = vunpack.c.l.s4 1983009808
      %v1592 = vunpack.c.0.s8 %v1591
      %v1593 = vlaneseq
      %v1594 = vshrl.u32 %v1593, 7
      %v1595 = vsub.s32 %v1592, %v1594
      %v1596 = vrot.slane %v1478, %v1595
      %v1597 = vcombine.low %v1588, %v1596
      %v1598 = vcombine.high %v1588, %v1596
      %v1600 = vunpack.c.l.s4 1934713408
      %v1601 = vunpack.c.0.s8 %v1600
      %v1602 = vlaneseq
      %v1603 = vshrl.u32 %v1602, 7
      %v1604 = vsub.s32 %v1601, %v1603
      %v1605 = vrot.slane %v1597, %v1604
      %v1607 = vunpack.c.l.s4 1934713408
      %v1608 = vunpack.c.0.s8 %v1607
      %v1609 = vlaneseq
      %v1610 = vshrl.u32 %v1609, 7
      %v1611 = vsub.s32 %v1608, %v1610
      %v1612 = vrot.slane %v1598, %v1611
      %v1613 = vcombine.high %v1605, 0
      %v1614 = vcombine.high %v1612, 0
      %v1616 = vunpack.c.l.b16 %v1537
      %v1617 = vpack.c.b16 %v1616, %v1616
      %1618 = vrot.lane.b32.xlu0 %v1617, 16
      %v1619 = vpop.permute.xlu0 %1618
      %v1621 = vunpack.c.l.b16 %v1511
      %v1622 = vpack.c.b16 %v1621, %v1621
      %1623 = vrot.lane.b32.xlu0 %v1622, 32
      %v1624 = vpop.permute.xlu0 %1623
      %v1626 = vunpack.c.l.b16 %v1545
      %v1627 = vpack.c.b16 %v1626, %v1626
      %1628 = vrot.lane.b32.xlu0 %v1627, 48
      %v1629 = vpop.permute.xlu0 %1628
      %v1631 = vunpack.c.l.b16 %v1510
      %v1632 = vpack.c.b16 %v1631, %v1631
      %1633 = vrot.lane.b32.xlu0 %v1632, 64
      %v1634 = vpop.permute.xlu0 %1633
      %v1636 = vunpack.c.l.b16 %v1544
      %v1637 = vpack.c.b16 %v1636, %v1636
      %1638 = vrot.lane.b32.xlu0 %v1637, 80
      %v1639 = vpop.permute.xlu0 %1638
      %v1641 = vunpack.c.l.b16 %v1512
      %v1642 = vpack.c.b16 %v1641, %v1641
      %1643 = vrot.lane.b32.xlu0 %v1642, 96
      %v1644 = vpop.permute.xlu0 %1643
      %v1646 = vunpack.c.l.b16 %v1546
      %v1647 = vpack.c.b16 %v1646, %v1646
      %1648 = vrot.lane.b32.xlu0 %v1647, 112
      %v1649 = vpop.permute.xlu0 %1648
      %v1651 = vunpack.c.l.b16 %v1605
      %v1652 = vpack.c.b16 %v1651, %v1651
      %1653 = vrot.lane.b32.xlu0 %v1652, 16
      %v1654 = vpop.permute.xlu0 %1653
      %v1656 = vunpack.c.l.b16 %v1579
      %v1657 = vpack.c.b16 %v1656, %v1656
      %1658 = vrot.lane.b32.xlu0 %v1657, 32
      %v1659 = vpop.permute.xlu0 %1658
      %v1661 = vunpack.c.l.b16 %v1613
      %v1662 = vpack.c.b16 %v1661, %v1661
      %1663 = vrot.lane.b32.xlu0 %v1662, 48
      %v1664 = vpop.permute.xlu0 %1663
      %v1666 = vunpack.c.l.b16 %v1578
      %v1667 = vpack.c.b16 %v1666, %v1666
      %1668 = vrot.lane.b32.xlu0 %v1667, 64
      %v1669 = vpop.permute.xlu0 %1668
      %v1671 = vunpack.c.l.b16 %v1612
      %v1672 = vpack.c.b16 %v1671, %v1671
      %1673 = vrot.lane.b32.xlu0 %v1672, 80
      %v1674 = vpop.permute.xlu0 %1673
      %v1676 = vunpack.c.l.b16 %v1580
      %v1677 = vpack.c.b16 %v1676, %v1676
      %1678 = vrot.lane.b32.xlu0 %v1677, 96
      %v1679 = vpop.permute.xlu0 %1678
      %v1681 = vunpack.c.l.b16 %v1614
      %v1682 = vpack.c.b16 %v1681, %v1681
      %1683 = vrot.lane.b32.xlu0 %v1682, 112
      %v1684 = vpop.permute.xlu0 %1683
      %v1687 = vsel %vm469, %v1503, %v1619
      %v1689 = vsel %vm473, %v1687, %v1624
      %v1691 = vsel %vm476, %v1689, %v1629
      %v1693 = vsel %vm479, %v1691, %v1634
      %v1695 = vsel %vm482, %v1693, %v1639
      %v1697 = vsel %vm485, %v1695, %v1644
      %v1699 = vsel %vm488, %v1697, %v1649
      %v1702 = vsel %vm469, %v1571, %v1654
      %v1704 = vsel %vm473, %v1702, %v1659
      %v1706 = vsel %vm476, %v1704, %v1664
      %v1708 = vsel %vm479, %v1706, %v1669
      %v1710 = vsel %vm482, %v1708, %v1674
      %v1712 = vsel %vm485, %v1710, %v1679
      %v1714 = vsel %vm488, %v1712, %v1684
      %v1717 = vunpack.c.l.b16 %v1699
      %v1718 = vunpack.c.l.b16 %v1714
      %v1719 = vpack.c.b16 %v1718, %v1717
      %1721 = vst [vmem:[#allocation2 + $0x10] sm:$0x33] %v1719
      %1722 = vrot.lane.b32.xlu0 %v1101, 126
      %v1723 = vpop.permute.xlu0 %1722
      %1724 = vrot.lane.b32.xlu0 %v1110, 126
      %v1725 = vpop.permute.xlu0 %1724
      %1726 = vrot.lane.b32.xlu0 %v1121, 126
      %v1727 = vpop.permute.xlu0 %1726
      %1728 = vrot.lane.b32.xlu0 %v1130, 126
      %v1729 = vpop.permute.xlu0 %1728
      %1730 = vrot.lane.b32.xlu0 %v1141, 126
      %v1731 = vpop.permute.xlu0 %1730
      %1732 = vrot.lane.b32.xlu0 %v1150, 126
      %v1733 = vpop.permute.xlu0 %1732
      %1734 = vrot.lane.b32.xlu0 %v1161, 126
      %v1735 = vpop.permute.xlu0 %1734
      %1736 = vrot.lane.b32.xlu0 %v1170, 126
      %v1737 = vpop.permute.xlu0 %1736
      %v1740 = vpack.i.b16 %v1727, %v1723
      %v1741 = vshrl.u32 %v1723, 16
      %v1742 = vshrl.u32 %v1727, 16
      %v1743 = vpack.i.b16 %v1742, %v1741
      %v1746 = vpack.i.b16 %v1735, %v1731
      %v1747 = vshrl.u32 %v1731, 16
      %v1748 = vshrl.u32 %v1735, 16
      %v1749 = vpack.i.b16 %v1748, %v1747
      %v1752 = vpack.i.b16 %v1729, %v1725
      %v1753 = vshrl.u32 %v1725, 16
      %v1754 = vshrl.u32 %v1729, 16
      %v1755 = vpack.i.b16 %v1754, %v1753
      %v1758 = vpack.i.b16 %v1737, %v1733
      %v1759 = vshrl.u32 %v1733, 16
      %v1760 = vshrl.u32 %v1737, 16
      %v1761 = vpack.i.b16 %v1760, %v1759
      %v1764 = vunpack.c.l.s4 1983009808
      %v1765 = vunpack.c.0.s8 %v1764
      %v1766 = vlaneseq
      %v1767 = vshrl.u32 %v1766, 7
      %v1768 = vsub.s32 %v1765, %v1767
      %v1769 = vrot.slane %v1740, %v1768
      %v1772 = vunpack.c.l.s4 1983009808
      %v1773 = vunpack.c.0.s8 %v1772
      %v1774 = vlaneseq
      %v1775 = vshrl.u32 %v1774, 7
      %v1776 = vsub.s32 %v1773, %v1775
      %v1777 = vrot.slane %v1746, %v1776
      %v1778 = vcombine.low %v1769, %v1777
      %v1779 = vcombine.high %v1769, %v1777
      %v1781 = vunpack.c.l.s4 1934713408
      %v1782 = vunpack.c.0.s8 %v1781
      %v1783 = vlaneseq
      %v1784 = vshrl.u32 %v1783, 7
      %v1785 = vsub.s32 %v1782, %v1784
      %v1786 = vrot.slane %v1778, %v1785
      %v1788 = vunpack.c.l.s4 1934713408
      %v1789 = vunpack.c.0.s8 %v1788
      %v1790 = vlaneseq
      %v1791 = vshrl.u32 %v1790, 7
      %v1792 = vsub.s32 %v1789, %v1791
      %v1793 = vrot.slane %v1779, %v1792
      %v1794 = vcombine.high %v1786, 0
      %v1795 = vcombine.high %v1793, 0
      %v1798 = vunpack.c.l.s4 1983009808
      %v1799 = vunpack.c.0.s8 %v1798
      %v1800 = vlaneseq
      %v1801 = vshrl.u32 %v1800, 7
      %v1802 = vsub.s32 %v1799, %v1801
      %v1803 = vrot.slane %v1743, %v1802
      %v1806 = vunpack.c.l.s4 1983009808
      %v1807 = vunpack.c.0.s8 %v1806
      %v1808 = vlaneseq
      %v1809 = vshrl.u32 %v1808, 7
      %v1810 = vsub.s32 %v1807, %v1809
      %v1811 = vrot.slane %v1749, %v1810
      %v1812 = vcombine.low %v1803, %v1811
      %v1813 = vcombine.high %v1803, %v1811
      %v1815 = vunpack.c.l.s4 1934713408
      %v1816 = vunpack.c.0.s8 %v1815
      %v1817 = vlaneseq
      %v1818 = vshrl.u32 %v1817, 7
      %v1819 = vsub.s32 %v1816, %v1818
      %v1820 = vrot.slane %v1812, %v1819
      %v1822 = vunpack.c.l.s4 1934713408
      %v1823 = vunpack.c.0.s8 %v1822
      %v1824 = vlaneseq
      %v1825 = vshrl.u32 %v1824, 7
      %v1826 = vsub.s32 %v1823, %v1825
      %v1827 = vrot.slane %v1813, %v1826
      %v1828 = vcombine.high %v1820, 0
      %v1829 = vcombine.high %v1827, 0
      %v1832 = vunpack.c.l.s4 1983009808
      %v1833 = vunpack.c.0.s8 %v1832
      %v1834 = vlaneseq
      %v1835 = vshrl.u32 %v1834, 7
      %v1836 = vsub.s32 %v1833, %v1835
      %v1837 = vrot.slane %v1752, %v1836
      %v1840 = vunpack.c.l.s4 1983009808
      %v1841 = vunpack.c.0.s8 %v1840
      %v1842 = vlaneseq
      %v1843 = vshrl.u32 %v1842, 7
      %v1844 = vsub.s32 %v1841, %v1843
      %v1845 = vrot.slane %v1758, %v1844
      %v1846 = vcombine.low %v1837, %v1845
      %v1847 = vcombine.high %v1837, %v1845
      %v1849 = vunpack.c.l.s4 1934713408
      %v1850 = vunpack.c.0.s8 %v1849
      %v1851 = vlaneseq
      %v1852 = vshrl.u32 %v1851, 7
      %v1853 = vsub.s32 %v1850, %v1852
      %v1854 = vrot.slane %v1846, %v1853
      %v1856 = vunpack.c.l.s4 1934713408
      %v1857 = vunpack.c.0.s8 %v1856
      %v1858 = vlaneseq
      %v1859 = vshrl.u32 %v1858, 7
      %v1860 = vsub.s32 %v1857, %v1859
      %v1861 = vrot.slane %v1847, %v1860
      %v1862 = vcombine.high %v1854, 0
      %v1863 = vcombine.high %v1861, 0
      %v1866 = vunpack.c.l.s4 1983009808
      %v1867 = vunpack.c.0.s8 %v1866
      %v1868 = vlaneseq
      %v1869 = vshrl.u32 %v1868, 7
      %v1870 = vsub.s32 %v1867, %v1869
      %v1871 = vrot.slane %v1755, %v1870
      %v1874 = vunpack.c.l.s4 1983009808
      %v1875 = vunpack.c.0.s8 %v1874
      %v1876 = vlaneseq
      %v1877 = vshrl.u32 %v1876, 7
      %v1878 = vsub.s32 %v1875, %v1877
      %v1879 = vrot.slane %v1761, %v1878
      %v1880 = vcombine.low %v1871, %v1879
      %v1881 = vcombine.high %v1871, %v1879
      %v1883 = vunpack.c.l.s4 1934713408
      %v1884 = vunpack.c.0.s8 %v1883
      %v1885 = vlaneseq
      %v1886 = vshrl.u32 %v1885, 7
      %v1887 = vsub.s32 %v1884, %v1886
      %v1888 = vrot.slane %v1880, %v1887
      %v1890 = vunpack.c.l.s4 1934713408
      %v1891 = vunpack.c.0.s8 %v1890
      %v1892 = vlaneseq
      %v1893 = vshrl.u32 %v1892, 7
      %v1894 = vsub.s32 %v1891, %v1893
      %v1895 = vrot.slane %v1881, %v1894
      %v1896 = vcombine.high %v1888, 0
      %v1897 = vcombine.high %v1895, 0
      %v1899 = vunpack.c.l.b16 %v1820
      %v1900 = vpack.c.b16 %v1899, %v1899
      %1901 = vrot.lane.b32.xlu0 %v1900, 16
      %v1902 = vpop.permute.xlu0 %1901
      %v1904 = vunpack.c.l.b16 %v1794
      %v1905 = vpack.c.b16 %v1904, %v1904
      %1906 = vrot.lane.b32.xlu0 %v1905, 32
      %v1907 = vpop.permute.xlu0 %1906
      %v1909 = vunpack.c.l.b16 %v1828
      %v1910 = vpack.c.b16 %v1909, %v1909
      %1911 = vrot.lane.b32.xlu0 %v1910, 48
      %v1912 = vpop.permute.xlu0 %1911
      %v1914 = vunpack.c.l.b16 %v1793
      %v1915 = vpack.c.b16 %v1914, %v1914
      %1916 = vrot.lane.b32.xlu0 %v1915, 64
      %v1917 = vpop.permute.xlu0 %1916
      %v1919 = vunpack.c.l.b16 %v1827
      %v1920 = vpack.c.b16 %v1919, %v1919
      %1921 = vrot.lane.b32.xlu0 %v1920, 80
      %v1922 = vpop.permute.xlu0 %1921
      %v1924 = vunpack.c.l.b16 %v1795
      %v1925 = vpack.c.b16 %v1924, %v1924
      %1926 = vrot.lane.b32.xlu0 %v1925, 96
      %v1927 = vpop.permute.xlu0 %1926
      %v1929 = vunpack.c.l.b16 %v1829
      %v1930 = vpack.c.b16 %v1929, %v1929
      %1931 = vrot.lane.b32.xlu0 %v1930, 112
      %v1932 = vpop.permute.xlu0 %1931
      %v1934 = vunpack.c.l.b16 %v1888
      %v1935 = vpack.c.b16 %v1934, %v1934
      %1936 = vrot.lane.b32.xlu0 %v1935, 16
      %v1937 = vpop.permute.xlu0 %1936
      %v1939 = vunpack.c.l.b16 %v1862
      %v1940 = vpack.c.b16 %v1939, %v1939
      %1941 = vrot.lane.b32.xlu0 %v1940, 32
      %v1942 = vpop.permute.xlu0 %1941
      %v1944 = vunpack.c.l.b16 %v1896
      %v1945 = vpack.c.b16 %v1944, %v1944
      %1946 = vrot.lane.b32.xlu0 %v1945, 48
      %v1947 = vpop.permute.xlu0 %1946
      %v1949 = vunpack.c.l.b16 %v1861
      %v1950 = vpack.c.b16 %v1949, %v1949
      %1951 = vrot.lane.b32.xlu0 %v1950, 64
      %v1952 = vpop.permute.xlu0 %1951
      %v1954 = vunpack.c.l.b16 %v1895
      %v1955 = vpack.c.b16 %v1954, %v1954
      %1956 = vrot.lane.b32.xlu0 %v1955, 80
      %v1957 = vpop.permute.xlu0 %1956
      %v1959 = vunpack.c.l.b16 %v1863
      %v1960 = vpack.c.b16 %v1959, %v1959
      %1961 = vrot.lane.b32.xlu0 %v1960, 96
      %v1962 = vpop.permute.xlu0 %1961
      %v1964 = vunpack.c.l.b16 %v1897
      %v1965 = vpack.c.b16 %v1964, %v1964
      %1966 = vrot.lane.b32.xlu0 %v1965, 112
      %v1967 = vpop.permute.xlu0 %1966
      %v1970 = vsel %vm469, %v1786, %v1902
      %v1972 = vsel %vm473, %v1970, %v1907
      %v1974 = vsel %vm476, %v1972, %v1912
      %v1976 = vsel %vm479, %v1974, %v1917
      %v1978 = vsel %vm482, %v1976, %v1922
      %v1980 = vsel %vm485, %v1978, %v1927
      %v1982 = vsel %vm488, %v1980, %v1932
      %v1985 = vsel %vm469, %v1854, %v1937
      %v1987 = vsel %vm473, %v1985, %v1942
      %v1989 = vsel %vm476, %v1987, %v1947
      %v1991 = vsel %vm479, %v1989, %v1952
      %v1993 = vsel %vm482, %v1991, %v1957
      %v1995 = vsel %vm485, %v1993, %v1962
      %v1997 = vsel %vm488, %v1995, %v1967
      %v2000 = vunpack.c.l.b16 %v1982
      %v2001 = vunpack.c.l.b16 %v1997
      %v2002 = vpack.c.b16 %v2001, %v2000
      %v2003 = vrot.slane %v2002, 6
      %2005 = vst [vmem:[#allocation2 + $0x10] sm:$0xcc] %v2003
      %vm2010 = vcmask 1042432
      %vm2011 = vcmask 1046532
      %vm2012 = vmor %vm2010, %vm2011
      %v2013 = vrot.slane %v227, 5
      %v2014 = vrot.slane %v2013, 4
      %v2015 = vrot.slane %v228, 5
      %v2016 = vsel %vm2012, %v2014, %v2015
      %v2017 = vrot.slane %v2015, 4
      %v2018 = vrot.slane %v229, 5
      %v2019 = vsel %vm2012, %v2017, %v2018
      %v2020 = vrot.slane %v230, 5
      %v2021 = vrot.slane %v2020, 4
      %v2022 = vrot.slane %v231, 5
      %v2023 = vsel %vm2012, %v2021, %v2022
      %v2024 = vrot.slane %v2022, 4
      %v2025 = vrot.slane %v232, 5
      %v2026 = vsel %vm2012, %v2024, %v2025
      %v2027 = vrot.slane %v233, 5
      %v2028 = vrot.slane %v2027, 4
      %v2029 = vrot.slane %v234, 5
      %v2030 = vsel %vm2012, %v2028, %v2029
      %v2031 = vrot.slane %v2029, 4
      %v2032 = vrot.slane %v235, 5
      %v2033 = vsel %vm2012, %v2031, %v2032
      %v2034 = vrot.slane %v236, 5
      %v2035 = vrot.slane %v2034, 4
      %v2036 = vrot.slane %v237, 5
      %v2037 = vsel %vm2012, %v2035, %v2036
      %v2038 = vrot.slane %v2036, 4
      %v2039 = vrot.slane %v238, 5
      %v2040 = vsel %vm2012, %v2038, %v2039
      %v2043 = vpack.i.b16 %v2023, %v2016
      %v2044 = vshrl.u32 %v2016, 16
      %v2045 = vshrl.u32 %v2023, 16
      %v2046 = vpack.i.b16 %v2045, %v2044
      %v2049 = vpack.i.b16 %v2037, %v2030
      %v2050 = vshrl.u32 %v2030, 16
      %v2051 = vshrl.u32 %v2037, 16
      %v2052 = vpack.i.b16 %v2051, %v2050
      %v2055 = vpack.i.b16 %v2026, %v2019
      %v2056 = vshrl.u32 %v2019, 16
      %v2057 = vshrl.u32 %v2026, 16
      %v2058 = vpack.i.b16 %v2057, %v2056
      %v2061 = vpack.i.b16 %v2040, %v2033
      %v2062 = vshrl.u32 %v2033, 16
      %v2063 = vshrl.u32 %v2040, 16
      %v2064 = vpack.i.b16 %v2063, %v2062
      %v2067 = vunpack.c.l.s4 1983009808
      %v2068 = vunpack.c.0.s8 %v2067
      %v2069 = vlaneseq
      %v2070 = vshrl.u32 %v2069, 7
      %v2071 = vsub.s32 %v2068, %v2070
      %v2072 = vrot.slane %v2043, %v2071
      %v2075 = vunpack.c.l.s4 1983009808
      %v2076 = vunpack.c.0.s8 %v2075
      %v2077 = vlaneseq
      %v2078 = vshrl.u32 %v2077, 7
      %v2079 = vsub.s32 %v2076, %v2078
      %v2080 = vrot.slane %v2049, %v2079
      %v2081 = vcombine.low %v2072, %v2080
      %v2082 = vcombine.high %v2072, %v2080
      %v2084 = vunpack.c.l.s4 1934713408
      %v2085 = vunpack.c.0.s8 %v2084
      %v2086 = vlaneseq
      %v2087 = vshrl.u32 %v2086, 7
      %v2088 = vsub.s32 %v2085, %v2087
      %v2089 = vrot.slane %v2081, %v2088
      %v2091 = vunpack.c.l.s4 1934713408
      %v2092 = vunpack.c.0.s8 %v2091
      %v2093 = vlaneseq
      %v2094 = vshrl.u32 %v2093, 7
      %v2095 = vsub.s32 %v2092, %v2094
      %v2096 = vrot.slane %v2082, %v2095
      %v2097 = vcombine.high %v2089, 0
      %v2098 = vcombine.high %v2096, 0
      %v2101 = vunpack.c.l.s4 1983009808
      %v2102 = vunpack.c.0.s8 %v2101
      %v2103 = vlaneseq
      %v2104 = vshrl.u32 %v2103, 7
      %v2105 = vsub.s32 %v2102, %v2104
      %v2106 = vrot.slane %v2046, %v2105
      %v2109 = vunpack.c.l.s4 1983009808
      %v2110 = vunpack.c.0.s8 %v2109
      %v2111 = vlaneseq
      %v2112 = vshrl.u32 %v2111, 7
      %v2113 = vsub.s32 %v2110, %v2112
      %v2114 = vrot.slane %v2052, %v2113
      %v2115 = vcombine.low %v2106, %v2114
      %v2116 = vcombine.high %v2106, %v2114
      %v2118 = vunpack.c.l.s4 1934713408
      %v2119 = vunpack.c.0.s8 %v2118
      %v2120 = vlaneseq
      %v2121 = vshrl.u32 %v2120, 7
      %v2122 = vsub.s32 %v2119, %v2121
      %v2123 = vrot.slane %v2115, %v2122
      %v2125 = vunpack.c.l.s4 1934713408
      %v2126 = vunpack.c.0.s8 %v2125
      %v2127 = vlaneseq
      %v2128 = vshrl.u32 %v2127, 7
      %v2129 = vsub.s32 %v2126, %v2128
      %v2130 = vrot.slane %v2116, %v2129
      %v2131 = vcombine.high %v2123, 0
      %v2132 = vcombine.high %v2130, 0
      %v2135 = vunpack.c.l.s4 1983009808
      %v2136 = vunpack.c.0.s8 %v2135
      %v2137 = vlaneseq
      %v2138 = vshrl.u32 %v2137, 7
      %v2139 = vsub.s32 %v2136, %v2138
      %v2140 = vrot.slane %v2055, %v2139
      %v2143 = vunpack.c.l.s4 1983009808
      %v2144 = vunpack.c.0.s8 %v2143
      %v2145 = vlaneseq
      %v2146 = vshrl.u32 %v2145, 7
      %v2147 = vsub.s32 %v2144, %v2146
      %v2148 = vrot.slane %v2061, %v2147
      %v2149 = vcombine.low %v2140, %v2148
      %v2150 = vcombine.high %v2140, %v2148
      %v2152 = vunpack.c.l.s4 1934713408
      %v2153 = vunpack.c.0.s8 %v2152
      %v2154 = vlaneseq
      %v2155 = vshrl.u32 %v2154, 7
      %v2156 = vsub.s32 %v2153, %v2155
      %v2157 = vrot.slane %v2149, %v2156
      %v2159 = vunpack.c.l.s4 1934713408
      %v2160 = vunpack.c.0.s8 %v2159
      %v2161 = vlaneseq
      %v2162 = vshrl.u32 %v2161, 7
      %v2163 = vsub.s32 %v2160, %v2162
      %v2164 = vrot.slane %v2150, %v2163
      %v2165 = vcombine.high %v2157, 0
      %v2166 = vcombine.high %v2164, 0
      %v2169 = vunpack.c.l.s4 1983009808
      %v2170 = vunpack.c.0.s8 %v2169
      %v2171 = vlaneseq
      %v2172 = vshrl.u32 %v2171, 7
      %v2173 = vsub.s32 %v2170, %v2172
      %v2174 = vrot.slane %v2058, %v2173
      %v2177 = vunpack.c.l.s4 1983009808
      %v2178 = vunpack.c.0.s8 %v2177
      %v2179 = vlaneseq
      %v2180 = vshrl.u32 %v2179, 7
      %v2181 = vsub.s32 %v2178, %v2180
      %v2182 = vrot.slane %v2064, %v2181
      %v2183 = vcombine.low %v2174, %v2182
      %v2184 = vcombine.high %v2174, %v2182
      %v2186 = vunpack.c.l.s4 1934713408
      %v2187 = vunpack.c.0.s8 %v2186
      %v2188 = vlaneseq
      %v2189 = vshrl.u32 %v2188, 7
      %v2190 = vsub.s32 %v2187, %v2189
      %v2191 = vrot.slane %v2183, %v2190
      %v2193 = vunpack.c.l.s4 1934713408
      %v2194 = vunpack.c.0.s8 %v2193
      %v2195 = vlaneseq
      %v2196 = vshrl.u32 %v2195, 7
      %v2197 = vsub.s32 %v2194, %v2196
      %v2198 = vrot.slane %v2184, %v2197
      %v2199 = vcombine.high %v2191, 0
      %v2200 = vcombine.high %v2198, 0
      %v2202 = vunpack.c.l.b16 %v2123
      %v2203 = vpack.c.b16 %v2202, %v2202
      %2204 = vrot.lane.b32.xlu0 %v2203, 16
      %v2205 = vpop.permute.xlu0 %2204
      %v2207 = vunpack.c.l.b16 %v2097
      %v2208 = vpack.c.b16 %v2207, %v2207
      %2209 = vrot.lane.b32.xlu0 %v2208, 32
      %v2210 = vpop.permute.xlu0 %2209
      %v2212 = vunpack.c.l.b16 %v2131
      %v2213 = vpack.c.b16 %v2212, %v2212
      %2214 = vrot.lane.b32.xlu0 %v2213, 48
      %v2215 = vpop.permute.xlu0 %2214
      %v2217 = vunpack.c.l.b16 %v2096
      %v2218 = vpack.c.b16 %v2217, %v2217
      %2219 = vrot.lane.b32.xlu0 %v2218, 64
      %v2220 = vpop.permute.xlu0 %2219
      %v2222 = vunpack.c.l.b16 %v2130
      %v2223 = vpack.c.b16 %v2222, %v2222
      %2224 = vrot.lane.b32.xlu0 %v2223, 80
      %v2225 = vpop.permute.xlu0 %2224
      %v2227 = vunpack.c.l.b16 %v2098
      %v2228 = vpack.c.b16 %v2227, %v2227
      %2229 = vrot.lane.b32.xlu0 %v2228, 96
      %v2230 = vpop.permute.xlu0 %2229
      %v2232 = vunpack.c.l.b16 %v2132
      %v2233 = vpack.c.b16 %v2232, %v2232
      %2234 = vrot.lane.b32.xlu0 %v2233, 112
      %v2235 = vpop.permute.xlu0 %2234
      %v2237 = vunpack.c.l.b16 %v2191
      %v2238 = vpack.c.b16 %v2237, %v2237
      %2239 = vrot.lane.b32.xlu0 %v2238, 16
      %v2240 = vpop.permute.xlu0 %2239
      %v2242 = vunpack.c.l.b16 %v2165
      %v2243 = vpack.c.b16 %v2242, %v2242
      %2244 = vrot.lane.b32.xlu0 %v2243, 32
      %v2245 = vpop.permute.xlu0 %2244
      %v2247 = vunpack.c.l.b16 %v2199
      %v2248 = vpack.c.b16 %v2247, %v2247
      %2249 = vrot.lane.b32.xlu0 %v2248, 48
      %v2250 = vpop.permute.xlu0 %2249
      %v2252 = vunpack.c.l.b16 %v2164
      %v2253 = vpack.c.b16 %v2252, %v2252
      %2254 = vrot.lane.b32.xlu0 %v2253, 64
      %v2255 = vpop.permute.xlu0 %2254
      %v2257 = vunpack.c.l.b16 %v2198
      %v2258 = vpack.c.b16 %v2257, %v2257
      %2259 = vrot.lane.b32.xlu0 %v2258, 80
      %v2260 = vpop.permute.xlu0 %2259
      %v2262 = vunpack.c.l.b16 %v2166
      %v2263 = vpack.c.b16 %v2262, %v2262
      %2264 = vrot.lane.b32.xlu0 %v2263, 96
      %v2265 = vpop.permute.xlu0 %2264
      %v2267 = vunpack.c.l.b16 %v2200
      %v2268 = vpack.c.b16 %v2267, %v2267
      %2269 = vrot.lane.b32.xlu0 %v2268, 112
      %v2270 = vpop.permute.xlu0 %2269
      %v2273 = vsel %vm469, %v2089, %v2205
      %v2275 = vsel %vm473, %v2273, %v2210
      %v2277 = vsel %vm476, %v2275, %v2215
      %v2279 = vsel %vm479, %v2277, %v2220
      %v2281 = vsel %vm482, %v2279, %v2225
      %v2283 = vsel %vm485, %v2281, %v2230
      %v2285 = vsel %vm488, %v2283, %v2235
      %v2288 = vsel %vm469, %v2157, %v2240
      %v2290 = vsel %vm473, %v2288, %v2245
      %v2292 = vsel %vm476, %v2290, %v2250
      %v2294 = vsel %vm479, %v2292, %v2255
      %v2296 = vsel %vm482, %v2294, %v2260
      %v2298 = vsel %vm485, %v2296, %v2265
      %v2300 = vsel %vm488, %v2298, %v2270
      %v2303 = vunpack.c.l.b16 %v2285
      %v2304 = vunpack.c.l.b16 %v2300
      %v2305 = vpack.c.b16 %v2304, %v2303
      %2307 = vst [vmem:[#allocation2 + $0x18] sm:$0x33] %v2305
      %2308 = vrot.lane.b32.xlu0 %v2016, 127
      %v2309 = vpop.permute.xlu0 %2308
      %2310 = vrot.lane.b32.xlu0 %v2019, 127
      %v2311 = vpop.permute.xlu0 %2310
      %2312 = vrot.lane.b32.xlu0 %v2023, 127
      %v2313 = vpop.permute.xlu0 %2312
      %2314 = vrot.lane.b32.xlu0 %v2026, 127
      %v2315 = vpop.permute.xlu0 %2314
      %2316 = vrot.lane.b32.xlu0 %v2030, 127
      %v2317 = vpop.permute.xlu0 %2316
      %2318 = vrot.lane.b32.xlu0 %v2033, 127
      %v2319 = vpop.permute.xlu0 %2318
      %2320 = vrot.lane.b32.xlu0 %v2037, 127
      %v2321 = vpop.permute.xlu0 %2320
      %2322 = vrot.lane.b32.xlu0 %v2040, 127
      %v2323 = vpop.permute.xlu0 %2322
      %v2326 = vpack.i.b16 %v2313, %v2309
      %v2327 = vshrl.u32 %v2309, 16
      %v2328 = vshrl.u32 %v2313, 16
      %v2329 = vpack.i.b16 %v2328, %v2327
      %v2332 = vpack.i.b16 %v2321, %v2317
      %v2333 = vshrl.u32 %v2317, 16
      %v2334 = vshrl.u32 %v2321, 16
      %v2335 = vpack.i.b16 %v2334, %v2333
      %v2338 = vpack.i.b16 %v2315, %v2311
      %v2339 = vshrl.u32 %v2311, 16
      %v2340 = vshrl.u32 %v2315, 16
      %v2341 = vpack.i.b16 %v2340, %v2339
      %v2344 = vpack.i.b16 %v2323, %v2319
      %v2345 = vshrl.u32 %v2319, 16
      %v2346 = vshrl.u32 %v2323, 16
      %v2347 = vpack.i.b16 %v2346, %v2345
      %v2350 = vunpack.c.l.s4 1983009808
      %v2351 = vunpack.c.0.s8 %v2350
      %v2352 = vlaneseq
      %v2353 = vshrl.u32 %v2352, 7
      %v2354 = vsub.s32 %v2351, %v2353
      %v2355 = vrot.slane %v2326, %v2354
      %v2358 = vunpack.c.l.s4 1983009808
      %v2359 = vunpack.c.0.s8 %v2358
      %v2360 = vlaneseq
      %v2361 = vshrl.u32 %v2360, 7
      %v2362 = vsub.s32 %v2359, %v2361
      %v2363 = vrot.slane %v2332, %v2362
      %v2364 = vcombine.low %v2355, %v2363
      %v2365 = vcombine.high %v2355, %v2363
      %v2367 = vunpack.c.l.s4 1934713408
      %v2368 = vunpack.c.0.s8 %v2367
      %v2369 = vlaneseq
      %v2370 = vshrl.u32 %v2369, 7
      %v2371 = vsub.s32 %v2368, %v2370
      %v2372 = vrot.slane %v2364, %v2371
      %v2374 = vunpack.c.l.s4 1934713408
      %v2375 = vunpack.c.0.s8 %v2374
      %v2376 = vlaneseq
      %v2377 = vshrl.u32 %v2376, 7
      %v2378 = vsub.s32 %v2375, %v2377
      %v2379 = vrot.slane %v2365, %v2378
      %v2380 = vcombine.high %v2372, 0
      %v2381 = vcombine.high %v2379, 0
      %v2384 = vunpack.c.l.s4 1983009808
      %v2385 = vunpack.c.0.s8 %v2384
      %v2386 = vlaneseq
      %v2387 = vshrl.u32 %v2386, 7
      %v2388 = vsub.s32 %v2385, %v2387
      %v2389 = vrot.slane %v2329, %v2388
      %v2392 = vunpack.c.l.s4 1983009808
      %v2393 = vunpack.c.0.s8 %v2392
      %v2394 = vlaneseq
      %v2395 = vshrl.u32 %v2394, 7
      %v2396 = vsub.s32 %v2393, %v2395
      %v2397 = vrot.slane %v2335, %v2396
      %v2398 = vcombine.low %v2389, %v2397
      %v2399 = vcombine.high %v2389, %v2397
      %v2401 = vunpack.c.l.s4 1934713408
      %v2402 = vunpack.c.0.s8 %v2401
      %v2403 = vlaneseq
      %v2404 = vshrl.u32 %v2403, 7
      %v2405 = vsub.s32 %v2402, %v2404
      %v2406 = vrot.slane %v2398, %v2405
      %v2408 = vunpack.c.l.s4 1934713408
      %v2409 = vunpack.c.0.s8 %v2408
      %v2410 = vlaneseq
      %v2411 = vshrl.u32 %v2410, 7
      %v2412 = vsub.s32 %v2409, %v2411
      %v2413 = vrot.slane %v2399, %v2412
      %v2414 = vcombine.high %v2406, 0
      %v2415 = vcombine.high %v2413, 0
      %v2418 = vunpack.c.l.s4 1983009808
      %v2419 = vunpack.c.0.s8 %v2418
      %v2420 = vlaneseq
      %v2421 = vshrl.u32 %v2420, 7
      %v2422 = vsub.s32 %v2419, %v2421
      %v2423 = vrot.slane %v2338, %v2422
      %v2426 = vunpack.c.l.s4 1983009808
      %v2427 = vunpack.c.0.s8 %v2426
      %v2428 = vlaneseq
      %v2429 = vshrl.u32 %v2428, 7
      %v2430 = vsub.s32 %v2427, %v2429
      %v2431 = vrot.slane %v2344, %v2430
      %v2432 = vcombine.low %v2423, %v2431
      %v2433 = vcombine.high %v2423, %v2431
      %v2435 = vunpack.c.l.s4 1934713408
      %v2436 = vunpack.c.0.s8 %v2435
      %v2437 = vlaneseq
      %v2438 = vshrl.u32 %v2437, 7
      %v2439 = vsub.s32 %v2436, %v2438
      %v2440 = vrot.slane %v2432, %v2439
      %v2442 = vunpack.c.l.s4 1934713408
      %v2443 = vunpack.c.0.s8 %v2442
      %v2444 = vlaneseq
      %v2445 = vshrl.u32 %v2444, 7
      %v2446 = vsub.s32 %v2443, %v2445
      %v2447 = vrot.slane %v2433, %v2446
      %v2448 = vcombine.high %v2440, 0
      %v2449 = vcombine.high %v2447, 0
      %v2452 = vunpack.c.l.s4 1983009808
      %v2453 = vunpack.c.0.s8 %v2452
      %v2454 = vlaneseq
      %v2455 = vshrl.u32 %v2454, 7
      %v2456 = vsub.s32 %v2453, %v2455
      %v2457 = vrot.slane %v2341, %v2456
      %v2460 = vunpack.c.l.s4 1983009808
      %v2461 = vunpack.c.0.s8 %v2460
      %v2462 = vlaneseq
      %v2463 = vshrl.u32 %v2462, 7
      %v2464 = vsub.s32 %v2461, %v2463
      %v2465 = vrot.slane %v2347, %v2464
      %v2466 = vcombine.low %v2457, %v2465
      %v2467 = vcombine.high %v2457, %v2465
      %v2469 = vunpack.c.l.s4 1934713408
      %v2470 = vunpack.c.0.s8 %v2469
      %v2471 = vlaneseq
      %v2472 = vshrl.u32 %v2471, 7
      %v2473 = vsub.s32 %v2470, %v2472
      %v2474 = vrot.slane %v2466, %v2473
      %v2476 = vunpack.c.l.s4 1934713408
      %v2477 = vunpack.c.0.s8 %v2476
      %v2478 = vlaneseq
      %v2479 = vshrl.u32 %v2478, 7
      %v2480 = vsub.s32 %v2477, %v2479
      %v2481 = vrot.slane %v2467, %v2480
      %v2482 = vcombine.high %v2474, 0
      %v2483 = vcombine.high %v2481, 0
      %v2485 = vunpack.c.l.b16 %v2406
      %v2486 = vpack.c.b16 %v2485, %v2485
      %2487 = vrot.lane.b32.xlu0 %v2486, 16
      %v2488 = vpop.permute.xlu0 %2487
      %v2490 = vunpack.c.l.b16 %v2380
      %v2491 = vpack.c.b16 %v2490, %v2490
      %2492 = vrot.lane.b32.xlu0 %v2491, 32
      %v2493 = vpop.permute.xlu0 %2492
      %v2495 = vunpack.c.l.b16 %v2414
      %v2496 = vpack.c.b16 %v2495, %v2495
      %2497 = vrot.lane.b32.xlu0 %v2496, 48
      %v2498 = vpop.permute.xlu0 %2497
      %v2500 = vunpack.c.l.b16 %v2379
      %v2501 = vpack.c.b16 %v2500, %v2500
      %2502 = vrot.lane.b32.xlu0 %v2501, 64
      %v2503 = vpop.permute.xlu0 %2502
      %v2505 = vunpack.c.l.b16 %v2413
      %v2506 = vpack.c.b16 %v2505, %v2505
      %2507 = vrot.lane.b32.xlu0 %v2506, 80
      %v2508 = vpop.permute.xlu0 %2507
      %v2510 = vunpack.c.l.b16 %v2381
      %v2511 = vpack.c.b16 %v2510, %v2510
      %2512 = vrot.lane.b32.xlu0 %v2511, 96
      %v2513 = vpop.permute.xlu0 %2512
      %v2515 = vunpack.c.l.b16 %v2415
      %v2516 = vpack.c.b16 %v2515, %v2515
      %2517 = vrot.lane.b32.xlu0 %v2516, 112
      %v2518 = vpop.permute.xlu0 %2517
      %v2520 = vunpack.c.l.b16 %v2474
      %v2521 = vpack.c.b16 %v2520, %v2520
      %2522 = vrot.lane.b32.xlu0 %v2521, 16
      %v2523 = vpop.permute.xlu0 %2522
      %v2525 = vunpack.c.l.b16 %v2448
      %v2526 = vpack.c.b16 %v2525, %v2525
      %2527 = vrot.lane.b32.xlu0 %v2526, 32
      %v2528 = vpop.permute.xlu0 %2527
      %v2530 = vunpack.c.l.b16 %v2482
      %v2531 = vpack.c.b16 %v2530, %v2530
      %2532 = vrot.lane.b32.xlu0 %v2531, 48
      %v2533 = vpop.permute.xlu0 %2532
      %v2535 = vunpack.c.l.b16 %v2447
      %v2536 = vpack.c.b16 %v2535, %v2535
      %2537 = vrot.lane.b32.xlu0 %v2536, 64
      %v2538 = vpop.permute.xlu0 %2537
      %v2540 = vunpack.c.l.b16 %v2481
      %v2541 = vpack.c.b16 %v2540, %v2540
      %2542 = vrot.lane.b32.xlu0 %v2541, 80
      %v2543 = vpop.permute.xlu0 %2542
      %v2545 = vunpack.c.l.b16 %v2449
      %v2546 = vpack.c.b16 %v2545, %v2545
      %2547 = vrot.lane.b32.xlu0 %v2546, 96
      %v2548 = vpop.permute.xlu0 %2547
      %v2550 = vunpack.c.l.b16 %v2483
      %v2551 = vpack.c.b16 %v2550, %v2550
      %2552 = vrot.lane.b32.xlu0 %v2551, 112
      %v2553 = vpop.permute.xlu0 %2552
      %v2556 = vsel %vm469, %v2372, %v2488
      %v2558 = vsel %vm473, %v2556, %v2493
      %v2560 = vsel %vm476, %v2558, %v2498
      %v2562 = vsel %vm479, %v2560, %v2503
      %v2564 = vsel %vm482, %v2562, %v2508
      %v2566 = vsel %vm485, %v2564, %v2513
      %v2568 = vsel %vm488, %v2566, %v2518
      %v2571 = vsel %vm469, %v2440, %v2523
      %v2573 = vsel %vm473, %v2571, %v2528
      %v2575 = vsel %vm476, %v2573, %v2533
      %v2577 = vsel %vm479, %v2575, %v2538
      %v2579 = vsel %vm482, %v2577, %v2543
      %v2581 = vsel %vm485, %v2579, %v2548
      %v2583 = vsel %vm488, %v2581, %v2553
      %v2586 = vunpack.c.l.b16 %v2568
      %v2587 = vunpack.c.l.b16 %v2583
      %v2588 = vpack.c.b16 %v2587, %v2586
      %v2589 = vrot.slane %v2588, 6
      %2591 = vst [vmem:[#allocation2 + $0x18] sm:$0xcc] %v2589
      %2592 = vrot.lane.b32.xlu0 %v2016, 126
      %v2593 = vpop.permute.xlu0 %2592
      %2594 = vrot.lane.b32.xlu0 %v2019, 126
      %v2595 = vpop.permute.xlu0 %2594
      %2596 = vrot.lane.b32.xlu0 %v2023, 126
      %v2597 = vpop.permute.xlu0 %2596
      %2598 = vrot.lane.b32.xlu0 %v2026, 126
      %v2599 = vpop.permute.xlu0 %2598
      %2600 = vrot.lane.b32.xlu0 %v2030, 126
      %v2601 = vpop.permute.xlu0 %2600
      %2602 = vrot.lane.b32.xlu0 %v2033, 126
      %v2603 = vpop.permute.xlu0 %2602
      %2604 = vrot.lane.b32.xlu0 %v2037, 126
      %v2605 = vpop.permute.xlu0 %2604
      %2606 = vrot.lane.b32.xlu0 %v2040, 126
      %v2607 = vpop.permute.xlu0 %2606
      %v2610 = vpack.i.b16 %v2597, %v2593
      %v2611 = vshrl.u32 %v2593, 16
      %v2612 = vshrl.u32 %v2597, 16
      %v2613 = vpack.i.b16 %v2612, %v2611
      %v2616 = vpack.i.b16 %v2605, %v2601
      %v2617 = vshrl.u32 %v2601, 16
      %v2618 = vshrl.u32 %v2605, 16
      %v2619 = vpack.i.b16 %v2618, %v2617
      %v2622 = vpack.i.b16 %v2599, %v2595
      %v2623 = vshrl.u32 %v2595, 16
      %v2624 = vshrl.u32 %v2599, 16
      %v2625 = vpack.i.b16 %v2624, %v2623
      %v2628 = vpack.i.b16 %v2607, %v2603
      %v2629 = vshrl.u32 %v2603, 16
      %v2630 = vshrl.u32 %v2607, 16
      %v2631 = vpack.i.b16 %v2630, %v2629
      %v2634 = vunpack.c.l.s4 1983009808
      %v2635 = vunpack.c.0.s8 %v2634
      %v2636 = vlaneseq
      %v2637 = vshrl.u32 %v2636, 7
      %v2638 = vsub.s32 %v2635, %v2637
      %v2639 = vrot.slane %v2610, %v2638
      %v2642 = vunpack.c.l.s4 1983009808
      %v2643 = vunpack.c.0.s8 %v2642
      %v2644 = vlaneseq
      %v2645 = vshrl.u32 %v2644, 7
      %v2646 = vsub.s32 %v2643, %v2645
      %v2647 = vrot.slane %v2616, %v2646
      %v2648 = vcombine.low %v2639, %v2647
      %v2649 = vcombine.high %v2639, %v2647
      %v2651 = vunpack.c.l.s4 1934713408
      %v2652 = vunpack.c.0.s8 %v2651
      %v2653 = vlaneseq
      %v2654 = vshrl.u32 %v2653, 7
      %v2655 = vsub.s32 %v2652, %v2654
      %v2656 = vrot.slane %v2648, %v2655
      %v2658 = vunpack.c.l.s4 1934713408
      %v2659 = vunpack.c.0.s8 %v2658
      %v2660 = vlaneseq
      %v2661 = vshrl.u32 %v2660, 7
      %v2662 = vsub.s32 %v2659, %v2661
      %v2663 = vrot.slane %v2649, %v2662
      %v2664 = vcombine.high %v2656, 0
      %v2665 = vcombine.high %v2663, 0
      %v2668 = vunpack.c.l.s4 1983009808
      %v2669 = vunpack.c.0.s8 %v2668
      %v2670 = vlaneseq
      %v2671 = vshrl.u32 %v2670, 7
      %v2672 = vsub.s32 %v2669, %v2671
      %v2673 = vrot.slane %v2613, %v2672
      %v2676 = vunpack.c.l.s4 1983009808
      %v2677 = vunpack.c.0.s8 %v2676
      %v2678 = vlaneseq
      %v2679 = vshrl.u32 %v2678, 7
      %v2680 = vsub.s32 %v2677, %v2679
      %v2681 = vrot.slane %v2619, %v2680
      %v2682 = vcombine.low %v2673, %v2681
      %v2683 = vcombine.high %v2673, %v2681
      %v2685 = vunpack.c.l.s4 1934713408
      %v2686 = vunpack.c.0.s8 %v2685
      %v2687 = vlaneseq
      %v2688 = vshrl.u32 %v2687, 7
      %v2689 = vsub.s32 %v2686, %v2688
      %v2690 = vrot.slane %v2682, %v2689
      %v2692 = vunpack.c.l.s4 1934713408
      %v2693 = vunpack.c.0.s8 %v2692
      %v2694 = vlaneseq
      %v2695 = vshrl.u32 %v2694, 7
      %v2696 = vsub.s32 %v2693, %v2695
      %v2697 = vrot.slane %v2683, %v2696
      %v2698 = vcombine.high %v2690, 0
      %v2699 = vcombine.high %v2697, 0
      %v2702 = vunpack.c.l.s4 1983009808
      %v2703 = vunpack.c.0.s8 %v2702
      %v2704 = vlaneseq
      %v2705 = vshrl.u32 %v2704, 7
      %v2706 = vsub.s32 %v2703, %v2705
      %v2707 = vrot.slane %v2622, %v2706
      %v2710 = vunpack.c.l.s4 1983009808
      %v2711 = vunpack.c.0.s8 %v2710
      %v2712 = vlaneseq
      %v2713 = vshrl.u32 %v2712, 7
      %v2714 = vsub.s32 %v2711, %v2713
      %v2715 = vrot.slane %v2628, %v2714
      %v2716 = vcombine.low %v2707, %v2715
      %v2717 = vcombine.high %v2707, %v2715
      %v2719 = vunpack.c.l.s4 1934713408
      %v2720 = vunpack.c.0.s8 %v2719
      %v2721 = vlaneseq
      %v2722 = vshrl.u32 %v2721, 7
      %v2723 = vsub.s32 %v2720, %v2722
      %v2724 = vrot.slane %v2716, %v2723
      %v2726 = vunpack.c.l.s4 1934713408
      %v2727 = vunpack.c.0.s8 %v2726
      %v2728 = vlaneseq
      %v2729 = vshrl.u32 %v2728, 7
      %v2730 = vsub.s32 %v2727, %v2729
      %v2731 = vrot.slane %v2717, %v2730
      %v2732 = vcombine.high %v2724, 0
      %v2733 = vcombine.high %v2731, 0
      %v2736 = vunpack.c.l.s4 1983009808
      %v2737 = vunpack.c.0.s8 %v2736
      %v2738 = vlaneseq
      %v2739 = vshrl.u32 %v2738, 7
      %v2740 = vsub.s32 %v2737, %v2739
      %v2741 = vrot.slane %v2625, %v2740
      %v2744 = vunpack.c.l.s4 1983009808
      %v2745 = vunpack.c.0.s8 %v2744
      %v2746 = vlaneseq
      %v2747 = vshrl.u32 %v2746, 7
      %v2748 = vsub.s32 %v2745, %v2747
      %v2749 = vrot.slane %v2631, %v2748
      %v2750 = vcombine.low %v2741, %v2749
      %v2751 = vcombine.high %v2741, %v2749
      %v2753 = vunpack.c.l.s4 1934713408
      %v2754 = vunpack.c.0.s8 %v2753
      %v2755 = vlaneseq
      %v2756 = vshrl.u32 %v2755, 7
      %v2757 = vsub.s32 %v2754, %v2756
      %v2758 = vrot.slane %v2750, %v2757
      %v2760 = vunpack.c.l.s4 1934713408
      %v2761 = vunpack.c.0.s8 %v2760
      %v2762 = vlaneseq
      %v2763 = vshrl.u32 %v2762, 7
      %v2764 = vsub.s32 %v2761, %v2763
      %v2765 = vrot.slane %v2751, %v2764
      %v2766 = vcombine.high %v2758, 0
      %v2767 = vcombine.high %v2765, 0
      %v2769 = vunpack.c.l.b16 %v2690
      %v2770 = vpack.c.b16 %v2769, %v2769
      %2771 = vrot.lane.b32.xlu0 %v2770, 16
      %v2772 = vpop.permute.xlu0 %2771
      %v2774 = vunpack.c.l.b16 %v2664
      %v2775 = vpack.c.b16 %v2774, %v2774
      %2776 = vrot.lane.b32.xlu0 %v2775, 32
      %v2777 = vpop.permute.xlu0 %2776
      %v2779 = vunpack.c.l.b16 %v2698
      %v2780 = vpack.c.b16 %v2779, %v2779
      %2781 = vrot.lane.b32.xlu0 %v2780, 48
      %v2782 = vpop.permute.xlu0 %2781
      %v2784 = vunpack.c.l.b16 %v2663
      %v2785 = vpack.c.b16 %v2784, %v2784
      %2786 = vrot.lane.b32.xlu0 %v2785, 64
      %v2787 = vpop.permute.xlu0 %2786
      %v2789 = vunpack.c.l.b16 %v2697
      %v2790 = vpack.c.b16 %v2789, %v2789
      %2791 = vrot.lane.b32.xlu0 %v2790, 80
      %v2792 = vpop.permute.xlu0 %2791
      %v2794 = vunpack.c.l.b16 %v2665
      %v2795 = vpack.c.b16 %v2794, %v2794
      %2796 = vrot.lane.b32.xlu0 %v2795, 96
      %v2797 = vpop.permute.xlu0 %2796
      %v2799 = vunpack.c.l.b16 %v2699
      %v2800 = vpack.c.b16 %v2799, %v2799
      %2801 = vrot.lane.b32.xlu0 %v2800, 112
      %v2802 = vpop.permute.xlu0 %2801
      %v2804 = vunpack.c.l.b16 %v2758
      %v2805 = vpack.c.b16 %v2804, %v2804
      %2806 = vrot.lane.b32.xlu0 %v2805, 16
      %v2807 = vpop.permute.xlu0 %2806
      %v2809 = vunpack.c.l.b16 %v2732
      %v2810 = vpack.c.b16 %v2809, %v2809
      %2811 = vrot.lane.b32.xlu0 %v2810, 32
      %v2812 = vpop.permute.xlu0 %2811
      %v2814 = vunpack.c.l.b16 %v2766
      %v2815 = vpack.c.b16 %v2814, %v2814
      %2816 = vrot.lane.b32.xlu0 %v2815, 48
      %v2817 = vpop.permute.xlu0 %2816
      %v2819 = vunpack.c.l.b16 %v2731
      %v2820 = vpack.c.b16 %v2819, %v2819
      %2821 = vrot.lane.b32.xlu0 %v2820, 64
      %v2822 = vpop.permute.xlu0 %2821
      %v2824 = vunpack.c.l.b16 %v2765
      %v2825 = vpack.c.b16 %v2824, %v2824
      %2826 = vrot.lane.b32.xlu0 %v2825, 80
      %v2827 = vpop.permute.xlu0 %2826
      %v2829 = vunpack.c.l.b16 %v2733
      %v2830 = vpack.c.b16 %v2829, %v2829
      %2831 = vrot.lane.b32.xlu0 %v2830, 96
      %v2832 = vpop.permute.xlu0 %2831
      %v2834 = vunpack.c.l.b16 %v2767
      %v2835 = vpack.c.b16 %v2834, %v2834
      %2836 = vrot.lane.b32.xlu0 %v2835, 112
      %v2837 = vpop.permute.xlu0 %2836
      %v2840 = vsel %vm469, %v2656, %v2772
      %v2842 = vsel %vm473, %v2840, %v2777
      %v2844 = vsel %vm476, %v2842, %v2782
      %v2846 = vsel %vm479, %v2844, %v2787
      %v2848 = vsel %vm482, %v2846, %v2792
      %v2850 = vsel %vm485, %v2848, %v2797
      %v2852 = vsel %vm488, %v2850, %v2802
      %v2855 = vsel %vm469, %v2724, %v2807
      %v2857 = vsel %vm473, %v2855, %v2812
      %v2859 = vsel %vm476, %v2857, %v2817
      %v2861 = vsel %vm479, %v2859, %v2822
      %v2863 = vsel %vm482, %v2861, %v2827
      %v2865 = vsel %vm485, %v2863, %v2832
      %v2867 = vsel %vm488, %v2865, %v2837
      %v2870 = vunpack.c.l.b16 %v2852
      %v2871 = vunpack.c.l.b16 %v2867
      %v2872 = vpack.c.b16 %v2871, %v2870
      %2874 = vst [vmem:[#allocation2 + $0x20] sm:$0x33] %v2872
      %v2875 = vld [vmem:[%s1] sm:$0xf]
      %v2876 = vld [vmem:[#allocation2] sm:$0xff]
      %v2877 = vld [vmem:[#allocation2 + $0x8] sm:$0xff]
      %v2878 = vld [vmem:[#allocation2 + $0x10] sm:$0xff]
      %v2879 = vld [vmem:[#allocation2 + $0x18] sm:$0xff]
      %v2880 = vld [vmem:[#allocation2 + $0x20] sm:$0x33]
      %v2886 = vunpack.c.l.b16 %v2876
      %v2887 = vunpack.c.h.b16 %v2876
      %v2888 = vunpack.c.l.b16 %v2877
      %v2889 = vunpack.c.h.b16 %v2877
      %v2890 = vunpack.c.l.b16 %v2878
      %v2891 = vunpack.c.h.b16 %v2878
      %v2892 = vunpack.c.l.b16 %v2879
      %v2893 = vunpack.c.h.b16 %v2879
      %v2894 = vunpack.c.l.b16 %v2880
      %v2895 = vunpack.c.h.b16 %v2880
      %v2896 = vpack.c.b16 %v2888, %v2886
      %v2897 = vpack.c.b16 %v2889, %v2887
      %v2898 = vpack.c.b16 %v2892, %v2890
      %v2899 = vpack.c.b16 %v2893, %v2891
      %v2900 = vpack.c.b16 %v2894, %v2894
      %v2901 = vpack.c.b16 %v2895, %v2895
      %vm2906 = vcmask 293888
      %v2908 = vsel %vm2906, %v2875, 0
      %vm2910 = vcmask 1041408
      %v2912 = vsel %vm2910, %v2900, 0
      %v2915 = vsel %vm2910, %v2901, 0
      %2917 = vmatprep.subr.bf16.mxu0 0
      %2918 = vmatpush1.bf16.msra.mxu0 0
      %2919 = vmatprep.subr.bf16.mxu0 0
      %2920 = vmatpush1.bf16.msra.mxu0 0
      %2921 = vmatprep.subr.bf16.mxu0 0
      %2922 = vmatpush1.bf16.msra.mxu0 0
      %2923 = vmatprep.subr.bf16.mxu0 0
      %2924 = vmatpush1.bf16.msra.mxu0 0
      %2925 = vmatprep.subr.bf16.mxu0 0
      %2926 = vmatpush1.bf16.msra.mxu0 0
      %2927 = vmatprep.subr.bf16.mxu0 %v2915
      %2928 = vmatpush1.bf16.msra.mxu0 %v2912
      %2929 = vmatprep.subr.bf16.mxu0 %v2899
      %2930 = vmatpush1.bf16.msra.mxu0 %v2898
      %2931 = vmatprep.subr.bf16.mxu0 %v2897
      %2932 = vmatpush1.bf16.msra.mxu0 %v2896
      %2933 = vmatprep.subr.bf16.mxu0 0
      %2934 = vmatpush2.bf16.msra.mxu0 0
      %2935 = vmatprep.subr.bf16.mxu0 0
      %2936 = vmatpush2.bf16.msra.mxu0 0
      %2937 = vmatprep.subr.bf16.mxu0 0
      %2938 = vmatpush2.bf16.msra.mxu0 0
      %2939 = vmatprep.subr.bf16.mxu0 0
      %2940 = vmatpush2.bf16.msra.mxu0 0
      %2941 = vmatprep.subr.bf16.mxu0 0
      %2942 = vmatpush2.bf16.msra.mxu0 0
      %2943 = vmatprep.subr.bf16.mxu0 0
      %2944 = vmatpush2.bf16.msra.mxu0 0
      %2945 = vmatprep.subr.bf16.mxu0 0
      %2946 = vmatpush2.bf16.msra.mxu0 0
      %2947 = vmatprep.subr.bf16.mxu0 0
      %2948 = vmatpush2.bf16.msra.mxu0 0
      %2949 = vmatprep.mubr.bf16.mxu0 0
      %2950 = vmatmul.mubr.bf16.gmra.mxu0 %v2908
      %v2951 = vpop.f32.mrf.mxu0
      %v2952 = vadd.f32 0.0, %v2951
      %v2953 = vpop.f32.mrf.mxu0
      %v2954 = vadd.f32 0.0, %v2953
      %v2955 = vpop.f32.mrf.mxu0
      %v2956 = vpop.f32.mrf.mxu0
      %2957 = vdwg.mxu0
      %v2958 = vld [vmem:[%s2] sm:$0xff]
      %2960 = vset.pattern.permute.xlu0 0
      %2961 = vperm.xlu0 %2960, %v2958
      %v2962 = vpop.permute.xlu0 %2961
      %v2964 = vmul.f32 %v2952, %v2962
      %v2965 = vmul.f32 %v2954, %v2962
      %v2966 = vld [vmem:[%s3] sm:$0xff]
      %2968 = vset.pattern.permute.xlu0 0
      %2969 = vperm.xlu0 %2968, %v2966
      %v2970 = vpop.permute.xlu0 %2969
      %v2972 = vadd.f32 %v2964, %v2970
      %v2973 = vadd.f32 %v2965, %v2970
      %2974 = vst [vmem:[%s219] sm:$0xff] %v2972
      %2975 = vst [vmem:[%s219 + $0x8] sm:$0xff] %v2973
      %s2976 = smul.u32 2, %s20
      %p2977 = scmp.lt.s32.totalorder %s19, 1
      %s2978 = scalar_select %p2977, %s19, 1
      %p2979 = scmp.lt.s32.totalorder %s2976, 1
      %s2980 = scalar_select %p2979, %s2976, 1
      %s2981 = smul.addr %s2978, 2
      %s2982 = sadd.s32 %s2980, %s2981
      %s2983 = smul.addr %s2982, 8
      %s2984 = scalar_lea.vmem %s4, %s2983
      // Predicated region
      $region37: #{first_octave_cb.5} parent=35 // pred_check
        %p2985 = pneg %p136
      $region38: #{first_octave_cb.5} parent=35 // pred_check_branch
        %2987 = sbr.rel (%p2985) target = $region40
      $region39: #{first_octave_cb.5} parent=35 // pred_region
        %s2988 = smul.u32 2, %s20
      $region40: #{first_octave_cb.5} parent=35 // pred_fallthru
        _
    $region36: #{first_octave_cb.5} parent=5 // pred_fallthru
      _
    %p2989 = scmp.le.s32.totalorder 2, %s10
    // Predicated region
    $region41: #{first_octave_cb.5} parent=5 // pred_check
      %p2990 = pneg %p2989
    $region42: #{first_octave_cb.5} parent=5 // pred_check_branch
      %2992 = sbr.rel (%p2990) target = $region44
    $region43: #{first_octave_cb.5} parent=5 // pred_region
      %s2993 = ssub.s32 %s10, 2
      // Predicated region
      $region45: #{first_octave_cb.5} parent=43 // pred_check
        %p2994 = pneg %p142
      $region46: #{first_octave_cb.5} parent=43 // pred_check_branch
        %2996 = sbr.rel (%p2994) target = $region48
      $region47: #{first_octave_cb.5} parent=43 // pred_region
        %s2997 = smul.u32 2, %s22
        %p2998 = scmp.lt.s32.totalorder %s21, 1
        %s2999 = scalar_select %p2998, %s21, 1
        %p3000 = scmp.lt.s32.totalorder %s2997, 1
        %s3001 = scalar_select %p3000, %s2997, 1
        %s3002 = smul.addr %s2999, 2
        %s3003 = sadd.s32 %s3001, %s3002
        %s3004 = smul.addr %s3003, 8
        %s3005 = scalar_lea.vmem %s4, %s3004
      $region48: #{first_octave_cb.5} parent=43 // pred_fallthru
        _
    $region44: #{first_octave_cb.5} parent=5 // pred_fallthru
      _
  $region6: #{first_octave_cb.5} parent=0 // loop_footer
    %s14 = sadd.s32 1, %s10
  $region7: #{first_octave_cb.5} parent=0 // loop_footer_branch
    %9 = sbr.rel target = $region3
  $region8: #{first_octave_cb.5} parent=0 // loop_exit
    _

</llo_original>
